<compile_context>
chip_gen: v7x
topology: tpu7x:2x2x1
jax: 0.10.0
libtpu: 0.0.40
codegen_flags: <defaults>
</compile_context>

<pallas_src>
import functools

import jax
import jax.numpy as jnp
from jax import lax
from jax.experimental import pallas as pl
from jax.experimental.pallas import tpu as pltpu

block_size = 256
n_embed = 384


# ---------------- fused multi-head attention kernel ----------------
def _fused_mha_kernel(x_ref, wqkv_ref, wproj_ref, bproj_ref, o_ref,
                      qkv_scr, cat_scr, *, num_heads, head_size, block_b,
                      seq_len):
    # x_ref:     (M, C) bf16, M = block_b * T
    # wqkv_ref:  (C, 3*H*D) bf16 -- [Q | K | V] column blocks, Q pre-scaled
    # wproj_ref: (C, C) bf16     -- pre-transposed: (C_in, C_out)
    # bproj_ref: (1, C) f32
    # o_ref:     (M, C) f32      -- lane-dense (C = 384 = 3 * 128 lanes)
    # qkv_scr:   (M, 3*H*D) bf16 VMEM scratch
    # cat_scr:   (M, C) bf16 VMEM scratch
    H, D, GB, T = num_heads, head_size, block_b, seq_len
    HD = H * D

    # One wide bf16 matmul for ALL (batch, head) Q/K/V projections (f32 accum).
    qkv = jnp.dot(x_ref[...], wqkv_ref[...], preferred_element_type=jnp.float32)
    # Park the slab in VMEM scratch; bounds the live range (spill relief) and is
    # the bf16 cast point for the score / p@v matmul operands.
    qkv_scr[...] = qkv.astype(qkv_scr.dtype)

    # Causal (tril) mask, hoisted out of the (batch, head) loops.
    row = lax.broadcasted_iota(jnp.int32, (T, T), 0)
    col = lax.broadcasted_iota(jnp.int32, (T, T), 1)
    causal = col <= row

    for b in range(GB):                              # static, fully unrolled
        r0 = b * T
        for h in range(H):                           # H = 6, static
            c0 = h * D
            q = qkv_scr[r0:r0 + T, c0:c0 + D]                    # (T, D) bf16
            k = qkv_scr[r0:r0 + T, HD + c0:HD + c0 + D]          # (T, D) bf16
            v = qkv_scr[r0:r0 + T, 2 * HD + c0:2 * HD + c0 + D]  # (T, D) bf16

            # q @ k^T as a dot_general contraction over dim 1 of both operands:
            # no materialized k.T, so no per-head XLU transpose.
            wei = lax.dot_general(q, k, (((1,), (1,)), ((), ())),
                                  preferred_element_type=jnp.float32)  # (T, T)
            wei = jnp.where(causal, wei, -jnp.inf)

            # Softmax entirely in f32; exact division (no approx reciprocal).
            wei = wei - jnp.max(wei, axis=-1, keepdims=True)
            p = jnp.exp(wei)
            p = p / jnp.sum(p, axis=-1, keepdims=True)
            # Attention-weight dropout is identity in eval mode.

            out_h = jnp.dot(p.astype(v.dtype), v,
                            preferred_element_type=jnp.float32)        # (T, D)
            # torch.cat([...], dim=-1): head h -> columns [h*D, (h+1)*D).
            cat_scr[r0:r0 + T, c0:c0 + D] = out_h.astype(cat_scr.dtype)

    # Output projection with pre-transposed bf16 weight (lane-dense M x C slab)
    # + f32 bias.  Projection-output dropout is identity in eval mode.
    y = jnp.dot(cat_scr[...], wproj_ref[...], preferred_element_type=jnp.float32)
    o_ref[...] = (y + bproj_ref[...]).astype(o_ref.dtype)


def multihead_attention(x, wq, wk, wv, w_proj, b_proj, *, block_b=None):
    """x: (B, T, C) f32;  wq/wk/wv: (H, D, C);  w_proj: (C, C);  b_proj: (C,)."""
    B, T, C = x.shape
    H, D, _ = wq.shape
    assert H * D == C, "num_heads * head_size must equal n_embed"
    scale = C ** (-0.5)   # PyTorch code scales by C = n_embed (NOT head_size)

    if block_b is None:
        # Keep >= 2 grid steps ("parallel") for v7x's two TensorCores while B is
        # small; once B >= 4, fold 2 batches per step so the projection matmuls
        # see M = 2*T = 256 rows (full MXU row fill).  Single-TensorCore chips
        # (v5e/v6e) benefit from block_b=B even at small B.
        block_b = 2 if (B >= 4 and B % 2 == 0) else 1
    assert B % block_b == 0, "batch must be divisible by block_b"
    m_blk = block_b * T

    # Host-side (trace-time) weight preparation:
    #  - stack all heads' Q/K/V weights into one (C, 3*H*D) matrix,
    #  - bake the softmax scale into the Q columns,
    #  - pre-transpose so the kernel contracts row-major (no in-kernel weight .T),
    #  - cast matmul operands to bf16 (f32 accumulation inside the kernel);
    #    this also halves the cold-start resident-weight DMA (~2.3 -> ~1.15 MiB).
    wq_t = (wq * scale).transpose(2, 0, 1).reshape(C, H * D)   # (C, H*D)
    wk_t = wk.transpose(2, 0, 1).reshape(C, H * D)
    wv_t = wv.transpose(2, 0, 1).reshape(C, H * D)
    w_qkv = jnp.concatenate([wq_t, wk_t, wv_t], axis=1).astype(jnp.bfloat16)
    w_proj_t = w_proj.T.astype(jnp.bfloat16)                   # (C_in, C_out)
    b2d = b_proj.reshape(1, C).astype(jnp.float32)

    # Flatten (B, T, C) -> (B*T, C) outside the kernel (metadata-only in XLA) so
    # blocks are 2-D, lane/sublane dense, and the projections see M rows per step.
    x2 = x.reshape(B * T, C).astype(jnp.bfloat16)

    kernel = functools.partial(_fused_mha_kernel, num_heads=H, head_size=D,
                               block_b=block_b, seq_len=T)

    out = pl.pallas_call(
        kernel,
        out_shape=jax.ShapeDtypeStruct((B * T, C), x.dtype),
        grid=(B // block_b,),
        in_specs=[
            pl.BlockSpec((m_blk, C), lambda i: (i, 0)),
            # Weights/bias: constant index maps -> DMA'd once, VMEM-resident
            # across the grid.  (Total VMEM here is << the scoped limit, so an
            # explicit single-buffering request via pipeline_mode is unnecessary.)
            pl.BlockSpec((C, 3 * H * D), lambda i: (0, 0)),
            pl.BlockSpec((C, C), lambda i: (0, 0)),
            pl.BlockSpec((1, C), lambda i: (0, 0)),
        ],
        out_specs=pl.BlockSpec((m_blk, C), lambda i: (i, 0)),
        scratch_shapes=[
            pltpu.VMEM((m_blk, 3 * H * D), jnp.bfloat16),   # qkv slab
            pltpu.VMEM((m_blk, C), jnp.bfloat16),           # concat(head outs)
        ],
        compiler_params=pltpu.CompilerParams(
            dimension_semantics=("parallel",)),
    )(x2, w_qkv, w_proj_t, b2d)
    return out.reshape(B, T, C)


# ---------------- pure-JAX reference (mirrors the PyTorch forward, f32) ----------------
def _reference(x, wq, wk, wv, w_proj, b_proj):
    B, T, C = x.shape
    outs = []
    for h in range(wq.shape[0]):
        q = x @ wq[h].T
        k = x @ wk[h].T
        v = x @ wv[h].T
        wei = (q @ jnp.swapaxes(k, -2, -1)) * (C ** -0.5)
        row = jnp.arange(T)[:, None]
        col = jnp.arange(T)[None, :]
        wei = jnp.where(col <= row, wei, -jnp.inf)
        wei = jax.nn.softmax(wei, axis=-1)
        outs.append(wei @ v)
    cat = jnp.concatenate(outs, axis=-1)
    return cat @ w_proj.T + b_proj


if __name__ == "__main__":
    # Small, module-consistent shapes: n_embed = 384, 6 heads of size 64, seq = 128 <= block_size.
    B, T = 2, 128
    num_heads, head_size = 6, n_embed // 6   # 6 * 64 = 384 = n_embed

    key = jax.random.PRNGKey(0)
    kx, kq, kk, kv, kpw, kpb = jax.random.split(key, 6)

    x = jax.random.normal(kx, (B, T, n_embed), dtype=jnp.float32)
    init = 1.0 / (n_embed ** 0.5)
    wq = jax.random.uniform(kq, (num_heads, head_size, n_embed), jnp.float32, -init, init)
    wk = jax.random.uniform(kk, (num_heads, head_size, n_embed), jnp.float32, -init, init)
    wv = jax.random.uniform(kv, (num_heads, head_size, n_embed), jnp.float32, -init, init)
    w_proj = jax.random.uniform(kpw, (n_embed, n_embed), jnp.float32, -init, init)
    b_proj = jax.random.uniform(kpb, (n_embed,), jnp.float32, -init, init)

    ref = _reference(x, wq, wk, wv, w_proj, b_proj)

    # Path 1: default tiling (1 batch per grid step -> 2 "parallel" steps).
    out = multihead_attention(x, wq, wk, wv, w_proj, b_proj)
    out = jax.block_until_ready(out)
    assert out.shape == (B, T, n_embed)
    # Tolerance accounts for bf16 matmul operands (f32 accumulation) vs f32 reference;
    # observed error is ~1e-3, 2e-2 leaves ample margin.
    assert jnp.allclose(out, ref, atol=2e-2, rtol=2e-2), "mismatch vs reference (block_b=1)"

    # Path 2: batch folded into one block (grid=(1,), M = 256 projection rows) --
    # the single-TensorCore (v5e/v6e) configuration.
    out2 = multihead_attention(x, wq, wk, wv, w_proj, b_proj, block_b=B)
    out2 = jax.block_until_ready(out2)
    assert out2.shape == (B, T, n_embed)
    assert jnp.allclose(out2, ref, atol=2e-2, rtol=2e-2), "mismatch vs reference (block_b=B)"

    print("KERNEL_OK")
</pallas_src>

<mosaic_0001>
module attributes {stable_mosaic.version = 11 : i64} {
  func.func @_fused_mha_kernel(%arg0: i32, %arg1: memref<128x384xbf16, #tpu.memory_space<vmem>>, %arg2: memref<384x1152xbf16, #tpu.memory_space<vmem>>, %arg3: memref<384x384xbf16, #tpu.memory_space<vmem>>, %arg4: memref<1x384xf32, #tpu.memory_space<vmem>>, %arg5: memref<128x384xf32, #tpu.memory_space<vmem>>, %arg6: memref<128x1152xbf16, #tpu.memory_space<vmem>>, %arg7: memref<128x384xbf16, #tpu.memory_space<vmem>>) attributes {dimension_semantics = [#tpu.dimension_semantics<parallel>], iteration_bounds = array<i64: 2>, scalar_prefetch = 0 : i64, scratch_operands = 2 : i64, tpu.core_type = #tpu.core_type<tc>, window_params = [{transform_indices = @transform_0, window_bounds = array<i64: 128, 384>}, {pipeline_mode = #tpu.pipeline_mode<synchronous>, transform_indices = @transform_1, window_bounds = array<i64: 384, 1152>}, {pipeline_mode = #tpu.pipeline_mode<synchronous>, transform_indices = @transform_2, window_bounds = array<i64: 384, 384>}, {pipeline_mode = #tpu.pipeline_mode<synchronous>, transform_indices = @transform_3, window_bounds = array<i64: 1, 384>}, {transform_indices = @transform_4, window_bounds = array<i64: 128, 384>}]} {
    %c0 = arith.constant 0 : index
    %c0_0 = arith.constant 0 : index
    %0 = vector.load %arg1[%c0, %c0_0] : memref<128x384xbf16, #tpu.memory_space<vmem>>, vector<128x384xbf16>
    %c0_1 = arith.constant 0 : index
    %c0_2 = arith.constant 0 : index
    %1 = vector.load %arg2[%c0_1, %c0_2] : memref<384x1152xbf16, #tpu.memory_space<vmem>>, vector<384x1152xbf16>
    %cst = arith.constant dense<0.000000e+00> : vector<128x1152xf32>
    %2 = tpu.matmul %0, %1, %cst {dimension_numbers = #tpu.dot_dimension_numbers<[1], [0], [0], [1], [0, 0, 1, 1], [], []>} : vector<128x384xbf16>, vector<384x1152xbf16>, vector<128x1152xf32> -> vector<128x1152xf32>
    %3 = arith.truncf %2 : vector<128x1152xf32> to vector<128x1152xbf16>
    %c0_3 = arith.constant 0 : index
    %c0_4 = arith.constant 0 : index
    %4 = vector.load %arg6[%c0_3, %c0_4] : memref<128x1152xbf16, #tpu.memory_space<vmem>>, vector<128x1152xbf16>
    tpu.vector_store %arg6[%c0_3, %c0_4], %3 {strides = array<i32>} : memref<128x1152xbf16, #tpu.memory_space<vmem>>, vector<128x1152xbf16>,
    %5 = tpu.iota {dimensions = array<i32: 0>} : vector<128x128xi32>
    %6 = tpu.iota {dimensions = array<i32: 1>} : vector<128x128xi32>
    %7 = arith.cmpi sle, %6, %5 : vector<128x128xi32>
    %c0_5 = arith.constant 0 : index
    %c0_6 = arith.constant 0 : index
    %8 = vector.load %arg6[%c0_5, %c0_6] : memref<128x1152xbf16, #tpu.memory_space<vmem>>, vector<128x64xbf16>
    %c0_7 = arith.constant 0 : index
    %c384 = arith.constant 384 : index
    %9 = vector.load %arg6[%c0_7, %c384] : memref<128x1152xbf16, #tpu.memory_space<vmem>>, vector<128x64xbf16>
    %c0_8 = arith.constant 0 : index
    %c768 = arith.constant 768 : index
    %10 = vector.load %arg6[%c0_8, %c768] : memref<128x1152xbf16, #tpu.memory_space<vmem>>, vector<128x64xbf16>
    %cst_9 = arith.constant dense<0.000000e+00> : vector<128x128xf32>
    %11 = tpu.matmul %8, %9, %cst_9 {dimension_numbers = #tpu.dot_dimension_numbers<[1], [1], [0], [0], [0, 0, 1, 0], [], []>} : vector<128x64xbf16>, vector<128x64xbf16>, vector<128x128xf32> -> vector<128x128xf32>
    %cst_10 = arith.constant 0xFF800000 : f32
    %12 = vector.broadcast %cst_10 : f32 to vector<128x128xf32>
    %13 = arith.select %7, %11, %12 : vector<128x128xi1>, vector<128x128xf32>
    %cst_11 = arith.constant dense<0xFF800000> : vector<128xf32>
    %14 = vector.multi_reduction <maximumf>, %13, %cst_11 [1] : vector<128x128xf32> to vector<128xf32>
    %15 = vector.shape_cast %14 : vector<128xf32> to vector<128x1xf32>
    %16 = vector.broadcast %15 : vector<128x1xf32> to vector<128x128xf32>
    %17 = arith.subf %13, %16 : vector<128x128xf32>
    %18 = math.exp %17 : vector<128x128xf32>
    %cst_12 = arith.constant dense<0.000000e+00> : vector<128xf32>
    %19 = vector.multi_reduction <add>, %18, %cst_12 [1] : vector<128x128xf32> to vector<128xf32>
    %20 = vector.shape_cast %19 : vector<128xf32> to vector<128x1xf32>
    %21 = vector.broadcast %20 : vector<128x1xf32> to vector<128x128xf32>
    %22 = arith.divf %18, %21 : vector<128x128xf32>
    %23 = arith.truncf %22 : vector<128x128xf32> to vector<128x128xbf16>
    %cst_13 = arith.constant dense<0.000000e+00> : vector<128x64xf32>
    %24 = tpu.matmul %23, %10, %cst_13 {dimension_numbers = #tpu.dot_dimension_numbers<[1], [0], [0], [1], [0, 0, 1, 1], [], []>} : vector<128x128xbf16>, vector<128x64xbf16>, vector<128x64xf32> -> vector<128x64xf32>
    %25 = arith.truncf %24 : vector<128x64xf32> to vector<128x64xbf16>
    %c0_14 = arith.constant 0 : index
    %c0_15 = arith.constant 0 : index
    %26 = vector.load %arg7[%c0_14, %c0_15] : memref<128x384xbf16, #tpu.memory_space<vmem>>, vector<128x64xbf16>
    tpu.vector_store %arg7[%c0_14, %c0_15], %25 {strides = array<i32>} : memref<128x384xbf16, #tpu.memory_space<vmem>>, vector<128x64xbf16>,
    %c0_16 = arith.constant 0 : index
    %c64 = arith.constant 64 : index
    %27 = vector.load %arg6[%c0_16, %c64] : memref<128x1152xbf16, #tpu.memory_space<vmem>>, vector<128x64xbf16>
    %c0_17 = arith.constant 0 : index
    %c448 = arith.constant 448 : index
    %28 = vector.load %arg6[%c0_17, %c448] : memref<128x1152xbf16, #tpu.memory_space<vmem>>, vector<128x64xbf16>
    %c0_18 = arith.constant 0 : index
    %c832 = arith.constant 832 : index
    %29 = vector.load %arg6[%c0_18, %c832] : memref<128x1152xbf16, #tpu.memory_space<vmem>>, vector<128x64xbf16>
    %cst_19 = arith.constant dense<0.000000e+00> : vector<128x128xf32>
    %30 = tpu.matmul %27, %28, %cst_19 {dimension_numbers = #tpu.dot_dimension_numbers<[1], [1], [0], [0], [0, 0, 1, 0], [], []>} : vector<128x64xbf16>, vector<128x64xbf16>, vector<128x128xf32> -> vector<128x128xf32>
    %cst_20 = arith.constant 0xFF800000 : f32
    %31 = vector.broadcast %cst_20 : f32 to vector<128x128xf32>
    %32 = arith.select %7, %30, %31 : vector<128x128xi1>, vector<128x128xf32>
    %cst_21 = arith.constant dense<0xFF800000> : vector<128xf32>
    %33 = vector.multi_reduction <maximumf>, %32, %cst_21 [1] : vector<128x128xf32> to vector<128xf32>
    %34 = vector.shape_cast %33 : vector<128xf32> to vector<128x1xf32>
    %35 = vector.broadcast %34 : vector<128x1xf32> to vector<128x128xf32>
    %36 = arith.subf %32, %35 : vector<128x128xf32>
    %37 = math.exp %36 : vector<128x128xf32>
    %cst_22 = arith.constant dense<0.000000e+00> : vector<128xf32>
    %38 = vector.multi_reduction <add>, %37, %cst_22 [1] : vector<128x128xf32> to vector<128xf32>
    %39 = vector.shape_cast %38 : vector<128xf32> to vector<128x1xf32>
    %40 = vector.broadcast %39 : vector<128x1xf32> to vector<128x128xf32>
    %41 = arith.divf %37, %40 : vector<128x128xf32>
    %42 = arith.truncf %41 : vector<128x128xf32> to vector<128x128xbf16>
    %cst_23 = arith.constant dense<0.000000e+00> : vector<128x64xf32>
    %43 = tpu.matmul %42, %29, %cst_23 {dimension_numbers = #tpu.dot_dimension_numbers<[1], [0], [0], [1], [0, 0, 1, 1], [], []>} : vector<128x128xbf16>, vector<128x64xbf16>, vector<128x64xf32> -> vector<128x64xf32>
    %44 = arith.truncf %43 : vector<128x64xf32> to vector<128x64xbf16>
    %c0_24 = arith.constant 0 : index
    %c64_25 = arith.constant 64 : index
    %45 = vector.load %arg7[%c0_24, %c64_25] : memref<128x384xbf16, #tpu.memory_space<vmem>>, vector<128x64xbf16>
    tpu.vector_store %arg7[%c0_24, %c64_25], %44 {strides = array<i32>} : memref<128x384xbf16, #tpu.memory_space<vmem>>, vector<128x64xbf16>,
    %c0_26 = arith.constant 0 : index
    %c128 = arith.constant 128 : index
    %46 = vector.load %arg6[%c0_26, %c128] : memref<128x1152xbf16, #tpu.memory_space<vmem>>, vector<128x64xbf16>
    %c0_27 = arith.constant 0 : index
    %c512 = arith.constant 512 : index
    %47 = vector.load %arg6[%c0_27, %c512] : memref<128x1152xbf16, #tpu.memory_space<vmem>>, vector<128x64xbf16>
    %c0_28 = arith.constant 0 : index
    %c896 = arith.constant 896 : index
    %48 = vector.load %arg6[%c0_28, %c896] : memref<128x1152xbf16, #tpu.memory_space<vmem>>, vector<128x64xbf16>
    %cst_29 = arith.constant dense<0.000000e+00> : vector<128x128xf32>
    %49 = tpu.matmul %46, %47, %cst_29 {dimension_numbers = #tpu.dot_dimension_numbers<[1], [1], [0], [0], [0, 0, 1, 0], [], []>} : vector<128x64xbf16>, vector<128x64xbf16>, vector<128x128xf32> -> vector<128x128xf32>
    %cst_30 = arith.constant 0xFF800000 : f32
    %50 = vector.broadcast %cst_30 : f32 to vector<128x128xf32>
    %51 = arith.select %7, %49, %50 : vector<128x128xi1>, vector<128x128xf32>
    %cst_31 = arith.constant dense<0xFF800000> : vector<128xf32>
    %52 = vector.multi_reduction <maximumf>, %51, %cst_31 [1] : vector<128x128xf32> to vector<128xf32>
    %53 = vector.shape_cast %52 : vector<128xf32> to vector<128x1xf32>
    %54 = vector.broadcast %53 : vector<128x1xf32> to vector<128x128xf32>
    %55 = arith.subf %51, %54 : vector<128x128xf32>
    %56 = math.exp %55 : vector<128x128xf32>
    %cst_32 = arith.constant dense<0.000000e+00> : vector<128xf32>
    %57 = vector.multi_reduction <add>, %56, %cst_32 [1] : vector<128x128xf32> to vector<128xf32>
    %58 = vector.shape_cast %57 : vector<128xf32> to vector<128x1xf32>
    %59 = vector.broadcast %58 : vector<128x1xf32> to vector<128x128xf32>
    %60 = arith.divf %56, %59 : vector<128x128xf32>
    %61 = arith.truncf %60 : vector<128x128xf32> to vector<128x128xbf16>
    %cst_33 = arith.constant dense<0.000000e+00> : vector<128x64xf32>
    %62 = tpu.matmul %61, %48, %cst_33 {dimension_numbers = #tpu.dot_dimension_numbers<[1], [0], [0], [1], [0, 0, 1, 1], [], []>} : vector<128x128xbf16>, vector<128x64xbf16>, vector<128x64xf32> -> vector<128x64xf32>
    %63 = arith.truncf %62 : vector<128x64xf32> to vector<128x64xbf16>
    %c0_34 = arith.constant 0 : index
    %c128_35 = arith.constant 128 : index
    %64 = vector.load %arg7[%c0_34, %c128_35] : memref<128x384xbf16, #tpu.memory_space<vmem>>, vector<128x64xbf16>
    tpu.vector_store %arg7[%c0_34, %c128_35], %63 {strides = array<i32>} : memref<128x384xbf16, #tpu.memory_space<vmem>>, vector<128x64xbf16>,
    %c0_36 = arith.constant 0 : index
    %c192 = arith.constant 192 : index
    %65 = vector.load %arg6[%c0_36, %c192] : memref<128x1152xbf16, #tpu.memory_space<vmem>>, vector<128x64xbf16>
    %c0_37 = arith.constant 0 : index
    %c576 = arith.constant 576 : index
    %66 = vector.load %arg6[%c0_37, %c576] : memref<128x1152xbf16, #tpu.memory_space<vmem>>, vector<128x64xbf16>
    %c0_38 = arith.constant 0 : index
    %c960 = arith.constant 960 : index
    %67 = vector.load %arg6[%c0_38, %c960] : memref<128x1152xbf16, #tpu.memory_space<vmem>>, vector<128x64xbf16>
    %cst_39 = arith.constant dense<0.000000e+00> : vector<128x128xf32>
    %68 = tpu.matmul %65, %66, %cst_39 {dimension_numbers = #tpu.dot_dimension_numbers<[1], [1], [0], [0], [0, 0, 1, 0], [], []>} : vector<128x64xbf16>, vector<128x64xbf16>, vector<128x128xf32> -> vector<128x128xf32>
    %cst_40 = arith.constant 0xFF800000 : f32
    %69 = vector.broadcast %cst_40 : f32 to vector<128x128xf32>
    %70 = arith.select %7, %68, %69 : vector<128x128xi1>, vector<128x128xf32>
    %cst_41 = arith.constant dense<0xFF800000> : vector<128xf32>
    %71 = vector.multi_reduction <maximumf>, %70, %cst_41 [1] : vector<128x128xf32> to vector<128xf32>
    %72 = vector.shape_cast %71 : vector<128xf32> to vector<128x1xf32>
    %73 = vector.broadcast %72 : vector<128x1xf32> to vector<128x128xf32>
    %74 = arith.subf %70, %73 : vector<128x128xf32>
    %75 = math.exp %74 : vector<128x128xf32>
    %cst_42 = arith.constant dense<0.000000e+00> : vector<128xf32>
    %76 = vector.multi_reduction <add>, %75, %cst_42 [1] : vector<128x128xf32> to vector<128xf32>
    %77 = vector.shape_cast %76 : vector<128xf32> to vector<128x1xf32>
    %78 = vector.broadcast %77 : vector<128x1xf32> to vector<128x128xf32>
    %79 = arith.divf %75, %78 : vector<128x128xf32>
    %80 = arith.truncf %79 : vector<128x128xf32> to vector<128x128xbf16>
    %cst_43 = arith.constant dense<0.000000e+00> : vector<128x64xf32>
    %81 = tpu.matmul %80, %67, %cst_43 {dimension_numbers = #tpu.dot_dimension_numbers<[1], [0], [0], [1], [0, 0, 1, 1], [], []>} : vector<128x128xbf16>, vector<128x64xbf16>, vector<128x64xf32> -> vector<128x64xf32>
    %82 = arith.truncf %81 : vector<128x64xf32> to vector<128x64xbf16>
    %c0_44 = arith.constant 0 : index
    %c192_45 = arith.constant 192 : index
    %83 = vector.load %arg7[%c0_44, %c192_45] : memref<128x384xbf16, #tpu.memory_space<vmem>>, vector<128x64xbf16>
    tpu.vector_store %arg7[%c0_44, %c192_45], %82 {strides = array<i32>} : memref<128x384xbf16, #tpu.memory_space<vmem>>, vector<128x64xbf16>,
    %c0_46 = arith.constant 0 : index
    %c256 = arith.constant 256 : index
    %84 = vector.load %arg6[%c0_46, %c256] : memref<128x1152xbf16, #tpu.memory_space<vmem>>, vector<128x64xbf16>
    %c0_47 = arith.constant 0 : index
    %c640 = arith.constant 640 : index
    %85 = vector.load %arg6[%c0_47, %c640] : memref<128x1152xbf16, #tpu.memory_space<vmem>>, vector<128x64xbf16>
    %c0_48 = arith.constant 0 : index
    %c1024 = arith.constant 1024 : index
    %86 = vector.load %arg6[%c0_48, %c1024] : memref<128x1152xbf16, #tpu.memory_space<vmem>>, vector<128x64xbf16>
    %cst_49 = arith.constant dense<0.000000e+00> : vector<128x128xf32>
    %87 = tpu.matmul %84, %85, %cst_49 {dimension_numbers = #tpu.dot_dimension_numbers<[1], [1], [0], [0], [0, 0, 1, 0], [], []>} : vector<128x64xbf16>, vector<128x64xbf16>, vector<128x128xf32> -> vector<128x128xf32>
    %cst_50 = arith.constant 0xFF800000 : f32
    %88 = vector.broadcast %cst_50 : f32 to vector<128x128xf32>
    %89 = arith.select %7, %87, %88 : vector<128x128xi1>, vector<128x128xf32>
    %cst_51 = arith.constant dense<0xFF800000> : vector<128xf32>
    %90 = vector.multi_reduction <maximumf>, %89, %cst_51 [1] : vector<128x128xf32> to vector<128xf32>
    %91 = vector.shape_cast %90 : vector<128xf32> to vector<128x1xf32>
    %92 = vector.broadcast %91 : vector<128x1xf32> to vector<128x128xf32>
    %93 = arith.subf %89, %92 : vector<128x128xf32>
    %94 = math.exp %93 : vector<128x128xf32>
    %cst_52 = arith.constant dense<0.000000e+00> : vector<128xf32>
    %95 = vector.multi_reduction <add>, %94, %cst_52 [1] : vector<128x128xf32> to vector<128xf32>
    %96 = vector.shape_cast %95 : vector<128xf32> to vector<128x1xf32>
    %97 = vector.broadcast %96 : vector<128x1xf32> to vector<128x128xf32>
    %98 = arith.divf %94, %97 : vector<128x128xf32>
    %99 = arith.truncf %98 : vector<128x128xf32> to vector<128x128xbf16>
    %cst_53 = arith.constant dense<0.000000e+00> : vector<128x64xf32>
    %100 = tpu.matmul %99, %86, %cst_53 {dimension_numbers = #tpu.dot_dimension_numbers<[1], [0], [0], [1], [0, 0, 1, 1], [], []>} : vector<128x128xbf16>, vector<128x64xbf16>, vector<128x64xf32> -> vector<128x64xf32>
    %101 = arith.truncf %100 : vector<128x64xf32> to vector<128x64xbf16>
    %c0_54 = arith.constant 0 : index
    %c256_55 = arith.constant 256 : index
    %102 = vector.load %arg7[%c0_54, %c256_55] : memref<128x384xbf16, #tpu.memory_space<vmem>>, vector<128x64xbf16>
    tpu.vector_store %arg7[%c0_54, %c256_55], %101 {strides = array<i32>} : memref<128x384xbf16, #tpu.memory_space<vmem>>, vector<128x64xbf16>,
    %c0_56 = arith.constant 0 : index
    %c320 = arith.constant 320 : index
    %103 = vector.load %arg6[%c0_56, %c320] : memref<128x1152xbf16, #tpu.memory_space<vmem>>, vector<128x64xbf16>
    %c0_57 = arith.constant 0 : index
    %c704 = arith.constant 704 : index
    %104 = vector.load %arg6[%c0_57, %c704] : memref<128x1152xbf16, #tpu.memory_space<vmem>>, vector<128x64xbf16>
    %c0_58 = arith.constant 0 : index
    %c1088 = arith.constant 1088 : index
    %105 = vector.load %arg6[%c0_58, %c1088] : memref<128x1152xbf16, #tpu.memory_space<vmem>>, vector<128x64xbf16>
    %cst_59 = arith.constant dense<0.000000e+00> : vector<128x128xf32>
    %106 = tpu.matmul %103, %104, %cst_59 {dimension_numbers = #tpu.dot_dimension_numbers<[1], [1], [0], [0], [0, 0, 1, 0], [], []>} : vector<128x64xbf16>, vector<128x64xbf16>, vector<128x128xf32> -> vector<128x128xf32>
    %cst_60 = arith.constant 0xFF800000 : f32
    %107 = vector.broadcast %cst_60 : f32 to vector<128x128xf32>
    %108 = arith.select %7, %106, %107 : vector<128x128xi1>, vector<128x128xf32>
    %cst_61 = arith.constant dense<0xFF800000> : vector<128xf32>
    %109 = vector.multi_reduction <maximumf>, %108, %cst_61 [1] : vector<128x128xf32> to vector<128xf32>
    %110 = vector.shape_cast %109 : vector<128xf32> to vector<128x1xf32>
    %111 = vector.broadcast %110 : vector<128x1xf32> to vector<128x128xf32>
    %112 = arith.subf %108, %111 : vector<128x128xf32>
    %113 = math.exp %112 : vector<128x128xf32>
    %cst_62 = arith.constant dense<0.000000e+00> : vector<128xf32>
    %114 = vector.multi_reduction <add>, %113, %cst_62 [1] : vector<128x128xf32> to vector<128xf32>
    %115 = vector.shape_cast %114 : vector<128xf32> to vector<128x1xf32>
    %116 = vector.broadcast %115 : vector<128x1xf32> to vector<128x128xf32>
    %117 = arith.divf %113, %116 : vector<128x128xf32>
    %118 = arith.truncf %117 : vector<128x128xf32> to vector<128x128xbf16>
    %cst_63 = arith.constant dense<0.000000e+00> : vector<128x64xf32>
    %119 = tpu.matmul %118, %105, %cst_63 {dimension_numbers = #tpu.dot_dimension_numbers<[1], [0], [0], [1], [0, 0, 1, 1], [], []>} : vector<128x128xbf16>, vector<128x64xbf16>, vector<128x64xf32> -> vector<128x64xf32>
    %120 = arith.truncf %119 : vector<128x64xf32> to vector<128x64xbf16>
    %c0_64 = arith.constant 0 : index
    %c320_65 = arith.constant 320 : index
    %121 = vector.load %arg7[%c0_64, %c320_65] : memref<128x384xbf16, #tpu.memory_space<vmem>>, vector<128x64xbf16>
    tpu.vector_store %arg7[%c0_64, %c320_65], %120 {strides = array<i32>} : memref<128x384xbf16, #tpu.memory_space<vmem>>, vector<128x64xbf16>,
    %c0_66 = arith.constant 0 : index
    %c0_67 = arith.constant 0 : index
    %122 = vector.load %arg7[%c0_66, %c0_67] : memref<128x384xbf16, #tpu.memory_space<vmem>>, vector<128x384xbf16>
    %c0_68 = arith.constant 0 : index
    %c0_69 = arith.constant 0 : index
    %123 = vector.load %arg3[%c0_68, %c0_69] : memref<384x384xbf16, #tpu.memory_space<vmem>>, vector<384x384xbf16>
    %cst_70 = arith.constant dense<0.000000e+00> : vector<128x384xf32>
    %124 = tpu.matmul %122, %123, %cst_70 {dimension_numbers = #tpu.dot_dimension_numbers<[1], [0], [0], [1], [0, 0, 1, 1], [], []>} : vector<128x384xbf16>, vector<384x384xbf16>, vector<128x384xf32> -> vector<128x384xf32>
    %c0_71 = arith.constant 0 : index
    %c0_72 = arith.constant 0 : index
    %125 = vector.load %arg4[%c0_71, %c0_72] : memref<1x384xf32, #tpu.memory_space<vmem>>, vector<1x384xf32>
    %126 = vector.broadcast %125 : vector<1x384xf32> to vector<128x384xf32>
    %127 = arith.addf %124, %126 : vector<128x384xf32>
    %c0_73 = arith.constant 0 : index
    %c0_74 = arith.constant 0 : index
    %128 = vector.load %arg5[%c0_73, %c0_74] : memref<128x384xf32, #tpu.memory_space<vmem>>, vector<128x384xf32>
    tpu.vector_store %arg5[%c0_73, %c0_74], %127 {strides = array<i32>} : memref<128x384xf32, #tpu.memory_space<vmem>>, vector<128x384xf32>,
    return
  }
  func.func @transform_0(%arg0: i32) -> (i32, i32) {
    %c0_i32 = arith.constant 0 : i32
    %c0_i32_0 = arith.constant 0 : i32
    return %arg0, %c0_i32 : i32, i32
  }
  func.func @transform_1(%arg0: i32) -> (i32, i32) {
    %c0_i32 = arith.constant 0 : i32
    %c0_i32_0 = arith.constant 0 : i32
    %c0_i32_1 = arith.constant 0 : i32
    return %c0_i32, %c0_i32_0 : i32, i32
  }
  func.func @transform_2(%arg0: i32) -> (i32, i32) {
    %c0_i32 = arith.constant 0 : i32
    %c0_i32_0 = arith.constant 0 : i32
    %c0_i32_1 = arith.constant 0 : i32
    return %c0_i32, %c0_i32_0 : i32, i32
  }
  func.func @transform_3(%arg0: i32) -> (i32, i32) {
    %c0_i32 = arith.constant 0 : i32
    %c0_i32_0 = arith.constant 0 : i32
    %c0_i32_1 = arith.constant 0 : i32
    return %c0_i32, %c0_i32_0 : i32, i32
  }
  func.func @transform_4(%arg0: i32) -> (i32, i32) {
    %c0_i32 = arith.constant 0 : i32
    %c0_i32_0 = arith.constant 0 : i32
    return %arg0, %c0_i32 : i32, i32
  }
}

</mosaic_0001>

<llo_original>
// kernel: tpu_custom_call.1
$region0: #{tpu_custom_call.1}
  #allocation0 [shape = 'u32[]', space=smem, size = 0x4, offset = 0x4, fixed_abs, tag = 'smem constant byte address 0x4 - core index']
  #allocation1 [shape = 'u32[144,128]{1,0:T(1,128)}', space=vmem, size = 0x12000, scoped, tag = 'internal scratch']
  #allocation2 [shape = 'bf16[128,1152]{1,0:T(16,128)(2,1)}', space=vmem, size = 0x48000, scoped, tag = 'scratch operand']
  #allocation3 [shape = 'bf16[128,384]{1,0:T(16,128)(2,1)}', space=vmem, size = 0x18000, scoped, tag = 'scratch operand']
  %s0 = inlined_call_operand.hbm [shape: bf16[256,384], index: 0, kind: input, shape index: {}]
  %s1 = inlined_call_operand.hbm [shape: bf16[384,1152], index: 1, kind: input, shape index: {}]
  %s2 = inlined_call_operand.hbm [shape: bf16[384,384], index: 2, kind: input, shape index: {}]
  %s3 = inlined_call_operand.vmem [shape: f32[1,384], index: 3, kind: input, shape index: {}]
  %s4 = inlined_call_operand.hbm [shape: f32[256,384], index: 4, kind: output, shape index: {}]
  %s5 = sld [smem:[#allocation0]]
  $region61: #{tpu_custom_call.1} parent=0
    _
  %s7 = ssub.s32 1, %s5
  %s8 = scalar_select 0, %s7, %s5
  $region1: #{tpu_custom_call.1} parent=0
    #allocation4 [shape = 'u8[196608]{0}', space=vmem, size = 0x30000, scoped, tag = 'input window, operand 0']
    #allocation5 [shape = 's32[2]{0}', space=sflag, size = 0x8, scoped, tag = 'scoped memory for tpu_custom_call.1']
    #allocation6 [shape = 's32[2]{0}', space=sflag, size = 0x8, scoped, tag = 'scoped memory for tpu_custom_call.1']
    #allocation7 [shape = 'u8[884736]{0}', space=vmem, size = 0xd8000, scoped, tag = 'input window, operand 1, single buffered']
    #allocation8 [shape = 's32[1]{0}', space=sflag, size = 0x4, scoped, tag = 'scoped memory for tpu_custom_call.1']
    #allocation9 [shape = 'u8[294912]{0}', space=vmem, size = 0x48000, scoped, tag = 'input window, operand 2, single buffered']
    #allocation10 [shape = 'u8[393216]{0}', space=vmem, size = 0x60000, scoped, tag = 'output window, operand 0']
    %9 = vsyncpa [#allocation5], 0
    %s10 = scalar_lea.sflag [#allocation5], 1
    %11 = vsyncpa %s10, 0
    %12 = vsyncpa [#allocation8], 0
    %13 = vsyncpa [#allocation6], 0
    %s14 = scalar_lea.sflag [#allocation6], 1
    %15 = vsyncpa %s14, 0
    loop: start=0, step=1, limit=4
    $region2: #{tpu_custom_call.1} parent=1 // loop_pre_header
      _
    $region3: #{tpu_custom_call.1} parent=1 // loop_header
      %s17 = sphi 0, %s21
      %p18 = scmp.ge.s32.totalorder %s17, 4
      %s27 = sphi 0, %s29
      %s30 = sphi 0, %s27
      %s31 = sphi 0, %s30
      %s47 = sphi 0, %s31
      %s51 = sphi 0, %s51
      %s53 = sphi 0, %s51
      %s54 = sphi 0, %s53
      %s68 = sphi 0, %s54
      %s72 = sphi 0, %s72
      %s74 = sphi 0, %s72
      %s75 = sphi 0, %s74
      %s89 = sphi 0, %s75
      %s93 = sphi 0, %s93
      %s95 = sphi 0, %s93
      %s96 = sphi 0, %s95
      %s110 = sphi 0, %s96
      %s116 = sphi 0, %s118
      %s119 = sphi 0, %s116
      %s120 = sphi 0, %s119
      %s136 = sphi 0, %s120
    $region4: #{tpu_custom_call.1} parent=1 // loop_header_branch
      %20 = sbr.rel (%p18) target = $region8
    $region5: #{tpu_custom_call.1} parent=1 // loop_body
      %s22 = ssub.s32 %s17, 1
      %s23 = ssub.s32 %s17, 2
      %s24 = sadd.s32 %s17, 1
      %s25 = ssub.s32 %s17, %s24
      %p26 = scmp.eq.s32.totalorder %s25, 0
      %s28 = sadd.s32 %s27, 1
      %s29 = scalar_select %p26, %s27, %s28
      %p32 = pneg %p26
      %p33 = scmp.eq.s32.totalorder %s17, 1
      %p34 = por %p32, %p33
      %p35 = scmp.ne.s32.totalorder %s27, %s30
      %p36 = scmp.eq.s32.totalorder %s17, 0
      %p37 = por %p35, %p36
      %p38 = scmp.ne.s32.totalorder %s27, %s30
      %p39 = scmp.eq.s32.totalorder %s22, 1
      %p40 = por %p38, %p39
      %p41 = scmp.ne.s32.totalorder %s30, %s31
      %p42 = scmp.eq.s32.totalorder %s22, 0
      %p43 = por %p41, %p42
      %p44 = scmp.ne.s32.totalorder %s30, %s31
      %p45 = scmp.eq.s32.totalorder %s23, 1
      %p46 = por %p44, %p45
      %p48 = scmp.ne.s32.totalorder %s31, %s47
      %p49 = scmp.eq.s32.totalorder %s23, 0
      %p50 = por %p48, %p49
      %s52 = sadd.s32 %s51, 1
      %p55 = scmp.eq.s32.totalorder %s17, 1
      %p56 = scmp.ne.s32.totalorder %s51, %s53
      %p57 = scmp.eq.s32.totalorder %s17, 0
      %p58 = por %p56, %p57
      %p59 = scmp.ne.s32.totalorder %s51, %s53
      %p60 = scmp.eq.s32.totalorder %s22, 1
      %p61 = por %p59, %p60
      %p62 = scmp.ne.s32.totalorder %s53, %s54
      %p63 = scmp.eq.s32.totalorder %s22, 0
      %p64 = por %p62, %p63
      %p65 = scmp.ne.s32.totalorder %s53, %s54
      %p66 = scmp.eq.s32.totalorder %s23, 1
      %p67 = por %p65, %p66
      %p69 = scmp.ne.s32.totalorder %s54, %s68
      %p70 = scmp.eq.s32.totalorder %s23, 0
      %p71 = por %p69, %p70
      %s73 = sadd.s32 %s72, 1
      %p76 = scmp.eq.s32.totalorder %s17, 1
      %p77 = scmp.ne.s32.totalorder %s72, %s74
      %p78 = scmp.eq.s32.totalorder %s17, 0
      %p79 = por %p77, %p78
      %p80 = scmp.ne.s32.totalorder %s72, %s74
      %p81 = scmp.eq.s32.totalorder %s22, 1
      %p82 = por %p80, %p81
      %p83 = scmp.ne.s32.totalorder %s74, %s75
      %p84 = scmp.eq.s32.totalorder %s22, 0
      %p85 = por %p83, %p84
      %p86 = scmp.ne.s32.totalorder %s74, %s75
      %p87 = scmp.eq.s32.totalorder %s23, 1
      %p88 = por %p86, %p87
      %p90 = scmp.ne.s32.totalorder %s75, %s89
      %p91 = scmp.eq.s32.totalorder %s23, 0
      %p92 = por %p90, %p91
      %s94 = sadd.s32 %s93, 1
      %p97 = scmp.eq.s32.totalorder %s17, 1
      %p98 = scmp.ne.s32.totalorder %s93, %s95
      %p99 = scmp.eq.s32.totalorder %s17, 0
      %p100 = por %p98, %p99
      %p101 = scmp.ne.s32.totalorder %s93, %s95
      %p102 = scmp.eq.s32.totalorder %s22, 1
      %p103 = por %p101, %p102
      %p104 = scmp.ne.s32.totalorder %s95, %s96
      %p105 = scmp.eq.s32.totalorder %s22, 0
      %p106 = por %p104, %p105
      %p107 = scmp.ne.s32.totalorder %s95, %s96
      %p108 = scmp.eq.s32.totalorder %s23, 1
      %p109 = por %p107, %p108
      %p111 = scmp.ne.s32.totalorder %s96, %s110
      %p112 = scmp.eq.s32.totalorder %s23, 0
      %p113 = por %p111, %p112
      %s114 = ssub.s32 %s17, %s24
      %p115 = scmp.eq.s32.totalorder %s114, 0
      %s117 = sadd.s32 %s116, 1
      %s118 = scalar_select %p115, %s116, %s117
      %p121 = pneg %p115
      %p122 = scmp.eq.s32.totalorder %s17, 1
      %p123 = por %p121, %p122
      %p124 = scmp.ne.s32.totalorder %s116, %s119
      %p125 = scmp.eq.s32.totalorder %s17, 0
      %p126 = por %p124, %p125
      %p127 = scmp.ne.s32.totalorder %s116, %s119
      %p128 = scmp.eq.s32.totalorder %s22, 1
      %p129 = por %p127, %p128
      %p130 = scmp.ne.s32.totalorder %s119, %s120
      %p131 = scmp.eq.s32.totalorder %s22, 0
      %p132 = por %p130, %p131
      %p133 = scmp.ne.s32.totalorder %s119, %s120
      %p134 = scmp.eq.s32.totalorder %s23, 1
      %p135 = por %p133, %p134
      %p137 = scmp.ne.s32.totalorder %s120, %s136
      %p138 = scmp.eq.s32.totalorder %s23, 0
      %p139 = por %p137, %p138
      %p140 = scmp.le.s32.totalorder 1, %s17
      %p141 = scmp.lt.s32.totalorder %s17, 3
      %p142 = pnand %p140, %p141
      %p143 = pneg %p142
      // Predicated region
      $region9: #{tpu_custom_call.1} parent=5 // pred_check
        _
      $region10: #{tpu_custom_call.1} parent=5 // pred_check_branch
        %145 = sbr.rel (%p142) target = $region12
      $region11: #{tpu_custom_call.1} parent=5 // pred_region
        %s146 = ssub.s32 %s17, 1
        // Predicated region
        $region13: #{tpu_custom_call.1} parent=11 // pred_check
          %p147 = pneg %p64
        $region14: #{tpu_custom_call.1} parent=11 // pred_check_branch
          %149 = sbr.rel (%p147) target = $region16
        $region15: #{tpu_custom_call.1} parent=11 // pred_region
          %s151 = ssub.s32 27648, 27648
          %152 = vsyncadd [#allocation8], %s151
          %s153 = sshll.u32 [#allocation7], 4
          %s154 = int_to_ptr.vmem [resolvable:$true] %s153
          %159 = dma.hbm_to_vmem [thread:$0]  %s1, 27648, %s154, [#allocation8], 576, 576, 36
        $region16: #{tpu_custom_call.1} parent=11 // pred_fallthru
          _
        // Predicated region
        $region17: #{tpu_custom_call.1} parent=11 // pred_check
          %p160 = pneg %p85
        $region18: #{tpu_custom_call.1} parent=11 // pred_check_branch
          %162 = sbr.rel (%p160) target = $region20
        $region19: #{tpu_custom_call.1} parent=11 // pred_region
          %s164 = ssub.s32 9216, 9216
          %165 = vsyncadd [#allocation8], %s164
          %s166 = sshll.u32 [#allocation9], 4
          %s167 = int_to_ptr.vmem [resolvable:$true] %s166
          %172 = dma.hbm_to_vmem [thread:$0]  %s2, 9216, %s167, [#allocation8], 192, 192, 12
        $region20: #{tpu_custom_call.1} parent=11 // pred_fallthru
          _
        // Predicated region
        $region21: #{tpu_custom_call.1} parent=11 // pred_check
          %p173 = pneg %p106
        $region22: #{tpu_custom_call.1} parent=11 // pred_check_branch
          %175 = sbr.rel (%p173) target = $region24
        $region23: #{tpu_custom_call.1} parent=11 // pred_region
          _
        $region24: #{tpu_custom_call.1} parent=11 // pred_fallthru
          _
      $region12: #{tpu_custom_call.1} parent=5 // pred_fallthru
        _
      %p176 = scmp.lt.s32.totalorder %s17, 2
      // Predicated region
      $region25: #{tpu_custom_call.1} parent=5 // pred_check
        %p177 = pneg %p176
      $region26: #{tpu_custom_call.1} parent=5 // pred_check_branch
        %179 = sbr.rel (%p177) target = $region28
      $region27: #{tpu_custom_call.1} parent=5 // pred_region
        // Predicated region
        $region29: #{tpu_custom_call.1} parent=27 // pred_check
          %p180 = pneg %p37
        $region30: #{tpu_custom_call.1} parent=27 // pred_check_branch
          %182 = sbr.rel (%p180) target = $region32
        $region31: #{tpu_custom_call.1} parent=27 // pred_region
          %s183 = sand.u32 %s27, 1
          %s184 = scalar_lea.sflag [#allocation5], %s183
          %s185 = sand.u32 %s27, 1
          %s186 = smul.addr %s185, 192
          %s187 = scalar_lea.vmem [#allocation4], %s186
          %s188 = smul.u32 16, %s17
          %s190 = ssub.s32 3072, 3072
          %191 = vsyncadd %s184, %s190
          %s192 = smul.addr %s188, 3
          %s193 = smul.addr %s192, 64
          %s194 = scalar_lea.hbm %s0, %s193
          %s195 = sshll.u32 %s187, 4
          %s196 = int_to_ptr.vmem [resolvable:$true] %s195
          %201 = dma.hbm_to_vmem [thread:$0]  %s194, 3072, %s196, %s184, 192, 192, 12
        $region32: #{tpu_custom_call.1} parent=27 // pred_fallthru
          _
      $region28: #{tpu_custom_call.1} parent=5 // pred_fallthru
        _
      %p202 = scmp.le.s32.totalorder 1, %s17
      %p203 = scmp.lt.s32.totalorder %s17, 3
      %p204 = pnand %p202, %p203
      %p205 = pneg %p204
      // Predicated region
      $region33: #{tpu_custom_call.1} parent=5 // pred_check
        _
      $region34: #{tpu_custom_call.1} parent=5 // pred_check_branch
        %207 = sbr.rel (%p204) target = $region36
      $region35: #{tpu_custom_call.1} parent=5 // pred_region
        %s208 = ssub.s32 %s17, 1
        %s209 = sand.u32 %s30, 1
        %s210 = scalar_lea.sflag [#allocation5], %s209
        %s211 = sand.u32 %s30, 1
        %s212 = smul.addr %s211, 192
        %s213 = scalar_lea.vmem [#allocation4], %s212
        // Predicated region
        $region37: #{tpu_custom_call.1} parent=35 // pred_check
          %p214 = pneg %p43
        $region38: #{tpu_custom_call.1} parent=35 // pred_check_branch
          %216 = sbr.rel (%p214) target = $region40
        $region39: #{tpu_custom_call.1} parent=35 // pred_region
          %217 = dma.done %s210, 3072
        $region40: #{tpu_custom_call.1} parent=35 // pred_fallthru
          _
        // Predicated region
        $region41: #{tpu_custom_call.1} parent=35 // pred_check
          %p218 = pneg %p64
        $region42: #{tpu_custom_call.1} parent=35 // pred_check_branch
          %220 = sbr.rel (%p218) target = $region44
        $region43: #{tpu_custom_call.1} parent=35 // pred_region
          %221 = dma.done [#allocation8], 27648
        $region44: #{tpu_custom_call.1} parent=35 // pred_fallthru
          _
        // Predicated region
        $region45: #{tpu_custom_call.1} parent=35 // pred_check
          %p222 = pneg %p85
        $region46: #{tpu_custom_call.1} parent=35 // pred_check_branch
          %224 = sbr.rel (%p222) target = $region48
        $region47: #{tpu_custom_call.1} parent=35 // pred_region
          %225 = dma.done [#allocation8], 9216
        $region48: #{tpu_custom_call.1} parent=35 // pred_fallthru
          _
        %s226 = sand.u32 %s30, 1
        %s227 = scalar_lea.sflag [#allocation5], %s226
        %s228 = sand.u32 %s30, 1
        %s229 = smul.addr %s228, 192
        %s230 = scalar_lea.vmem [#allocation4], %s229
        %p231 = pneg %p43
        %p232 = pneg %p40
        %p233 = pneg %p64
        %p234 = pneg %p61
        %p235 = pneg %p85
        %p236 = pneg %p82
        %p237 = pneg %p106
        %p238 = pneg %p103
        %p239 = pneg %p132
        %p240 = pneg %p129
        %s241 = sand.u32 %s119, 1
        %s242 = scalar_lea.sflag [#allocation6], %s241
        %s243 = sand.u32 %s119, 1
        %s244 = smul.addr %s243, 384
        %s245 = scalar_lea.vmem [#allocation10], %s244
        %s246 = smul.u32 16, %s22
        %s247 = smul.u32 16, %s22
        %v249 = vld [vmem:[%s213] sm:$0xff]
        %v250 = vld [vmem:[%s213 + $0x8] sm:$0xf]
        %v251 = vld [vmem:[%s213 + $0xc] sm:$0xff]
        %v252 = vld [vmem:[%s213 + $0x14] sm:$0xf]
        %v253 = vld [vmem:[%s213 + $0x18] sm:$0xff]
        %v254 = vld [vmem:[%s213 + $0x20] sm:$0xf]
        %v255 = vld [vmem:[%s213 + $0x24] sm:$0xff]
        %v256 = vld [vmem:[%s213 + $0x2c] sm:$0xf]
        %v257 = vld [vmem:[%s213 + $0x30] sm:$0xff]
        %v258 = vld [vmem:[%s213 + $0x38] sm:$0xf]
        %v259 = vld [vmem:[%s213 + $0x3c] sm:$0xff]
        %v260 = vld [vmem:[%s213 + $0x44] sm:$0xf]
        %v261 = vld [vmem:[%s213 + $0x48] sm:$0xff]
        %v262 = vld [vmem:[%s213 + $0x50] sm:$0xf]
        %v263 = vld [vmem:[%s213 + $0x54] sm:$0xff]
        %v264 = vld [vmem:[%s213 + $0x5c] sm:$0xf]
        %v265 = vld [vmem:[%s213 + $0x60] sm:$0xff]
        %v266 = vld [vmem:[%s213 + $0x68] sm:$0xf]
        %v267 = vld [vmem:[%s213 + $0x6c] sm:$0xff]
        %v268 = vld [vmem:[%s213 + $0x74] sm:$0xf]
        %v269 = vld [vmem:[%s213 + $0x78] sm:$0xff]
        %v270 = vld [vmem:[%s213 + $0x80] sm:$0xf]
        %v271 = vld [vmem:[%s213 + $0x84] sm:$0xff]
        %v272 = vld [vmem:[%s213 + $0x8c] sm:$0xf]
        %v273 = vld [vmem:[%s213 + $0x90] sm:$0xff]
        %v274 = vld [vmem:[%s213 + $0x98] sm:$0xf]
        %v275 = vld [vmem:[%s213 + $0x9c] sm:$0xff]
        %v276 = vld [vmem:[%s213 + $0xa4] sm:$0xf]
        %v277 = vld [vmem:[%s213 + $0xa8] sm:$0xff]
        %v278 = vld [vmem:[%s213 + $0xb0] sm:$0xf]
        %v279 = vld [vmem:[%s213 + $0xb4] sm:$0xff]
        %v280 = vld [vmem:[%s213 + $0xbc] sm:$0xf]
        %v281 = vld [vmem:[#allocation7] sm:$0xff]
        %v282 = vld [vmem:[#allocation7 + $0x8] sm:$0xff]
        %v283 = vld [vmem:[#allocation7 + $0x10] sm:$0xff]
        %v284 = vld [vmem:[#allocation7 + $0x18] sm:$0xff]
        %v285 = vld [vmem:[#allocation7 + $0x20] sm:$0xf]
        %v286 = vld [vmem:[#allocation7 + $0x24] sm:$0xff]
        %v287 = vld [vmem:[#allocation7 + $0x2c] sm:$0xff]
        %v288 = vld [vmem:[#allocation7 + $0x34] sm:$0xff]
        %v289 = vld [vmem:[#allocation7 + $0x3c] sm:$0xff]
        %v290 = vld [vmem:[#allocation7 + $0x44] sm:$0xf]
        %v291 = vld [vmem:[#allocation7 + $0x48] sm:$0xff]
        %v292 = vld [vmem:[#allocation7 + $0x50] sm:$0xff]
        %v293 = vld [vmem:[#allocation7 + $0x58] sm:$0xff]
        %v294 = vld [vmem:[#allocation7 + $0x60] sm:$0xff]
        %v295 = vld [vmem:[#allocation7 + $0x68] sm:$0xf]
        %v296 = vld [vmem:[#allocation7 + $0x6c] sm:$0xff]
        %v297 = vld [vmem:[#allocation7 + $0x74] sm:$0xff]
        %v298 = vld [vmem:[#allocation7 + $0x7c] sm:$0xff]
        %v299 = vld [vmem:[#allocation7 + $0x84] sm:$0xff]
        %v300 = vld [vmem:[#allocation7 + $0x8c] sm:$0xf]
        %v301 = vld [vmem:[#allocation7 + $0x90] sm:$0xff]
        %v302 = vld [vmem:[#allocation7 + $0x98] sm:$0xff]
        %v303 = vld [vmem:[#allocation7 + $0xa0] sm:$0xff]
        %v304 = vld [vmem:[#allocation7 + $0xa8] sm:$0xff]
        %v305 = vld [vmem:[#allocation7 + $0xb0] sm:$0xf]
        %v306 = vld [vmem:[#allocation7 + $0xb4] sm:$0xff]
        %v307 = vld [vmem:[#allocation7 + $0xbc] sm:$0xff]
        %v308 = vld [vmem:[#allocation7 + $0xc4] sm:$0xff]
        %v309 = vld [vmem:[#allocation7 + $0xcc] sm:$0xff]
        %v310 = vld [vmem:[#allocation7 + $0xd4] sm:$0xf]
        %v311 = vld [vmem:[#allocation7 + $0xd8] sm:$0xff]
        %v312 = vld [vmem:[#allocation7 + $0xe0] sm:$0xff]
        %v313 = vld [vmem:[#allocation7 + $0xe8] sm:$0xff]
        %v314 = vld [vmem:[#allocation7 + $0xf0] sm:$0xff]
        %v315 = vld [vmem:[#allocation7 + $0xf8] sm:$0xf]
        %v316 = vld [vmem:[#allocation7 + $0xfc] sm:$0xff]
        %v317 = vld [vmem:[#allocation7 + $0x104] sm:$0xff]
        %v318 = vld [vmem:[#allocation7 + $0x10c] sm:$0xff]
        %v319 = vld [vmem:[#allocation7 + $0x114] sm:$0xff]
        %v320 = vld [vmem:[#allocation7 + $0x11c] sm:$0xf]
        %v321 = vld [vmem:[#allocation7 + $0x120] sm:$0xff]
        %v322 = vld [vmem:[#allocation7 + $0x128] sm:$0xff]
        %v323 = vld [vmem:[#allocation7 + $0x130] sm:$0xff]
        %v324 = vld [vmem:[#allocation7 + $0x138] sm:$0xff]
        %v325 = vld [vmem:[#allocation7 + $0x140] sm:$0xf]
        %v326 = vld [vmem:[#allocation7 + $0x144] sm:$0xff]
        %v327 = vld [vmem:[#allocation7 + $0x14c] sm:$0xff]
        %v328 = vld [vmem:[#allocation7 + $0x154] sm:$0xff]
        %v329 = vld [vmem:[#allocation7 + $0x15c] sm:$0xff]
        %v330 = vld [vmem:[#allocation7 + $0x164] sm:$0xf]
        %v331 = vld [vmem:[#allocation7 + $0x168] sm:$0xff]
        %v332 = vld [vmem:[#allocation7 + $0x170] sm:$0xff]
        %v333 = vld [vmem:[#allocation7 + $0x178] sm:$0xff]
        %v334 = vld [vmem:[#allocation7 + $0x180] sm:$0xff]
        %v335 = vld [vmem:[#allocation7 + $0x188] sm:$0xf]
        %v336 = vld [vmem:[#allocation7 + $0x18c] sm:$0xff]
        %v337 = vld [vmem:[#allocation7 + $0x194] sm:$0xff]
        %v338 = vld [vmem:[#allocation7 + $0x19c] sm:$0xff]
        %v339 = vld [vmem:[#allocation7 + $0x1a4] sm:$0xff]
        %v340 = vld [vmem:[#allocation7 + $0x1ac] sm:$0xf]
        %v341 = vld [vmem:[#allocation7 + $0x1b0] sm:$0xff]
        %v342 = vld [vmem:[#allocation7 + $0x1b8] sm:$0xff]
        %v343 = vld [vmem:[#allocation7 + $0x1c0] sm:$0xff]
        %v344 = vld [vmem:[#allocation7 + $0x1c8] sm:$0xff]
        %v345 = vld [vmem:[#allocation7 + $0x1d0] sm:$0xf]
        %v346 = vld [vmem:[#allocation7 + $0x1d4] sm:$0xff]
        %v347 = vld [vmem:[#allocation7 + $0x1dc] sm:$0xff]
        %v348 = vld [vmem:[#allocation7 + $0x1e4] sm:$0xff]
        %v349 = vld [vmem:[#allocation7 + $0x1ec] sm:$0xff]
        %v350 = vld [vmem:[#allocation7 + $0x1f4] sm:$0xf]
        %v351 = vld [vmem:[#allocation7 + $0x1f8] sm:$0xff]
        %v352 = vld [vmem:[#allocation7 + $0x200] sm:$0xff]
        %v353 = vld [vmem:[#allocation7 + $0x208] sm:$0xff]
        %v354 = vld [vmem:[#allocation7 + $0x210] sm:$0xff]
        %v355 = vld [vmem:[#allocation7 + $0x218] sm:$0xf]
        %v356 = vld [vmem:[#allocation7 + $0x21c] sm:$0xff]
        %v357 = vld [vmem:[#allocation7 + $0x224] sm:$0xff]
        %v358 = vld [vmem:[#allocation7 + $0x22c] sm:$0xff]
        %v359 = vld [vmem:[#allocation7 + $0x234] sm:$0xff]
        %v360 = vld [vmem:[#allocation7 + $0x23c] sm:$0xf]
        %v361 = vld [vmem:[#allocation7 + $0x240] sm:$0xff]
        %v362 = vld [vmem:[#allocation7 + $0x248] sm:$0xff]
        %v363 = vld [vmem:[#allocation7 + $0x250] sm:$0xff]
        %v364 = vld [vmem:[#allocation7 + $0x258] sm:$0xff]
        %v365 = vld [vmem:[#allocation7 + $0x260] sm:$0xf]
        %v366 = vld [vmem:[#allocation7 + $0x264] sm:$0xff]
        %v367 = vld [vmem:[#allocation7 + $0x26c] sm:$0xff]
        %v368 = vld [vmem:[#allocation7 + $0x274] sm:$0xff]
        %v369 = vld [vmem:[#allocation7 + $0x27c] sm:$0xff]
        %v370 = vld [vmem:[#allocation7 + $0x284] sm:$0xf]
        %v371 = vld [vmem:[#allocation7 + $0x288] sm:$0xff]
        %v372 = vld [vmem:[#allocation7 + $0x290] sm:$0xff]
        %v373 = vld [vmem:[#allocation7 + $0x298] sm:$0xff]
        %v374 = vld [vmem:[#allocation7 + $0x2a0] sm:$0xff]
        %v375 = vld [vmem:[#allocation7 + $0x2a8] sm:$0xf]
        %v376 = vld [vmem:[#allocation7 + $0x2ac] sm:$0xff]
        %v377 = vld [vmem:[#allocation7 + $0x2b4] sm:$0xff]
        %v378 = vld [vmem:[#allocation7 + $0x2bc] sm:$0xff]
        %v379 = vld [vmem:[#allocation7 + $0x2c4] sm:$0xff]
        %v380 = vld [vmem:[#allocation7 + $0x2cc] sm:$0xf]
        %v381 = vld [vmem:[#allocation7 + $0x2d0] sm:$0xff]
        %v382 = vld [vmem:[#allocation7 + $0x2d8] sm:$0xff]
        %v383 = vld [vmem:[#allocation7 + $0x2e0] sm:$0xff]
        %v384 = vld [vmem:[#allocation7 + $0x2e8] sm:$0xff]
        %v385 = vld [vmem:[#allocation7 + $0x2f0] sm:$0xf]
        %v386 = vld [vmem:[#allocation7 + $0x2f4] sm:$0xff]
        %v387 = vld [vmem:[#allocation7 + $0x2fc] sm:$0xff]
        %v388 = vld [vmem:[#allocation7 + $0x304] sm:$0xff]
        %v389 = vld [vmem:[#allocation7 + $0x30c] sm:$0xff]
        %v390 = vld [vmem:[#allocation7 + $0x314] sm:$0xf]
        %v391 = vld [vmem:[#allocation7 + $0x318] sm:$0xff]
        %v392 = vld [vmem:[#allocation7 + $0x320] sm:$0xff]
        %v393 = vld [vmem:[#allocation7 + $0x328] sm:$0xff]
        %v394 = vld [vmem:[#allocation7 + $0x330] sm:$0xff]
        %v395 = vld [vmem:[#allocation7 + $0x338] sm:$0xf]
        %v396 = vld [vmem:[#allocation7 + $0x33c] sm:$0xff]
        %v397 = vld [vmem:[#allocation7 + $0x344] sm:$0xff]
        %v398 = vld [vmem:[#allocation7 + $0x34c] sm:$0xff]
        %v399 = vld [vmem:[#allocation7 + $0x354] sm:$0xff]
        %v400 = vld [vmem:[#allocation7 + $0x35c] sm:$0xf]
        %v401 = vld [vmem:[#allocation7 + $0x360] sm:$0xff]
        %v402 = vld [vmem:[#allocation7 + $0x368] sm:$0xff]
        %v403 = vld [vmem:[#allocation7 + $0x370] sm:$0xff]
        %v404 = vld [vmem:[#allocation7 + $0x378] sm:$0xff]
        %v405 = vld [vmem:[#allocation7 + $0x380] sm:$0xf]
        %v406 = vld [vmem:[#allocation7 + $0x384] sm:$0xff]
        %v407 = vld [vmem:[#allocation7 + $0x38c] sm:$0xff]
        %v408 = vld [vmem:[#allocation7 + $0x394] sm:$0xff]
        %v409 = vld [vmem:[#allocation7 + $0x39c] sm:$0xff]
        %v410 = vld [vmem:[#allocation7 + $0x3a4] sm:$0xf]
        %v411 = vld [vmem:[#allocation7 + $0x3a8] sm:$0xff]
        %v412 = vld [vmem:[#allocation7 + $0x3b0] sm:$0xff]
        %v413 = vld [vmem:[#allocation7 + $0x3b8] sm:$0xff]
        %v414 = vld [vmem:[#allocation7 + $0x3c0] sm:$0xff]
        %v415 = vld [vmem:[#allocation7 + $0x3c8] sm:$0xf]
        %v416 = vld [vmem:[#allocation7 + $0x3cc] sm:$0xff]
        %v417 = vld [vmem:[#allocation7 + $0x3d4] sm:$0xff]
        %v418 = vld [vmem:[#allocation7 + $0x3dc] sm:$0xff]
        %v419 = vld [vmem:[#allocation7 + $0x3e4] sm:$0xff]
        %v420 = vld [vmem:[#allocation7 + $0x3ec] sm:$0xf]
        %v421 = vld [vmem:[#allocation7 + $0x3f0] sm:$0xff]
        %v422 = vld [vmem:[#allocation7 + $0x3f8] sm:$0xff]
        %v423 = vld [vmem:[#allocation7 + $0x400] sm:$0xff]
        %v424 = vld [vmem:[#allocation7 + $0x408] sm:$0xff]
        %v425 = vld [vmem:[#allocation7 + $0x410] sm:$0xf]
        %v426 = vld [vmem:[#allocation7 + $0x414] sm:$0xff]
        %v427 = vld [vmem:[#allocation7 + $0x41c] sm:$0xff]
        %v428 = vld [vmem:[#allocation7 + $0x424] sm:$0xff]
        %v429 = vld [vmem:[#allocation7 + $0x42c] sm:$0xff]
        %v430 = vld [vmem:[#allocation7 + $0x434] sm:$0xf]
        %v431 = vld [vmem:[#allocation7 + $0x438] sm:$0xff]
        %v432 = vld [vmem:[#allocation7 + $0x440] sm:$0xff]
        %v433 = vld [vmem:[#allocation7 + $0x448] sm:$0xff]
        %v434 = vld [vmem:[#allocation7 + $0x450] sm:$0xff]
        %v435 = vld [vmem:[#allocation7 + $0x458] sm:$0xf]
        %v436 = vld [vmem:[#allocation7 + $0x45c] sm:$0xff]
        %v437 = vld [vmem:[#allocation7 + $0x464] sm:$0xff]
        %v438 = vld [vmem:[#allocation7 + $0x46c] sm:$0xff]
        %v439 = vld [vmem:[#allocation7 + $0x474] sm:$0xff]
        %v440 = vld [vmem:[#allocation7 + $0x47c] sm:$0xf]
        %v441 = vld [vmem:[#allocation7 + $0x480] sm:$0xff]
        %v442 = vld [vmem:[#allocation7 + $0x488] sm:$0xff]
        %v443 = vld [vmem:[#allocation7 + $0x490] sm:$0xff]
        %v444 = vld [vmem:[#allocation7 + $0x498] sm:$0xff]
        %v445 = vld [vmem:[#allocation7 + $0x4a0] sm:$0xf]
        %v446 = vld [vmem:[#allocation7 + $0x4a4] sm:$0xff]
        %v447 = vld [vmem:[#allocation7 + $0x4ac] sm:$0xff]
        %v448 = vld [vmem:[#allocation7 + $0x4b4] sm:$0xff]
        %v449 = vld [vmem:[#allocation7 + $0x4bc] sm:$0xff]
        %v450 = vld [vmem:[#allocation7 + $0x4c4] sm:$0xf]
        %v451 = vld [vmem:[#allocation7 + $0x4c8] sm:$0xff]
        %v452 = vld [vmem:[#allocation7 + $0x4d0] sm:$0xff]
        %v453 = vld [vmem:[#allocation7 + $0x4d8] sm:$0xff]
        %v454 = vld [vmem:[#allocation7 + $0x4e0] sm:$0xff]
        %v455 = vld [vmem:[#allocation7 + $0x4e8] sm:$0xf]
        %v456 = vld [vmem:[#allocation7 + $0x4ec] sm:$0xff]
        %v457 = vld [vmem:[#allocation7 + $0x4f4] sm:$0xff]
        %v458 = vld [vmem:[#allocation7 + $0x4fc] sm:$0xff]
        %v459 = vld [vmem:[#allocation7 + $0x504] sm:$0xff]
        %v460 = vld [vmem:[#allocation7 + $0x50c] sm:$0xf]
        %v461 = vld [vmem:[#allocation7 + $0x510] sm:$0xff]
        %v462 = vld [vmem:[#allocation7 + $0x518] sm:$0xff]
        %v463 = vld [vmem:[#allocation7 + $0x520] sm:$0xff]
        %v464 = vld [vmem:[#allocation7 + $0x528] sm:$0xff]
        %v465 = vld [vmem:[#allocation7 + $0x530] sm:$0xf]
        %v466 = vld [vmem:[#allocation7 + $0x534] sm:$0xff]
        %v467 = vld [vmem:[#allocation7 + $0x53c] sm:$0xff]
        %v468 = vld [vmem:[#allocation7 + $0x544] sm:$0xff]
        %v469 = vld [vmem:[#allocation7 + $0x54c] sm:$0xff]
        %v470 = vld [vmem:[#allocation7 + $0x554] sm:$0xf]
        %v471 = vld [vmem:[#allocation7 + $0x558] sm:$0xff]
        %v472 = vld [vmem:[#allocation7 + $0x560] sm:$0xff]
        %v473 = vld [vmem:[#allocation7 + $0x568] sm:$0xff]
        %v474 = vld [vmem:[#allocation7 + $0x570] sm:$0xff]
        %v475 = vld [vmem:[#allocation7 + $0x578] sm:$0xf]
        %v476 = vld [vmem:[#allocation7 + $0x57c] sm:$0xff]
        %v477 = vld [vmem:[#allocation7 + $0x584] sm:$0xff]
        %v478 = vld [vmem:[#allocation7 + $0x58c] sm:$0xff]
        %v479 = vld [vmem:[#allocation7 + $0x594] sm:$0xff]
        %v480 = vld [vmem:[#allocation7 + $0x59c] sm:$0xf]
        %v481 = vld [vmem:[#allocation7 + $0x5a0] sm:$0xff]
        %v482 = vld [vmem:[#allocation7 + $0x5a8] sm:$0xff]
        %v483 = vld [vmem:[#allocation7 + $0x5b0] sm:$0xff]
        %v484 = vld [vmem:[#allocation7 + $0x5b8] sm:$0xff]
        %v485 = vld [vmem:[#allocation7 + $0x5c0] sm:$0xf]
        %v486 = vld [vmem:[#allocation7 + $0x5c4] sm:$0xff]
        %v487 = vld [vmem:[#allocation7 + $0x5cc] sm:$0xff]
        %v488 = vld [vmem:[#allocation7 + $0x5d4] sm:$0xff]
        %v489 = vld [vmem:[#allocation7 + $0x5dc] sm:$0xff]
        %v490 = vld [vmem:[#allocation7 + $0x5e4] sm:$0xf]
        %v491 = vld [vmem:[#allocation7 + $0x5e8] sm:$0xff]
        %v492 = vld [vmem:[#allocation7 + $0x5f0] sm:$0xff]
        %v493 = vld [vmem:[#allocation7 + $0x5f8] sm:$0xff]
        %v494 = vld [vmem:[#allocation7 + $0x600] sm:$0xff]
        %v495 = vld [vmem:[#allocation7 + $0x608] sm:$0xf]
        %v496 = vld [vmem:[#allocation7 + $0x60c] sm:$0xff]
        %v497 = vld [vmem:[#allocation7 + $0x614] sm:$0xff]
        %v498 = vld [vmem:[#allocation7 + $0x61c] sm:$0xff]
        %v499 = vld [vmem:[#allocation7 + $0x624] sm:$0xff]
        %v500 = vld [vmem:[#allocation7 + $0x62c] sm:$0xf]
        %v501 = vld [vmem:[#allocation7 + $0x630] sm:$0xff]
        %v502 = vld [vmem:[#allocation7 + $0x638] sm:$0xff]
        %v503 = vld [vmem:[#allocation7 + $0x640] sm:$0xff]
        %v504 = vld [vmem:[#allocation7 + $0x648] sm:$0xff]
        %v505 = vld [vmem:[#allocation7 + $0x650] sm:$0xf]
        %v506 = vld [vmem:[#allocation7 + $0x654] sm:$0xff]
        %v507 = vld [vmem:[#allocation7 + $0x65c] sm:$0xff]
        %v508 = vld [vmem:[#allocation7 + $0x664] sm:$0xff]
        %v509 = vld [vmem:[#allocation7 + $0x66c] sm:$0xff]
        %v510 = vld [vmem:[#allocation7 + $0x674] sm:$0xf]
        %v511 = vld [vmem:[#allocation7 + $0x678] sm:$0xff]
        %v512 = vld [vmem:[#allocation7 + $0x680] sm:$0xff]
        %v513 = vld [vmem:[#allocation7 + $0x688] sm:$0xff]
        %v514 = vld [vmem:[#allocation7 + $0x690] sm:$0xff]
        %v515 = vld [vmem:[#allocation7 + $0x698] sm:$0xf]
        %v516 = vld [vmem:[#allocation7 + $0x69c] sm:$0xff]
        %v517 = vld [vmem:[#allocation7 + $0x6a4] sm:$0xff]
        %v518 = vld [vmem:[#allocation7 + $0x6ac] sm:$0xff]
        %v519 = vld [vmem:[#allocation7 + $0x6b4] sm:$0xff]
        %v520 = vld [vmem:[#allocation7 + $0x6bc] sm:$0xf]
        %v553 = vunpack.c.l.b16 %v249
        %v554 = vunpack.c.h.b16 %v249
        %v555 = vunpack.c.l.b16 %v250
        %v556 = vunpack.c.l.b16 %v251
        %v557 = vunpack.c.h.b16 %v251
        %v558 = vunpack.c.l.b16 %v252
        %v559 = vunpack.c.l.b16 %v253
        %v560 = vunpack.c.h.b16 %v253
        %v561 = vunpack.c.l.b16 %v254
        %v562 = vunpack.c.l.b16 %v255
        %v563 = vunpack.c.h.b16 %v255
        %v564 = vunpack.c.l.b16 %v256
        %v565 = vunpack.c.l.b16 %v257
        %v566 = vunpack.c.h.b16 %v257
        %v567 = vunpack.c.l.b16 %v258
        %v568 = vunpack.c.l.b16 %v259
        %v569 = vunpack.c.h.b16 %v259
        %v570 = vunpack.c.l.b16 %v260
        %v571 = vunpack.c.l.b16 %v261
        %v572 = vunpack.c.h.b16 %v261
        %v573 = vunpack.c.l.b16 %v262
        %v574 = vunpack.c.l.b16 %v263
        %v575 = vunpack.c.h.b16 %v263
        %v576 = vunpack.c.l.b16 %v264
        %v577 = vunpack.c.l.b16 %v265
        %v578 = vunpack.c.h.b16 %v265
        %v579 = vunpack.c.l.b16 %v266
        %v580 = vunpack.c.l.b16 %v267
        %v581 = vunpack.c.h.b16 %v267
        %v582 = vunpack.c.l.b16 %v268
        %v583 = vunpack.c.l.b16 %v269
        %v584 = vunpack.c.h.b16 %v269
        %v585 = vunpack.c.l.b16 %v270
        %v586 = vunpack.c.l.b16 %v271
        %v587 = vunpack.c.h.b16 %v271
        %v588 = vunpack.c.l.b16 %v272
        %v589 = vunpack.c.l.b16 %v273
        %v590 = vunpack.c.h.b16 %v273
        %v591 = vunpack.c.l.b16 %v274
        %v592 = vunpack.c.l.b16 %v275
        %v593 = vunpack.c.h.b16 %v275
        %v594 = vunpack.c.l.b16 %v276
        %v595 = vunpack.c.l.b16 %v277
        %v596 = vunpack.c.h.b16 %v277
        %v597 = vunpack.c.l.b16 %v278
        %v598 = vunpack.c.l.b16 %v279
        %v599 = vunpack.c.h.b16 %v279
        %v600 = vunpack.c.l.b16 %v280
        %v601 = vpack.c.b16 %v556, %v553
        %v602 = vpack.c.b16 %v557, %v554
        %v603 = vpack.c.b16 %v558, %v555
        %v604 = vpack.c.b16 %v562, %v559
        %v605 = vpack.c.b16 %v563, %v560
        %v606 = vpack.c.b16 %v564, %v561
        %v607 = vpack.c.b16 %v568, %v565
        %v608 = vpack.c.b16 %v569, %v566
        %v609 = vpack.c.b16 %v570, %v567
        %v610 = vpack.c.b16 %v574, %v571
        %v611 = vpack.c.b16 %v575, %v572
        %v612 = vpack.c.b16 %v576, %v573
        %v613 = vpack.c.b16 %v580, %v577
        %v614 = vpack.c.b16 %v581, %v578
        %v615 = vpack.c.b16 %v582, %v579
        %v616 = vpack.c.b16 %v586, %v583
        %v617 = vpack.c.b16 %v587, %v584
        %v618 = vpack.c.b16 %v588, %v585
        %v619 = vpack.c.b16 %v592, %v589
        %v620 = vpack.c.b16 %v593, %v590
        %v621 = vpack.c.b16 %v594, %v591
        %v622 = vpack.c.b16 %v598, %v595
        %v623 = vpack.c.b16 %v599, %v596
        %v624 = vpack.c.b16 %v600, %v597
        %v889 = vunpack.c.l.b16 %v281
        %v890 = vunpack.c.h.b16 %v281
        %v891 = vunpack.c.l.b16 %v282
        %v892 = vunpack.c.h.b16 %v282
        %v893 = vunpack.c.l.b16 %v283
        %v894 = vunpack.c.h.b16 %v283
        %v895 = vunpack.c.l.b16 %v284
        %v896 = vunpack.c.h.b16 %v284
        %v897 = vunpack.c.l.b16 %v285
        %v898 = vunpack.c.l.b16 %v286
        %v899 = vunpack.c.h.b16 %v286
        %v900 = vunpack.c.l.b16 %v287
        %v901 = vunpack.c.h.b16 %v287
        %v902 = vunpack.c.l.b16 %v288
        %v903 = vunpack.c.h.b16 %v288
        %v904 = vunpack.c.l.b16 %v289
        %v905 = vunpack.c.h.b16 %v289
        %v906 = vunpack.c.l.b16 %v290
        %v907 = vunpack.c.l.b16 %v291
        %v908 = vunpack.c.h.b16 %v291
        %v909 = vunpack.c.l.b16 %v292
        %v910 = vunpack.c.h.b16 %v292
        %v911 = vunpack.c.l.b16 %v293
        %v912 = vunpack.c.h.b16 %v293
        %v913 = vunpack.c.l.b16 %v294
        %v914 = vunpack.c.h.b16 %v294
        %v915 = vunpack.c.l.b16 %v295
        %v916 = vunpack.c.l.b16 %v296
        %v917 = vunpack.c.h.b16 %v296
        %v918 = vunpack.c.l.b16 %v297
        %v919 = vunpack.c.h.b16 %v297
        %v920 = vunpack.c.l.b16 %v298
        %v921 = vunpack.c.h.b16 %v298
        %v922 = vunpack.c.l.b16 %v299
        %v923 = vunpack.c.h.b16 %v299
        %v924 = vunpack.c.l.b16 %v300
        %v925 = vunpack.c.l.b16 %v301
        %v926 = vunpack.c.h.b16 %v301
        %v927 = vunpack.c.l.b16 %v302
        %v928 = vunpack.c.h.b16 %v302
        %v929 = vunpack.c.l.b16 %v303
        %v930 = vunpack.c.h.b16 %v303
        %v931 = vunpack.c.l.b16 %v304
        %v932 = vunpack.c.h.b16 %v304
        %v933 = vunpack.c.l.b16 %v305
        %v934 = vunpack.c.l.b16 %v306
        %v935 = vunpack.c.h.b16 %v306
        %v936 = vunpack.c.l.b16 %v307
        %v937 = vunpack.c.h.b16 %v307
        %v938 = vunpack.c.l.b16 %v308
        %v939 = vunpack.c.h.b16 %v308
        %v940 = vunpack.c.l.b16 %v309
        %v941 = vunpack.c.h.b16 %v309
        %v942 = vunpack.c.l.b16 %v310
        %v943 = vunpack.c.l.b16 %v311
        %v944 = vunpack.c.h.b16 %v311
        %v945 = vunpack.c.l.b16 %v312
        %v946 = vunpack.c.h.b16 %v312
        %v947 = vunpack.c.l.b16 %v313
        %v948 = vunpack.c.h.b16 %v313
        %v949 = vunpack.c.l.b16 %v314
        %v950 = vunpack.c.h.b16 %v314
        %v951 = vunpack.c.l.b16 %v315
        %v952 = vunpack.c.l.b16 %v316
        %v953 = vunpack.c.h.b16 %v316
        %v954 = vunpack.c.l.b16 %v317
        %v955 = vunpack.c.h.b16 %v317
        %v956 = vunpack.c.l.b16 %v318
        %v957 = vunpack.c.h.b16 %v318
        %v958 = vunpack.c.l.b16 %v319
        %v959 = vunpack.c.h.b16 %v319
        %v960 = vunpack.c.l.b16 %v320
        %v961 = vunpack.c.l.b16 %v321
        %v962 = vunpack.c.h.b16 %v321
        %v963 = vunpack.c.l.b16 %v322
        %v964 = vunpack.c.h.b16 %v322
        %v965 = vunpack.c.l.b16 %v323
        %v966 = vunpack.c.h.b16 %v323
        %v967 = vunpack.c.l.b16 %v324
        %v968 = vunpack.c.h.b16 %v324
        %v969 = vunpack.c.l.b16 %v325
        %v970 = vunpack.c.l.b16 %v326
        %v971 = vunpack.c.h.b16 %v326
        %v972 = vunpack.c.l.b16 %v327
        %v973 = vunpack.c.h.b16 %v327
        %v974 = vunpack.c.l.b16 %v328
        %v975 = vunpack.c.h.b16 %v328
        %v976 = vunpack.c.l.b16 %v329
        %v977 = vunpack.c.h.b16 %v329
        %v978 = vunpack.c.l.b16 %v330
        %v979 = vunpack.c.l.b16 %v331
        %v980 = vunpack.c.h.b16 %v331
        %v981 = vunpack.c.l.b16 %v332
        %v982 = vunpack.c.h.b16 %v332
        %v983 = vunpack.c.l.b16 %v333
        %v984 = vunpack.c.h.b16 %v333
        %v985 = vunpack.c.l.b16 %v334
        %v986 = vunpack.c.h.b16 %v334
        %v987 = vunpack.c.l.b16 %v335
        %v988 = vunpack.c.l.b16 %v336
        %v989 = vunpack.c.h.b16 %v336
        %v990 = vunpack.c.l.b16 %v337
        %v991 = vunpack.c.h.b16 %v337
        %v992 = vunpack.c.l.b16 %v338
        %v993 = vunpack.c.h.b16 %v338
        %v994 = vunpack.c.l.b16 %v339
        %v995 = vunpack.c.h.b16 %v339
        %v996 = vunpack.c.l.b16 %v340
        %v997 = vunpack.c.l.b16 %v341
        %v998 = vunpack.c.h.b16 %v341
        %v999 = vunpack.c.l.b16 %v342
        %v1000 = vunpack.c.h.b16 %v342
        %v1001 = vunpack.c.l.b16 %v343
        %v1002 = vunpack.c.h.b16 %v343
        %v1003 = vunpack.c.l.b16 %v344
        %v1004 = vunpack.c.h.b16 %v344
        %v1005 = vunpack.c.l.b16 %v345
        %v1006 = vunpack.c.l.b16 %v346
        %v1007 = vunpack.c.h.b16 %v346
        %v1008 = vunpack.c.l.b16 %v347
        %v1009 = vunpack.c.h.b16 %v347
        %v1010 = vunpack.c.l.b16 %v348
        %v1011 = vunpack.c.h.b16 %v348
        %v1012 = vunpack.c.l.b16 %v349
        %v1013 = vunpack.c.h.b16 %v349
        %v1014 = vunpack.c.l.b16 %v350
        %v1015 = vunpack.c.l.b16 %v351
        %v1016 = vunpack.c.h.b16 %v351
        %v1017 = vunpack.c.l.b16 %v352
        %v1018 = vunpack.c.h.b16 %v352
        %v1019 = vunpack.c.l.b16 %v353
        %v1020 = vunpack.c.h.b16 %v353
        %v1021 = vunpack.c.l.b16 %v354
        %v1022 = vunpack.c.h.b16 %v354
        %v1023 = vunpack.c.l.b16 %v355
        %v1024 = vunpack.c.l.b16 %v356
        %v1025 = vunpack.c.h.b16 %v356
        %v1026 = vunpack.c.l.b16 %v357
        %v1027 = vunpack.c.h.b16 %v357
        %v1028 = vunpack.c.l.b16 %v358
        %v1029 = vunpack.c.h.b16 %v358
        %v1030 = vunpack.c.l.b16 %v359
        %v1031 = vunpack.c.h.b16 %v359
        %v1032 = vunpack.c.l.b16 %v360
        %v1033 = vunpack.c.l.b16 %v361
        %v1034 = vunpack.c.h.b16 %v361
        %v1035 = vunpack.c.l.b16 %v362
        %v1036 = vunpack.c.h.b16 %v362
        %v1037 = vunpack.c.l.b16 %v363
        %v1038 = vunpack.c.h.b16 %v363
        %v1039 = vunpack.c.l.b16 %v364
        %v1040 = vunpack.c.h.b16 %v364
        %v1041 = vunpack.c.l.b16 %v365
        %v1042 = vunpack.c.l.b16 %v366
        %v1043 = vunpack.c.h.b16 %v366
        %v1044 = vunpack.c.l.b16 %v367
        %v1045 = vunpack.c.h.b16 %v367
        %v1046 = vunpack.c.l.b16 %v368
        %v1047 = vunpack.c.h.b16 %v368
        %v1048 = vunpack.c.l.b16 %v369
        %v1049 = vunpack.c.h.b16 %v369
        %v1050 = vunpack.c.l.b16 %v370
        %v1051 = vunpack.c.l.b16 %v371
        %v1052 = vunpack.c.h.b16 %v371
        %v1053 = vunpack.c.l.b16 %v372
        %v1054 = vunpack.c.h.b16 %v372
        %v1055 = vunpack.c.l.b16 %v373
        %v1056 = vunpack.c.h.b16 %v373
        %v1057 = vunpack.c.l.b16 %v374
        %v1058 = vunpack.c.h.b16 %v374
        %v1059 = vunpack.c.l.b16 %v375
        %v1060 = vunpack.c.l.b16 %v376
        %v1061 = vunpack.c.h.b16 %v376
        %v1062 = vunpack.c.l.b16 %v377
        %v1063 = vunpack.c.h.b16 %v377
        %v1064 = vunpack.c.l.b16 %v378
        %v1065 = vunpack.c.h.b16 %v378
        %v1066 = vunpack.c.l.b16 %v379
        %v1067 = vunpack.c.h.b16 %v379
        %v1068 = vunpack.c.l.b16 %v380
        %v1069 = vunpack.c.l.b16 %v381
        %v1070 = vunpack.c.h.b16 %v381
        %v1071 = vunpack.c.l.b16 %v382
        %v1072 = vunpack.c.h.b16 %v382
        %v1073 = vunpack.c.l.b16 %v383
        %v1074 = vunpack.c.h.b16 %v383
        %v1075 = vunpack.c.l.b16 %v384
        %v1076 = vunpack.c.h.b16 %v384
        %v1077 = vunpack.c.l.b16 %v385
        %v1078 = vunpack.c.l.b16 %v386
        %v1079 = vunpack.c.h.b16 %v386
        %v1080 = vunpack.c.l.b16 %v387
        %v1081 = vunpack.c.h.b16 %v387
        %v1082 = vunpack.c.l.b16 %v388
        %v1083 = vunpack.c.h.b16 %v388
        %v1084 = vunpack.c.l.b16 %v389
        %v1085 = vunpack.c.h.b16 %v389
        %v1086 = vunpack.c.l.b16 %v390
        %v1087 = vunpack.c.l.b16 %v391
        %v1088 = vunpack.c.h.b16 %v391
        %v1089 = vunpack.c.l.b16 %v392
        %v1090 = vunpack.c.h.b16 %v392
        %v1091 = vunpack.c.l.b16 %v393
        %v1092 = vunpack.c.h.b16 %v393
        %v1093 = vunpack.c.l.b16 %v394
        %v1094 = vunpack.c.h.b16 %v394
        %v1095 = vunpack.c.l.b16 %v395
        %v1096 = vunpack.c.l.b16 %v396
        %v1097 = vunpack.c.h.b16 %v396
        %v1098 = vunpack.c.l.b16 %v397
        %v1099 = vunpack.c.h.b16 %v397
        %v1100 = vunpack.c.l.b16 %v398
        %v1101 = vunpack.c.h.b16 %v398
        %v1102 = vunpack.c.l.b16 %v399
        %v1103 = vunpack.c.h.b16 %v399
        %v1104 = vunpack.c.l.b16 %v400
        %v1105 = vunpack.c.l.b16 %v401
        %v1106 = vunpack.c.h.b16 %v401
        %v1107 = vunpack.c.l.b16 %v402
        %v1108 = vunpack.c.h.b16 %v402
        %v1109 = vunpack.c.l.b16 %v403
        %v1110 = vunpack.c.h.b16 %v403
        %v1111 = vunpack.c.l.b16 %v404
        %v1112 = vunpack.c.h.b16 %v404
        %v1113 = vunpack.c.l.b16 %v405
        %v1114 = vunpack.c.l.b16 %v406
        %v1115 = vunpack.c.h.b16 %v406
        %v1116 = vunpack.c.l.b16 %v407
        %v1117 = vunpack.c.h.b16 %v407
        %v1118 = vunpack.c.l.b16 %v408
        %v1119 = vunpack.c.h.b16 %v408
        %v1120 = vunpack.c.l.b16 %v409
        %v1121 = vunpack.c.h.b16 %v409
        %v1122 = vunpack.c.l.b16 %v410
        %v1123 = vunpack.c.l.b16 %v411
        %v1124 = vunpack.c.h.b16 %v411
        %v1125 = vunpack.c.l.b16 %v412
        %v1126 = vunpack.c.h.b16 %v412
        %v1127 = vunpack.c.l.b16 %v413
        %v1128 = vunpack.c.h.b16 %v413
        %v1129 = vunpack.c.l.b16 %v414
        %v1130 = vunpack.c.h.b16 %v414
        %v1131 = vunpack.c.l.b16 %v415
        %v1132 = vunpack.c.l.b16 %v416
        %v1133 = vunpack.c.h.b16 %v416
        %v1134 = vunpack.c.l.b16 %v417
        %v1135 = vunpack.c.h.b16 %v417
        %v1136 = vunpack.c.l.b16 %v418
        %v1137 = vunpack.c.h.b16 %v418
        %v1138 = vunpack.c.l.b16 %v419
        %v1139 = vunpack.c.h.b16 %v419
        %v1140 = vunpack.c.l.b16 %v420
        %v1141 = vunpack.c.l.b16 %v421
        %v1142 = vunpack.c.h.b16 %v421
        %v1143 = vunpack.c.l.b16 %v422
        %v1144 = vunpack.c.h.b16 %v422
        %v1145 = vunpack.c.l.b16 %v423
        %v1146 = vunpack.c.h.b16 %v423
        %v1147 = vunpack.c.l.b16 %v424
        %v1148 = vunpack.c.h.b16 %v424
        %v1149 = vunpack.c.l.b16 %v425
        %v1150 = vunpack.c.l.b16 %v426
        %v1151 = vunpack.c.h.b16 %v426
        %v1152 = vunpack.c.l.b16 %v427
        %v1153 = vunpack.c.h.b16 %v427
        %v1154 = vunpack.c.l.b16 %v428
        %v1155 = vunpack.c.h.b16 %v428
        %v1156 = vunpack.c.l.b16 %v429
        %v1157 = vunpack.c.h.b16 %v429
        %v1158 = vunpack.c.l.b16 %v430
        %v1159 = vunpack.c.l.b16 %v431
        %v1160 = vunpack.c.h.b16 %v431
        %v1161 = vunpack.c.l.b16 %v432
        %v1162 = vunpack.c.h.b16 %v432
        %v1163 = vunpack.c.l.b16 %v433
        %v1164 = vunpack.c.h.b16 %v433
        %v1165 = vunpack.c.l.b16 %v434
        %v1166 = vunpack.c.h.b16 %v434
        %v1167 = vunpack.c.l.b16 %v435
        %v1168 = vunpack.c.l.b16 %v436
        %v1169 = vunpack.c.h.b16 %v436
        %v1170 = vunpack.c.l.b16 %v437
        %v1171 = vunpack.c.h.b16 %v437
        %v1172 = vunpack.c.l.b16 %v438
        %v1173 = vunpack.c.h.b16 %v438
        %v1174 = vunpack.c.l.b16 %v439
        %v1175 = vunpack.c.h.b16 %v439
        %v1176 = vunpack.c.l.b16 %v440
        %v1177 = vunpack.c.l.b16 %v441
        %v1178 = vunpack.c.h.b16 %v441
        %v1179 = vunpack.c.l.b16 %v442
        %v1180 = vunpack.c.h.b16 %v442
        %v1181 = vunpack.c.l.b16 %v443
        %v1182 = vunpack.c.h.b16 %v443
        %v1183 = vunpack.c.l.b16 %v444
        %v1184 = vunpack.c.h.b16 %v444
        %v1185 = vunpack.c.l.b16 %v445
        %v1186 = vunpack.c.l.b16 %v446
        %v1187 = vunpack.c.h.b16 %v446
        %v1188 = vunpack.c.l.b16 %v447
        %v1189 = vunpack.c.h.b16 %v447
        %v1190 = vunpack.c.l.b16 %v448
        %v1191 = vunpack.c.h.b16 %v448
        %v1192 = vunpack.c.l.b16 %v449
        %v1193 = vunpack.c.h.b16 %v449
        %v1194 = vunpack.c.l.b16 %v450
        %v1195 = vunpack.c.l.b16 %v451
        %v1196 = vunpack.c.h.b16 %v451
        %v1197 = vunpack.c.l.b16 %v452
        %v1198 = vunpack.c.h.b16 %v452
        %v1199 = vunpack.c.l.b16 %v453
        %v1200 = vunpack.c.h.b16 %v453
        %v1201 = vunpack.c.l.b16 %v454
        %v1202 = vunpack.c.h.b16 %v454
        %v1203 = vunpack.c.l.b16 %v455
        %v1204 = vunpack.c.l.b16 %v456
        %v1205 = vunpack.c.h.b16 %v456
        %v1206 = vunpack.c.l.b16 %v457
        %v1207 = vunpack.c.h.b16 %v457
        %v1208 = vunpack.c.l.b16 %v458
        %v1209 = vunpack.c.h.b16 %v458
        %v1210 = vunpack.c.l.b16 %v459
        %v1211 = vunpack.c.h.b16 %v459
        %v1212 = vunpack.c.l.b16 %v460
        %v1213 = vunpack.c.l.b16 %v461
        %v1214 = vunpack.c.h.b16 %v461
        %v1215 = vunpack.c.l.b16 %v462
        %v1216 = vunpack.c.h.b16 %v462
        %v1217 = vunpack.c.l.b16 %v463
        %v1218 = vunpack.c.h.b16 %v463
        %v1219 = vunpack.c.l.b16 %v464
        %v1220 = vunpack.c.h.b16 %v464
        %v1221 = vunpack.c.l.b16 %v465
        %v1222 = vunpack.c.l.b16 %v466
        %v1223 = vunpack.c.h.b16 %v466
        %v1224 = vunpack.c.l.b16 %v467
        %v1225 = vunpack.c.h.b16 %v467
        %v1226 = vunpack.c.l.b16 %v468
        %v1227 = vunpack.c.h.b16 %v468
        %v1228 = vunpack.c.l.b16 %v469
        %v1229 = vunpack.c.h.b16 %v469
        %v1230 = vunpack.c.l.b16 %v470
        %v1231 = vunpack.c.l.b16 %v471
        %v1232 = vunpack.c.h.b16 %v471
        %v1233 = vunpack.c.l.b16 %v472
        %v1234 = vunpack.c.h.b16 %v472
        %v1235 = vunpack.c.l.b16 %v473
        %v1236 = vunpack.c.h.b16 %v473
        %v1237 = vunpack.c.l.b16 %v474
        %v1238 = vunpack.c.h.b16 %v474
        %v1239 = vunpack.c.l.b16 %v475
        %v1240 = vunpack.c.l.b16 %v476
        %v1241 = vunpack.c.h.b16 %v476
        %v1242 = vunpack.c.l.b16 %v477
        %v1243 = vunpack.c.h.b16 %v477
        %v1244 = vunpack.c.l.b16 %v478
        %v1245 = vunpack.c.h.b16 %v478
        %v1246 = vunpack.c.l.b16 %v479
        %v1247 = vunpack.c.h.b16 %v479
        %v1248 = vunpack.c.l.b16 %v480
        %v1249 = vunpack.c.l.b16 %v481
        %v1250 = vunpack.c.h.b16 %v481
        %v1251 = vunpack.c.l.b16 %v482
        %v1252 = vunpack.c.h.b16 %v482
        %v1253 = vunpack.c.l.b16 %v483
        %v1254 = vunpack.c.h.b16 %v483
        %v1255 = vunpack.c.l.b16 %v484
        %v1256 = vunpack.c.h.b16 %v484
        %v1257 = vunpack.c.l.b16 %v485
        %v1258 = vunpack.c.l.b16 %v486
        %v1259 = vunpack.c.h.b16 %v486
        %v1260 = vunpack.c.l.b16 %v487
        %v1261 = vunpack.c.h.b16 %v487
        %v1262 = vunpack.c.l.b16 %v488
        %v1263 = vunpack.c.h.b16 %v488
        %v1264 = vunpack.c.l.b16 %v489
        %v1265 = vunpack.c.h.b16 %v489
        %v1266 = vunpack.c.l.b16 %v490
        %v1267 = vunpack.c.l.b16 %v491
        %v1268 = vunpack.c.h.b16 %v491
        %v1269 = vunpack.c.l.b16 %v492
        %v1270 = vunpack.c.h.b16 %v492
        %v1271 = vunpack.c.l.b16 %v493
        %v1272 = vunpack.c.h.b16 %v493
        %v1273 = vunpack.c.l.b16 %v494
        %v1274 = vunpack.c.h.b16 %v494
        %v1275 = vunpack.c.l.b16 %v495
        %v1276 = vunpack.c.l.b16 %v496
        %v1277 = vunpack.c.h.b16 %v496
        %v1278 = vunpack.c.l.b16 %v497
        %v1279 = vunpack.c.h.b16 %v497
        %v1280 = vunpack.c.l.b16 %v498
        %v1281 = vunpack.c.h.b16 %v498
        %v1282 = vunpack.c.l.b16 %v499
        %v1283 = vunpack.c.h.b16 %v499
        %v1284 = vunpack.c.l.b16 %v500
        %v1285 = vunpack.c.l.b16 %v501
        %v1286 = vunpack.c.h.b16 %v501
        %v1287 = vunpack.c.l.b16 %v502
        %v1288 = vunpack.c.h.b16 %v502
        %v1289 = vunpack.c.l.b16 %v503
        %v1290 = vunpack.c.h.b16 %v503
        %v1291 = vunpack.c.l.b16 %v504
        %v1292 = vunpack.c.h.b16 %v504
        %v1293 = vunpack.c.l.b16 %v505
        %v1294 = vunpack.c.l.b16 %v506
        %v1295 = vunpack.c.h.b16 %v506
        %v1296 = vunpack.c.l.b16 %v507
        %v1297 = vunpack.c.h.b16 %v507
        %v1298 = vunpack.c.l.b16 %v508
        %v1299 = vunpack.c.h.b16 %v508
        %v1300 = vunpack.c.l.b16 %v509
        %v1301 = vunpack.c.h.b16 %v509
        %v1302 = vunpack.c.l.b16 %v510
        %v1303 = vunpack.c.l.b16 %v511
        %v1304 = vunpack.c.h.b16 %v511
        %v1305 = vunpack.c.l.b16 %v512
        %v1306 = vunpack.c.h.b16 %v512
        %v1307 = vunpack.c.l.b16 %v513
        %v1308 = vunpack.c.h.b16 %v513
        %v1309 = vunpack.c.l.b16 %v514
        %v1310 = vunpack.c.h.b16 %v514
        %v1311 = vunpack.c.l.b16 %v515
        %v1312 = vunpack.c.l.b16 %v516
        %v1313 = vunpack.c.h.b16 %v516
        %v1314 = vunpack.c.l.b16 %v517
        %v1315 = vunpack.c.h.b16 %v517
        %v1316 = vunpack.c.l.b16 %v518
        %v1317 = vunpack.c.h.b16 %v518
        %v1318 = vunpack.c.l.b16 %v519
        %v1319 = vunpack.c.h.b16 %v519
        %v1320 = vunpack.c.l.b16 %v520
        %v1321 = vpack.c.b16 %v898, %v889
        %v1322 = vpack.c.b16 %v899, %v890
        %v1323 = vpack.c.b16 %v900, %v891
        %v1324 = vpack.c.b16 %v901, %v892
        %v1325 = vpack.c.b16 %v902, %v893
        %v1326 = vpack.c.b16 %v903, %v894
        %v1327 = vpack.c.b16 %v904, %v895
        %v1328 = vpack.c.b16 %v905, %v896
        %v1329 = vpack.c.b16 %v906, %v897
        %v1330 = vpack.c.b16 %v916, %v907
        %v1331 = vpack.c.b16 %v917, %v908
        %v1332 = vpack.c.b16 %v918, %v909
        %v1333 = vpack.c.b16 %v919, %v910
        %v1334 = vpack.c.b16 %v920, %v911
        %v1335 = vpack.c.b16 %v921, %v912
        %v1336 = vpack.c.b16 %v922, %v913
        %v1337 = vpack.c.b16 %v923, %v914
        %v1338 = vpack.c.b16 %v924, %v915
        %v1339 = vpack.c.b16 %v934, %v925
        %v1340 = vpack.c.b16 %v935, %v926
        %v1341 = vpack.c.b16 %v936, %v927
        %v1342 = vpack.c.b16 %v937, %v928
        %v1343 = vpack.c.b16 %v938, %v929
        %v1344 = vpack.c.b16 %v939, %v930
        %v1345 = vpack.c.b16 %v940, %v931
        %v1346 = vpack.c.b16 %v941, %v932
        %v1347 = vpack.c.b16 %v942, %v933
        %v1348 = vpack.c.b16 %v952, %v943
        %v1349 = vpack.c.b16 %v953, %v944
        %v1350 = vpack.c.b16 %v954, %v945
        %v1351 = vpack.c.b16 %v955, %v946
        %v1352 = vpack.c.b16 %v956, %v947
        %v1353 = vpack.c.b16 %v957, %v948
        %v1354 = vpack.c.b16 %v958, %v949
        %v1355 = vpack.c.b16 %v959, %v950
        %v1356 = vpack.c.b16 %v960, %v951
        %v1357 = vpack.c.b16 %v970, %v961
        %v1358 = vpack.c.b16 %v971, %v962
        %v1359 = vpack.c.b16 %v972, %v963
        %v1360 = vpack.c.b16 %v973, %v964
        %v1361 = vpack.c.b16 %v974, %v965
        %v1362 = vpack.c.b16 %v975, %v966
        %v1363 = vpack.c.b16 %v976, %v967
        %v1364 = vpack.c.b16 %v977, %v968
        %v1365 = vpack.c.b16 %v978, %v969
        %v1366 = vpack.c.b16 %v988, %v979
        %v1367 = vpack.c.b16 %v989, %v980
        %v1368 = vpack.c.b16 %v990, %v981
        %v1369 = vpack.c.b16 %v991, %v982
        %v1370 = vpack.c.b16 %v992, %v983
        %v1371 = vpack.c.b16 %v993, %v984
        %v1372 = vpack.c.b16 %v994, %v985
        %v1373 = vpack.c.b16 %v995, %v986
        %v1374 = vpack.c.b16 %v996, %v987
        %v1375 = vpack.c.b16 %v1006, %v997
        %v1376 = vpack.c.b16 %v1007, %v998
        %v1377 = vpack.c.b16 %v1008, %v999
        %v1378 = vpack.c.b16 %v1009, %v1000
        %v1379 = vpack.c.b16 %v1010, %v1001
        %v1380 = vpack.c.b16 %v1011, %v1002
        %v1381 = vpack.c.b16 %v1012, %v1003
        %v1382 = vpack.c.b16 %v1013, %v1004
        %v1383 = vpack.c.b16 %v1014, %v1005
        %v1384 = vpack.c.b16 %v1024, %v1015
        %v1385 = vpack.c.b16 %v1025, %v1016
        %v1386 = vpack.c.b16 %v1026, %v1017
        %v1387 = vpack.c.b16 %v1027, %v1018
        %v1388 = vpack.c.b16 %v1028, %v1019
        %v1389 = vpack.c.b16 %v1029, %v1020
        %v1390 = vpack.c.b16 %v1030, %v1021
        %v1391 = vpack.c.b16 %v1031, %v1022
        %v1392 = vpack.c.b16 %v1032, %v1023
        %v1393 = vpack.c.b16 %v1042, %v1033
        %v1394 = vpack.c.b16 %v1043, %v1034
        %v1395 = vpack.c.b16 %v1044, %v1035
        %v1396 = vpack.c.b16 %v1045, %v1036
        %v1397 = vpack.c.b16 %v1046, %v1037
        %v1398 = vpack.c.b16 %v1047, %v1038
        %v1399 = vpack.c.b16 %v1048, %v1039
        %v1400 = vpack.c.b16 %v1049, %v1040
        %v1401 = vpack.c.b16 %v1050, %v1041
        %v1402 = vpack.c.b16 %v1060, %v1051
        %v1403 = vpack.c.b16 %v1061, %v1052
        %v1404 = vpack.c.b16 %v1062, %v1053
        %v1405 = vpack.c.b16 %v1063, %v1054
        %v1406 = vpack.c.b16 %v1064, %v1055
        %v1407 = vpack.c.b16 %v1065, %v1056
        %v1408 = vpack.c.b16 %v1066, %v1057
        %v1409 = vpack.c.b16 %v1067, %v1058
        %v1410 = vpack.c.b16 %v1068, %v1059
        %v1411 = vpack.c.b16 %v1078, %v1069
        %v1412 = vpack.c.b16 %v1079, %v1070
        %v1413 = vpack.c.b16 %v1080, %v1071
        %v1414 = vpack.c.b16 %v1081, %v1072
        %v1415 = vpack.c.b16 %v1082, %v1073
        %v1416 = vpack.c.b16 %v1083, %v1074
        %v1417 = vpack.c.b16 %v1084, %v1075
        %v1418 = vpack.c.b16 %v1085, %v1076
        %v1419 = vpack.c.b16 %v1086, %v1077
        %v1420 = vpack.c.b16 %v1096, %v1087
        %v1421 = vpack.c.b16 %v1097, %v1088
        %v1422 = vpack.c.b16 %v1098, %v1089
        %v1423 = vpack.c.b16 %v1099, %v1090
        %v1424 = vpack.c.b16 %v1100, %v1091
        %v1425 = vpack.c.b16 %v1101, %v1092
        %v1426 = vpack.c.b16 %v1102, %v1093
        %v1427 = vpack.c.b16 %v1103, %v1094
        %v1428 = vpack.c.b16 %v1104, %v1095
        %v1429 = vpack.c.b16 %v1114, %v1105
        %v1430 = vpack.c.b16 %v1115, %v1106
        %v1431 = vpack.c.b16 %v1116, %v1107
        %v1432 = vpack.c.b16 %v1117, %v1108
        %v1433 = vpack.c.b16 %v1118, %v1109
        %v1434 = vpack.c.b16 %v1119, %v1110
        %v1435 = vpack.c.b16 %v1120, %v1111
        %v1436 = vpack.c.b16 %v1121, %v1112
        %v1437 = vpack.c.b16 %v1122, %v1113
        %v1438 = vpack.c.b16 %v1132, %v1123
        %v1439 = vpack.c.b16 %v1133, %v1124
        %v1440 = vpack.c.b16 %v1134, %v1125
        %v1441 = vpack.c.b16 %v1135, %v1126
        %v1442 = vpack.c.b16 %v1136, %v1127
        %v1443 = vpack.c.b16 %v1137, %v1128
        %v1444 = vpack.c.b16 %v1138, %v1129
        %v1445 = vpack.c.b16 %v1139, %v1130
        %v1446 = vpack.c.b16 %v1140, %v1131
        %v1447 = vpack.c.b16 %v1150, %v1141
        %v1448 = vpack.c.b16 %v1151, %v1142
        %v1449 = vpack.c.b16 %v1152, %v1143
        %v1450 = vpack.c.b16 %v1153, %v1144
        %v1451 = vpack.c.b16 %v1154, %v1145
        %v1452 = vpack.c.b16 %v1155, %v1146
        %v1453 = vpack.c.b16 %v1156, %v1147
        %v1454 = vpack.c.b16 %v1157, %v1148
        %v1455 = vpack.c.b16 %v1158, %v1149
        %v1456 = vpack.c.b16 %v1168, %v1159
        %v1457 = vpack.c.b16 %v1169, %v1160
        %v1458 = vpack.c.b16 %v1170, %v1161
        %v1459 = vpack.c.b16 %v1171, %v1162
        %v1460 = vpack.c.b16 %v1172, %v1163
        %v1461 = vpack.c.b16 %v1173, %v1164
        %v1462 = vpack.c.b16 %v1174, %v1165
        %v1463 = vpack.c.b16 %v1175, %v1166
        %v1464 = vpack.c.b16 %v1176, %v1167
        %v1465 = vpack.c.b16 %v1186, %v1177
        %v1466 = vpack.c.b16 %v1187, %v1178
        %v1467 = vpack.c.b16 %v1188, %v1179
        %v1468 = vpack.c.b16 %v1189, %v1180
        %v1469 = vpack.c.b16 %v1190, %v1181
        %v1470 = vpack.c.b16 %v1191, %v1182
        %v1471 = vpack.c.b16 %v1192, %v1183
        %v1472 = vpack.c.b16 %v1193, %v1184
        %v1473 = vpack.c.b16 %v1194, %v1185
        %v1474 = vpack.c.b16 %v1204, %v1195
        %v1475 = vpack.c.b16 %v1205, %v1196
        %v1476 = vpack.c.b16 %v1206, %v1197
        %v1477 = vpack.c.b16 %v1207, %v1198
        %v1478 = vpack.c.b16 %v1208, %v1199
        %v1479 = vpack.c.b16 %v1209, %v1200
        %v1480 = vpack.c.b16 %v1210, %v1201
        %v1481 = vpack.c.b16 %v1211, %v1202
        %v1482 = vpack.c.b16 %v1212, %v1203
        %v1483 = vpack.c.b16 %v1222, %v1213
        %v1484 = vpack.c.b16 %v1223, %v1214
        %v1485 = vpack.c.b16 %v1224, %v1215
        %v1486 = vpack.c.b16 %v1225, %v1216
        %v1487 = vpack.c.b16 %v1226, %v1217
        %v1488 = vpack.c.b16 %v1227, %v1218
        %v1489 = vpack.c.b16 %v1228, %v1219
        %v1490 = vpack.c.b16 %v1229, %v1220
        %v1491 = vpack.c.b16 %v1230, %v1221
        %v1492 = vpack.c.b16 %v1240, %v1231
        %v1493 = vpack.c.b16 %v1241, %v1232
        %v1494 = vpack.c.b16 %v1242, %v1233
        %v1495 = vpack.c.b16 %v1243, %v1234
        %v1496 = vpack.c.b16 %v1244, %v1235
        %v1497 = vpack.c.b16 %v1245, %v1236
        %v1498 = vpack.c.b16 %v1246, %v1237
        %v1499 = vpack.c.b16 %v1247, %v1238
        %v1500 = vpack.c.b16 %v1248, %v1239
        %v1501 = vpack.c.b16 %v1258, %v1249
        %v1502 = vpack.c.b16 %v1259, %v1250
        %v1503 = vpack.c.b16 %v1260, %v1251
        %v1504 = vpack.c.b16 %v1261, %v1252
        %v1505 = vpack.c.b16 %v1262, %v1253
        %v1506 = vpack.c.b16 %v1263, %v1254
        %v1507 = vpack.c.b16 %v1264, %v1255
        %v1508 = vpack.c.b16 %v1265, %v1256
        %v1509 = vpack.c.b16 %v1266, %v1257
        %v1510 = vpack.c.b16 %v1276, %v1267
        %v1511 = vpack.c.b16 %v1277, %v1268
        %v1512 = vpack.c.b16 %v1278, %v1269
        %v1513 = vpack.c.b16 %v1279, %v1270
        %v1514 = vpack.c.b16 %v1280, %v1271
        %v1515 = vpack.c.b16 %v1281, %v1272
        %v1516 = vpack.c.b16 %v1282, %v1273
        %v1517 = vpack.c.b16 %v1283, %v1274
        %v1518 = vpack.c.b16 %v1284, %v1275
        %v1519 = vpack.c.b16 %v1294, %v1285
        %v1520 = vpack.c.b16 %v1295, %v1286
        %v1521 = vpack.c.b16 %v1296, %v1287
        %v1522 = vpack.c.b16 %v1297, %v1288
        %v1523 = vpack.c.b16 %v1298, %v1289
        %v1524 = vpack.c.b16 %v1299, %v1290
        %v1525 = vpack.c.b16 %v1300, %v1291
        %v1526 = vpack.c.b16 %v1301, %v1292
        %v1527 = vpack.c.b16 %v1302, %v1293
        %v1528 = vpack.c.b16 %v1312, %v1303
        %v1529 = vpack.c.b16 %v1313, %v1304
        %v1530 = vpack.c.b16 %v1314, %v1305
        %v1531 = vpack.c.b16 %v1315, %v1306
        %v1532 = vpack.c.b16 %v1316, %v1307
        %v1533 = vpack.c.b16 %v1317, %v1308
        %v1534 = vpack.c.b16 %v1318, %v1309
        %v1535 = vpack.c.b16 %v1319, %v1310
        %v1536 = vpack.c.b16 %v1320, %v1311
        %1753 = vmatprep.subr.bf16.mxu0 %v1322
        %1754 = vmatpush1.bf16.msra.mxu0 %v1321
        %1755 = vmatprep.subr.bf16.mxu0 %v1331
        %1756 = vmatpush1.bf16.msra.mxu0 %v1330
        %1757 = vmatprep.subr.bf16.mxu0 %v1340
        %1758 = vmatpush1.bf16.msra.mxu0 %v1339
        %1759 = vmatprep.subr.bf16.mxu0 %v1349
        %1760 = vmatpush1.bf16.msra.mxu0 %v1348
        %1761 = vmatprep.subr.bf16.mxu0 %v1358
        %1762 = vmatpush1.bf16.msra.mxu0 %v1357
        %1763 = vmatprep.subr.bf16.mxu0 %v1367
        %1764 = vmatpush1.bf16.msra.mxu0 %v1366
        %1765 = vmatprep.subr.bf16.mxu0 %v1376
        %1766 = vmatpush1.bf16.msra.mxu0 %v1375
        %1767 = vmatprep.subr.bf16.mxu0 %v1385
        %1768 = vmatpush1.bf16.msra.mxu0 %v1384
        %1769 = vmatprep.subr.bf16.mxu0 %v1394
        %1770 = vmatpush1.bf16.msra.mxu0 %v1393
        %1771 = vmatprep.subr.bf16.mxu0 %v1403
        %1772 = vmatpush1.bf16.msra.mxu0 %v1402
        %1773 = vmatprep.subr.bf16.mxu0 %v1412
        %1774 = vmatpush1.bf16.msra.mxu0 %v1411
        %1775 = vmatprep.subr.bf16.mxu0 %v1421
        %1776 = vmatpush1.bf16.msra.mxu0 %v1420
        %1777 = vmatprep.subr.bf16.mxu0 %v1430
        %1778 = vmatpush1.bf16.msra.mxu0 %v1429
        %1779 = vmatprep.subr.bf16.mxu0 %v1439
        %1780 = vmatpush1.bf16.msra.mxu0 %v1438
        %1781 = vmatprep.subr.bf16.mxu0 %v1448
        %1782 = vmatpush1.bf16.msra.mxu0 %v1447
        %1783 = vmatprep.subr.bf16.mxu0 %v1457
        %1784 = vmatpush1.bf16.msra.mxu0 %v1456
        %1785 = vmatprep.mubr.bf16.mxu0 %v602
        %1786 = vmatmul.mubr.bf16.gmra.mrb[0].mxu0 %v601
        %v1787 = vpop.f32.mrb[0].mxu0
        %v1788 = vadd.f32 0.0, %v1787
        %v1789 = vpop.f32.mrb[0].mxu0
        %v1790 = vadd.f32 0.0, %v1789
        %v1791 = vpop.f32.mrb[0].mxu0
        %v1792 = vadd.f32 0.0, %v1791
        %v1793 = vpop.f32.mrb[0].mxu0
        %v1794 = vadd.f32 0.0, %v1793
        %1795 = vmatprep.mubr.bf16.mxu0 %v605
        %1796 = vmatmul.mubr.bf16.gmra.mrb[0].mxu0 %v604
        %v1797 = vpop.f32.mrb[0].mxu0
        %v1798 = vadd.f32 0.0, %v1797
        %v1799 = vpop.f32.mrb[0].mxu0
        %v1800 = vadd.f32 0.0, %v1799
        %v1801 = vpop.f32.mrb[0].mxu0
        %v1802 = vadd.f32 0.0, %v1801
        %v1803 = vpop.f32.mrb[0].mxu0
        %v1804 = vadd.f32 0.0, %v1803
        %1805 = vmatprep.mubr.bf16.mxu0 %v608
        %1806 = vmatmul.mubr.bf16.gmra.mrb[0].mxu0 %v607
        %v1807 = vpop.f32.mrb[0].mxu0
        %v1808 = vadd.f32 0.0, %v1807
        %v1809 = vpop.f32.mrb[0].mxu0
        %v1810 = vadd.f32 0.0, %v1809
        %v1811 = vpop.f32.mrb[0].mxu0
        %v1812 = vadd.f32 0.0, %v1811
        %v1813 = vpop.f32.mrb[0].mxu0
        %v1814 = vadd.f32 0.0, %v1813
        %1815 = vmatprep.mubr.bf16.mxu0 %v611
        %1816 = vmatmul.mubr.bf16.gmra.mrb[0].mxu0 %v610
        %v1817 = vpop.f32.mrb[0].mxu0
        %v1818 = vadd.f32 0.0, %v1817
        %v1819 = vpop.f32.mrb[0].mxu0
        %v1820 = vadd.f32 0.0, %v1819
        %v1821 = vpop.f32.mrb[0].mxu0
        %v1822 = vadd.f32 0.0, %v1821
        %v1823 = vpop.f32.mrb[0].mxu0
        %v1824 = vadd.f32 0.0, %v1823
        %1825 = vmatprep.mubr.bf16.mxu0 %v614
        %1826 = vmatmul.mubr.bf16.gmra.mrb[0].mxu0 %v613
        %v1827 = vpop.f32.mrb[0].mxu0
        %v1828 = vadd.f32 0.0, %v1827
        %v1829 = vpop.f32.mrb[0].mxu0
        %v1830 = vadd.f32 0.0, %v1829
        %v1831 = vpop.f32.mrb[0].mxu0
        %v1832 = vadd.f32 0.0, %v1831
        %v1833 = vpop.f32.mrb[0].mxu0
        %v1834 = vadd.f32 0.0, %v1833
        %1835 = vmatprep.mubr.bf16.mxu0 %v617
        %1836 = vmatmul.mubr.bf16.gmra.mrb[0].mxu0 %v616
        %v1837 = vpop.f32.mrb[0].mxu0
        %v1838 = vadd.f32 0.0, %v1837
        %v1839 = vpop.f32.mrb[0].mxu0
        %v1840 = vadd.f32 0.0, %v1839
        %v1841 = vpop.f32.mrb[0].mxu0
        %v1842 = vadd.f32 0.0, %v1841
        %v1843 = vpop.f32.mrb[0].mxu0
        %v1844 = vadd.f32 0.0, %v1843
        %1845 = vmatprep.mubr.bf16.mxu0 %v620
        %1846 = vmatmul.mubr.bf16.gmra.mrb[0].mxu0 %v619
        %v1847 = vpop.f32.mrb[0].mxu0
        %v1848 = vadd.f32 0.0, %v1847
        %v1849 = vpop.f32.mrb[0].mxu0
        %v1850 = vadd.f32 0.0, %v1849
        %v1851 = vpop.f32.mrb[0].mxu0
        %v1852 = vadd.f32 0.0, %v1851
        %v1853 = vpop.f32.mrb[0].mxu0
        %v1854 = vadd.f32 0.0, %v1853
        %1855 = vmatprep.mubr.bf16.mxu0 %v623
        %1856 = vmatmul.mubr.bf16.gmra.mrb[0].mxu0 %v622
        %v1857 = vpop.f32.mrb[0].mxu0
        %v1858 = vadd.f32 0.0, %v1857
        %v1859 = vpop.f32.mrb[0].mxu0
        %v1860 = vadd.f32 0.0, %v1859
        %v1861 = vpop.f32.mrb[0].mxu0
        %v1862 = vadd.f32 0.0, %v1861
        %v1863 = vpop.f32.mrb[0].mxu0
        %v1864 = vadd.f32 0.0, %v1863
        %1865 = vdwg.mxu0
        %1866 = vmatprep.subr.bf16.mxu0 %v1466
        %1867 = vmatpush1.bf16.msra.mxu0 %v1465
        %1868 = vmatprep.subr.bf16.mxu0 %v1475
        %1869 = vmatpush1.bf16.msra.mxu0 %v1474
        %1870 = vmatprep.subr.bf16.mxu0 %v1484
        %1871 = vmatpush1.bf16.msra.mxu0 %v1483
        %1872 = vmatprep.subr.bf16.mxu0 %v1493
        %1873 = vmatpush1.bf16.msra.mxu0 %v1492
        %1874 = vmatprep.subr.bf16.mxu0 %v1502
        %1875 = vmatpush1.bf16.msra.mxu0 %v1501
        %1876 = vmatprep.subr.bf16.mxu0 %v1511
        %1877 = vmatpush1.bf16.msra.mxu0 %v1510
        %1878 = vmatprep.subr.bf16.mxu0 %v1520
        %1879 = vmatpush1.bf16.msra.mxu0 %v1519
        %1880 = vmatprep.subr.bf16.mxu0 %v1529
        %1881 = vmatpush1.bf16.msra.mxu0 %v1528
        %1882 = vmatprep.subr.bf16.mxu0 0
        %1883 = vmatpush1.bf16.msra.mxu0 0
        %1884 = vmatprep.subr.bf16.mxu0 0
        %1885 = vmatpush1.bf16.msra.mxu0 0
        %1886 = vmatprep.subr.bf16.mxu0 0
        %1887 = vmatpush1.bf16.msra.mxu0 0
        %1888 = vmatprep.subr.bf16.mxu0 0
        %1889 = vmatpush1.bf16.msra.mxu0 0
        %1890 = vmatprep.subr.bf16.mxu0 0
        %1891 = vmatpush1.bf16.msra.mxu0 0
        %1892 = vmatprep.subr.bf16.mxu0 0
        %1893 = vmatpush1.bf16.msra.mxu0 0
        %1894 = vmatprep.subr.bf16.mxu0 0
        %1895 = vmatpush1.bf16.msra.mxu0 0
        %1896 = vmatprep.subr.bf16.mxu0 0
        %1897 = vmatpush1.bf16.msra.mxu0 0
        %1898 = vmatprep.mubr.bf16.mxu0 0
        %1899 = vmatmul.mubr.bf16.gmra.mrb[0].mxu0 %v603
        %v1900 = vpop.f32.mrb[0].mxu0
        %v1901 = vadd.f32 %v1788, %v1900
        %v1902 = vpop.f32.mrb[0].mxu0
        %v1903 = vadd.f32 %v1790, %v1902
        %v1904 = vpop.f32.mrb[0].mxu0
        %v1905 = vadd.f32 %v1792, %v1904
        %v1906 = vpop.f32.mrb[0].mxu0
        %v1907 = vadd.f32 %v1794, %v1906
        %1908 = vmatprep.mubr.bf16.mxu0 0
        %1909 = vmatmul.mubr.bf16.gmra.mrb[0].mxu0 %v606
        %v1910 = vpop.f32.mrb[0].mxu0
        %v1911 = vadd.f32 %v1798, %v1910
        %v1912 = vpop.f32.mrb[0].mxu0
        %v1913 = vadd.f32 %v1800, %v1912
        %v1914 = vpop.f32.mrb[0].mxu0
        %v1915 = vadd.f32 %v1802, %v1914
        %v1916 = vpop.f32.mrb[0].mxu0
        %v1917 = vadd.f32 %v1804, %v1916
        %1918 = vmatprep.mubr.bf16.mxu0 0
        %1919 = vmatmul.mubr.bf16.gmra.mrb[0].mxu0 %v609
        %v1920 = vpop.f32.mrb[0].mxu0
        %v1921 = vadd.f32 %v1808, %v1920
        %v1922 = vpop.f32.mrb[0].mxu0
        %v1923 = vadd.f32 %v1810, %v1922
        %v1924 = vpop.f32.mrb[0].mxu0
        %v1925 = vadd.f32 %v1812, %v1924
        %v1926 = vpop.f32.mrb[0].mxu0
        %v1927 = vadd.f32 %v1814, %v1926
        %1928 = vmatprep.mubr.bf16.mxu0 0
        %1929 = vmatmul.mubr.bf16.gmra.mrb[0].mxu0 %v612
        %v1930 = vpop.f32.mrb[0].mxu0
        %v1931 = vadd.f32 %v1818, %v1930
        %v1932 = vpop.f32.mrb[0].mxu0
        %v1933 = vadd.f32 %v1820, %v1932
        %v1934 = vpop.f32.mrb[0].mxu0
        %v1935 = vadd.f32 %v1822, %v1934
        %v1936 = vpop.f32.mrb[0].mxu0
        %v1937 = vadd.f32 %v1824, %v1936
        %1938 = vmatprep.mubr.bf16.mxu0 0
        %1939 = vmatmul.mubr.bf16.gmra.mrb[0].mxu0 %v615
        %v1940 = vpop.f32.mrb[0].mxu0
        %v1941 = vadd.f32 %v1828, %v1940
        %v1942 = vpop.f32.mrb[0].mxu0
        %v1943 = vadd.f32 %v1830, %v1942
        %v1944 = vpop.f32.mrb[0].mxu0
        %v1945 = vadd.f32 %v1832, %v1944
        %v1946 = vpop.f32.mrb[0].mxu0
        %v1947 = vadd.f32 %v1834, %v1946
        %1948 = vmatprep.mubr.bf16.mxu0 0
        %1949 = vmatmul.mubr.bf16.gmra.mrb[0].mxu0 %v618
        %v1950 = vpop.f32.mrb[0].mxu0
        %v1951 = vadd.f32 %v1838, %v1950
        %v1952 = vpop.f32.mrb[0].mxu0
        %v1953 = vadd.f32 %v1840, %v1952
        %v1954 = vpop.f32.mrb[0].mxu0
        %v1955 = vadd.f32 %v1842, %v1954
        %v1956 = vpop.f32.mrb[0].mxu0
        %v1957 = vadd.f32 %v1844, %v1956
        %1958 = vmatprep.mubr.bf16.mxu0 0
        %1959 = vmatmul.mubr.bf16.gmra.mrb[0].mxu0 %v621
        %v1960 = vpop.f32.mrb[0].mxu0
        %v1961 = vadd.f32 %v1848, %v1960
        %v1962 = vpop.f32.mrb[0].mxu0
        %v1963 = vadd.f32 %v1850, %v1962
        %v1964 = vpop.f32.mrb[0].mxu0
        %v1965 = vadd.f32 %v1852, %v1964
        %v1966 = vpop.f32.mrb[0].mxu0
        %v1967 = vadd.f32 %v1854, %v1966
        %1968 = vmatprep.mubr.bf16.mxu0 0
        %1969 = vmatmul.mubr.bf16.gmra.mrb[0].mxu0 %v624
        %v1970 = vpop.f32.mrb[0].mxu0
        %v1971 = vadd.f32 %v1858, %v1970
        %v1972 = vpop.f32.mrb[0].mxu0
        %v1973 = vadd.f32 %v1860, %v1972
        %v1974 = vpop.f32.mrb[0].mxu0
        %v1975 = vadd.f32 %v1862, %v1974
        %v1976 = vpop.f32.mrb[0].mxu0
        %v1977 = vadd.f32 %v1864, %v1976
        %1978 = vdwg.mxu0
        %1979 = vmatprep.subr.bf16.mxu0 %v1324
        %1980 = vmatpush1.bf16.msra.mxu0 %v1323
        %1981 = vmatprep.subr.bf16.mxu0 %v1333
        %1982 = vmatpush1.bf16.msra.mxu0 %v1332
        %1983 = vmatprep.subr.bf16.mxu0 %v1342
        %1984 = vmatpush1.bf16.msra.mxu0 %v1341
        %1985 = vmatprep.subr.bf16.mxu0 %v1351
        %1986 = vmatpush1.bf16.msra.mxu0 %v1350
        %1987 = vmatprep.subr.bf16.mxu0 %v1360
        %1988 = vmatpush1.bf16.msra.mxu0 %v1359
        %1989 = vmatprep.subr.bf16.mxu0 %v1369
        %1990 = vmatpush1.bf16.msra.mxu0 %v1368
        %1991 = vmatprep.subr.bf16.mxu0 %v1378
        %1992 = vmatpush1.bf16.msra.mxu0 %v1377
        %1993 = vmatprep.subr.bf16.mxu0 %v1387
        %1994 = vmatpush1.bf16.msra.mxu0 %v1386
        %1995 = vmatprep.subr.bf16.mxu0 %v1396
        %1996 = vmatpush1.bf16.msra.mxu0 %v1395
        %1997 = vmatprep.subr.bf16.mxu0 %v1405
        %1998 = vmatpush1.bf16.msra.mxu0 %v1404
        %1999 = vmatprep.subr.bf16.mxu0 %v1414
        %2000 = vmatpush1.bf16.msra.mxu0 %v1413
        %2001 = vmatprep.subr.bf16.mxu0 %v1423
        %2002 = vmatpush1.bf16.msra.mxu0 %v1422
        %2003 = vmatprep.subr.bf16.mxu0 %v1432
        %2004 = vmatpush1.bf16.msra.mxu0 %v1431
        %2005 = vmatprep.subr.bf16.mxu0 %v1441
        %2006 = vmatpush1.bf16.msra.mxu0 %v1440
        %2007 = vmatprep.subr.bf16.mxu0 %v1450
        %2008 = vmatpush1.bf16.msra.mxu0 %v1449
        %2009 = vmatprep.subr.bf16.mxu0 %v1459
        %2010 = vmatpush1.bf16.msra.mxu0 %v1458
        %2011 = vmatprep.mubr.bf16.mxu0 %v602
        %2012 = vmatmul.mubr.bf16.gmra.mrb[0].mxu0 %v601
        %v2013 = vpop.f32.mrb[0].mxu0
        %v2014 = vadd.f32 0.0, %v2013
        %v2015 = vpop.f32.mrb[0].mxu0
        %v2016 = vadd.f32 0.0, %v2015
        %v2017 = vpop.f32.mrb[0].mxu0
        %v2018 = vadd.f32 0.0, %v2017
        %v2019 = vpop.f32.mrb[0].mxu0
        %v2020 = vadd.f32 0.0, %v2019
        %2021 = vmatprep.mubr.bf16.mxu0 %v605
        %2022 = vmatmul.mubr.bf16.gmra.mrb[0].mxu0 %v604
        %v2023 = vpop.f32.mrb[0].mxu0
        %v2024 = vadd.f32 0.0, %v2023
        %v2025 = vpop.f32.mrb[0].mxu0
        %v2026 = vadd.f32 0.0, %v2025
        %v2027 = vpop.f32.mrb[0].mxu0
        %v2028 = vadd.f32 0.0, %v2027
        %v2029 = vpop.f32.mrb[0].mxu0
        %v2030 = vadd.f32 0.0, %v2029
        %2031 = vmatprep.mubr.bf16.mxu0 %v608
        %2032 = vmatmul.mubr.bf16.gmra.mrb[0].mxu0 %v607
        %v2033 = vpop.f32.mrb[0].mxu0
        %v2034 = vadd.f32 0.0, %v2033
        %v2035 = vpop.f32.mrb[0].mxu0
        %v2036 = vadd.f32 0.0, %v2035
        %v2037 = vpop.f32.mrb[0].mxu0
        %v2038 = vadd.f32 0.0, %v2037
        %v2039 = vpop.f32.mrb[0].mxu0
        %v2040 = vadd.f32 0.0, %v2039
        %2041 = vmatprep.mubr.bf16.mxu0 %v611
        %2042 = vmatmul.mubr.bf16.gmra.mrb[0].mxu0 %v610
        %v2043 = vpop.f32.mrb[0].mxu0
        %v2044 = vadd.f32 0.0, %v2043
        %v2045 = vpop.f32.mrb[0].mxu0
        %v2046 = vadd.f32 0.0, %v2045
        %v2047 = vpop.f32.mrb[0].mxu0
        %v2048 = vadd.f32 0.0, %v2047
        %v2049 = vpop.f32.mrb[0].mxu0
        %v2050 = vadd.f32 0.0, %v2049
        %2051 = vmatprep.mubr.bf16.mxu0 %v614
        %2052 = vmatmul.mubr.bf16.gmra.mrb[0].mxu0 %v613
        %v2053 = vpop.f32.mrb[0].mxu0
        %v2054 = vadd.f32 0.0, %v2053
        %v2055 = vpop.f32.mrb[0].mxu0
        %v2056 = vadd.f32 0.0, %v2055
        %v2057 = vpop.f32.mrb[0].mxu0
        %v2058 = vadd.f32 0.0, %v2057
        %v2059 = vpop.f32.mrb[0].mxu0
        %v2060 = vadd.f32 0.0, %v2059
        %2061 = vmatprep.mubr.bf16.mxu0 %v617
        %2062 = vmatmul.mubr.bf16.gmra.mrb[0].mxu0 %v616
        %v2063 = vpop.f32.mrb[0].mxu0
        %v2064 = vadd.f32 0.0, %v2063
        %v2065 = vpop.f32.mrb[0].mxu0
        %v2066 = vadd.f32 0.0, %v2065
        %v2067 = vpop.f32.mrb[0].mxu0
        %v2068 = vadd.f32 0.0, %v2067
        %v2069 = vpop.f32.mrb[0].mxu0
        %v2070 = vadd.f32 0.0, %v2069
        %2071 = vmatprep.mubr.bf16.mxu0 %v620
        %2072 = vmatmul.mubr.bf16.gmra.mrb[0].mxu0 %v619
        %v2073 = vpop.f32.mrb[0].mxu0
        %v2074 = vadd.f32 0.0, %v2073
        %v2075 = vpop.f32.mrb[0].mxu0
        %v2076 = vadd.f32 0.0, %v2075
        %v2077 = vpop.f32.mrb[0].mxu0
        %v2078 = vadd.f32 0.0, %v2077
        %v2079 = vpop.f32.mrb[0].mxu0
        %v2080 = vadd.f32 0.0, %v2079
        %2081 = vmatprep.mubr.bf16.mxu0 %v623
        %2082 = vmatmul.mubr.bf16.gmra.mrb[0].mxu0 %v622
        %v2083 = vpop.f32.mrb[0].mxu0
        %v2084 = vadd.f32 0.0, %v2083
        %v2085 = vpop.f32.mrb[0].mxu0
        %v2086 = vadd.f32 0.0, %v2085
        %v2087 = vpop.f32.mrb[0].mxu0
        %v2088 = vadd.f32 0.0, %v2087
        %v2089 = vpop.f32.mrb[0].mxu0
        %v2090 = vadd.f32 0.0, %v2089
        %2091 = vdwg.mxu0
        %2092 = vmatprep.subr.bf16.mxu0 %v1468
        %2093 = vmatpush1.bf16.msra.mxu0 %v1467
        %2094 = vmatprep.subr.bf16.mxu0 %v1477
        %2095 = vmatpush1.bf16.msra.mxu0 %v1476
        %2096 = vmatprep.subr.bf16.mxu0 %v1486
        %2097 = vmatpush1.bf16.msra.mxu0 %v1485
        %2098 = vmatprep.subr.bf16.mxu0 %v1495
        %2099 = vmatpush1.bf16.msra.mxu0 %v1494
        %2100 = vmatprep.subr.bf16.mxu0 %v1504
        %2101 = vmatpush1.bf16.msra.mxu0 %v1503
        %2102 = vmatprep.subr.bf16.mxu0 %v1513
        %2103 = vmatpush1.bf16.msra.mxu0 %v1512
        %2104 = vmatprep.subr.bf16.mxu0 %v1522
        %2105 = vmatpush1.bf16.msra.mxu0 %v1521
        %2106 = vmatprep.subr.bf16.mxu0 %v1531
        %2107 = vmatpush1.bf16.msra.mxu0 %v1530
        %2108 = vmatprep.subr.bf16.mxu0 0
        %2109 = vmatpush1.bf16.msra.mxu0 0
        %2110 = vmatprep.subr.bf16.mxu0 0
        %2111 = vmatpush1.bf16.msra.mxu0 0
        %2112 = vmatprep.subr.bf16.mxu0 0
        %2113 = vmatpush1.bf16.msra.mxu0 0
        %2114 = vmatprep.subr.bf16.mxu0 0
        %2115 = vmatpush1.bf16.msra.mxu0 0
        %2116 = vmatprep.subr.bf16.mxu0 0
        %2117 = vmatpush1.bf16.msra.mxu0 0
        %2118 = vmatprep.subr.bf16.mxu0 0
        %2119 = vmatpush1.bf16.msra.mxu0 0
        %2120 = vmatprep.subr.bf16.mxu0 0
        %2121 = vmatpush1.bf16.msra.mxu0 0
        %2122 = vmatprep.subr.bf16.mxu0 0
        %2123 = vmatpush1.bf16.msra.mxu0 0
        %2124 = vmatprep.mubr.bf16.mxu0 0
        %2125 = vmatmul.mubr.bf16.gmra.mrb[0].mxu0 %v603
        %v2126 = vpop.f32.mrb[0].mxu0
        %v2127 = vadd.f32 %v2014, %v2126
        %v2128 = vpop.f32.mrb[0].mxu0
        %v2129 = vadd.f32 %v2016, %v2128
        %v2130 = vpop.f32.mrb[0].mxu0
        %v2131 = vadd.f32 %v2018, %v2130
        %v2132 = vpop.f32.mrb[0].mxu0
        %v2133 = vadd.f32 %v2020, %v2132
        %2134 = vmatprep.mubr.bf16.mxu0 0
        %2135 = vmatmul.mubr.bf16.gmra.mrb[0].mxu0 %v606
        %v2136 = vpop.f32.mrb[0].mxu0
        %v2137 = vadd.f32 %v2024, %v2136
        %v2138 = vpop.f32.mrb[0].mxu0
        %v2139 = vadd.f32 %v2026, %v2138
        %v2140 = vpop.f32.mrb[0].mxu0
        %v2141 = vadd.f32 %v2028, %v2140
        %v2142 = vpop.f32.mrb[0].mxu0
        %v2143 = vadd.f32 %v2030, %v2142
        %2144 = vmatprep.mubr.bf16.mxu0 0
        %2145 = vmatmul.mubr.bf16.gmra.mrb[0].mxu0 %v609
        %v2146 = vpop.f32.mrb[0].mxu0
        %v2147 = vadd.f32 %v2034, %v2146
        %v2148 = vpop.f32.mrb[0].mxu0
        %v2149 = vadd.f32 %v2036, %v2148
        %v2150 = vpop.f32.mrb[0].mxu0
        %v2151 = vadd.f32 %v2038, %v2150
        %v2152 = vpop.f32.mrb[0].mxu0
        %v2153 = vadd.f32 %v2040, %v2152
        %2154 = vmatprep.mubr.bf16.mxu0 0
        %2155 = vmatmul.mubr.bf16.gmra.mrb[0].mxu0 %v612
        %v2156 = vpop.f32.mrb[0].mxu0
        %v2157 = vadd.f32 %v2044, %v2156
        %v2158 = vpop.f32.mrb[0].mxu0
        %v2159 = vadd.f32 %v2046, %v2158
        %v2160 = vpop.f32.mrb[0].mxu0
        %v2161 = vadd.f32 %v2048, %v2160
        %v2162 = vpop.f32.mrb[0].mxu0
        %v2163 = vadd.f32 %v2050, %v2162
        %2164 = vmatprep.mubr.bf16.mxu0 0
        %2165 = vmatmul.mubr.bf16.gmra.mrb[0].mxu0 %v615
        %v2166 = vpop.f32.mrb[0].mxu0
        %v2167 = vadd.f32 %v2054, %v2166
        %v2168 = vpop.f32.mrb[0].mxu0
        %v2169 = vadd.f32 %v2056, %v2168
        %v2170 = vpop.f32.mrb[0].mxu0
        %v2171 = vadd.f32 %v2058, %v2170
        %v2172 = vpop.f32.mrb[0].mxu0
        %v2173 = vadd.f32 %v2060, %v2172
        %2174 = vmatprep.mubr.bf16.mxu0 0
        %2175 = vmatmul.mubr.bf16.gmra.mrb[0].mxu0 %v618
        %v2176 = vpop.f32.mrb[0].mxu0
        %v2177 = vadd.f32 %v2064, %v2176
        %v2178 = vpop.f32.mrb[0].mxu0
        %v2179 = vadd.f32 %v2066, %v2178
        %v2180 = vpop.f32.mrb[0].mxu0
        %v2181 = vadd.f32 %v2068, %v2180
        %v2182 = vpop.f32.mrb[0].mxu0
        %v2183 = vadd.f32 %v2070, %v2182
        %2184 = vmatprep.mubr.bf16.mxu0 0
        %2185 = vmatmul.mubr.bf16.gmra.mrb[0].mxu0 %v621
        %v2186 = vpop.f32.mrb[0].mxu0
        %v2187 = vadd.f32 %v2074, %v2186
        %v2188 = vpop.f32.mrb[0].mxu0
        %v2189 = vadd.f32 %v2076, %v2188
        %v2190 = vpop.f32.mrb[0].mxu0
        %v2191 = vadd.f32 %v2078, %v2190
        %v2192 = vpop.f32.mrb[0].mxu0
        %v2193 = vadd.f32 %v2080, %v2192
        %2194 = vmatprep.mubr.bf16.mxu0 0
        %2195 = vmatmul.mubr.bf16.gmra.mrb[0].mxu0 %v624
        %v2196 = vpop.f32.mrb[0].mxu0
        %v2197 = vadd.f32 %v2084, %v2196
        %v2198 = vpop.f32.mrb[0].mxu0
        %v2199 = vadd.f32 %v2086, %v2198
        %v2200 = vpop.f32.mrb[0].mxu0
        %v2201 = vadd.f32 %v2088, %v2200
        %v2202 = vpop.f32.mrb[0].mxu0
        %v2203 = vadd.f32 %v2090, %v2202
        %2204 = vdwg.mxu0
        %2205 = vmatprep.subr.bf16.mxu0 %v1326
        %2206 = vmatpush1.bf16.msra.mxu0 %v1325
        %2207 = vmatprep.subr.bf16.mxu0 %v1335
        %2208 = vmatpush1.bf16.msra.mxu0 %v1334
        %2209 = vmatprep.subr.bf16.mxu0 %v1344
        %2210 = vmatpush1.bf16.msra.mxu0 %v1343
        %2211 = vmatprep.subr.bf16.mxu0 %v1353
        %2212 = vmatpush1.bf16.msra.mxu0 %v1352
        %2213 = vmatprep.subr.bf16.mxu0 %v1362
        %2214 = vmatpush1.bf16.msra.mxu0 %v1361
        %2215 = vmatprep.subr.bf16.mxu0 %v1371
        %2216 = vmatpush1.bf16.msra.mxu0 %v1370
        %2217 = vmatprep.subr.bf16.mxu0 %v1380
        %2218 = vmatpush1.bf16.msra.mxu0 %v1379
        %2219 = vmatprep.subr.bf16.mxu0 %v1389
        %2220 = vmatpush1.bf16.msra.mxu0 %v1388
        %2221 = vmatprep.subr.bf16.mxu0 %v1398
        %2222 = vmatpush1.bf16.msra.mxu0 %v1397
        %2223 = vmatprep.subr.bf16.mxu0 %v1407
        %2224 = vmatpush1.bf16.msra.mxu0 %v1406
        %2225 = vmatprep.subr.bf16.mxu0 %v1416
        %2226 = vmatpush1.bf16.msra.mxu0 %v1415
        %2227 = vmatprep.subr.bf16.mxu0 %v1425
        %2228 = vmatpush1.bf16.msra.mxu0 %v1424
        %2229 = vmatprep.subr.bf16.mxu0 %v1434
        %2230 = vmatpush1.bf16.msra.mxu0 %v1433
        %2231 = vmatprep.subr.bf16.mxu0 %v1443
        %2232 = vmatpush1.bf16.msra.mxu0 %v1442
        %2233 = vmatprep.subr.bf16.mxu0 %v1452
        %2234 = vmatpush1.bf16.msra.mxu0 %v1451
        %2235 = vmatprep.subr.bf16.mxu0 %v1461
        %2236 = vmatpush1.bf16.msra.mxu0 %v1460
        %2237 = vmatprep.mubr.bf16.mxu0 %v602
        %2238 = vmatmul.mubr.bf16.gmra.mrb[0].mxu0 %v601
        %v2239 = vpop.f32.mrb[0].mxu0
        %v2240 = vadd.f32 0.0, %v2239
        %v2241 = vpop.f32.mrb[0].mxu0
        %v2242 = vadd.f32 0.0, %v2241
        %v2243 = vpop.f32.mrb[0].mxu0
        %v2244 = vadd.f32 0.0, %v2243
        %v2245 = vpop.f32.mrb[0].mxu0
        %v2246 = vadd.f32 0.0, %v2245
        %2247 = vmatprep.mubr.bf16.mxu0 %v605
        %2248 = vmatmul.mubr.bf16.gmra.mrb[0].mxu0 %v604
        %v2249 = vpop.f32.mrb[0].mxu0
        %v2250 = vadd.f32 0.0, %v2249
        %v2251 = vpop.f32.mrb[0].mxu0
        %v2252 = vadd.f32 0.0, %v2251
        %v2253 = vpop.f32.mrb[0].mxu0
        %v2254 = vadd.f32 0.0, %v2253
        %v2255 = vpop.f32.mrb[0].mxu0
        %v2256 = vadd.f32 0.0, %v2255
        %2257 = vmatprep.mubr.bf16.mxu0 %v608
        %2258 = vmatmul.mubr.bf16.gmra.mrb[0].mxu0 %v607
        %v2259 = vpop.f32.mrb[0].mxu0
        %v2260 = vadd.f32 0.0, %v2259
        %v2261 = vpop.f32.mrb[0].mxu0
        %v2262 = vadd.f32 0.0, %v2261
        %v2263 = vpop.f32.mrb[0].mxu0
        %v2264 = vadd.f32 0.0, %v2263
        %v2265 = vpop.f32.mrb[0].mxu0
        %v2266 = vadd.f32 0.0, %v2265
        %2267 = vmatprep.mubr.bf16.mxu0 %v611
        %2268 = vmatmul.mubr.bf16.gmra.mrb[0].mxu0 %v610
        %v2269 = vpop.f32.mrb[0].mxu0
        %v2270 = vadd.f32 0.0, %v2269
        %v2271 = vpop.f32.mrb[0].mxu0
        %v2272 = vadd.f32 0.0, %v2271
        %v2273 = vpop.f32.mrb[0].mxu0
        %v2274 = vadd.f32 0.0, %v2273
        %v2275 = vpop.f32.mrb[0].mxu0
        %v2276 = vadd.f32 0.0, %v2275
        %2277 = vmatprep.mubr.bf16.mxu0 %v614
        %2278 = vmatmul.mubr.bf16.gmra.mrb[0].mxu0 %v613
        %v2279 = vpop.f32.mrb[0].mxu0
        %v2280 = vadd.f32 0.0, %v2279
        %v2281 = vpop.f32.mrb[0].mxu0
        %v2282 = vadd.f32 0.0, %v2281
        %v2283 = vpop.f32.mrb[0].mxu0
        %v2284 = vadd.f32 0.0, %v2283
        %v2285 = vpop.f32.mrb[0].mxu0
        %v2286 = vadd.f32 0.0, %v2285
        %2287 = vmatprep.mubr.bf16.mxu0 %v617
        %2288 = vmatmul.mubr.bf16.gmra.mrb[0].mxu0 %v616
        %v2289 = vpop.f32.mrb[0].mxu0
        %v2290 = vadd.f32 0.0, %v2289
        %v2291 = vpop.f32.mrb[0].mxu0
        %v2292 = vadd.f32 0.0, %v2291
        %v2293 = vpop.f32.mrb[0].mxu0
        %v2294 = vadd.f32 0.0, %v2293
        %v2295 = vpop.f32.mrb[0].mxu0
        %v2296 = vadd.f32 0.0, %v2295
        %2297 = vmatprep.mubr.bf16.mxu0 %v620
        %2298 = vmatmul.mubr.bf16.gmra.mrb[0].mxu0 %v619
        %v2299 = vpop.f32.mrb[0].mxu0
        %v2300 = vadd.f32 0.0, %v2299
        %v2301 = vpop.f32.mrb[0].mxu0
        %v2302 = vadd.f32 0.0, %v2301
        %v2303 = vpop.f32.mrb[0].mxu0
        %v2304 = vadd.f32 0.0, %v2303
        %v2305 = vpop.f32.mrb[0].mxu0
        %v2306 = vadd.f32 0.0, %v2305
        %2307 = vmatprep.mubr.bf16.mxu0 %v623
        %2308 = vmatmul.mubr.bf16.gmra.mrb[0].mxu0 %v622
        %v2309 = vpop.f32.mrb[0].mxu0
        %v2310 = vadd.f32 0.0, %v2309
        %v2311 = vpop.f32.mrb[0].mxu0
        %v2312 = vadd.f32 0.0, %v2311
        %v2313 = vpop.f32.mrb[0].mxu0
        %v2314 = vadd.f32 0.0, %v2313
        %v2315 = vpop.f32.mrb[0].mxu0
        %v2316 = vadd.f32 0.0, %v2315
        %2317 = vdwg.mxu0
        %2318 = vmatprep.subr.bf16.mxu0 %v1470
        %2319 = vmatpush1.bf16.msra.mxu0 %v1469
        %2320 = vmatprep.subr.bf16.mxu0 %v1479
        %2321 = vmatpush1.bf16.msra.mxu0 %v1478
        %2322 = vmatprep.subr.bf16.mxu0 %v1488
        %2323 = vmatpush1.bf16.msra.mxu0 %v1487
        %2324 = vmatprep.subr.bf16.mxu0 %v1497
        %2325 = vmatpush1.bf16.msra.mxu0 %v1496
        %2326 = vmatprep.subr.bf16.mxu0 %v1506
        %2327 = vmatpush1.bf16.msra.mxu0 %v1505
        %2328 = vmatprep.subr.bf16.mxu0 %v1515
        %2329 = vmatpush1.bf16.msra.mxu0 %v1514
        %2330 = vmatprep.subr.bf16.mxu0 %v1524
        %2331 = vmatpush1.bf16.msra.mxu0 %v1523
        %2332 = vmatprep.subr.bf16.mxu0 %v1533
        %2333 = vmatpush1.bf16.msra.mxu0 %v1532
        %2334 = vmatprep.subr.bf16.mxu0 0
        %2335 = vmatpush1.bf16.msra.mxu0 0
        %2336 = vmatprep.subr.bf16.mxu0 0
        %2337 = vmatpush1.bf16.msra.mxu0 0
        %2338 = vmatprep.subr.bf16.mxu0 0
        %2339 = vmatpush1.bf16.msra.mxu0 0
        %2340 = vmatprep.subr.bf16.mxu0 0
        %2341 = vmatpush1.bf16.msra.mxu0 0
        %2342 = vmatprep.subr.bf16.mxu0 0
        %2343 = vmatpush1.bf16.msra.mxu0 0
        %2344 = vmatprep.subr.bf16.mxu0 0
        %2345 = vmatpush1.bf16.msra.mxu0 0
        %2346 = vmatprep.subr.bf16.mxu0 0
        %2347 = vmatpush1.bf16.msra.mxu0 0
        %2348 = vmatprep.subr.bf16.mxu0 0
        %2349 = vmatpush1.bf16.msra.mxu0 0
        %2350 = vmatprep.mubr.bf16.mxu0 0
        %2351 = vmatmul.mubr.bf16.gmra.mrb[0].mxu0 %v603
        %v2352 = vpop.f32.mrb[0].mxu0
        %v2353 = vadd.f32 %v2240, %v2352
        %v2354 = vpop.f32.mrb[0].mxu0
        %v2355 = vadd.f32 %v2242, %v2354
        %v2356 = vpop.f32.mrb[0].mxu0
        %v2357 = vadd.f32 %v2244, %v2356
        %v2358 = vpop.f32.mrb[0].mxu0
        %v2359 = vadd.f32 %v2246, %v2358
        %2360 = vmatprep.mubr.bf16.mxu0 0
        %2361 = vmatmul.mubr.bf16.gmra.mrb[0].mxu0 %v606
        %v2362 = vpop.f32.mrb[0].mxu0
        %v2363 = vadd.f32 %v2250, %v2362
        %v2364 = vpop.f32.mrb[0].mxu0
        %v2365 = vadd.f32 %v2252, %v2364
        %v2366 = vpop.f32.mrb[0].mxu0
        %v2367 = vadd.f32 %v2254, %v2366
        %v2368 = vpop.f32.mrb[0].mxu0
        %v2369 = vadd.f32 %v2256, %v2368
        %2370 = vmatprep.mubr.bf16.mxu0 0
        %2371 = vmatmul.mubr.bf16.gmra.mrb[0].mxu0 %v609
        %v2372 = vpop.f32.mrb[0].mxu0
        %v2373 = vadd.f32 %v2260, %v2372
        %v2374 = vpop.f32.mrb[0].mxu0
        %v2375 = vadd.f32 %v2262, %v2374
        %v2376 = vpop.f32.mrb[0].mxu0
        %v2377 = vadd.f32 %v2264, %v2376
        %v2378 = vpop.f32.mrb[0].mxu0
        %v2379 = vadd.f32 %v2266, %v2378
        %2380 = vmatprep.mubr.bf16.mxu0 0
        %2381 = vmatmul.mubr.bf16.gmra.mrb[0].mxu0 %v612
        %v2382 = vpop.f32.mrb[0].mxu0
        %v2383 = vadd.f32 %v2270, %v2382
        %v2384 = vpop.f32.mrb[0].mxu0
        %v2385 = vadd.f32 %v2272, %v2384
        %v2386 = vpop.f32.mrb[0].mxu0
        %v2387 = vadd.f32 %v2274, %v2386
        %v2388 = vpop.f32.mrb[0].mxu0
        %v2389 = vadd.f32 %v2276, %v2388
        %2390 = vmatprep.mubr.bf16.mxu0 0
        %2391 = vmatmul.mubr.bf16.gmra.mrb[0].mxu0 %v615
        %v2392 = vpop.f32.mrb[0].mxu0
        %v2393 = vadd.f32 %v2280, %v2392
        %v2394 = vpop.f32.mrb[0].mxu0
        %v2395 = vadd.f32 %v2282, %v2394
        %v2396 = vpop.f32.mrb[0].mxu0
        %v2397 = vadd.f32 %v2284, %v2396
        %v2398 = vpop.f32.mrb[0].mxu0
        %v2399 = vadd.f32 %v2286, %v2398
        %2400 = vmatprep.mubr.bf16.mxu0 0
        %2401 = vmatmul.mubr.bf16.gmra.mrb[0].mxu0 %v618
        %v2402 = vpop.f32.mrb[0].mxu0
        %v2403 = vadd.f32 %v2290, %v2402
        %v2404 = vpop.f32.mrb[0].mxu0
        %v2405 = vadd.f32 %v2292, %v2404
        %v2406 = vpop.f32.mrb[0].mxu0
        %v2407 = vadd.f32 %v2294, %v2406
        %v2408 = vpop.f32.mrb[0].mxu0
        %v2409 = vadd.f32 %v2296, %v2408
        %2410 = vmatprep.mubr.bf16.mxu0 0
        %2411 = vmatmul.mubr.bf16.gmra.mrb[0].mxu0 %v621
        %v2412 = vpop.f32.mrb[0].mxu0
        %v2413 = vadd.f32 %v2300, %v2412
        %v2414 = vpop.f32.mrb[0].mxu0
        %v2415 = vadd.f32 %v2302, %v2414
        %v2416 = vpop.f32.mrb[0].mxu0
        %v2417 = vadd.f32 %v2304, %v2416
        %v2418 = vpop.f32.mrb[0].mxu0
        %v2419 = vadd.f32 %v2306, %v2418
        %2420 = vmatprep.mubr.bf16.mxu0 0
        %2421 = vmatmul.mubr.bf16.gmra.mrb[0].mxu0 %v624
        %v2422 = vpop.f32.mrb[0].mxu0
        %v2423 = vadd.f32 %v2310, %v2422
        %v2424 = vpop.f32.mrb[0].mxu0
        %v2425 = vadd.f32 %v2312, %v2424
        %v2426 = vpop.f32.mrb[0].mxu0
        %v2427 = vadd.f32 %v2314, %v2426
        %v2428 = vpop.f32.mrb[0].mxu0
        %v2429 = vadd.f32 %v2316, %v2428
        %2430 = vdwg.mxu0
        %2431 = vmatprep.subr.bf16.mxu0 %v1328
        %2432 = vmatpush1.bf16.msra.mxu0 %v1327
        %2433 = vmatprep.subr.bf16.mxu0 %v1337
        %2434 = vmatpush1.bf16.msra.mxu0 %v1336
        %2435 = vmatprep.subr.bf16.mxu0 %v1346
        %2436 = vmatpush1.bf16.msra.mxu0 %v1345
        %2437 = vmatprep.subr.bf16.mxu0 %v1355
        %2438 = vmatpush1.bf16.msra.mxu0 %v1354
        %2439 = vmatprep.subr.bf16.mxu0 %v1364
        %2440 = vmatpush1.bf16.msra.mxu0 %v1363
        %2441 = vmatprep.subr.bf16.mxu0 %v1373
        %2442 = vmatpush1.bf16.msra.mxu0 %v1372
        %2443 = vmatprep.subr.bf16.mxu0 %v1382
        %2444 = vmatpush1.bf16.msra.mxu0 %v1381
        %2445 = vmatprep.subr.bf16.mxu0 %v1391
        %2446 = vmatpush1.bf16.msra.mxu0 %v1390
        %2447 = vmatprep.subr.bf16.mxu0 %v1400
        %2448 = vmatpush1.bf16.msra.mxu0 %v1399
        %2449 = vmatprep.subr.bf16.mxu0 %v1409
        %2450 = vmatpush1.bf16.msra.mxu0 %v1408
        %2451 = vmatprep.subr.bf16.mxu0 %v1418
        %2452 = vmatpush1.bf16.msra.mxu0 %v1417
        %2453 = vmatprep.subr.bf16.mxu0 %v1427
        %2454 = vmatpush1.bf16.msra.mxu0 %v1426
        %2455 = vmatprep.subr.bf16.mxu0 %v1436
        %2456 = vmatpush1.bf16.msra.mxu0 %v1435
        %2457 = vmatprep.subr.bf16.mxu0 %v1445
        %2458 = vmatpush1.bf16.msra.mxu0 %v1444
        %2459 = vmatprep.subr.bf16.mxu0 %v1454
        %2460 = vmatpush1.bf16.msra.mxu0 %v1453
        %2461 = vmatprep.subr.bf16.mxu0 %v1463
        %2462 = vmatpush1.bf16.msra.mxu0 %v1462
        %2463 = vmatprep.mubr.bf16.mxu0 %v602
        %2464 = vmatmul.mubr.bf16.gmra.mrb[0].mxu0 %v601
        %v2465 = vpop.f32.mrb[0].mxu0
        %v2466 = vadd.f32 0.0, %v2465
        %v2467 = vpop.f32.mrb[0].mxu0
        %v2468 = vadd.f32 0.0, %v2467
        %v2469 = vpop.f32.mrb[0].mxu0
        %v2470 = vadd.f32 0.0, %v2469
        %v2471 = vpop.f32.mrb[0].mxu0
        %v2472 = vadd.f32 0.0, %v2471
        %2473 = vmatprep.mubr.bf16.mxu0 %v605
        %2474 = vmatmul.mubr.bf16.gmra.mrb[0].mxu0 %v604
        %v2475 = vpop.f32.mrb[0].mxu0
        %v2476 = vadd.f32 0.0, %v2475
        %v2477 = vpop.f32.mrb[0].mxu0
        %v2478 = vadd.f32 0.0, %v2477
        %v2479 = vpop.f32.mrb[0].mxu0
        %v2480 = vadd.f32 0.0, %v2479
        %v2481 = vpop.f32.mrb[0].mxu0
        %v2482 = vadd.f32 0.0, %v2481
        %2483 = vmatprep.mubr.bf16.mxu0 %v608
        %2484 = vmatmul.mubr.bf16.gmra.mrb[0].mxu0 %v607
        %v2485 = vpop.f32.mrb[0].mxu0
        %v2486 = vadd.f32 0.0, %v2485
        %v2487 = vpop.f32.mrb[0].mxu0
        %v2488 = vadd.f32 0.0, %v2487
        %v2489 = vpop.f32.mrb[0].mxu0
        %v2490 = vadd.f32 0.0, %v2489
        %v2491 = vpop.f32.mrb[0].mxu0
        %v2492 = vadd.f32 0.0, %v2491
        %2493 = vmatprep.mubr.bf16.mxu0 %v611
        %2494 = vmatmul.mubr.bf16.gmra.mrb[0].mxu0 %v610
        %v2495 = vpop.f32.mrb[0].mxu0
        %v2496 = vadd.f32 0.0, %v2495
        %v2497 = vpop.f32.mrb[0].mxu0
        %v2498 = vadd.f32 0.0, %v2497
        %v2499 = vpop.f32.mrb[0].mxu0
        %v2500 = vadd.f32 0.0, %v2499
        %v2501 = vpop.f32.mrb[0].mxu0
        %v2502 = vadd.f32 0.0, %v2501
        %2503 = vmatprep.mubr.bf16.mxu0 %v614
        %2504 = vmatmul.mubr.bf16.gmra.mrb[0].mxu0 %v613
        %v2505 = vpop.f32.mrb[0].mxu0
        %v2506 = vadd.f32 0.0, %v2505
        %v2507 = vpop.f32.mrb[0].mxu0
        %v2508 = vadd.f32 0.0, %v2507
        %v2509 = vpop.f32.mrb[0].mxu0
        %v2510 = vadd.f32 0.0, %v2509
        %v2511 = vpop.f32.mrb[0].mxu0
        %v2512 = vadd.f32 0.0, %v2511
        %2513 = vmatprep.mubr.bf16.mxu0 %v617
        %2514 = vmatmul.mubr.bf16.gmra.mrb[0].mxu0 %v616
        %v2515 = vpop.f32.mrb[0].mxu0
        %v2516 = vadd.f32 0.0, %v2515
        %v2517 = vpop.f32.mrb[0].mxu0
        %v2518 = vadd.f32 0.0, %v2517
        %v2519 = vpop.f32.mrb[0].mxu0
        %v2520 = vadd.f32 0.0, %v2519
        %v2521 = vpop.f32.mrb[0].mxu0
        %v2522 = vadd.f32 0.0, %v2521
        %2523 = vmatprep.mubr.bf16.mxu0 %v620
        %2524 = vmatmul.mubr.bf16.gmra.mrb[0].mxu0 %v619
        %v2525 = vpop.f32.mrb[0].mxu0
        %v2526 = vadd.f32 0.0, %v2525
        %v2527 = vpop.f32.mrb[0].mxu0
        %v2528 = vadd.f32 0.0, %v2527
        %v2529 = vpop.f32.mrb[0].mxu0
        %v2530 = vadd.f32 0.0, %v2529
        %v2531 = vpop.f32.mrb[0].mxu0
        %v2532 = vadd.f32 0.0, %v2531
        %2533 = vmatprep.mubr.bf16.mxu0 %v623
        %2534 = vmatmul.mubr.bf16.gmra.mrb[0].mxu0 %v622
        %v2535 = vpop.f32.mrb[0].mxu0
        %v2536 = vadd.f32 0.0, %v2535
        %v2537 = vpop.f32.mrb[0].mxu0
        %v2538 = vadd.f32 0.0, %v2537
        %v2539 = vpop.f32.mrb[0].mxu0
        %v2540 = vadd.f32 0.0, %v2539
        %v2541 = vpop.f32.mrb[0].mxu0
        %v2542 = vadd.f32 0.0, %v2541
        %2543 = vdwg.mxu0
        %2544 = vmatprep.subr.bf16.mxu0 %v1472
        %2545 = vmatpush1.bf16.msra.mxu0 %v1471
        %2546 = vmatprep.subr.bf16.mxu0 %v1481
        %2547 = vmatpush1.bf16.msra.mxu0 %v1480
        %2548 = vmatprep.subr.bf16.mxu0 %v1490
        %2549 = vmatpush1.bf16.msra.mxu0 %v1489
        %2550 = vmatprep.subr.bf16.mxu0 %v1499
        %2551 = vmatpush1.bf16.msra.mxu0 %v1498
        %2552 = vmatprep.subr.bf16.mxu0 %v1508
        %2553 = vmatpush1.bf16.msra.mxu0 %v1507
        %2554 = vmatprep.subr.bf16.mxu0 %v1517
        %2555 = vmatpush1.bf16.msra.mxu0 %v1516
        %2556 = vmatprep.subr.bf16.mxu0 %v1526
        %2557 = vmatpush1.bf16.msra.mxu0 %v1525
        %2558 = vmatprep.subr.bf16.mxu0 %v1535
        %2559 = vmatpush1.bf16.msra.mxu0 %v1534
        %2560 = vmatprep.subr.bf16.mxu0 0
        %2561 = vmatpush1.bf16.msra.mxu0 0
        %2562 = vmatprep.subr.bf16.mxu0 0
        %2563 = vmatpush1.bf16.msra.mxu0 0
        %2564 = vmatprep.subr.bf16.mxu0 0
        %2565 = vmatpush1.bf16.msra.mxu0 0
        %2566 = vmatprep.subr.bf16.mxu0 0
        %2567 = vmatpush1.bf16.msra.mxu0 0
        %2568 = vmatprep.subr.bf16.mxu0 0
        %2569 = vmatpush1.bf16.msra.mxu0 0
        %2570 = vmatprep.subr.bf16.mxu0 0
        %2571 = vmatpush1.bf16.msra.mxu0 0
        %2572 = vmatprep.subr.bf16.mxu0 0
        %2573 = vmatpush1.bf16.msra.mxu0 0
        %2574 = vmatprep.subr.bf16.mxu0 0
        %2575 = vmatpush1.bf16.msra.mxu0 0
        %2576 = vmatprep.mubr.bf16.mxu0 0
        %2577 = vmatmul.mubr.bf16.gmra.mrb[0].mxu0 %v603
        %v2578 = vpop.f32.mrb[0].mxu0
        %v2579 = vadd.f32 %v2466, %v2578
        %v2580 = vpop.f32.mrb[0].mxu0
        %v2581 = vadd.f32 %v2468, %v2580
        %v2582 = vpop.f32.mrb[0].mxu0
        %v2583 = vadd.f32 %v2470, %v2582
        %v2584 = vpop.f32.mrb[0].mxu0
        %v2585 = vadd.f32 %v2472, %v2584
        %2586 = vmatprep.mubr.bf16.mxu0 0
        %2587 = vmatmul.mubr.bf16.gmra.mrb[0].mxu0 %v606
        %v2588 = vpop.f32.mrb[0].mxu0
        %v2589 = vadd.f32 %v2476, %v2588
        %v2590 = vpop.f32.mrb[0].mxu0
        %v2591 = vadd.f32 %v2478, %v2590
        %v2592 = vpop.f32.mrb[0].mxu0
        %v2593 = vadd.f32 %v2480, %v2592
        %v2594 = vpop.f32.mrb[0].mxu0
        %v2595 = vadd.f32 %v2482, %v2594
        %2596 = vmatprep.mubr.bf16.mxu0 0
        %2597 = vmatmul.mubr.bf16.gmra.mrb[0].mxu0 %v609
        %v2598 = vpop.f32.mrb[0].mxu0
        %v2599 = vadd.f32 %v2486, %v2598
        %v2600 = vpop.f32.mrb[0].mxu0
        %v2601 = vadd.f32 %v2488, %v2600
        %v2602 = vpop.f32.mrb[0].mxu0
        %v2603 = vadd.f32 %v2490, %v2602
        %v2604 = vpop.f32.mrb[0].mxu0
        %v2605 = vadd.f32 %v2492, %v2604
        %2606 = vmatprep.mubr.bf16.mxu0 0
        %2607 = vmatmul.mubr.bf16.gmra.mrb[0].mxu0 %v612
        %v2608 = vpop.f32.mrb[0].mxu0
        %v2609 = vadd.f32 %v2496, %v2608
        %v2610 = vpop.f32.mrb[0].mxu0
        %v2611 = vadd.f32 %v2498, %v2610
        %v2612 = vpop.f32.mrb[0].mxu0
        %v2613 = vadd.f32 %v2500, %v2612
        %v2614 = vpop.f32.mrb[0].mxu0
        %v2615 = vadd.f32 %v2502, %v2614
        %2616 = vmatprep.mubr.bf16.mxu0 0
        %2617 = vmatmul.mubr.bf16.gmra.mrb[0].mxu0 %v615
        %v2618 = vpop.f32.mrb[0].mxu0
        %v2619 = vadd.f32 %v2506, %v2618
        %v2620 = vpop.f32.mrb[0].mxu0
        %v2621 = vadd.f32 %v2508, %v2620
        %v2622 = vpop.f32.mrb[0].mxu0
        %v2623 = vadd.f32 %v2510, %v2622
        %v2624 = vpop.f32.mrb[0].mxu0
        %v2625 = vadd.f32 %v2512, %v2624
        %2626 = vmatprep.mubr.bf16.mxu0 0
        %2627 = vmatmul.mubr.bf16.gmra.mrb[0].mxu0 %v618
        %v2628 = vpop.f32.mrb[0].mxu0
        %v2629 = vadd.f32 %v2516, %v2628
        %v2630 = vpop.f32.mrb[0].mxu0
        %v2631 = vadd.f32 %v2518, %v2630
        %v2632 = vpop.f32.mrb[0].mxu0
        %v2633 = vadd.f32 %v2520, %v2632
        %v2634 = vpop.f32.mrb[0].mxu0
        %v2635 = vadd.f32 %v2522, %v2634
        %2636 = vmatprep.mubr.bf16.mxu0 0
        %2637 = vmatmul.mubr.bf16.gmra.mrb[0].mxu0 %v621
        %v2638 = vpop.f32.mrb[0].mxu0
        %v2639 = vadd.f32 %v2526, %v2638
        %v2640 = vpop.f32.mrb[0].mxu0
        %v2641 = vadd.f32 %v2528, %v2640
        %v2642 = vpop.f32.mrb[0].mxu0
        %v2643 = vadd.f32 %v2530, %v2642
        %v2644 = vpop.f32.mrb[0].mxu0
        %v2645 = vadd.f32 %v2532, %v2644
        %2646 = vmatprep.mubr.bf16.mxu0 0
        %2647 = vmatmul.mubr.bf16.gmra.mrb[0].mxu0 %v624
        %v2648 = vpop.f32.mrb[0].mxu0
        %v2649 = vadd.f32 %v2536, %v2648
        %v2650 = vpop.f32.mrb[0].mxu0
        %v2651 = vadd.f32 %v2538, %v2650
        %v2652 = vpop.f32.mrb[0].mxu0
        %v2653 = vadd.f32 %v2540, %v2652
        %v2654 = vpop.f32.mrb[0].mxu0
        %v2655 = vadd.f32 %v2542, %v2654
        %2656 = vdwg.mxu0
        %2657 = vmatprep.subr.bf16.mxu0 0
        %2658 = vmatpush1.bf16.msra.mxu0 %v1329
        %2659 = vmatprep.subr.bf16.mxu0 0
        %2660 = vmatpush1.bf16.msra.mxu0 %v1338
        %2661 = vmatprep.subr.bf16.mxu0 0
        %2662 = vmatpush1.bf16.msra.mxu0 %v1347
        %2663 = vmatprep.subr.bf16.mxu0 0
        %2664 = vmatpush1.bf16.msra.mxu0 %v1356
        %2665 = vmatprep.subr.bf16.mxu0 0
        %2666 = vmatpush1.bf16.msra.mxu0 %v1365
        %2667 = vmatprep.subr.bf16.mxu0 0
        %2668 = vmatpush1.bf16.msra.mxu0 %v1374
        %2669 = vmatprep.subr.bf16.mxu0 0
        %2670 = vmatpush1.bf16.msra.mxu0 %v1383
        %2671 = vmatprep.subr.bf16.mxu0 0
        %2672 = vmatpush1.bf16.msra.mxu0 %v1392
        %2673 = vmatprep.subr.bf16.mxu0 0
        %2674 = vmatpush1.bf16.msra.mxu0 %v1401
        %2675 = vmatprep.subr.bf16.mxu0 0
        %2676 = vmatpush1.bf16.msra.mxu0 %v1410
        %2677 = vmatprep.subr.bf16.mxu0 0
        %2678 = vmatpush1.bf16.msra.mxu0 %v1419
        %2679 = vmatprep.subr.bf16.mxu0 0
        %2680 = vmatpush1.bf16.msra.mxu0 %v1428
        %2681 = vmatprep.subr.bf16.mxu0 0
        %2682 = vmatpush1.bf16.msra.mxu0 %v1437
        %2683 = vmatprep.subr.bf16.mxu0 0
        %2684 = vmatpush1.bf16.msra.mxu0 %v1446
        %2685 = vmatprep.subr.bf16.mxu0 0
        %2686 = vmatpush1.bf16.msra.mxu0 %v1455
        %2687 = vmatprep.subr.bf16.mxu0 0
        %2688 = vmatpush1.bf16.msra.mxu0 %v1464
        %2689 = vmatprep.mubr.bf16.mxu0 %v602
        %2690 = vmatmul.mubr.bf16.gmra.mrb[0].mxu0 %v601
        %v2691 = vpop.f32.mrb[0].mxu0
        %v2692 = vadd.f32 0.0, %v2691
        %v2693 = vpop.f32.mrb[0].mxu0
        %v2694 = vpop.f32.mrb[0].mxu0
        %v2695 = vadd.f32 0.0, %v2694
        %v2696 = vpop.f32.mrb[0].mxu0
        %2697 = vmatprep.mubr.bf16.mxu0 %v605
        %2698 = vmatmul.mubr.bf16.gmra.mrb[0].mxu0 %v604
        %v2699 = vpop.f32.mrb[0].mxu0
        %v2700 = vadd.f32 0.0, %v2699
        %v2701 = vpop.f32.mrb[0].mxu0
        %v2702 = vpop.f32.mrb[0].mxu0
        %v2703 = vadd.f32 0.0, %v2702
        %v2704 = vpop.f32.mrb[0].mxu0
        %2705 = vmatprep.mubr.bf16.mxu0 %v608
        %2706 = vmatmul.mubr.bf16.gmra.mrb[0].mxu0 %v607
        %v2707 = vpop.f32.mrb[0].mxu0
        %v2708 = vadd.f32 0.0, %v2707
        %v2709 = vpop.f32.mrb[0].mxu0
        %v2710 = vpop.f32.mrb[0].mxu0
        %v2711 = vadd.f32 0.0, %v2710
        %v2712 = vpop.f32.mrb[0].mxu0
        %2713 = vmatprep.mubr.bf16.mxu0 %v611
        %2714 = vmatmul.mubr.bf16.gmra.mrb[0].mxu0 %v610
        %v2715 = vpop.f32.mrb[0].mxu0
        %v2716 = vadd.f32 0.0, %v2715
        %v2717 = vpop.f32.mrb[0].mxu0
        %v2718 = vpop.f32.mrb[0].mxu0
        %v2719 = vadd.f32 0.0, %v2718
        %v2720 = vpop.f32.mrb[0].mxu0
        %2721 = vmatprep.mubr.bf16.mxu0 %v614
        %2722 = vmatmul.mubr.bf16.gmra.mrb[0].mxu0 %v613
        %v2723 = vpop.f32.mrb[0].mxu0
        %v2724 = vadd.f32 0.0, %v2723
        %v2725 = vpop.f32.mrb[0].mxu0
        %v2726 = vpop.f32.mrb[0].mxu0
        %v2727 = vadd.f32 0.0, %v2726
        %v2728 = vpop.f32.mrb[0].mxu0
        %2729 = vmatprep.mubr.bf16.mxu0 %v617
        %2730 = vmatmul.mubr.bf16.gmra.mrb[0].mxu0 %v616
        %v2731 = vpop.f32.mrb[0].mxu0
        %v2732 = vadd.f32 0.0, %v2731
        %v2733 = vpop.f32.mrb[0].mxu0
        %v2734 = vpop.f32.mrb[0].mxu0
        %v2735 = vadd.f32 0.0, %v2734
        %v2736 = vpop.f32.mrb[0].mxu0
        %2737 = vmatprep.mubr.bf16.mxu0 %v620
        %2738 = vmatmul.mubr.bf16.gmra.mrb[0].mxu0 %v619
        %v2739 = vpop.f32.mrb[0].mxu0
        %v2740 = vadd.f32 0.0, %v2739
        %v2741 = vpop.f32.mrb[0].mxu0
        %v2742 = vpop.f32.mrb[0].mxu0
        %v2743 = vadd.f32 0.0, %v2742
        %v2744 = vpop.f32.mrb[0].mxu0
        %2745 = vmatprep.mubr.bf16.mxu0 %v623
        %2746 = vmatmul.mubr.bf16.gmra.mrb[0].mxu0 %v622
        %v2747 = vpop.f32.mrb[0].mxu0
        %v2748 = vadd.f32 0.0, %v2747
        %v2749 = vpop.f32.mrb[0].mxu0
        %v2750 = vpop.f32.mrb[0].mxu0
        %v2751 = vadd.f32 0.0, %v2750
        %v2752 = vpop.f32.mrb[0].mxu0
        %2753 = vdwg.mxu0
        %2754 = vmatprep.subr.bf16.mxu0 0
        %2755 = vmatpush1.bf16.msra.mxu0 %v1473
        %2756 = vmatprep.subr.bf16.mxu0 0
        %2757 = vmatpush1.bf16.msra.mxu0 %v1482
        %2758 = vmatprep.subr.bf16.mxu0 0
        %2759 = vmatpush1.bf16.msra.mxu0 %v1491
        %2760 = vmatprep.subr.bf16.mxu0 0
        %2761 = vmatpush1.bf16.msra.mxu0 %v1500
        %2762 = vmatprep.subr.bf16.mxu0 0
        %2763 = vmatpush1.bf16.msra.mxu0 %v1509
        %2764 = vmatprep.subr.bf16.mxu0 0
        %2765 = vmatpush1.bf16.msra.mxu0 %v1518
        %2766 = vmatprep.subr.bf16.mxu0 0
        %2767 = vmatpush1.bf16.msra.mxu0 %v1527
        %2768 = vmatprep.subr.bf16.mxu0 0
        %2769 = vmatpush1.bf16.msra.mxu0 %v1536
        %2770 = vmatprep.subr.bf16.mxu0 0
        %2771 = vmatpush1.bf16.msra.mxu0 0
        %2772 = vmatprep.subr.bf16.mxu0 0
        %2773 = vmatpush1.bf16.msra.mxu0 0
        %2774 = vmatprep.subr.bf16.mxu0 0
        %2775 = vmatpush1.bf16.msra.mxu0 0
        %2776 = vmatprep.subr.bf16.mxu0 0
        %2777 = vmatpush1.bf16.msra.mxu0 0
        %2778 = vmatprep.subr.bf16.mxu0 0
        %2779 = vmatpush1.bf16.msra.mxu0 0
        %2780 = vmatprep.subr.bf16.mxu0 0
        %2781 = vmatpush1.bf16.msra.mxu0 0
        %2782 = vmatprep.subr.bf16.mxu0 0
        %2783 = vmatpush1.bf16.msra.mxu0 0
        %2784 = vmatprep.subr.bf16.mxu0 0
        %2785 = vmatpush1.bf16.msra.mxu0 0
        %2786 = vmatprep.mubr.bf16.mxu0 0
        %2787 = vmatmul.mubr.bf16.gmra.mrb[0].mxu0 %v603
        %v2788 = vpop.f32.mrb[0].mxu0
        %v2789 = vadd.f32 %v2692, %v2788
        %v2790 = vpop.f32.mrb[0].mxu0
        %v2791 = vpop.f32.mrb[0].mxu0
        %v2792 = vadd.f32 %v2695, %v2791
        %v2793 = vpop.f32.mrb[0].mxu0
        %2794 = vmatprep.mubr.bf16.mxu0 0
        %2795 = vmatmul.mubr.bf16.gmra.mrb[0].mxu0 %v606
        %v2796 = vpop.f32.mrb[0].mxu0
        %v2797 = vadd.f32 %v2700, %v2796
        %v2798 = vpop.f32.mrb[0].mxu0
        %v2799 = vpop.f32.mrb[0].mxu0
        %v2800 = vadd.f32 %v2703, %v2799
        %v2801 = vpop.f32.mrb[0].mxu0
        %2802 = vmatprep.mubr.bf16.mxu0 0
        %2803 = vmatmul.mubr.bf16.gmra.mrb[0].mxu0 %v609
        %v2804 = vpop.f32.mrb[0].mxu0
        %v2805 = vadd.f32 %v2708, %v2804
        %v2806 = vpop.f32.mrb[0].mxu0
        %v2807 = vpop.f32.mrb[0].mxu0
        %v2808 = vadd.f32 %v2711, %v2807
        %v2809 = vpop.f32.mrb[0].mxu0
        %2810 = vmatprep.mubr.bf16.mxu0 0
        %2811 = vmatmul.mubr.bf16.gmra.mrb[0].mxu0 %v612
        %v2812 = vpop.f32.mrb[0].mxu0
        %v2813 = vadd.f32 %v2716, %v2812
        %v2814 = vpop.f32.mrb[0].mxu0
        %v2815 = vpop.f32.mrb[0].mxu0
        %v2816 = vadd.f32 %v2719, %v2815
        %v2817 = vpop.f32.mrb[0].mxu0
        %2818 = vmatprep.mubr.bf16.mxu0 0
        %2819 = vmatmul.mubr.bf16.gmra.mrb[0].mxu0 %v615
        %v2820 = vpop.f32.mrb[0].mxu0
        %v2821 = vadd.f32 %v2724, %v2820
        %v2822 = vpop.f32.mrb[0].mxu0
        %v2823 = vpop.f32.mrb[0].mxu0
        %v2824 = vadd.f32 %v2727, %v2823
        %v2825 = vpop.f32.mrb[0].mxu0
        %2826 = vmatprep.mubr.bf16.mxu0 0
        %2827 = vmatmul.mubr.bf16.gmra.mrb[0].mxu0 %v618
        %v2828 = vpop.f32.mrb[0].mxu0
        %v2829 = vadd.f32 %v2732, %v2828
        %v2830 = vpop.f32.mrb[0].mxu0
        %v2831 = vpop.f32.mrb[0].mxu0
        %v2832 = vadd.f32 %v2735, %v2831
        %v2833 = vpop.f32.mrb[0].mxu0
        %2834 = vmatprep.mubr.bf16.mxu0 0
        %2835 = vmatmul.mubr.bf16.gmra.mrb[0].mxu0 %v621
        %v2836 = vpop.f32.mrb[0].mxu0
        %v2837 = vadd.f32 %v2740, %v2836
        %v2838 = vpop.f32.mrb[0].mxu0
        %v2839 = vpop.f32.mrb[0].mxu0
        %v2840 = vadd.f32 %v2743, %v2839
        %v2841 = vpop.f32.mrb[0].mxu0
        %2842 = vmatprep.mubr.bf16.mxu0 0
        %2843 = vmatmul.mubr.bf16.gmra.mrb[0].mxu0 %v624
        %v2844 = vpop.f32.mrb[0].mxu0
        %v2845 = vadd.f32 %v2748, %v2844
        %v2846 = vpop.f32.mrb[0].mxu0
        %v2847 = vpop.f32.mrb[0].mxu0
        %v2848 = vadd.f32 %v2751, %v2847
        %v2849 = vpop.f32.mrb[0].mxu0
        %2850 = vdwg.mxu0
        %v2851 = vpack.c.bf16 %v1905, %v1901
        %v2852 = vpack.c.bf16 %v1907, %v1903
        %v2853 = vpack.c.bf16 %v2131, %v2127
        %v2854 = vpack.c.bf16 %v2133, %v2129
        %v2855 = vpack.c.bf16 %v2357, %v2353
        %v2856 = vpack.c.bf16 %v2359, %v2355
        %v2857 = vpack.c.bf16 %v2583, %v2579
        %v2858 = vpack.c.bf16 %v2585, %v2581
        %v2859 = vpack.c.bf16 %v2792, %v2789
        %v2860 = vpack.c.bf16 %v1915, %v1911
        %v2861 = vpack.c.bf16 %v1917, %v1913
        %v2862 = vpack.c.bf16 %v2141, %v2137
        %v2863 = vpack.c.bf16 %v2143, %v2139
        %v2864 = vpack.c.bf16 %v2367, %v2363
        %v2865 = vpack.c.bf16 %v2369, %v2365
        %v2866 = vpack.c.bf16 %v2593, %v2589
        %v2867 = vpack.c.bf16 %v2595, %v2591
        %v2868 = vpack.c.bf16 %v2800, %v2797
        %v2869 = vpack.c.bf16 %v1925, %v1921
        %v2870 = vpack.c.bf16 %v1927, %v1923
        %v2871 = vpack.c.bf16 %v2151, %v2147
        %v2872 = vpack.c.bf16 %v2153, %v2149
        %v2873 = vpack.c.bf16 %v2377, %v2373
        %v2874 = vpack.c.bf16 %v2379, %v2375
        %v2875 = vpack.c.bf16 %v2603, %v2599
        %v2876 = vpack.c.bf16 %v2605, %v2601
        %v2877 = vpack.c.bf16 %v2808, %v2805
        %v2878 = vpack.c.bf16 %v1935, %v1931
        %v2879 = vpack.c.bf16 %v1937, %v1933
        %v2880 = vpack.c.bf16 %v2161, %v2157
        %v2881 = vpack.c.bf16 %v2163, %v2159
        %v2882 = vpack.c.bf16 %v2387, %v2383
        %v2883 = vpack.c.bf16 %v2389, %v2385
        %v2884 = vpack.c.bf16 %v2613, %v2609
        %v2885 = vpack.c.bf16 %v2615, %v2611
        %v2886 = vpack.c.bf16 %v2816, %v2813
        %v2887 = vpack.c.bf16 %v1945, %v1941
        %v2888 = vpack.c.bf16 %v1947, %v1943
        %v2889 = vpack.c.bf16 %v2171, %v2167
        %v2890 = vpack.c.bf16 %v2173, %v2169
        %v2891 = vpack.c.bf16 %v2397, %v2393
        %v2892 = vpack.c.bf16 %v2399, %v2395
        %v2893 = vpack.c.bf16 %v2623, %v2619
        %v2894 = vpack.c.bf16 %v2625, %v2621
        %v2895 = vpack.c.bf16 %v2824, %v2821
        %v2896 = vpack.c.bf16 %v1955, %v1951
        %v2897 = vpack.c.bf16 %v1957, %v1953
        %v2898 = vpack.c.bf16 %v2181, %v2177
        %v2899 = vpack.c.bf16 %v2183, %v2179
        %v2900 = vpack.c.bf16 %v2407, %v2403
        %v2901 = vpack.c.bf16 %v2409, %v2405
        %v2902 = vpack.c.bf16 %v2633, %v2629
        %v2903 = vpack.c.bf16 %v2635, %v2631
        %v2904 = vpack.c.bf16 %v2832, %v2829
        %v2905 = vpack.c.bf16 %v1965, %v1961
        %v2906 = vpack.c.bf16 %v1967, %v1963
        %v2907 = vpack.c.bf16 %v2191, %v2187
        %v2908 = vpack.c.bf16 %v2193, %v2189
        %v2909 = vpack.c.bf16 %v2417, %v2413
        %v2910 = vpack.c.bf16 %v2419, %v2415
        %v2911 = vpack.c.bf16 %v2643, %v2639
        %v2912 = vpack.c.bf16 %v2645, %v2641
        %v2913 = vpack.c.bf16 %v2840, %v2837
        %v2914 = vpack.c.bf16 %v1975, %v1971
        %v2915 = vpack.c.bf16 %v1977, %v1973
        %v2916 = vpack.c.bf16 %v2201, %v2197
        %v2917 = vpack.c.bf16 %v2203, %v2199
        %v2918 = vpack.c.bf16 %v2427, %v2423
        %v2919 = vpack.c.bf16 %v2429, %v2425
        %v2920 = vpack.c.bf16 %v2653, %v2649
        %v2921 = vpack.c.bf16 %v2655, %v2651
        %v2922 = vpack.c.bf16 %v2848, %v2845
        %2923 = vst [vmem:[#allocation2] sm:$0xff] %v2851
        %2924 = vst [vmem:[#allocation2 + $0x8] sm:$0xff] %v2852
        %2925 = vst [vmem:[#allocation2 + $0x10] sm:$0xff] %v2853
        %2926 = vst [vmem:[#allocation2 + $0x18] sm:$0xff] %v2854
        %2927 = vst [vmem:[#allocation2 + $0x20] sm:$0xff] %v2855
        %2928 = vst [vmem:[#allocation2 + $0x28] sm:$0xff] %v2856
        %2929 = vst [vmem:[#allocation2 + $0x30] sm:$0xff] %v2857
        %2930 = vst [vmem:[#allocation2 + $0x38] sm:$0xff] %v2858
        %2931 = vst [vmem:[#allocation2 + $0x40] sm:$0xff] %v2859
        %2932 = vst [vmem:[#allocation2 + $0x48] sm:$0xff] %v2860
        %2933 = vst [vmem:[#allocation2 + $0x50] sm:$0xff] %v2861
        %2934 = vst [vmem:[#allocation2 + $0x58] sm:$0xff] %v2862
        %2935 = vst [vmem:[#allocation2 + $0x60] sm:$0xff] %v2863
        %2936 = vst [vmem:[#allocation2 + $0x68] sm:$0xff] %v2864
        %2937 = vst [vmem:[#allocation2 + $0x70] sm:$0xff] %v2865
        %2938 = vst [vmem:[#allocation2 + $0x78] sm:$0xff] %v2866
        %2939 = vst [vmem:[#allocation2 + $0x80] sm:$0xff] %v2867
        %2940 = vst [vmem:[#allocation2 + $0x88] sm:$0xff] %v2868
        %2941 = vst [vmem:[#allocation2 + $0x90] sm:$0xff] %v2869
        %2942 = vst [vmem:[#allocation2 + $0x98] sm:$0xff] %v2870
        %2943 = vst [vmem:[#allocation2 + $0xa0] sm:$0xff] %v2871
        %2944 = vst [vmem:[#allocation2 + $0xa8] sm:$0xff] %v2872
        %2945 = vst [vmem:[#allocation2 + $0xb0] sm:$0xff] %v2873
        %2946 = vst [vmem:[#allocation2 + $0xb8] sm:$0xff] %v2874
        %2947 = vst [vmem:[#allocation2 + $0xc0] sm:$0xff] %v2875
        %2948 = vst [vmem:[#allocation2 + $0xc8] sm:$0xff] %v2876
        %2949 = vst [vmem:[#allocation2 + $0xd0] sm:$0xff] %v2877
        %2950 = vst [vmem:[#allocation2 + $0xd8] sm:$0xff] %v2878
        %2951 = vst [vmem:[#allocation2 + $0xe0] sm:$0xff] %v2879
        %2952 = vst [vmem:[#allocation2 + $0xe8] sm:$0xff] %v2880
        %2953 = vst [vmem:[#allocation2 + $0xf0] sm:$0xff] %v2881
        %2954 = vst [vmem:[#allocation2 + $0xf8] sm:$0xff] %v2882
        %2955 = vst [vmem:[#allocation2 + $0x100] sm:$0xff] %v2883
        %2956 = vst [vmem:[#allocation2 + $0x108] sm:$0xff] %v2884
        %2957 = vst [vmem:[#allocation2 + $0x110] sm:$0xff] %v2885
        %2958 = vst [vmem:[#allocation2 + $0x118] sm:$0xff] %v2886
        %2959 = vst [vmem:[#allocation2 + $0x120] sm:$0xff] %v2887
        %2960 = vst [vmem:[#allocation2 + $0x128] sm:$0xff] %v2888
        %2961 = vst [vmem:[#allocation2 + $0x130] sm:$0xff] %v2889
        %2962 = vst [vmem:[#allocation2 + $0x138] sm:$0xff] %v2890
        %2963 = vst [vmem:[#allocation2 + $0x140] sm:$0xff] %v2891
        %2964 = vst [vmem:[#allocation2 + $0x148] sm:$0xff] %v2892
        %2965 = vst [vmem:[#allocation2 + $0x150] sm:$0xff] %v2893
        %2966 = vst [vmem:[#allocation2 + $0x158] sm:$0xff] %v2894
        %2967 = vst [vmem:[#allocation2 + $0x160] sm:$0xff] %v2895
        %2968 = vst [vmem:[#allocation2 + $0x168] sm:$0xff] %v2896
        %2969 = vst [vmem:[#allocation2 + $0x170] sm:$0xff] %v2897
        %2970 = vst [vmem:[#allocation2 + $0x178] sm:$0xff] %v2898
        %2971 = vst [vmem:[#allocation2 + $0x180] sm:$0xff] %v2899
        %2972 = vst [vmem:[#allocation2 + $0x188] sm:$0xff] %v2900
        %2973 = vst [vmem:[#allocation2 + $0x190] sm:$0xff] %v2901
        %2974 = vst [vmem:[#allocation2 + $0x198] sm:$0xff] %v2902
        %2975 = vst [vmem:[#allocation2 + $0x1a0] sm:$0xff] %v2903
        %2976 = vst [vmem:[#allocation2 + $0x1a8] sm:$0xff] %v2904
        %2977 = vst [vmem:[#allocation2 + $0x1b0] sm:$0xff] %v2905
        %2978 = vst [vmem:[#allocation2 + $0x1b8] sm:$0xff] %v2906
        %2979 = vst [vmem:[#allocation2 + $0x1c0] sm:$0xff] %v2907
        %2980 = vst [vmem:[#allocation2 + $0x1c8] sm:$0xff] %v2908
        %2981 = vst [vmem:[#allocation2 + $0x1d0] sm:$0xff] %v2909
        %2982 = vst [vmem:[#allocation2 + $0x1d8] sm:$0xff] %v2910
        %2983 = vst [vmem:[#allocation2 + $0x1e0] sm:$0xff] %v2911
        %2984 = vst [vmem:[#allocation2 + $0x1e8] sm:$0xff] %v2912
        %2985 = vst [vmem:[#allocation2 + $0x1f0] sm:$0xff] %v2913
        %2986 = vst [vmem:[#allocation2 + $0x1f8] sm:$0xff] %v2914
        %2987 = vst [vmem:[#allocation2 + $0x200] sm:$0xff] %v2915
        %2988 = vst [vmem:[#allocation2 + $0x208] sm:$0xff] %v2916
        %2989 = vst [vmem:[#allocation2 + $0x210] sm:$0xff] %v2917
        %2990 = vst [vmem:[#allocation2 + $0x218] sm:$0xff] %v2918
        %2991 = vst [vmem:[#allocation2 + $0x220] sm:$0xff] %v2919
        %2992 = vst [vmem:[#allocation2 + $0x228] sm:$0xff] %v2920
        %2993 = vst [vmem:[#allocation2 + $0x230] sm:$0xff] %v2921
        %2994 = vst [vmem:[#allocation2 + $0x238] sm:$0xff] %v2922
        %v2995 = vlaneseq
        %v2996 = vshrl.u32 %v2995, 7
        %v2997 = vadd.s32 %v2996, 8
        %v2998 = vadd.s32 %v2996, 16
        %v2999 = vadd.s32 %v2996, 24
        %v3000 = vadd.s32 %v2996, 32
        %v3001 = vadd.s32 %v2996, 40
        %v3002 = vadd.s32 %v2996, 48
        %v3003 = vadd.s32 %v2996, 56
        %v3004 = vadd.s32 %v2996, 64
        %v3005 = vadd.s32 %v2996, 72
        %v3006 = vadd.s32 %v2996, 80
        %v3007 = vadd.s32 %v2996, 88
        %v3008 = vadd.s32 %v2996, 96
        %v3009 = vadd.s32 %v2996, 104
        %v3010 = vadd.s32 %v2996, 112
        %v3011 = vadd.s32 %v2996, 120
        %v3012 = vlaneseq
        %v3013 = vand.u32 %v3012, 127
        %vm3014 = vcmp.le.s32.totalorder %v3013, %v2996
        %vm3015 = vcmp.le.s32.totalorder %v3013, %v2997
        %vm3016 = vcmp.le.s32.totalorder %v3013, %v2998
        %vm3017 = vcmp.le.s32.totalorder %v3013, %v2999
        %vm3018 = vcmp.le.s32.totalorder %v3013, %v3000
        %vm3019 = vcmp.le.s32.totalorder %v3013, %v3001
        %vm3020 = vcmp.le.s32.totalorder %v3013, %v3002
        %vm3021 = vcmp.le.s32.totalorder %v3013, %v3003
        %vm3022 = vcmp.le.s32.totalorder %v3013, %v3004
        %vm3023 = vcmp.le.s32.totalorder %v3013, %v3005
        %vm3024 = vcmp.le.s32.totalorder %v3013, %v3006
        %vm3025 = vcmp.le.s32.totalorder %v3013, %v3007
        %vm3026 = vcmp.le.s32.totalorder %v3013, %v3008
        %vm3027 = vcmp.le.s32.totalorder %v3013, %v3009
        %vm3028 = vcmp.le.s32.totalorder %v3013, %v3010
        %vm3029 = vcmp.le.s32.totalorder %v3013, %v3011
        %v3030 = vld [vmem:[#allocation2] sm:$0xff]
        %v3031 = vld [vmem:[#allocation2 + $0x48] sm:$0xff]
        %v3032 = vld [vmem:[#allocation2 + $0x90] sm:$0xff]
        %v3033 = vld [vmem:[#allocation2 + $0xd8] sm:$0xff]
        %v3034 = vld [vmem:[#allocation2 + $0x120] sm:$0xff]
        %v3035 = vld [vmem:[#allocation2 + $0x168] sm:$0xff]
        %v3036 = vld [vmem:[#allocation2 + $0x1b0] sm:$0xff]
        %v3037 = vld [vmem:[#allocation2 + $0x1f8] sm:$0xff]
        %v3038 = vld [vmem:[#allocation2 + $0x18] sm:$0xff]
        %v3039 = vld [vmem:[#allocation2 + $0x60] sm:$0xff]
        %v3040 = vld [vmem:[#allocation2 + $0xa8] sm:$0xff]
        %v3041 = vld [vmem:[#allocation2 + $0xf0] sm:$0xff]
        %v3042 = vld [vmem:[#allocation2 + $0x138] sm:$0xff]
        %v3043 = vld [vmem:[#allocation2 + $0x180] sm:$0xff]
        %v3044 = vld [vmem:[#allocation2 + $0x1c8] sm:$0xff]
        %v3045 = vld [vmem:[#allocation2 + $0x210] sm:$0xff]
        %v3046 = vld [vmem:[#allocation2 + $0x30] sm:$0xff]
        %v3047 = vld [vmem:[#allocation2 + $0x78] sm:$0xff]
        %v3048 = vld [vmem:[#allocation2 + $0xc0] sm:$0xff]
        %v3049 = vld [vmem:[#allocation2 + $0x108] sm:$0xff]
        %v3050 = vld [vmem:[#allocation2 + $0x150] sm:$0xff]
        %v3051 = vld [vmem:[#allocation2 + $0x198] sm:$0xff]
        %v3052 = vld [vmem:[#allocation2 + $0x1e0] sm:$0xff]
        %v3053 = vld [vmem:[#allocation2 + $0x228] sm:$0xff]
        %vm3054 = vcmask 523264
        %v3056 = vsel %vm3054, %v3030, 0
        %v3059 = vsel %vm3054, %v3031, 0
        %v3062 = vsel %vm3054, %v3032, 0
        %v3065 = vsel %vm3054, %v3033, 0
        %v3068 = vsel %vm3054, %v3034, 0
        %v3071 = vsel %vm3054, %v3035, 0
        %v3074 = vsel %vm3054, %v3036, 0
        %v3077 = vsel %vm3054, %v3037, 0
        %v3080 = vsel %vm3054, %v3038, 0
        %v3083 = vsel %vm3054, %v3039, 0
        %v3086 = vsel %vm3054, %v3040, 0
        %v3089 = vsel %vm3054, %v3041, 0
        %v3092 = vsel %vm3054, %v3042, 0
        %v3095 = vsel %vm3054, %v3043, 0
        %v3098 = vsel %vm3054, %v3044, 0
        %v3101 = vsel %vm3054, %v3045, 0
        %3103 = vmatprep.subr.bf16.mxu0 0
        %3104 = vmatpush1.bf16.xpose.msra.mxu0 %v3080
        %3105 = vmatprep.subr.bf16.mxu0 0
        %3106 = vmatpush1.bf16.xpose.msra.mxu0 %v3083
        %3107 = vmatprep.subr.bf16.mxu0 0
        %3108 = vmatpush1.bf16.xpose.msra.mxu0 %v3086
        %3109 = vmatprep.subr.bf16.mxu0 0
        %3110 = vmatpush1.bf16.xpose.msra.mxu0 %v3089
        %3111 = vmatprep.subr.bf16.mxu0 0
        %3112 = vmatpush1.bf16.xpose.msra.mxu0 %v3092
        %3113 = vmatprep.subr.bf16.mxu0 0
        %3114 = vmatpush1.bf16.xpose.msra.mxu0 %v3095
        %3115 = vmatprep.subr.bf16.mxu0 0
        %3116 = vmatpush1.bf16.xpose.msra.mxu0 %v3098
        %3117 = vmatprep.subr.bf16.mxu0 0
        %3118 = vmatpush1.bf16.xpose.msra.mxu0 %v3101
        %3119 = vmatprep.subr.bf16.mxu0 0
        %3120 = vmatpush1.bf16.xpose.msra.mxu0 0
        %3121 = vmatprep.subr.bf16.mxu0 0
        %3122 = vmatpush1.bf16.xpose.msra.mxu0 0
        %3123 = vmatprep.subr.bf16.mxu0 0
        %3124 = vmatpush1.bf16.xpose.msra.mxu0 0
        %3125 = vmatprep.subr.bf16.mxu0 0
        %3126 = vmatpush1.bf16.xpose.msra.mxu0 0
        %3127 = vmatprep.subr.bf16.mxu0 0
        %3128 = vmatpush1.bf16.xpose.msra.mxu0 0
        %3129 = vmatprep.subr.bf16.mxu0 0
        %3130 = vmatpush1.bf16.xpose.msra.mxu0 0
        %3131 = vmatprep.subr.bf16.mxu0 0
        %3132 = vmatpush1.bf16.xpose.msra.mxu0 0
        %3133 = vmatprep.subr.bf16.mxu0 0
        %3134 = vmatpush1.bf16.xpose.msra.mxu0 0
        %3135 = vmatprep.mubr.bf16.mxu0 0
        %3136 = vmatmul.mubr.bf16.gmra.mrb[0].mxu0 %v3056
        %v3137 = vpop.f32.mrb[0].mxu0
        %v3138 = vadd.f32 0.0, %v3137
        %v3139 = vpop.f32.mrb[0].mxu0
        %v3140 = vpop.f32.mrb[0].mxu0
        %v3141 = vadd.f32 0.0, %v3140
        %v3142 = vpop.f32.mrb[0].mxu0
        %3143 = vmatprep.mubr.bf16.mxu0 0
        %3144 = vmatmul.mubr.bf16.gmra.mrb[0].mxu0 %v3059
        %v3145 = vpop.f32.mrb[0].mxu0
        %v3146 = vadd.f32 0.0, %v3145
        %v3147 = vpop.f32.mrb[0].mxu0
        %v3148 = vpop.f32.mrb[0].mxu0
        %v3149 = vadd.f32 0.0, %v3148
        %v3150 = vpop.f32.mrb[0].mxu0
        %3151 = vmatprep.mubr.bf16.mxu0 0
        %3152 = vmatmul.mubr.bf16.gmra.mrb[0].mxu0 %v3062
        %v3153 = vpop.f32.mrb[0].mxu0
        %v3154 = vadd.f32 0.0, %v3153
        %v3155 = vpop.f32.mrb[0].mxu0
        %v3156 = vpop.f32.mrb[0].mxu0
        %v3157 = vadd.f32 0.0, %v3156
        %v3158 = vpop.f32.mrb[0].mxu0
        %3159 = vmatprep.mubr.bf16.mxu0 0
        %3160 = vmatmul.mubr.bf16.gmra.mrb[0].mxu0 %v3065
        %v3161 = vpop.f32.mrb[0].mxu0
        %v3162 = vadd.f32 0.0, %v3161
        %v3163 = vpop.f32.mrb[0].mxu0
        %v3164 = vpop.f32.mrb[0].mxu0
        %v3165 = vadd.f32 0.0, %v3164
        %v3166 = vpop.f32.mrb[0].mxu0
        %3167 = vmatprep.mubr.bf16.mxu0 0
        %3168 = vmatmul.mubr.bf16.gmra.mrb[0].mxu0 %v3068
        %v3169 = vpop.f32.mrb[0].mxu0
        %v3170 = vadd.f32 0.0, %v3169
        %v3171 = vpop.f32.mrb[0].mxu0
        %v3172 = vpop.f32.mrb[0].mxu0
        %v3173 = vadd.f32 0.0, %v3172
        %v3174 = vpop.f32.mrb[0].mxu0
        %3175 = vmatprep.mubr.bf16.mxu0 0
        %3176 = vmatmul.mubr.bf16.gmra.mrb[0].mxu0 %v3071
        %v3177 = vpop.f32.mrb[0].mxu0
        %v3178 = vadd.f32 0.0, %v3177
        %v3179 = vpop.f32.mrb[0].mxu0
        %v3180 = vpop.f32.mrb[0].mxu0
        %v3181 = vadd.f32 0.0, %v3180
        %v3182 = vpop.f32.mrb[0].mxu0
        %3183 = vmatprep.mubr.bf16.mxu0 0
        %3184 = vmatmul.mubr.bf16.gmra.mrb[0].mxu0 %v3074
        %v3185 = vpop.f32.mrb[0].mxu0
        %v3186 = vadd.f32 0.0, %v3185
        %v3187 = vpop.f32.mrb[0].mxu0
        %v3188 = vpop.f32.mrb[0].mxu0
        %v3189 = vadd.f32 0.0, %v3188
        %v3190 = vpop.f32.mrb[0].mxu0
        %3191 = vmatprep.mubr.bf16.mxu0 0
        %3192 = vmatmul.mubr.bf16.gmra.mrb[0].mxu0 %v3077
        %v3193 = vpop.f32.mrb[0].mxu0
        %v3194 = vadd.f32 0.0, %v3193
        %v3195 = vpop.f32.mrb[0].mxu0
        %v3196 = vpop.f32.mrb[0].mxu0
        %v3197 = vadd.f32 0.0, %v3196
        %v3198 = vpop.f32.mrb[0].mxu0
        %3199 = vdwg.mxu0
        %v3200 = vsel %vm3014, %v3138, -inf
        %v3201 = vsel %vm3015, %v3141, -inf
        %v3202 = vsel %vm3016, %v3146, -inf
        %v3203 = vsel %vm3017, %v3149, -inf
        %v3204 = vsel %vm3018, %v3154, -inf
        %v3205 = vsel %vm3019, %v3157, -inf
        %v3206 = vsel %vm3020, %v3162, -inf
        %v3207 = vsel %vm3021, %v3165, -inf
        %v3208 = vsel %vm3022, %v3170, -inf
        %v3209 = vsel %vm3023, %v3173, -inf
        %v3210 = vsel %vm3024, %v3178, -inf
        %v3211 = vsel %vm3025, %v3181, -inf
        %v3212 = vsel %vm3026, %v3186, -inf
        %v3213 = vsel %vm3027, %v3189, -inf
        %v3214 = vsel %vm3028, %v3194, -inf
        %v3215 = vsel %vm3029, %v3197, -inf
        %3216 = vmax.xlane.f32.xlu0 %v3200
        %v3217 = vpop.xlane.xlu0 %3216
        %3218 = vmax.xlane.f32.xlu0 %v3201
        %v3219 = vpop.xlane.xlu0 %3218
        %3220 = vmax.xlane.f32.xlu0 %v3202
        %v3221 = vpop.xlane.xlu0 %3220
        %3222 = vmax.xlane.f32.xlu0 %v3203
        %v3223 = vpop.xlane.xlu0 %3222
        %3224 = vmax.xlane.f32.xlu0 %v3204
        %v3225 = vpop.xlane.xlu0 %3224
        %3226 = vmax.xlane.f32.xlu0 %v3205
        %v3227 = vpop.xlane.xlu0 %3226
        %3228 = vmax.xlane.f32.xlu0 %v3206
        %v3229 = vpop.xlane.xlu0 %3228
        %3230 = vmax.xlane.f32.xlu0 %v3207
        %v3231 = vpop.xlane.xlu0 %3230
        %3232 = vmax.xlane.f32.xlu0 %v3208
        %v3233 = vpop.xlane.xlu0 %3232
        %3234 = vmax.xlane.f32.xlu0 %v3209
        %v3235 = vpop.xlane.xlu0 %3234
        %3236 = vmax.xlane.f32.xlu0 %v3210
        %v3237 = vpop.xlane.xlu0 %3236
        %3238 = vmax.xlane.f32.xlu0 %v3211
        %v3239 = vpop.xlane.xlu0 %3238
        %3240 = vmax.xlane.f32.xlu0 %v3212
        %v3241 = vpop.xlane.xlu0 %3240
        %3242 = vmax.xlane.f32.xlu0 %v3213
        %v3243 = vpop.xlane.xlu0 %3242
        %3244 = vmax.xlane.f32.xlu0 %v3214
        %v3245 = vpop.xlane.xlu0 %3244
        %3246 = vmax.xlane.f32.xlu0 %v3215
        %v3247 = vpop.xlane.xlu0 %3246
        %v3248 = vsub.f32 %v3200, %v3217
        %v3249 = vsub.f32 %v3201, %v3219
        %v3250 = vsub.f32 %v3202, %v3221
        %v3251 = vsub.f32 %v3203, %v3223
        %v3252 = vsub.f32 %v3204, %v3225
        %v3253 = vsub.f32 %v3205, %v3227
        %v3254 = vsub.f32 %v3206, %v3229
        %v3255 = vsub.f32 %v3207, %v3231
        %v3256 = vsub.f32 %v3208, %v3233
        %v3257 = vsub.f32 %v3209, %v3235
        %v3258 = vsub.f32 %v3210, %v3237
        %v3259 = vsub.f32 %v3211, %v3239
        %v3260 = vsub.f32 %v3212, %v3241
        %v3261 = vsub.f32 %v3213, %v3243
        %v3262 = vsub.f32 %v3214, %v3245
        %v3263 = vsub.f32 %v3215, %v3247
        %v3264 = vmul.f32 %v3248, 1.442695
        %v3265 = vpow.pop %v3264
        %v3266 = vmul.f32 %v3249, 1.442695
        %v3267 = vpow.pop %v3266
        %v3268 = vmul.f32 %v3250, 1.442695
        %v3269 = vpow.pop %v3268
        %v3270 = vmul.f32 %v3251, 1.442695
        %v3271 = vpow.pop %v3270
        %v3272 = vmul.f32 %v3252, 1.442695
        %v3273 = vpow.pop %v3272
        %v3274 = vmul.f32 %v3253, 1.442695
        %v3275 = vpow.pop %v3274
        %v3276 = vmul.f32 %v3254, 1.442695
        %v3277 = vpow.pop %v3276
        %v3278 = vmul.f32 %v3255, 1.442695
        %v3279 = vpow.pop %v3278
        %v3280 = vmul.f32 %v3256, 1.442695
        %v3281 = vpow.pop %v3280
        %v3282 = vmul.f32 %v3257, 1.442695
        %v3283 = vpow.pop %v3282
        %v3284 = vmul.f32 %v3258, 1.442695
        %v3285 = vpow.pop %v3284
        %v3286 = vmul.f32 %v3259, 1.442695
        %v3287 = vpow.pop %v3286
        %v3288 = vmul.f32 %v3260, 1.442695
        %v3289 = vpow.pop %v3288
        %v3290 = vmul.f32 %v3261, 1.442695
        %v3291 = vpow.pop %v3290
        %v3292 = vmul.f32 %v3262, 1.442695
        %v3293 = vpow.pop %v3292
        %v3294 = vmul.f32 %v3263, 1.442695
        %v3295 = vpow.pop %v3294
        %3296 = vadd.xlane.f32.xlu0 %v3265
        %v3297 = vpop.xlane.xlu0 %3296
        %3298 = vadd.xlane.f32.xlu0 %v3267
        %v3299 = vpop.xlane.xlu0 %3298
        %3300 = vadd.xlane.f32.xlu0 %v3269
        %v3301 = vpop.xlane.xlu0 %3300
        %3302 = vadd.xlane.f32.xlu0 %v3271
        %v3303 = vpop.xlane.xlu0 %3302
        %3304 = vadd.xlane.f32.xlu0 %v3273
        %v3305 = vpop.xlane.xlu0 %3304
        %3306 = vadd.xlane.f32.xlu0 %v3275
        %v3307 = vpop.xlane.xlu0 %3306
        %3308 = vadd.xlane.f32.xlu0 %v3277
        %v3309 = vpop.xlane.xlu0 %3308
        %3310 = vadd.xlane.f32.xlu0 %v3279
        %v3311 = vpop.xlane.xlu0 %3310
        %3312 = vadd.xlane.f32.xlu0 %v3281
        %v3313 = vpop.xlane.xlu0 %3312
        %3314 = vadd.xlane.f32.xlu0 %v3283
        %v3315 = vpop.xlane.xlu0 %3314
        %3316 = vadd.xlane.f32.xlu0 %v3285
        %v3317 = vpop.xlane.xlu0 %3316
        %3318 = vadd.xlane.f32.xlu0 %v3287
        %v3319 = vpop.xlane.xlu0 %3318
        %3320 = vadd.xlane.f32.xlu0 %v3289
        %v3321 = vpop.xlane.xlu0 %3320
        %3322 = vadd.xlane.f32.xlu0 %v3291
        %v3323 = vpop.xlane.xlu0 %3322
        %3324 = vadd.xlane.f32.xlu0 %v3293
        %v3325 = vpop.xlane.xlu0 %3324
        %3326 = vadd.xlane.f32.xlu0 %v3295
        %v3327 = vpop.xlane.xlu0 %3326
        %v3328 = vrcp.pop %v3297
        %v3329 = vmul.f32 %v3265, %v3328
        %v3330 = vrcp.pop %v3299
        %v3331 = vmul.f32 %v3267, %v3330
        %v3332 = vrcp.pop %v3301
        %v3333 = vmul.f32 %v3269, %v3332
        %v3334 = vrcp.pop %v3303
        %v3335 = vmul.f32 %v3271, %v3334
        %v3336 = vrcp.pop %v3305
        %v3337 = vmul.f32 %v3273, %v3336
        %v3338 = vrcp.pop %v3307
        %v3339 = vmul.f32 %v3275, %v3338
        %v3340 = vrcp.pop %v3309
        %v3341 = vmul.f32 %v3277, %v3340
        %v3342 = vrcp.pop %v3311
        %v3343 = vmul.f32 %v3279, %v3342
        %v3344 = vrcp.pop %v3313
        %v3345 = vmul.f32 %v3281, %v3344
        %v3346 = vrcp.pop %v3315
        %v3347 = vmul.f32 %v3283, %v3346
        %v3348 = vrcp.pop %v3317
        %v3349 = vmul.f32 %v3285, %v3348
        %v3350 = vrcp.pop %v3319
        %v3351 = vmul.f32 %v3287, %v3350
        %v3352 = vrcp.pop %v3321
        %v3353 = vmul.f32 %v3289, %v3352
        %v3354 = vrcp.pop %v3323
        %v3355 = vmul.f32 %v3291, %v3354
        %v3356 = vrcp.pop %v3325
        %v3357 = vmul.f32 %v3293, %v3356
        %v3358 = vrcp.pop %v3327
        %v3359 = vmul.f32 %v3295, %v3358
        %v3360 = vpack.c.bf16 %v3331, %v3329
        %v3361 = vpack.c.bf16 %v3335, %v3333
        %v3362 = vpack.c.bf16 %v3339, %v3337
        %v3363 = vpack.c.bf16 %v3343, %v3341
        %v3364 = vpack.c.bf16 %v3347, %v3345
        %v3365 = vpack.c.bf16 %v3351, %v3349
        %v3366 = vpack.c.bf16 %v3355, %v3353
        %v3367 = vpack.c.bf16 %v3359, %v3357
        %3368 = vmatprep.subr.bf16.mxu0 0
        %3369 = vmatpush1.bf16.msra.mxu0 %v3046
        %3370 = vmatprep.subr.bf16.mxu0 0
        %3371 = vmatpush1.bf16.msra.mxu0 %v3047
        %3372 = vmatprep.subr.bf16.mxu0 0
        %3373 = vmatpush1.bf16.msra.mxu0 %v3048
        %3374 = vmatprep.subr.bf16.mxu0 0
        %3375 = vmatpush1.bf16.msra.mxu0 %v3049
        %3376 = vmatprep.subr.bf16.mxu0 0
        %3377 = vmatpush1.bf16.msra.mxu0 %v3050
        %3378 = vmatprep.subr.bf16.mxu0 0
        %3379 = vmatpush1.bf16.msra.mxu0 %v3051
        %3380 = vmatprep.subr.bf16.mxu0 0
        %3381 = vmatpush1.bf16.msra.mxu0 %v3052
        %3382 = vmatprep.subr.bf16.mxu0 0
        %3383 = vmatpush1.bf16.msra.mxu0 %v3053
        %3384 = vmatprep.subr.bf16.mxu0 0
        %3385 = vmatpush1.bf16.msra.mxu0 0
        %3386 = vmatprep.subr.bf16.mxu0 0
        %3387 = vmatpush1.bf16.msra.mxu0 0
        %3388 = vmatprep.subr.bf16.mxu0 0
        %3389 = vmatpush1.bf16.msra.mxu0 0
        %3390 = vmatprep.subr.bf16.mxu0 0
        %3391 = vmatpush1.bf16.msra.mxu0 0
        %3392 = vmatprep.subr.bf16.mxu0 0
        %3393 = vmatpush1.bf16.msra.mxu0 0
        %3394 = vmatprep.subr.bf16.mxu0 0
        %3395 = vmatpush1.bf16.msra.mxu0 0
        %3396 = vmatprep.subr.bf16.mxu0 0
        %3397 = vmatpush1.bf16.msra.mxu0 0
        %3398 = vmatprep.subr.bf16.mxu0 0
        %3399 = vmatpush1.bf16.msra.mxu0 0
        %3400 = vmatprep.mubr.bf16.mxu0 0
        %3401 = vmatmul.mubr.bf16.gmra.mrb[0].mxu0 %v3360
        %v3402 = vpop.f32.mrb[0].mxu0
        %v3403 = vadd.f32 0.0, %v3402
        %v3404 = vpop.f32.mrb[0].mxu0
        %v3405 = vpop.f32.mrb[0].mxu0
        %v3406 = vadd.f32 0.0, %v3405
        %v3407 = vpop.f32.mrb[0].mxu0
        %3408 = vmatprep.mubr.bf16.mxu0 0
        %3409 = vmatmul.mubr.bf16.gmra.mrb[0].mxu0 %v3361
        %v3410 = vpop.f32.mrb[0].mxu0
        %v3411 = vadd.f32 0.0, %v3410
        %v3412 = vpop.f32.mrb[0].mxu0
        %v3413 = vpop.f32.mrb[0].mxu0
        %v3414 = vadd.f32 0.0, %v3413
        %v3415 = vpop.f32.mrb[0].mxu0
        %3416 = vmatprep.mubr.bf16.mxu0 0
        %3417 = vmatmul.mubr.bf16.gmra.mrb[0].mxu0 %v3362
        %v3418 = vpop.f32.mrb[0].mxu0
        %v3419 = vadd.f32 0.0, %v3418
        %v3420 = vpop.f32.mrb[0].mxu0
        %v3421 = vpop.f32.mrb[0].mxu0
        %v3422 = vadd.f32 0.0, %v3421
        %v3423 = vpop.f32.mrb[0].mxu0
        %3424 = vmatprep.mubr.bf16.mxu0 0
        %3425 = vmatmul.mubr.bf16.gmra.mrb[0].mxu0 %v3363
        %v3426 = vpop.f32.mrb[0].mxu0
        %v3427 = vadd.f32 0.0, %v3426
        %v3428 = vpop.f32.mrb[0].mxu0
        %v3429 = vpop.f32.mrb[0].mxu0
        %v3430 = vadd.f32 0.0, %v3429
        %v3431 = vpop.f32.mrb[0].mxu0
        %3432 = vmatprep.mubr.bf16.mxu0 0
        %3433 = vmatmul.mubr.bf16.gmra.mrb[0].mxu0 %v3364
        %v3434 = vpop.f32.mrb[0].mxu0
        %v3435 = vadd.f32 0.0, %v3434
        %v3436 = vpop.f32.mrb[0].mxu0
        %v3437 = vpop.f32.mrb[0].mxu0
        %v3438 = vadd.f32 0.0, %v3437
        %v3439 = vpop.f32.mrb[0].mxu0
        %3440 = vmatprep.mubr.bf16.mxu0 0
        %3441 = vmatmul.mubr.bf16.gmra.mrb[0].mxu0 %v3365
        %v3442 = vpop.f32.mrb[0].mxu0
        %v3443 = vadd.f32 0.0, %v3442
        %v3444 = vpop.f32.mrb[0].mxu0
        %v3445 = vpop.f32.mrb[0].mxu0
        %v3446 = vadd.f32 0.0, %v3445
        %v3447 = vpop.f32.mrb[0].mxu0
        %3448 = vmatprep.mubr.bf16.mxu0 0
        %3449 = vmatmul.mubr.bf16.gmra.mrb[0].mxu0 %v3366
        %v3450 = vpop.f32.mrb[0].mxu0
        %v3451 = vadd.f32 0.0, %v3450
        %v3452 = vpop.f32.mrb[0].mxu0
        %v3453 = vpop.f32.mrb[0].mxu0
        %v3454 = vadd.f32 0.0, %v3453
        %v3455 = vpop.f32.mrb[0].mxu0
        %3456 = vmatprep.mubr.bf16.mxu0 0
        %3457 = vmatmul.mubr.bf16.gmra.mrb[0].mxu0 %v3367
        %v3458 = vpop.f32.mrb[0].mxu0
        %v3459 = vadd.f32 0.0, %v3458
        %v3460 = vpop.f32.mrb[0].mxu0
        %v3461 = vpop.f32.mrb[0].mxu0
        %v3462 = vadd.f32 0.0, %v3461
        %v3463 = vpop.f32.mrb[0].mxu0
        %3464 = vdwg.mxu0
        %v3465 = vpack.c.bf16 %v3406, %v3403
        %v3466 = vpack.c.bf16 %v3414, %v3411
        %v3467 = vpack.c.bf16 %v3422, %v3419
        %v3468 = vpack.c.bf16 %v3430, %v3427
        %v3469 = vpack.c.bf16 %v3438, %v3435
        %v3470 = vpack.c.bf16 %v3446, %v3443
        %v3471 = vpack.c.bf16 %v3454, %v3451
        %v3472 = vpack.c.bf16 %v3462, %v3459
        %3473 = vst.msk [vmem:[#allocation3] sm:$0xff] %vm3054, %v3465
        %3474 = vst.msk [vmem:[#allocation3 + $0x18] sm:$0xff] %vm3054, %v3466
        %3475 = vst.msk [vmem:[#allocation3 + $0x30] sm:$0xff] %vm3054, %v3467
        %3476 = vst.msk [vmem:[#allocation3 + $0x48] sm:$0xff] %vm3054, %v3468
        %3477 = vst.msk [vmem:[#allocation3 + $0x60] sm:$0xff] %vm3054, %v3469
        %3478 = vst.msk [vmem:[#allocation3 + $0x78] sm:$0xff] %vm3054, %v3470
        %3479 = vst.msk [vmem:[#allocation3 + $0x90] sm:$0xff] %vm3054, %v3471
        %3480 = vst.msk [vmem:[#allocation3 + $0xa8] sm:$0xff] %vm3054, %v3472
        %v3481 = vld [vmem:[#allocation2] sm:$0xff]
        %v3482 = vld [vmem:[#allocation2 + $0x48] sm:$0xff]
        %v3483 = vld [vmem:[#allocation2 + $0x90] sm:$0xff]
        %v3484 = vld [vmem:[#allocation2 + $0xd8] sm:$0xff]
        %v3485 = vld [vmem:[#allocation2 + $0x120] sm:$0xff]
        %v3486 = vld [vmem:[#allocation2 + $0x168] sm:$0xff]
        %v3487 = vld [vmem:[#allocation2 + $0x1b0] sm:$0xff]
        %v3488 = vld [vmem:[#allocation2 + $0x1f8] sm:$0xff]
        %v3489 = vld [vmem:[#allocation2 + $0x18] sm:$0xff]
        %v3490 = vld [vmem:[#allocation2 + $0x60] sm:$0xff]
        %v3491 = vld [vmem:[#allocation2 + $0xa8] sm:$0xff]
        %v3492 = vld [vmem:[#allocation2 + $0xf0] sm:$0xff]
        %v3493 = vld [vmem:[#allocation2 + $0x138] sm:$0xff]
        %v3494 = vld [vmem:[#allocation2 + $0x180] sm:$0xff]
        %v3495 = vld [vmem:[#allocation2 + $0x1c8] sm:$0xff]
        %v3496 = vld [vmem:[#allocation2 + $0x210] sm:$0xff]
        %v3497 = vld [vmem:[#allocation2 + $0x30] sm:$0xff]
        %v3498 = vld [vmem:[#allocation2 + $0x78] sm:$0xff]
        %v3499 = vld [vmem:[#allocation2 + $0xc0] sm:$0xff]
        %v3500 = vld [vmem:[#allocation2 + $0x108] sm:$0xff]
        %v3501 = vld [vmem:[#allocation2 + $0x150] sm:$0xff]
        %v3502 = vld [vmem:[#allocation2 + $0x198] sm:$0xff]
        %v3503 = vld [vmem:[#allocation2 + $0x1e0] sm:$0xff]
        %v3504 = vld [vmem:[#allocation2 + $0x228] sm:$0xff]
        %3513 = vrot.lane.b32.xlu0 %v3481, 64
        %v3514 = vpop.permute.xlu0 %3513
        %3515 = vrot.lane.b32.xlu0 %v3482, 64
        %v3516 = vpop.permute.xlu0 %3515
        %3517 = vrot.lane.b32.xlu0 %v3483, 64
        %v3518 = vpop.permute.xlu0 %3517
        %3519 = vrot.lane.b32.xlu0 %v3484, 64
        %v3520 = vpop.permute.xlu0 %3519
        %3521 = vrot.lane.b32.xlu0 %v3485, 64
        %v3522 = vpop.permute.xlu0 %3521
        %3523 = vrot.lane.b32.xlu0 %v3486, 64
        %v3524 = vpop.permute.xlu0 %3523
        %3525 = vrot.lane.b32.xlu0 %v3487, 64
        %v3526 = vpop.permute.xlu0 %3525
        %3527 = vrot.lane.b32.xlu0 %v3488, 64
        %v3528 = vpop.permute.xlu0 %3527
        %3537 = vrot.lane.b32.xlu0 %v3489, 64
        %v3538 = vpop.permute.xlu0 %3537
        %3539 = vrot.lane.b32.xlu0 %v3490, 64
        %v3540 = vpop.permute.xlu0 %3539
        %3541 = vrot.lane.b32.xlu0 %v3491, 64
        %v3542 = vpop.permute.xlu0 %3541
        %3543 = vrot.lane.b32.xlu0 %v3492, 64
        %v3544 = vpop.permute.xlu0 %3543
        %3545 = vrot.lane.b32.xlu0 %v3493, 64
        %v3546 = vpop.permute.xlu0 %3545
        %3547 = vrot.lane.b32.xlu0 %v3494, 64
        %v3548 = vpop.permute.xlu0 %3547
        %3549 = vrot.lane.b32.xlu0 %v3495, 64
        %v3550 = vpop.permute.xlu0 %3549
        %3551 = vrot.lane.b32.xlu0 %v3496, 64
        %v3552 = vpop.permute.xlu0 %3551
        %v3554 = vsel %vm3054, %v3514, 0
        %v3557 = vsel %vm3054, %v3516, 0
        %v3560 = vsel %vm3054, %v3518, 0
        %v3563 = vsel %vm3054, %v3520, 0
        %v3566 = vsel %vm3054, %v3522, 0
        %v3569 = vsel %vm3054, %v3524, 0
        %v3572 = vsel %vm3054, %v3526, 0
        %v3575 = vsel %vm3054, %v3528, 0
        %v3578 = vsel %vm3054, %v3538, 0
        %v3581 = vsel %vm3054, %v3540, 0
        %v3584 = vsel %vm3054, %v3542, 0
        %v3587 = vsel %vm3054, %v3544, 0
        %v3590 = vsel %vm3054, %v3546, 0
        %v3593 = vsel %vm3054, %v3548, 0
        %v3596 = vsel %vm3054, %v3550, 0
        %v3599 = vsel %vm3054, %v3552, 0
        %3601 = vmatprep.subr.bf16.mxu0 0
        %3602 = vmatpush1.bf16.xpose.msra.mxu0 %v3578
        %3603 = vmatprep.subr.bf16.mxu0 0
        %3604 = vmatpush1.bf16.xpose.msra.mxu0 %v3581
        %3605 = vmatprep.subr.bf16.mxu0 0
        %3606 = vmatpush1.bf16.xpose.msra.mxu0 %v3584
        %3607 = vmatprep.subr.bf16.mxu0 0
        %3608 = vmatpush1.bf16.xpose.msra.mxu0 %v3587
        %3609 = vmatprep.subr.bf16.mxu0 0
        %3610 = vmatpush1.bf16.xpose.msra.mxu0 %v3590
        %3611 = vmatprep.subr.bf16.mxu0 0
        %3612 = vmatpush1.bf16.xpose.msra.mxu0 %v3593
        %3613 = vmatprep.subr.bf16.mxu0 0
        %3614 = vmatpush1.bf16.xpose.msra.mxu0 %v3596
        %3615 = vmatprep.subr.bf16.mxu0 0
        %3616 = vmatpush1.bf16.xpose.msra.mxu0 %v3599
        %3617 = vmatprep.subr.bf16.mxu0 0
        %3618 = vmatpush1.bf16.xpose.msra.mxu0 0
        %3619 = vmatprep.subr.bf16.mxu0 0
        %3620 = vmatpush1.bf16.xpose.msra.mxu0 0
        %3621 = vmatprep.subr.bf16.mxu0 0
        %3622 = vmatpush1.bf16.xpose.msra.mxu0 0
        %3623 = vmatprep.subr.bf16.mxu0 0
        %3624 = vmatpush1.bf16.xpose.msra.mxu0 0
        %3625 = vmatprep.subr.bf16.mxu0 0
        %3626 = vmatpush1.bf16.xpose.msra.mxu0 0
        %3627 = vmatprep.subr.bf16.mxu0 0
        %3628 = vmatpush1.bf16.xpose.msra.mxu0 0
        %3629 = vmatprep.subr.bf16.mxu0 0
        %3630 = vmatpush1.bf16.xpose.msra.mxu0 0
        %3631 = vmatprep.subr.bf16.mxu0 0
        %3632 = vmatpush1.bf16.xpose.msra.mxu0 0
        %3633 = vmatprep.mubr.bf16.mxu0 0
        %3634 = vmatmul.mubr.bf16.gmra.mrb[0].mxu0 %v3554
        %v3635 = vpop.f32.mrb[0].mxu0
        %v3636 = vadd.f32 0.0, %v3635
        %v3637 = vpop.f32.mrb[0].mxu0
        %v3638 = vpop.f32.mrb[0].mxu0
        %v3639 = vadd.f32 0.0, %v3638
        %v3640 = vpop.f32.mrb[0].mxu0
        %3641 = vmatprep.mubr.bf16.mxu0 0
        %3642 = vmatmul.mubr.bf16.gmra.mrb[0].mxu0 %v3557
        %v3643 = vpop.f32.mrb[0].mxu0
        %v3644 = vadd.f32 0.0, %v3643
        %v3645 = vpop.f32.mrb[0].mxu0
        %v3646 = vpop.f32.mrb[0].mxu0
        %v3647 = vadd.f32 0.0, %v3646
        %v3648 = vpop.f32.mrb[0].mxu0
        %3649 = vmatprep.mubr.bf16.mxu0 0
        %3650 = vmatmul.mubr.bf16.gmra.mrb[0].mxu0 %v3560
        %v3651 = vpop.f32.mrb[0].mxu0
        %v3652 = vadd.f32 0.0, %v3651
        %v3653 = vpop.f32.mrb[0].mxu0
        %v3654 = vpop.f32.mrb[0].mxu0
        %v3655 = vadd.f32 0.0, %v3654
        %v3656 = vpop.f32.mrb[0].mxu0
        %3657 = vmatprep.mubr.bf16.mxu0 0
        %3658 = vmatmul.mubr.bf16.gmra.mrb[0].mxu0 %v3563
        %v3659 = vpop.f32.mrb[0].mxu0
        %v3660 = vadd.f32 0.0, %v3659
        %v3661 = vpop.f32.mrb[0].mxu0
        %v3662 = vpop.f32.mrb[0].mxu0
        %v3663 = vadd.f32 0.0, %v3662
        %v3664 = vpop.f32.mrb[0].mxu0
        %3665 = vmatprep.mubr.bf16.mxu0 0
        %3666 = vmatmul.mubr.bf16.gmra.mrb[0].mxu0 %v3566
        %v3667 = vpop.f32.mrb[0].mxu0
        %v3668 = vadd.f32 0.0, %v3667
        %v3669 = vpop.f32.mrb[0].mxu0
        %v3670 = vpop.f32.mrb[0].mxu0
        %v3671 = vadd.f32 0.0, %v3670
        %v3672 = vpop.f32.mrb[0].mxu0
        %3673 = vmatprep.mubr.bf16.mxu0 0
        %3674 = vmatmul.mubr.bf16.gmra.mrb[0].mxu0 %v3569
        %v3675 = vpop.f32.mrb[0].mxu0
        %v3676 = vadd.f32 0.0, %v3675
        %v3677 = vpop.f32.mrb[0].mxu0
        %v3678 = vpop.f32.mrb[0].mxu0
        %v3679 = vadd.f32 0.0, %v3678
        %v3680 = vpop.f32.mrb[0].mxu0
        %3681 = vmatprep.mubr.bf16.mxu0 0
        %3682 = vmatmul.mubr.bf16.gmra.mrb[0].mxu0 %v3572
        %v3683 = vpop.f32.mrb[0].mxu0
        %v3684 = vadd.f32 0.0, %v3683
        %v3685 = vpop.f32.mrb[0].mxu0
        %v3686 = vpop.f32.mrb[0].mxu0
        %v3687 = vadd.f32 0.0, %v3686
        %v3688 = vpop.f32.mrb[0].mxu0
        %3689 = vmatprep.mubr.bf16.mxu0 0
        %3690 = vmatmul.mubr.bf16.gmra.mrb[0].mxu0 %v3575
        %v3691 = vpop.f32.mrb[0].mxu0
        %v3692 = vadd.f32 0.0, %v3691
        %v3693 = vpop.f32.mrb[0].mxu0
        %v3694 = vpop.f32.mrb[0].mxu0
        %v3695 = vadd.f32 0.0, %v3694
        %v3696 = vpop.f32.mrb[0].mxu0
        %3697 = vdwg.mxu0
        %v3698 = vsel %vm3014, %v3636, -inf
        %v3699 = vsel %vm3015, %v3639, -inf
        %v3700 = vsel %vm3016, %v3644, -inf
        %v3701 = vsel %vm3017, %v3647, -inf
        %v3702 = vsel %vm3018, %v3652, -inf
        %v3703 = vsel %vm3019, %v3655, -inf
        %v3704 = vsel %vm3020, %v3660, -inf
        %v3705 = vsel %vm3021, %v3663, -inf
        %v3706 = vsel %vm3022, %v3668, -inf
        %v3707 = vsel %vm3023, %v3671, -inf
        %v3708 = vsel %vm3024, %v3676, -inf
        %v3709 = vsel %vm3025, %v3679, -inf
        %v3710 = vsel %vm3026, %v3684, -inf
        %v3711 = vsel %vm3027, %v3687, -inf
        %v3712 = vsel %vm3028, %v3692, -inf
        %v3713 = vsel %vm3029, %v3695, -inf
        %3714 = vmax.xlane.f32.xlu0 %v3698
        %v3715 = vpop.xlane.xlu0 %3714
        %3716 = vmax.xlane.f32.xlu0 %v3699
        %v3717 = vpop.xlane.xlu0 %3716
        %3718 = vmax.xlane.f32.xlu0 %v3700
        %v3719 = vpop.xlane.xlu0 %3718
        %3720 = vmax.xlane.f32.xlu0 %v3701
        %v3721 = vpop.xlane.xlu0 %3720
        %3722 = vmax.xlane.f32.xlu0 %v3702
        %v3723 = vpop.xlane.xlu0 %3722
        %3724 = vmax.xlane.f32.xlu0 %v3703
        %v3725 = vpop.xlane.xlu0 %3724
        %3726 = vmax.xlane.f32.xlu0 %v3704
        %v3727 = vpop.xlane.xlu0 %3726
        %3728 = vmax.xlane.f32.xlu0 %v3705
        %v3729 = vpop.xlane.xlu0 %3728
        %3730 = vmax.xlane.f32.xlu0 %v3706
        %v3731 = vpop.xlane.xlu0 %3730
        %3732 = vmax.xlane.f32.xlu0 %v3707
        %v3733 = vpop.xlane.xlu0 %3732
        %3734 = vmax.xlane.f32.xlu0 %v3708
        %v3735 = vpop.xlane.xlu0 %3734
        %3736 = vmax.xlane.f32.xlu0 %v3709
        %v3737 = vpop.xlane.xlu0 %3736
        %3738 = vmax.xlane.f32.xlu0 %v3710
        %v3739 = vpop.xlane.xlu0 %3738
        %3740 = vmax.xlane.f32.xlu0 %v3711
        %v3741 = vpop.xlane.xlu0 %3740
        %3742 = vmax.xlane.f32.xlu0 %v3712
        %v3743 = vpop.xlane.xlu0 %3742
        %3744 = vmax.xlane.f32.xlu0 %v3713
        %v3745 = vpop.xlane.xlu0 %3744
        %v3746 = vsub.f32 %v3698, %v3715
        %v3747 = vsub.f32 %v3699, %v3717
        %v3748 = vsub.f32 %v3700, %v3719
        %v3749 = vsub.f32 %v3701, %v3721
        %v3750 = vsub.f32 %v3702, %v3723
        %v3751 = vsub.f32 %v3703, %v3725
        %v3752 = vsub.f32 %v3704, %v3727
        %v3753 = vsub.f32 %v3705, %v3729
        %v3754 = vsub.f32 %v3706, %v3731
        %v3755 = vsub.f32 %v3707, %v3733
        %v3756 = vsub.f32 %v3708, %v3735
        %v3757 = vsub.f32 %v3709, %v3737
        %v3758 = vsub.f32 %v3710, %v3739
        %v3759 = vsub.f32 %v3711, %v3741
        %v3760 = vsub.f32 %v3712, %v3743
        %v3761 = vsub.f32 %v3713, %v3745
        %v3762 = vmul.f32 %v3746, 1.442695
        %v3763 = vpow.pop %v3762
        %v3764 = vmul.f32 %v3747, 1.442695
        %v3765 = vpow.pop %v3764
        %v3766 = vmul.f32 %v3748, 1.442695
        %v3767 = vpow.pop %v3766
        %v3768 = vmul.f32 %v3749, 1.442695
        %v3769 = vpow.pop %v3768
        %v3770 = vmul.f32 %v3750, 1.442695
        %v3771 = vpow.pop %v3770
        %v3772 = vmul.f32 %v3751, 1.442695
        %v3773 = vpow.pop %v3772
        %v3774 = vmul.f32 %v3752, 1.442695
        %v3775 = vpow.pop %v3774
        %v3776 = vmul.f32 %v3753, 1.442695
        %v3777 = vpow.pop %v3776
        %v3778 = vmul.f32 %v3754, 1.442695
        %v3779 = vpow.pop %v3778
        %v3780 = vmul.f32 %v3755, 1.442695
        %v3781 = vpow.pop %v3780
        %v3782 = vmul.f32 %v3756, 1.442695
        %v3783 = vpow.pop %v3782
        %v3784 = vmul.f32 %v3757, 1.442695
        %v3785 = vpow.pop %v3784
        %v3786 = vmul.f32 %v3758, 1.442695
        %v3787 = vpow.pop %v3786
        %v3788 = vmul.f32 %v3759, 1.442695
        %v3789 = vpow.pop %v3788
        %v3790 = vmul.f32 %v3760, 1.442695
        %v3791 = vpow.pop %v3790
        %v3792 = vmul.f32 %v3761, 1.442695
        %v3793 = vpow.pop %v3792
        %3794 = vadd.xlane.f32.xlu0 %v3763
        %v3795 = vpop.xlane.xlu0 %3794
        %3796 = vadd.xlane.f32.xlu0 %v3765
        %v3797 = vpop.xlane.xlu0 %3796
        %3798 = vadd.xlane.f32.xlu0 %v3767
        %v3799 = vpop.xlane.xlu0 %3798
        %3800 = vadd.xlane.f32.xlu0 %v3769
        %v3801 = vpop.xlane.xlu0 %3800
        %3802 = vadd.xlane.f32.xlu0 %v3771
        %v3803 = vpop.xlane.xlu0 %3802
        %3804 = vadd.xlane.f32.xlu0 %v3773
        %v3805 = vpop.xlane.xlu0 %3804
        %3806 = vadd.xlane.f32.xlu0 %v3775
        %v3807 = vpop.xlane.xlu0 %3806
        %3808 = vadd.xlane.f32.xlu0 %v3777
        %v3809 = vpop.xlane.xlu0 %3808
        %3810 = vadd.xlane.f32.xlu0 %v3779
        %v3811 = vpop.xlane.xlu0 %3810
        %3812 = vadd.xlane.f32.xlu0 %v3781
        %v3813 = vpop.xlane.xlu0 %3812
        %3814 = vadd.xlane.f32.xlu0 %v3783
        %v3815 = vpop.xlane.xlu0 %3814
        %3816 = vadd.xlane.f32.xlu0 %v3785
        %v3817 = vpop.xlane.xlu0 %3816
        %3818 = vadd.xlane.f32.xlu0 %v3787
        %v3819 = vpop.xlane.xlu0 %3818
        %3820 = vadd.xlane.f32.xlu0 %v3789
        %v3821 = vpop.xlane.xlu0 %3820
        %3822 = vadd.xlane.f32.xlu0 %v3791
        %v3823 = vpop.xlane.xlu0 %3822
        %3824 = vadd.xlane.f32.xlu0 %v3793
        %v3825 = vpop.xlane.xlu0 %3824
        %v3826 = vrcp.pop %v3795
        %v3827 = vmul.f32 %v3763, %v3826
        %v3828 = vrcp.pop %v3797
        %v3829 = vmul.f32 %v3765, %v3828
        %v3830 = vrcp.pop %v3799
        %v3831 = vmul.f32 %v3767, %v3830
        %v3832 = vrcp.pop %v3801
        %v3833 = vmul.f32 %v3769, %v3832
        %v3834 = vrcp.pop %v3803
        %v3835 = vmul.f32 %v3771, %v3834
        %v3836 = vrcp.pop %v3805
        %v3837 = vmul.f32 %v3773, %v3836
        %v3838 = vrcp.pop %v3807
        %v3839 = vmul.f32 %v3775, %v3838
        %v3840 = vrcp.pop %v3809
        %v3841 = vmul.f32 %v3777, %v3840
        %v3842 = vrcp.pop %v3811
        %v3843 = vmul.f32 %v3779, %v3842
        %v3844 = vrcp.pop %v3813
        %v3845 = vmul.f32 %v3781, %v3844
        %v3846 = vrcp.pop %v3815
        %v3847 = vmul.f32 %v3783, %v3846
        %v3848 = vrcp.pop %v3817
        %v3849 = vmul.f32 %v3785, %v3848
        %v3850 = vrcp.pop %v3819
        %v3851 = vmul.f32 %v3787, %v3850
        %v3852 = vrcp.pop %v3821
        %v3853 = vmul.f32 %v3789, %v3852
        %v3854 = vrcp.pop %v3823
        %v3855 = vmul.f32 %v3791, %v3854
        %v3856 = vrcp.pop %v3825
        %v3857 = vmul.f32 %v3793, %v3856
        %v3858 = vpack.c.bf16 %v3829, %v3827
        %v3859 = vpack.c.bf16 %v3833, %v3831
        %v3860 = vpack.c.bf16 %v3837, %v3835
        %v3861 = vpack.c.bf16 %v3841, %v3839
        %v3862 = vpack.c.bf16 %v3845, %v3843
        %v3863 = vpack.c.bf16 %v3849, %v3847
        %v3864 = vpack.c.bf16 %v3853, %v3851
        %v3865 = vpack.c.bf16 %v3857, %v3855
        %3874 = vrot.lane.b32.xlu0 %v3497, 64
        %v3875 = vpop.permute.xlu0 %3874
        %3876 = vrot.lane.b32.xlu0 %v3498, 64
        %v3877 = vpop.permute.xlu0 %3876
        %3878 = vrot.lane.b32.xlu0 %v3499, 64
        %v3879 = vpop.permute.xlu0 %3878
        %3880 = vrot.lane.b32.xlu0 %v3500, 64
        %v3881 = vpop.permute.xlu0 %3880
        %3882 = vrot.lane.b32.xlu0 %v3501, 64
        %v3883 = vpop.permute.xlu0 %3882
        %3884 = vrot.lane.b32.xlu0 %v3502, 64
        %v3885 = vpop.permute.xlu0 %3884
        %3886 = vrot.lane.b32.xlu0 %v3503, 64
        %v3887 = vpop.permute.xlu0 %3886
        %3888 = vrot.lane.b32.xlu0 %v3504, 64
        %v3889 = vpop.permute.xlu0 %3888
        %3898 = vmatprep.subr.bf16.mxu0 0
        %3899 = vmatpush1.bf16.msra.mxu0 %v3875
        %3900 = vmatprep.subr.bf16.mxu0 0
        %3901 = vmatpush1.bf16.msra.mxu0 %v3877
        %3902 = vmatprep.subr.bf16.mxu0 0
        %3903 = vmatpush1.bf16.msra.mxu0 %v3879
        %3904 = vmatprep.subr.bf16.mxu0 0
        %3905 = vmatpush1.bf16.msra.mxu0 %v3881
        %3906 = vmatprep.subr.bf16.mxu0 0
        %3907 = vmatpush1.bf16.msra.mxu0 %v3883
        %3908 = vmatprep.subr.bf16.mxu0 0
        %3909 = vmatpush1.bf16.msra.mxu0 %v3885
        %3910 = vmatprep.subr.bf16.mxu0 0
        %3911 = vmatpush1.bf16.msra.mxu0 %v3887
        %3912 = vmatprep.subr.bf16.mxu0 0
        %3913 = vmatpush1.bf16.msra.mxu0 %v3889
        %3914 = vmatprep.subr.bf16.mxu0 0
        %3915 = vmatpush1.bf16.msra.mxu0 0
        %3916 = vmatprep.subr.bf16.mxu0 0
        %3917 = vmatpush1.bf16.msra.mxu0 0
        %3918 = vmatprep.subr.bf16.mxu0 0
        %3919 = vmatpush1.bf16.msra.mxu0 0
        %3920 = vmatprep.subr.bf16.mxu0 0
        %3921 = vmatpush1.bf16.msra.mxu0 0
        %3922 = vmatprep.subr.bf16.mxu0 0
        %3923 = vmatpush1.bf16.msra.mxu0 0
        %3924 = vmatprep.subr.bf16.mxu0 0
        %3925 = vmatpush1.bf16.msra.mxu0 0
        %3926 = vmatprep.subr.bf16.mxu0 0
        %3927 = vmatpush1.bf16.msra.mxu0 0
        %3928 = vmatprep.subr.bf16.mxu0 0
        %3929 = vmatpush1.bf16.msra.mxu0 0
        %3930 = vmatprep.mubr.bf16.mxu0 0
        %3931 = vmatmul.mubr.bf16.gmra.mrb[0].mxu0 %v3858
        %v3932 = vpop.f32.mrb[0].mxu0
        %v3933 = vadd.f32 0.0, %v3932
        %v3934 = vpop.f32.mrb[0].mxu0
        %v3935 = vpop.f32.mrb[0].mxu0
        %v3936 = vadd.f32 0.0, %v3935
        %v3937 = vpop.f32.mrb[0].mxu0
        %3938 = vmatprep.mubr.bf16.mxu0 0
        %3939 = vmatmul.mubr.bf16.gmra.mrb[0].mxu0 %v3859
        %v3940 = vpop.f32.mrb[0].mxu0
        %v3941 = vadd.f32 0.0, %v3940
        %v3942 = vpop.f32.mrb[0].mxu0
        %v3943 = vpop.f32.mrb[0].mxu0
        %v3944 = vadd.f32 0.0, %v3943
        %v3945 = vpop.f32.mrb[0].mxu0
        %3946 = vmatprep.mubr.bf16.mxu0 0
        %3947 = vmatmul.mubr.bf16.gmra.mrb[0].mxu0 %v3860
        %v3948 = vpop.f32.mrb[0].mxu0
        %v3949 = vadd.f32 0.0, %v3948
        %v3950 = vpop.f32.mrb[0].mxu0
        %v3951 = vpop.f32.mrb[0].mxu0
        %v3952 = vadd.f32 0.0, %v3951
        %v3953 = vpop.f32.mrb[0].mxu0
        %3954 = vmatprep.mubr.bf16.mxu0 0
        %3955 = vmatmul.mubr.bf16.gmra.mrb[0].mxu0 %v3861
        %v3956 = vpop.f32.mrb[0].mxu0
        %v3957 = vadd.f32 0.0, %v3956
        %v3958 = vpop.f32.mrb[0].mxu0
        %v3959 = vpop.f32.mrb[0].mxu0
        %v3960 = vadd.f32 0.0, %v3959
        %v3961 = vpop.f32.mrb[0].mxu0
        %3962 = vmatprep.mubr.bf16.mxu0 0
        %3963 = vmatmul.mubr.bf16.gmra.mrb[0].mxu0 %v3862
        %v3964 = vpop.f32.mrb[0].mxu0
        %v3965 = vadd.f32 0.0, %v3964
        %v3966 = vpop.f32.mrb[0].mxu0
        %v3967 = vpop.f32.mrb[0].mxu0
        %v3968 = vadd.f32 0.0, %v3967
        %v3969 = vpop.f32.mrb[0].mxu0
        %3970 = vmatprep.mubr.bf16.mxu0 0
        %3971 = vmatmul.mubr.bf16.gmra.mrb[0].mxu0 %v3863
        %v3972 = vpop.f32.mrb[0].mxu0
        %v3973 = vadd.f32 0.0, %v3972
        %v3974 = vpop.f32.mrb[0].mxu0
        %v3975 = vpop.f32.mrb[0].mxu0
        %v3976 = vadd.f32 0.0, %v3975
        %v3977 = vpop.f32.mrb[0].mxu0
        %3978 = vmatprep.mubr.bf16.mxu0 0
        %3979 = vmatmul.mubr.bf16.gmra.mrb[0].mxu0 %v3864
        %v3980 = vpop.f32.mrb[0].mxu0
        %v3981 = vadd.f32 0.0, %v3980
        %v3982 = vpop.f32.mrb[0].mxu0
        %v3983 = vpop.f32.mrb[0].mxu0
        %v3984 = vadd.f32 0.0, %v3983
        %v3985 = vpop.f32.mrb[0].mxu0
        %3986 = vmatprep.mubr.bf16.mxu0 0
        %3987 = vmatmul.mubr.bf16.gmra.mrb[0].mxu0 %v3865
        %v3988 = vpop.f32.mrb[0].mxu0
        %v3989 = vadd.f32 0.0, %v3988
        %v3990 = vpop.f32.mrb[0].mxu0
        %v3991 = vpop.f32.mrb[0].mxu0
        %v3992 = vadd.f32 0.0, %v3991
        %v3993 = vpop.f32.mrb[0].mxu0
        %3994 = vdwg.mxu0
        %v3995 = vpack.c.bf16 %v3936, %v3933
        %v3996 = vpack.c.bf16 %v3944, %v3941
        %v3997 = vpack.c.bf16 %v3952, %v3949
        %v3998 = vpack.c.bf16 %v3960, %v3957
        %v3999 = vpack.c.bf16 %v3968, %v3965
        %v4000 = vpack.c.bf16 %v3976, %v3973
        %v4001 = vpack.c.bf16 %v3984, %v3981
        %v4002 = vpack.c.bf16 %v3992, %v3989
        %4011 = vrot.lane.b32.xlu0 %v3995, 64
        %v4012 = vpop.permute.xlu0 %4011
        %4013 = vrot.lane.b32.xlu0 %v3996, 64
        %v4014 = vpop.permute.xlu0 %4013
        %4015 = vrot.lane.b32.xlu0 %v3997, 64
        %v4016 = vpop.permute.xlu0 %4015
        %4017 = vrot.lane.b32.xlu0 %v3998, 64
        %v4018 = vpop.permute.xlu0 %4017
        %4019 = vrot.lane.b32.xlu0 %v3999, 64
        %v4020 = vpop.permute.xlu0 %4019
        %4021 = vrot.lane.b32.xlu0 %v4000, 64
        %v4022 = vpop.permute.xlu0 %4021
        %4023 = vrot.lane.b32.xlu0 %v4001, 64
        %v4024 = vpop.permute.xlu0 %4023
        %4025 = vrot.lane.b32.xlu0 %v4002, 64
        %v4026 = vpop.permute.xlu0 %4025
        %vm4035 = vcmask 1048064
        %4036 = vst.msk [vmem:[#allocation3] sm:$0xff] %vm4035, %v4012
        %4037 = vst.msk [vmem:[#allocation3 + $0x18] sm:$0xff] %vm4035, %v4014
        %4038 = vst.msk [vmem:[#allocation3 + $0x30] sm:$0xff] %vm4035, %v4016
        %4039 = vst.msk [vmem:[#allocation3 + $0x48] sm:$0xff] %vm4035, %v4018
        %4040 = vst.msk [vmem:[#allocation3 + $0x60] sm:$0xff] %vm4035, %v4020
        %4041 = vst.msk [vmem:[#allocation3 + $0x78] sm:$0xff] %vm4035, %v4022
        %4042 = vst.msk [vmem:[#allocation3 + $0x90] sm:$0xff] %vm4035, %v4024
        %4043 = vst.msk [vmem:[#allocation3 + $0xa8] sm:$0xff] %vm4035, %v4026
        %v4044 = vld [vmem:[#allocation2 + $0x8] sm:$0xff]
        %v4045 = vld [vmem:[#allocation2 + $0x50] sm:$0xff]
        %v4046 = vld [vmem:[#allocation2 + $0x98] sm:$0xff]
        %v4047 = vld [vmem:[#allocation2 + $0xe0] sm:$0xff]
        %v4048 = vld [vmem:[#allocation2 + $0x128] sm:$0xff]
        %v4049 = vld [vmem:[#allocation2 + $0x170] sm:$0xff]
        %v4050 = vld [vmem:[#allocation2 + $0x1b8] sm:$0xff]
        %v4051 = vld [vmem:[#allocation2 + $0x200] sm:$0xff]
        %v4052 = vld [vmem:[#allocation2 + $0x20] sm:$0xff]
        %v4053 = vld [vmem:[#allocation2 + $0x68] sm:$0xff]
        %v4054 = vld [vmem:[#allocation2 + $0xb0] sm:$0xff]
        %v4055 = vld [vmem:[#allocation2 + $0xf8] sm:$0xff]
        %v4056 = vld [vmem:[#allocation2 + $0x140] sm:$0xff]
        %v4057 = vld [vmem:[#allocation2 + $0x188] sm:$0xff]
        %v4058 = vld [vmem:[#allocation2 + $0x1d0] sm:$0xff]
        %v4059 = vld [vmem:[#allocation2 + $0x218] sm:$0xff]
        %v4060 = vld [vmem:[#allocation2 + $0x38] sm:$0xff]
        %v4061 = vld [vmem:[#allocation2 + $0x80] sm:$0xff]
        %v4062 = vld [vmem:[#allocation2 + $0xc8] sm:$0xff]
        %v4063 = vld [vmem:[#allocation2 + $0x110] sm:$0xff]
        %v4064 = vld [vmem:[#allocation2 + $0x158] sm:$0xff]
        %v4065 = vld [vmem:[#allocation2 + $0x1a0] sm:$0xff]
        %v4066 = vld [vmem:[#allocation2 + $0x1e8] sm:$0xff]
        %v4067 = vld [vmem:[#allocation2 + $0x230] sm:$0xff]
        %v4069 = vsel %vm3054, %v4044, 0
        %v4072 = vsel %vm3054, %v4045, 0
        %v4075 = vsel %vm3054, %v4046, 0
        %v4078 = vsel %vm3054, %v4047, 0
        %v4081 = vsel %vm3054, %v4048, 0
        %v4084 = vsel %vm3054, %v4049, 0
        %v4087 = vsel %vm3054, %v4050, 0
        %v4090 = vsel %vm3054, %v4051, 0
        %v4093 = vsel %vm3054, %v4052, 0
        %v4096 = vsel %vm3054, %v4053, 0
        %v4099 = vsel %vm3054, %v4054, 0
        %v4102 = vsel %vm3054, %v4055, 0
        %v4105 = vsel %vm3054, %v4056, 0
        %v4108 = vsel %vm3054, %v4057, 0
        %v4111 = vsel %vm3054, %v4058, 0
        %v4114 = vsel %vm3054, %v4059, 0
        %4116 = vmatprep.subr.bf16.mxu0 0
        %4117 = vmatpush1.bf16.xpose.msra.mxu0 %v4093
        %4118 = vmatprep.subr.bf16.mxu0 0
        %4119 = vmatpush1.bf16.xpose.msra.mxu0 %v4096
        %4120 = vmatprep.subr.bf16.mxu0 0
        %4121 = vmatpush1.bf16.xpose.msra.mxu0 %v4099
        %4122 = vmatprep.subr.bf16.mxu0 0
        %4123 = vmatpush1.bf16.xpose.msra.mxu0 %v4102
        %4124 = vmatprep.subr.bf16.mxu0 0
        %4125 = vmatpush1.bf16.xpose.msra.mxu0 %v4105
        %4126 = vmatprep.subr.bf16.mxu0 0
        %4127 = vmatpush1.bf16.xpose.msra.mxu0 %v4108
        %4128 = vmatprep.subr.bf16.mxu0 0
        %4129 = vmatpush1.bf16.xpose.msra.mxu0 %v4111
        %4130 = vmatprep.subr.bf16.mxu0 0
        %4131 = vmatpush1.bf16.xpose.msra.mxu0 %v4114
        %4132 = vmatprep.subr.bf16.mxu0 0
        %4133 = vmatpush1.bf16.xpose.msra.mxu0 0
        %4134 = vmatprep.subr.bf16.mxu0 0
        %4135 = vmatpush1.bf16.xpose.msra.mxu0 0
        %4136 = vmatprep.subr.bf16.mxu0 0
        %4137 = vmatpush1.bf16.xpose.msra.mxu0 0
        %4138 = vmatprep.subr.bf16.mxu0 0
        %4139 = vmatpush1.bf16.xpose.msra.mxu0 0
        %4140 = vmatprep.subr.bf16.mxu0 0
        %4141 = vmatpush1.bf16.xpose.msra.mxu0 0
        %4142 = vmatprep.subr.bf16.mxu0 0
        %4143 = vmatpush1.bf16.xpose.msra.mxu0 0
        %4144 = vmatprep.subr.bf16.mxu0 0
        %4145 = vmatpush1.bf16.xpose.msra.mxu0 0
        %4146 = vmatprep.subr.bf16.mxu0 0
        %4147 = vmatpush1.bf16.xpose.msra.mxu0 0
        %4148 = vmatprep.mubr.bf16.mxu0 0
        %4149 = vmatmul.mubr.bf16.gmra.mrb[0].mxu0 %v4069
        %v4150 = vpop.f32.mrb[0].mxu0
        %v4151 = vadd.f32 0.0, %v4150
        %v4152 = vpop.f32.mrb[0].mxu0
        %v4153 = vpop.f32.mrb[0].mxu0
        %v4154 = vadd.f32 0.0, %v4153
        %v4155 = vpop.f32.mrb[0].mxu0
        %4156 = vmatprep.mubr.bf16.mxu0 0
        %4157 = vmatmul.mubr.bf16.gmra.mrb[0].mxu0 %v4072
        %v4158 = vpop.f32.mrb[0].mxu0
        %v4159 = vadd.f32 0.0, %v4158
        %v4160 = vpop.f32.mrb[0].mxu0
        %v4161 = vpop.f32.mrb[0].mxu0
        %v4162 = vadd.f32 0.0, %v4161
        %v4163 = vpop.f32.mrb[0].mxu0
        %4164 = vmatprep.mubr.bf16.mxu0 0
        %4165 = vmatmul.mubr.bf16.gmra.mrb[0].mxu0 %v4075
        %v4166 = vpop.f32.mrb[0].mxu0
        %v4167 = vadd.f32 0.0, %v4166
        %v4168 = vpop.f32.mrb[0].mxu0
        %v4169 = vpop.f32.mrb[0].mxu0
        %v4170 = vadd.f32 0.0, %v4169
        %v4171 = vpop.f32.mrb[0].mxu0
        %4172 = vmatprep.mubr.bf16.mxu0 0
        %4173 = vmatmul.mubr.bf16.gmra.mrb[0].mxu0 %v4078
        %v4174 = vpop.f32.mrb[0].mxu0
        %v4175 = vadd.f32 0.0, %v4174
        %v4176 = vpop.f32.mrb[0].mxu0
        %v4177 = vpop.f32.mrb[0].mxu0
        %v4178 = vadd.f32 0.0, %v4177
        %v4179 = vpop.f32.mrb[0].mxu0
        %4180 = vmatprep.mubr.bf16.mxu0 0
        %4181 = vmatmul.mubr.bf16.gmra.mrb[0].mxu0 %v4081
        %v4182 = vpop.f32.mrb[0].mxu0
        %v4183 = vadd.f32 0.0, %v4182
        %v4184 = vpop.f32.mrb[0].mxu0
        %v4185 = vpop.f32.mrb[0].mxu0
        %v4186 = vadd.f32 0.0, %v4185
        %v4187 = vpop.f32.mrb[0].mxu0
        %4188 = vmatprep.mubr.bf16.mxu0 0
        %4189 = vmatmul.mubr.bf16.gmra.mrb[0].mxu0 %v4084
        %v4190 = vpop.f32.mrb[0].mxu0
        %v4191 = vadd.f32 0.0, %v4190
        %v4192 = vpop.f32.mrb[0].mxu0
        %v4193 = vpop.f32.mrb[0].mxu0
        %v4194 = vadd.f32 0.0, %v4193
        %v4195 = vpop.f32.mrb[0].mxu0
        %4196 = vmatprep.mubr.bf16.mxu0 0
        %4197 = vmatmul.mubr.bf16.gmra.mrb[0].mxu0 %v4087
        %v4198 = vpop.f32.mrb[0].mxu0
        %v4199 = vadd.f32 0.0, %v4198
        %v4200 = vpop.f32.mrb[0].mxu0
        %v4201 = vpop.f32.mrb[0].mxu0
        %v4202 = vadd.f32 0.0, %v4201
        %v4203 = vpop.f32.mrb[0].mxu0
        %4204 = vmatprep.mubr.bf16.mxu0 0
        %4205 = vmatmul.mubr.bf16.gmra.mrb[0].mxu0 %v4090
        %v4206 = vpop.f32.mrb[0].mxu0
        %v4207 = vadd.f32 0.0, %v4206
        %v4208 = vpop.f32.mrb[0].mxu0
        %v4209 = vpop.f32.mrb[0].mxu0
        %v4210 = vadd.f32 0.0, %v4209
        %v4211 = vpop.f32.mrb[0].mxu0
        %4212 = vdwg.mxu0
        %v4213 = vsel %vm3014, %v4151, -inf
        %v4214 = vsel %vm3015, %v4154, -inf
        %v4215 = vsel %vm3016, %v4159, -inf
        %v4216 = vsel %vm3017, %v4162, -inf
        %v4217 = vsel %vm3018, %v4167, -inf
        %v4218 = vsel %vm3019, %v4170, -inf
        %v4219 = vsel %vm3020, %v4175, -inf
        %v4220 = vsel %vm3021, %v4178, -inf
        %v4221 = vsel %vm3022, %v4183, -inf
        %v4222 = vsel %vm3023, %v4186, -inf
        %v4223 = vsel %vm3024, %v4191, -inf
        %v4224 = vsel %vm3025, %v4194, -inf
        %v4225 = vsel %vm3026, %v4199, -inf
        %v4226 = vsel %vm3027, %v4202, -inf
        %v4227 = vsel %vm3028, %v4207, -inf
        %v4228 = vsel %vm3029, %v4210, -inf
        %4229 = vmax.xlane.f32.xlu0 %v4213
        %v4230 = vpop.xlane.xlu0 %4229
        %4231 = vmax.xlane.f32.xlu0 %v4214
        %v4232 = vpop.xlane.xlu0 %4231
        %4233 = vmax.xlane.f32.xlu0 %v4215
        %v4234 = vpop.xlane.xlu0 %4233
        %4235 = vmax.xlane.f32.xlu0 %v4216
        %v4236 = vpop.xlane.xlu0 %4235
        %4237 = vmax.xlane.f32.xlu0 %v4217
        %v4238 = vpop.xlane.xlu0 %4237
        %4239 = vmax.xlane.f32.xlu0 %v4218
        %v4240 = vpop.xlane.xlu0 %4239
        %4241 = vmax.xlane.f32.xlu0 %v4219
        %v4242 = vpop.xlane.xlu0 %4241
        %4243 = vmax.xlane.f32.xlu0 %v4220
        %v4244 = vpop.xlane.xlu0 %4243
        %4245 = vmax.xlane.f32.xlu0 %v4221
        %v4246 = vpop.xlane.xlu0 %4245
        %4247 = vmax.xlane.f32.xlu0 %v4222
        %v4248 = vpop.xlane.xlu0 %4247
        %4249 = vmax.xlane.f32.xlu0 %v4223
        %v4250 = vpop.xlane.xlu0 %4249
        %4251 = vmax.xlane.f32.xlu0 %v4224
        %v4252 = vpop.xlane.xlu0 %4251
        %4253 = vmax.xlane.f32.xlu0 %v4225
        %v4254 = vpop.xlane.xlu0 %4253
        %4255 = vmax.xlane.f32.xlu0 %v4226
        %v4256 = vpop.xlane.xlu0 %4255
        %4257 = vmax.xlane.f32.xlu0 %v4227
        %v4258 = vpop.xlane.xlu0 %4257
        %4259 = vmax.xlane.f32.xlu0 %v4228
        %v4260 = vpop.xlane.xlu0 %4259
        %v4261 = vsub.f32 %v4213, %v4230
        %v4262 = vsub.f32 %v4214, %v4232
        %v4263 = vsub.f32 %v4215, %v4234
        %v4264 = vsub.f32 %v4216, %v4236
        %v4265 = vsub.f32 %v4217, %v4238
        %v4266 = vsub.f32 %v4218, %v4240
        %v4267 = vsub.f32 %v4219, %v4242
        %v4268 = vsub.f32 %v4220, %v4244
        %v4269 = vsub.f32 %v4221, %v4246
        %v4270 = vsub.f32 %v4222, %v4248
        %v4271 = vsub.f32 %v4223, %v4250
        %v4272 = vsub.f32 %v4224, %v4252
        %v4273 = vsub.f32 %v4225, %v4254
        %v4274 = vsub.f32 %v4226, %v4256
        %v4275 = vsub.f32 %v4227, %v4258
        %v4276 = vsub.f32 %v4228, %v4260
        %v4277 = vmul.f32 %v4261, 1.442695
        %v4278 = vpow.pop %v4277
        %v4279 = vmul.f32 %v4262, 1.442695
        %v4280 = vpow.pop %v4279
        %v4281 = vmul.f32 %v4263, 1.442695
        %v4282 = vpow.pop %v4281
        %v4283 = vmul.f32 %v4264, 1.442695
        %v4284 = vpow.pop %v4283
        %v4285 = vmul.f32 %v4265, 1.442695
        %v4286 = vpow.pop %v4285
        %v4287 = vmul.f32 %v4266, 1.442695
        %v4288 = vpow.pop %v4287
        %v4289 = vmul.f32 %v4267, 1.442695
        %v4290 = vpow.pop %v4289
        %v4291 = vmul.f32 %v4268, 1.442695
        %v4292 = vpow.pop %v4291
        %v4293 = vmul.f32 %v4269, 1.442695
        %v4294 = vpow.pop %v4293
        %v4295 = vmul.f32 %v4270, 1.442695
        %v4296 = vpow.pop %v4295
        %v4297 = vmul.f32 %v4271, 1.442695
        %v4298 = vpow.pop %v4297
        %v4299 = vmul.f32 %v4272, 1.442695
        %v4300 = vpow.pop %v4299
        %v4301 = vmul.f32 %v4273, 1.442695
        %v4302 = vpow.pop %v4301
        %v4303 = vmul.f32 %v4274, 1.442695
        %v4304 = vpow.pop %v4303
        %v4305 = vmul.f32 %v4275, 1.442695
        %v4306 = vpow.pop %v4305
        %v4307 = vmul.f32 %v4276, 1.442695
        %v4308 = vpow.pop %v4307
        %4309 = vadd.xlane.f32.xlu0 %v4278
        %v4310 = vpop.xlane.xlu0 %4309
        %4311 = vadd.xlane.f32.xlu0 %v4280
        %v4312 = vpop.xlane.xlu0 %4311
        %4313 = vadd.xlane.f32.xlu0 %v4282
        %v4314 = vpop.xlane.xlu0 %4313
        %4315 = vadd.xlane.f32.xlu0 %v4284
        %v4316 = vpop.xlane.xlu0 %4315
        %4317 = vadd.xlane.f32.xlu0 %v4286
        %v4318 = vpop.xlane.xlu0 %4317
        %4319 = vadd.xlane.f32.xlu0 %v4288
        %v4320 = vpop.xlane.xlu0 %4319
        %4321 = vadd.xlane.f32.xlu0 %v4290
        %v4322 = vpop.xlane.xlu0 %4321
        %4323 = vadd.xlane.f32.xlu0 %v4292
        %v4324 = vpop.xlane.xlu0 %4323
        %4325 = vadd.xlane.f32.xlu0 %v4294
        %v4326 = vpop.xlane.xlu0 %4325
        %4327 = vadd.xlane.f32.xlu0 %v4296
        %v4328 = vpop.xlane.xlu0 %4327
        %4329 = vadd.xlane.f32.xlu0 %v4298
        %v4330 = vpop.xlane.xlu0 %4329
        %4331 = vadd.xlane.f32.xlu0 %v4300
        %v4332 = vpop.xlane.xlu0 %4331
        %4333 = vadd.xlane.f32.xlu0 %v4302
        %v4334 = vpop.xlane.xlu0 %4333
        %4335 = vadd.xlane.f32.xlu0 %v4304
        %v4336 = vpop.xlane.xlu0 %4335
        %4337 = vadd.xlane.f32.xlu0 %v4306
        %v4338 = vpop.xlane.xlu0 %4337
        %4339 = vadd.xlane.f32.xlu0 %v4308
        %v4340 = vpop.xlane.xlu0 %4339
        %v4341 = vrcp.pop %v4310
        %v4342 = vmul.f32 %v4278, %v4341
        %v4343 = vrcp.pop %v4312
        %v4344 = vmul.f32 %v4280, %v4343
        %v4345 = vrcp.pop %v4314
        %v4346 = vmul.f32 %v4282, %v4345
        %v4347 = vrcp.pop %v4316
        %v4348 = vmul.f32 %v4284, %v4347
        %v4349 = vrcp.pop %v4318
        %v4350 = vmul.f32 %v4286, %v4349
        %v4351 = vrcp.pop %v4320
        %v4352 = vmul.f32 %v4288, %v4351
        %v4353 = vrcp.pop %v4322
        %v4354 = vmul.f32 %v4290, %v4353
        %v4355 = vrcp.pop %v4324
        %v4356 = vmul.f32 %v4292, %v4355
        %v4357 = vrcp.pop %v4326
        %v4358 = vmul.f32 %v4294, %v4357
        %v4359 = vrcp.pop %v4328
        %v4360 = vmul.f32 %v4296, %v4359
        %v4361 = vrcp.pop %v4330
        %v4362 = vmul.f32 %v4298, %v4361
        %v4363 = vrcp.pop %v4332
        %v4364 = vmul.f32 %v4300, %v4363
        %v4365 = vrcp.pop %v4334
        %v4366 = vmul.f32 %v4302, %v4365
        %v4367 = vrcp.pop %v4336
        %v4368 = vmul.f32 %v4304, %v4367
        %v4369 = vrcp.pop %v4338
        %v4370 = vmul.f32 %v4306, %v4369
        %v4371 = vrcp.pop %v4340
        %v4372 = vmul.f32 %v4308, %v4371
        %v4373 = vpack.c.bf16 %v4344, %v4342
        %v4374 = vpack.c.bf16 %v4348, %v4346
        %v4375 = vpack.c.bf16 %v4352, %v4350
        %v4376 = vpack.c.bf16 %v4356, %v4354
        %v4377 = vpack.c.bf16 %v4360, %v4358
        %v4378 = vpack.c.bf16 %v4364, %v4362
        %v4379 = vpack.c.bf16 %v4368, %v4366
        %v4380 = vpack.c.bf16 %v4372, %v4370
        %4381 = vmatprep.subr.bf16.mxu0 0
        %4382 = vmatpush1.bf16.msra.mxu0 %v4060
        %4383 = vmatprep.subr.bf16.mxu0 0
        %4384 = vmatpush1.bf16.msra.mxu0 %v4061
        %4385 = vmatprep.subr.bf16.mxu0 0
        %4386 = vmatpush1.bf16.msra.mxu0 %v4062
        %4387 = vmatprep.subr.bf16.mxu0 0
        %4388 = vmatpush1.bf16.msra.mxu0 %v4063
        %4389 = vmatprep.subr.bf16.mxu0 0
        %4390 = vmatpush1.bf16.msra.mxu0 %v4064
        %4391 = vmatprep.subr.bf16.mxu0 0
        %4392 = vmatpush1.bf16.msra.mxu0 %v4065
        %4393 = vmatprep.subr.bf16.mxu0 0
        %4394 = vmatpush1.bf16.msra.mxu0 %v4066
        %4395 = vmatprep.subr.bf16.mxu0 0
        %4396 = vmatpush1.bf16.msra.mxu0 %v4067
        %4397 = vmatprep.subr.bf16.mxu0 0
        %4398 = vmatpush1.bf16.msra.mxu0 0
        %4399 = vmatprep.subr.bf16.mxu0 0
        %4400 = vmatpush1.bf16.msra.mxu0 0
        %4401 = vmatprep.subr.bf16.mxu0 0
        %4402 = vmatpush1.bf16.msra.mxu0 0
        %4403 = vmatprep.subr.bf16.mxu0 0
        %4404 = vmatpush1.bf16.msra.mxu0 0
        %4405 = vmatprep.subr.bf16.mxu0 0
        %4406 = vmatpush1.bf16.msra.mxu0 0
        %4407 = vmatprep.subr.bf16.mxu0 0
        %4408 = vmatpush1.bf16.msra.mxu0 0
        %4409 = vmatprep.subr.bf16.mxu0 0
        %4410 = vmatpush1.bf16.msra.mxu0 0
        %4411 = vmatprep.subr.bf16.mxu0 0
        %4412 = vmatpush1.bf16.msra.mxu0 0
        %4413 = vmatprep.mubr.bf16.mxu0 0
        %4414 = vmatmul.mubr.bf16.gmra.mrb[0].mxu0 %v4373
        %v4415 = vpop.f32.mrb[0].mxu0
        %v4416 = vadd.f32 0.0, %v4415
        %v4417 = vpop.f32.mrb[0].mxu0
        %v4418 = vpop.f32.mrb[0].mxu0
        %v4419 = vadd.f32 0.0, %v4418
        %v4420 = vpop.f32.mrb[0].mxu0
        %4421 = vmatprep.mubr.bf16.mxu0 0
        %4422 = vmatmul.mubr.bf16.gmra.mrb[0].mxu0 %v4374
        %v4423 = vpop.f32.mrb[0].mxu0
        %v4424 = vadd.f32 0.0, %v4423
        %v4425 = vpop.f32.mrb[0].mxu0
        %v4426 = vpop.f32.mrb[0].mxu0
        %v4427 = vadd.f32 0.0, %v4426
        %v4428 = vpop.f32.mrb[0].mxu0
        %4429 = vmatprep.mubr.bf16.mxu0 0
        %4430 = vmatmul.mubr.bf16.gmra.mrb[0].mxu0 %v4375
        %v4431 = vpop.f32.mrb[0].mxu0
        %v4432 = vadd.f32 0.0, %v4431
        %v4433 = vpop.f32.mrb[0].mxu0
        %v4434 = vpop.f32.mrb[0].mxu0
        %v4435 = vadd.f32 0.0, %v4434
        %v4436 = vpop.f32.mrb[0].mxu0
        %4437 = vmatprep.mubr.bf16.mxu0 0
        %4438 = vmatmul.mubr.bf16.gmra.mrb[0].mxu0 %v4376
        %v4439 = vpop.f32.mrb[0].mxu0
        %v4440 = vadd.f32 0.0, %v4439
        %v4441 = vpop.f32.mrb[0].mxu0
        %v4442 = vpop.f32.mrb[0].mxu0
        %v4443 = vadd.f32 0.0, %v4442
        %v4444 = vpop.f32.mrb[0].mxu0
        %4445 = vmatprep.mubr.bf16.mxu0 0
        %4446 = vmatmul.mubr.bf16.gmra.mrb[0].mxu0 %v4377
        %v4447 = vpop.f32.mrb[0].mxu0
        %v4448 = vadd.f32 0.0, %v4447
        %v4449 = vpop.f32.mrb[0].mxu0
        %v4450 = vpop.f32.mrb[0].mxu0
        %v4451 = vadd.f32 0.0, %v4450
        %v4452 = vpop.f32.mrb[0].mxu0
        %4453 = vmatprep.mubr.bf16.mxu0 0
        %4454 = vmatmul.mubr.bf16.gmra.mrb[0].mxu0 %v4378
        %v4455 = vpop.f32.mrb[0].mxu0
        %v4456 = vadd.f32 0.0, %v4455
        %v4457 = vpop.f32.mrb[0].mxu0
        %v4458 = vpop.f32.mrb[0].mxu0
        %v4459 = vadd.f32 0.0, %v4458
        %v4460 = vpop.f32.mrb[0].mxu0
        %4461 = vmatprep.mubr.bf16.mxu0 0
        %4462 = vmatmul.mubr.bf16.gmra.mrb[0].mxu0 %v4379
        %v4463 = vpop.f32.mrb[0].mxu0
        %v4464 = vadd.f32 0.0, %v4463
        %v4465 = vpop.f32.mrb[0].mxu0
        %v4466 = vpop.f32.mrb[0].mxu0
        %v4467 = vadd.f32 0.0, %v4466
        %v4468 = vpop.f32.mrb[0].mxu0
        %4469 = vmatprep.mubr.bf16.mxu0 0
        %4470 = vmatmul.mubr.bf16.gmra.mrb[0].mxu0 %v4380
        %v4471 = vpop.f32.mrb[0].mxu0
        %v4472 = vadd.f32 0.0, %v4471
        %v4473 = vpop.f32.mrb[0].mxu0
        %v4474 = vpop.f32.mrb[0].mxu0
        %v4475 = vadd.f32 0.0, %v4474
        %v4476 = vpop.f32.mrb[0].mxu0
        %4477 = vdwg.mxu0
        %v4478 = vpack.c.bf16 %v4419, %v4416
        %v4479 = vpack.c.bf16 %v4427, %v4424
        %v4480 = vpack.c.bf16 %v4435, %v4432
        %v4481 = vpack.c.bf16 %v4443, %v4440
        %v4482 = vpack.c.bf16 %v4451, %v4448
        %v4483 = vpack.c.bf16 %v4459, %v4456
        %v4484 = vpack.c.bf16 %v4467, %v4464
        %v4485 = vpack.c.bf16 %v4475, %v4472
        %4486 = vst.msk [vmem:[#allocation3 + $0x8] sm:$0xff] %vm3054, %v4478
        %4487 = vst.msk [vmem:[#allocation3 + $0x20] sm:$0xff] %vm3054, %v4479
        %4488 = vst.msk [vmem:[#allocation3 + $0x38] sm:$0xff] %vm3054, %v4480
        %4489 = vst.msk [vmem:[#allocation3 + $0x50] sm:$0xff] %vm3054, %v4481
        %4490 = vst.msk [vmem:[#allocation3 + $0x68] sm:$0xff] %vm3054, %v4482
        %4491 = vst.msk [vmem:[#allocation3 + $0x80] sm:$0xff] %vm3054, %v4483
        %4492 = vst.msk [vmem:[#allocation3 + $0x98] sm:$0xff] %vm3054, %v4484
        %4493 = vst.msk [vmem:[#allocation3 + $0xb0] sm:$0xff] %vm3054, %v4485
        %v4494 = vld [vmem:[#allocation2 + $0x8] sm:$0xff]
        %v4495 = vld [vmem:[#allocation2 + $0x50] sm:$0xff]
        %v4496 = vld [vmem:[#allocation2 + $0x98] sm:$0xff]
        %v4497 = vld [vmem:[#allocation2 + $0xe0] sm:$0xff]
        %v4498 = vld [vmem:[#allocation2 + $0x128] sm:$0xff]
        %v4499 = vld [vmem:[#allocation2 + $0x170] sm:$0xff]
        %v4500 = vld [vmem:[#allocation2 + $0x1b8] sm:$0xff]
        %v4501 = vld [vmem:[#allocation2 + $0x200] sm:$0xff]
        %v4502 = vld [vmem:[#allocation2 + $0x20] sm:$0xff]
        %v4503 = vld [vmem:[#allocation2 + $0x68] sm:$0xff]
        %v4504 = vld [vmem:[#allocation2 + $0xb0] sm:$0xff]
        %v4505 = vld [vmem:[#allocation2 + $0xf8] sm:$0xff]
        %v4506 = vld [vmem:[#allocation2 + $0x140] sm:$0xff]
        %v4507 = vld [vmem:[#allocation2 + $0x188] sm:$0xff]
        %v4508 = vld [vmem:[#allocation2 + $0x1d0] sm:$0xff]
        %v4509 = vld [vmem:[#allocation2 + $0x218] sm:$0xff]
        %v4510 = vld [vmem:[#allocation2 + $0x38] sm:$0xff]
        %v4511 = vld [vmem:[#allocation2 + $0x80] sm:$0xff]
        %v4512 = vld [vmem:[#allocation2 + $0xc8] sm:$0xff]
        %v4513 = vld [vmem:[#allocation2 + $0x110] sm:$0xff]
        %v4514 = vld [vmem:[#allocation2 + $0x158] sm:$0xff]
        %v4515 = vld [vmem:[#allocation2 + $0x1a0] sm:$0xff]
        %v4516 = vld [vmem:[#allocation2 + $0x1e8] sm:$0xff]
        %v4517 = vld [vmem:[#allocation2 + $0x230] sm:$0xff]
        %4526 = vrot.lane.b32.xlu0 %v4494, 64
        %v4527 = vpop.permute.xlu0 %4526
        %4528 = vrot.lane.b32.xlu0 %v4495, 64
        %v4529 = vpop.permute.xlu0 %4528
        %4530 = vrot.lane.b32.xlu0 %v4496, 64
        %v4531 = vpop.permute.xlu0 %4530
        %4532 = vrot.lane.b32.xlu0 %v4497, 64
        %v4533 = vpop.permute.xlu0 %4532
        %4534 = vrot.lane.b32.xlu0 %v4498, 64
        %v4535 = vpop.permute.xlu0 %4534
        %4536 = vrot.lane.b32.xlu0 %v4499, 64
        %v4537 = vpop.permute.xlu0 %4536
        %4538 = vrot.lane.b32.xlu0 %v4500, 64
        %v4539 = vpop.permute.xlu0 %4538
        %4540 = vrot.lane.b32.xlu0 %v4501, 64
        %v4541 = vpop.permute.xlu0 %4540
        %4550 = vrot.lane.b32.xlu0 %v4502, 64
        %v4551 = vpop.permute.xlu0 %4550
        %4552 = vrot.lane.b32.xlu0 %v4503, 64
        %v4553 = vpop.permute.xlu0 %4552
        %4554 = vrot.lane.b32.xlu0 %v4504, 64
        %v4555 = vpop.permute.xlu0 %4554
        %4556 = vrot.lane.b32.xlu0 %v4505, 64
        %v4557 = vpop.permute.xlu0 %4556
        %4558 = vrot.lane.b32.xlu0 %v4506, 64
        %v4559 = vpop.permute.xlu0 %4558
        %4560 = vrot.lane.b32.xlu0 %v4507, 64
        %v4561 = vpop.permute.xlu0 %4560
        %4562 = vrot.lane.b32.xlu0 %v4508, 64
        %v4563 = vpop.permute.xlu0 %4562
        %4564 = vrot.lane.b32.xlu0 %v4509, 64
        %v4565 = vpop.permute.xlu0 %4564
        %v4567 = vsel %vm3054, %v4527, 0
        %v4570 = vsel %vm3054, %v4529, 0
        %v4573 = vsel %vm3054, %v4531, 0
        %v4576 = vsel %vm3054, %v4533, 0
        %v4579 = vsel %vm3054, %v4535, 0
        %v4582 = vsel %vm3054, %v4537, 0
        %v4585 = vsel %vm3054, %v4539, 0
        %v4588 = vsel %vm3054, %v4541, 0
        %v4591 = vsel %vm3054, %v4551, 0
        %v4594 = vsel %vm3054, %v4553, 0
        %v4597 = vsel %vm3054, %v4555, 0
        %v4600 = vsel %vm3054, %v4557, 0
        %v4603 = vsel %vm3054, %v4559, 0
        %v4606 = vsel %vm3054, %v4561, 0
        %v4609 = vsel %vm3054, %v4563, 0
        %v4612 = vsel %vm3054, %v4565, 0
        %4614 = vmatprep.subr.bf16.mxu0 0
        %4615 = vmatpush1.bf16.xpose.msra.mxu0 %v4591
        %4616 = vmatprep.subr.bf16.mxu0 0
        %4617 = vmatpush1.bf16.xpose.msra.mxu0 %v4594
        %4618 = vmatprep.subr.bf16.mxu0 0
        %4619 = vmatpush1.bf16.xpose.msra.mxu0 %v4597
        %4620 = vmatprep.subr.bf16.mxu0 0
        %4621 = vmatpush1.bf16.xpose.msra.mxu0 %v4600
        %4622 = vmatprep.subr.bf16.mxu0 0
        %4623 = vmatpush1.bf16.xpose.msra.mxu0 %v4603
        %4624 = vmatprep.subr.bf16.mxu0 0
        %4625 = vmatpush1.bf16.xpose.msra.mxu0 %v4606
        %4626 = vmatprep.subr.bf16.mxu0 0
        %4627 = vmatpush1.bf16.xpose.msra.mxu0 %v4609
        %4628 = vmatprep.subr.bf16.mxu0 0
        %4629 = vmatpush1.bf16.xpose.msra.mxu0 %v4612
        %4630 = vmatprep.subr.bf16.mxu0 0
        %4631 = vmatpush1.bf16.xpose.msra.mxu0 0
        %4632 = vmatprep.subr.bf16.mxu0 0
        %4633 = vmatpush1.bf16.xpose.msra.mxu0 0
        %4634 = vmatprep.subr.bf16.mxu0 0
        %4635 = vmatpush1.bf16.xpose.msra.mxu0 0
        %4636 = vmatprep.subr.bf16.mxu0 0
        %4637 = vmatpush1.bf16.xpose.msra.mxu0 0
        %4638 = vmatprep.subr.bf16.mxu0 0
        %4639 = vmatpush1.bf16.xpose.msra.mxu0 0
        %4640 = vmatprep.subr.bf16.mxu0 0
        %4641 = vmatpush1.bf16.xpose.msra.mxu0 0
        %4642 = vmatprep.subr.bf16.mxu0 0
        %4643 = vmatpush1.bf16.xpose.msra.mxu0 0
        %4644 = vmatprep.subr.bf16.mxu0 0
        %4645 = vmatpush1.bf16.xpose.msra.mxu0 0
        %4646 = vmatprep.mubr.bf16.mxu0 0
        %4647 = vmatmul.mubr.bf16.gmra.mrb[0].mxu0 %v4567
        %v4648 = vpop.f32.mrb[0].mxu0
        %v4649 = vadd.f32 0.0, %v4648
        %v4650 = vpop.f32.mrb[0].mxu0
        %v4651 = vpop.f32.mrb[0].mxu0
        %v4652 = vadd.f32 0.0, %v4651
        %v4653 = vpop.f32.mrb[0].mxu0
        %4654 = vmatprep.mubr.bf16.mxu0 0
        %4655 = vmatmul.mubr.bf16.gmra.mrb[0].mxu0 %v4570
        %v4656 = vpop.f32.mrb[0].mxu0
        %v4657 = vadd.f32 0.0, %v4656
        %v4658 = vpop.f32.mrb[0].mxu0
        %v4659 = vpop.f32.mrb[0].mxu0
        %v4660 = vadd.f32 0.0, %v4659
        %v4661 = vpop.f32.mrb[0].mxu0
        %4662 = vmatprep.mubr.bf16.mxu0 0
        %4663 = vmatmul.mubr.bf16.gmra.mrb[0].mxu0 %v4573
        %v4664 = vpop.f32.mrb[0].mxu0
        %v4665 = vadd.f32 0.0, %v4664
        %v4666 = vpop.f32.mrb[0].mxu0
        %v4667 = vpop.f32.mrb[0].mxu0
        %v4668 = vadd.f32 0.0, %v4667
        %v4669 = vpop.f32.mrb[0].mxu0
        %4670 = vmatprep.mubr.bf16.mxu0 0
        %4671 = vmatmul.mubr.bf16.gmra.mrb[0].mxu0 %v4576
        %v4672 = vpop.f32.mrb[0].mxu0
        %v4673 = vadd.f32 0.0, %v4672
        %v4674 = vpop.f32.mrb[0].mxu0
        %v4675 = vpop.f32.mrb[0].mxu0
        %v4676 = vadd.f32 0.0, %v4675
        %v4677 = vpop.f32.mrb[0].mxu0
        %4678 = vmatprep.mubr.bf16.mxu0 0
        %4679 = vmatmul.mubr.bf16.gmra.mrb[0].mxu0 %v4579
        %v4680 = vpop.f32.mrb[0].mxu0
        %v4681 = vadd.f32 0.0, %v4680
        %v4682 = vpop.f32.mrb[0].mxu0
        %v4683 = vpop.f32.mrb[0].mxu0
        %v4684 = vadd.f32 0.0, %v4683
        %v4685 = vpop.f32.mrb[0].mxu0
        %4686 = vmatprep.mubr.bf16.mxu0 0
        %4687 = vmatmul.mubr.bf16.gmra.mrb[0].mxu0 %v4582
        %v4688 = vpop.f32.mrb[0].mxu0
        %v4689 = vadd.f32 0.0, %v4688
        %v4690 = vpop.f32.mrb[0].mxu0
        %v4691 = vpop.f32.mrb[0].mxu0
        %v4692 = vadd.f32 0.0, %v4691
        %v4693 = vpop.f32.mrb[0].mxu0
        %4694 = vmatprep.mubr.bf16.mxu0 0
        %4695 = vmatmul.mubr.bf16.gmra.mrb[0].mxu0 %v4585
        %v4696 = vpop.f32.mrb[0].mxu0
        %v4697 = vadd.f32 0.0, %v4696
        %v4698 = vpop.f32.mrb[0].mxu0
        %v4699 = vpop.f32.mrb[0].mxu0
        %v4700 = vadd.f32 0.0, %v4699
        %v4701 = vpop.f32.mrb[0].mxu0
        %4702 = vmatprep.mubr.bf16.mxu0 0
        %4703 = vmatmul.mubr.bf16.gmra.mrb[0].mxu0 %v4588
        %v4704 = vpop.f32.mrb[0].mxu0
        %v4705 = vadd.f32 0.0, %v4704
        %v4706 = vpop.f32.mrb[0].mxu0
        %v4707 = vpop.f32.mrb[0].mxu0
        %v4708 = vadd.f32 0.0, %v4707
        %v4709 = vpop.f32.mrb[0].mxu0
        %4710 = vdwg.mxu0
        %v4711 = vsel %vm3014, %v4649, -inf
        %v4712 = vsel %vm3015, %v4652, -inf
        %v4713 = vsel %vm3016, %v4657, -inf
        %v4714 = vsel %vm3017, %v4660, -inf
        %v4715 = vsel %vm3018, %v4665, -inf
        %v4716 = vsel %vm3019, %v4668, -inf
        %v4717 = vsel %vm3020, %v4673, -inf
        %v4718 = vsel %vm3021, %v4676, -inf
        %v4719 = vsel %vm3022, %v4681, -inf
        %v4720 = vsel %vm3023, %v4684, -inf
        %v4721 = vsel %vm3024, %v4689, -inf
        %v4722 = vsel %vm3025, %v4692, -inf
        %v4723 = vsel %vm3026, %v4697, -inf
        %v4724 = vsel %vm3027, %v4700, -inf
        %v4725 = vsel %vm3028, %v4705, -inf
        %v4726 = vsel %vm3029, %v4708, -inf
        %4727 = vmax.xlane.f32.xlu0 %v4711
        %v4728 = vpop.xlane.xlu0 %4727
        %4729 = vmax.xlane.f32.xlu0 %v4712
        %v4730 = vpop.xlane.xlu0 %4729
        %4731 = vmax.xlane.f32.xlu0 %v4713
        %v4732 = vpop.xlane.xlu0 %4731
        %4733 = vmax.xlane.f32.xlu0 %v4714
        %v4734 = vpop.xlane.xlu0 %4733
        %4735 = vmax.xlane.f32.xlu0 %v4715
        %v4736 = vpop.xlane.xlu0 %4735
        %4737 = vmax.xlane.f32.xlu0 %v4716
        %v4738 = vpop.xlane.xlu0 %4737
        %4739 = vmax.xlane.f32.xlu0 %v4717
        %v4740 = vpop.xlane.xlu0 %4739
        %4741 = vmax.xlane.f32.xlu0 %v4718
        %v4742 = vpop.xlane.xlu0 %4741
        %4743 = vmax.xlane.f32.xlu0 %v4719
        %v4744 = vpop.xlane.xlu0 %4743
        %4745 = vmax.xlane.f32.xlu0 %v4720
        %v4746 = vpop.xlane.xlu0 %4745
        %4747 = vmax.xlane.f32.xlu0 %v4721
        %v4748 = vpop.xlane.xlu0 %4747
        %4749 = vmax.xlane.f32.xlu0 %v4722
        %v4750 = vpop.xlane.xlu0 %4749
        %4751 = vmax.xlane.f32.xlu0 %v4723
        %v4752 = vpop.xlane.xlu0 %4751
        %4753 = vmax.xlane.f32.xlu0 %v4724
        %v4754 = vpop.xlane.xlu0 %4753
        %4755 = vmax.xlane.f32.xlu0 %v4725
        %v4756 = vpop.xlane.xlu0 %4755
        %4757 = vmax.xlane.f32.xlu0 %v4726
        %v4758 = vpop.xlane.xlu0 %4757
        %v4759 = vsub.f32 %v4711, %v4728
        %v4760 = vsub.f32 %v4712, %v4730
        %v4761 = vsub.f32 %v4713, %v4732
        %v4762 = vsub.f32 %v4714, %v4734
        %v4763 = vsub.f32 %v4715, %v4736
        %v4764 = vsub.f32 %v4716, %v4738
        %v4765 = vsub.f32 %v4717, %v4740
        %v4766 = vsub.f32 %v4718, %v4742
        %v4767 = vsub.f32 %v4719, %v4744
        %v4768 = vsub.f32 %v4720, %v4746
        %v4769 = vsub.f32 %v4721, %v4748
        %v4770 = vsub.f32 %v4722, %v4750
        %v4771 = vsub.f32 %v4723, %v4752
        %v4772 = vsub.f32 %v4724, %v4754
        %v4773 = vsub.f32 %v4725, %v4756
        %v4774 = vsub.f32 %v4726, %v4758
        %v4775 = vmul.f32 %v4759, 1.442695
        %v4776 = vpow.pop %v4775
        %v4777 = vmul.f32 %v4760, 1.442695
        %v4778 = vpow.pop %v4777
        %v4779 = vmul.f32 %v4761, 1.442695
        %v4780 = vpow.pop %v4779
        %v4781 = vmul.f32 %v4762, 1.442695
        %v4782 = vpow.pop %v4781
        %v4783 = vmul.f32 %v4763, 1.442695
        %v4784 = vpow.pop %v4783
        %v4785 = vmul.f32 %v4764, 1.442695
        %v4786 = vpow.pop %v4785
        %v4787 = vmul.f32 %v4765, 1.442695
        %v4788 = vpow.pop %v4787
        %v4789 = vmul.f32 %v4766, 1.442695
        %v4790 = vpow.pop %v4789
        %v4791 = vmul.f32 %v4767, 1.442695
        %v4792 = vpow.pop %v4791
        %v4793 = vmul.f32 %v4768, 1.442695
        %v4794 = vpow.pop %v4793
        %v4795 = vmul.f32 %v4769, 1.442695
        %v4796 = vpow.pop %v4795
        %v4797 = vmul.f32 %v4770, 1.442695
        %v4798 = vpow.pop %v4797
        %v4799 = vmul.f32 %v4771, 1.442695
        %v4800 = vpow.pop %v4799
        %v4801 = vmul.f32 %v4772, 1.442695
        %v4802 = vpow.pop %v4801
        %v4803 = vmul.f32 %v4773, 1.442695
        %v4804 = vpow.pop %v4803
        %v4805 = vmul.f32 %v4774, 1.442695
        %v4806 = vpow.pop %v4805
        %4807 = vadd.xlane.f32.xlu0 %v4776
        %v4808 = vpop.xlane.xlu0 %4807
        %4809 = vadd.xlane.f32.xlu0 %v4778
        %v4810 = vpop.xlane.xlu0 %4809
        %4811 = vadd.xlane.f32.xlu0 %v4780
        %v4812 = vpop.xlane.xlu0 %4811
        %4813 = vadd.xlane.f32.xlu0 %v4782
        %v4814 = vpop.xlane.xlu0 %4813
        %4815 = vadd.xlane.f32.xlu0 %v4784
        %v4816 = vpop.xlane.xlu0 %4815
        %4817 = vadd.xlane.f32.xlu0 %v4786
        %v4818 = vpop.xlane.xlu0 %4817
        %4819 = vadd.xlane.f32.xlu0 %v4788
        %v4820 = vpop.xlane.xlu0 %4819
        %4821 = vadd.xlane.f32.xlu0 %v4790
        %v4822 = vpop.xlane.xlu0 %4821
        %4823 = vadd.xlane.f32.xlu0 %v4792
        %v4824 = vpop.xlane.xlu0 %4823
        %4825 = vadd.xlane.f32.xlu0 %v4794
        %v4826 = vpop.xlane.xlu0 %4825
        %4827 = vadd.xlane.f32.xlu0 %v4796
        %v4828 = vpop.xlane.xlu0 %4827
        %4829 = vadd.xlane.f32.xlu0 %v4798
        %v4830 = vpop.xlane.xlu0 %4829
        %4831 = vadd.xlane.f32.xlu0 %v4800
        %v4832 = vpop.xlane.xlu0 %4831
        %4833 = vadd.xlane.f32.xlu0 %v4802
        %v4834 = vpop.xlane.xlu0 %4833
        %4835 = vadd.xlane.f32.xlu0 %v4804
        %v4836 = vpop.xlane.xlu0 %4835
        %4837 = vadd.xlane.f32.xlu0 %v4806
        %v4838 = vpop.xlane.xlu0 %4837
        %v4839 = vrcp.pop %v4808
        %v4840 = vmul.f32 %v4776, %v4839
        %v4841 = vrcp.pop %v4810
        %v4842 = vmul.f32 %v4778, %v4841
        %v4843 = vrcp.pop %v4812
        %v4844 = vmul.f32 %v4780, %v4843
        %v4845 = vrcp.pop %v4814
        %v4846 = vmul.f32 %v4782, %v4845
        %v4847 = vrcp.pop %v4816
        %v4848 = vmul.f32 %v4784, %v4847
        %v4849 = vrcp.pop %v4818
        %v4850 = vmul.f32 %v4786, %v4849
        %v4851 = vrcp.pop %v4820
        %v4852 = vmul.f32 %v4788, %v4851
        %v4853 = vrcp.pop %v4822
        %v4854 = vmul.f32 %v4790, %v4853
        %v4855 = vrcp.pop %v4824
        %v4856 = vmul.f32 %v4792, %v4855
        %v4857 = vrcp.pop %v4826
        %v4858 = vmul.f32 %v4794, %v4857
        %v4859 = vrcp.pop %v4828
        %v4860 = vmul.f32 %v4796, %v4859
        %v4861 = vrcp.pop %v4830
        %v4862 = vmul.f32 %v4798, %v4861
        %v4863 = vrcp.pop %v4832
        %v4864 = vmul.f32 %v4800, %v4863
        %v4865 = vrcp.pop %v4834
        %v4866 = vmul.f32 %v4802, %v4865
        %v4867 = vrcp.pop %v4836
        %v4868 = vmul.f32 %v4804, %v4867
        %v4869 = vrcp.pop %v4838
        %v4870 = vmul.f32 %v4806, %v4869
        %v4871 = vpack.c.bf16 %v4842, %v4840
        %v4872 = vpack.c.bf16 %v4846, %v4844
        %v4873 = vpack.c.bf16 %v4850, %v4848
        %v4874 = vpack.c.bf16 %v4854, %v4852
        %v4875 = vpack.c.bf16 %v4858, %v4856
        %v4876 = vpack.c.bf16 %v4862, %v4860
        %v4877 = vpack.c.bf16 %v4866, %v4864
        %v4878 = vpack.c.bf16 %v4870, %v4868
        %4887 = vrot.lane.b32.xlu0 %v4510, 64
        %v4888 = vpop.permute.xlu0 %4887
        %4889 = vrot.lane.b32.xlu0 %v4511, 64
        %v4890 = vpop.permute.xlu0 %4889
        %4891 = vrot.lane.b32.xlu0 %v4512, 64
        %v4892 = vpop.permute.xlu0 %4891
        %4893 = vrot.lane.b32.xlu0 %v4513, 64
        %v4894 = vpop.permute.xlu0 %4893
        %4895 = vrot.lane.b32.xlu0 %v4514, 64
        %v4896 = vpop.permute.xlu0 %4895
        %4897 = vrot.lane.b32.xlu0 %v4515, 64
        %v4898 = vpop.permute.xlu0 %4897
        %4899 = vrot.lane.b32.xlu0 %v4516, 64
        %v4900 = vpop.permute.xlu0 %4899
        %4901 = vrot.lane.b32.xlu0 %v4517, 64
        %v4902 = vpop.permute.xlu0 %4901
        %4911 = vmatprep.subr.bf16.mxu0 0
        %4912 = vmatpush1.bf16.msra.mxu0 %v4888
        %4913 = vmatprep.subr.bf16.mxu0 0
        %4914 = vmatpush1.bf16.msra.mxu0 %v4890
        %4915 = vmatprep.subr.bf16.mxu0 0
        %4916 = vmatpush1.bf16.msra.mxu0 %v4892
        %4917 = vmatprep.subr.bf16.mxu0 0
        %4918 = vmatpush1.bf16.msra.mxu0 %v4894
        %4919 = vmatprep.subr.bf16.mxu0 0
        %4920 = vmatpush1.bf16.msra.mxu0 %v4896
        %4921 = vmatprep.subr.bf16.mxu0 0
        %4922 = vmatpush1.bf16.msra.mxu0 %v4898
        %4923 = vmatprep.subr.bf16.mxu0 0
        %4924 = vmatpush1.bf16.msra.mxu0 %v4900
        %4925 = vmatprep.subr.bf16.mxu0 0
        %4926 = vmatpush1.bf16.msra.mxu0 %v4902
        %4927 = vmatprep.subr.bf16.mxu0 0
        %4928 = vmatpush1.bf16.msra.mxu0 0
        %4929 = vmatprep.subr.bf16.mxu0 0
        %4930 = vmatpush1.bf16.msra.mxu0 0
        %4931 = vmatprep.subr.bf16.mxu0 0
        %4932 = vmatpush1.bf16.msra.mxu0 0
        %4933 = vmatprep.subr.bf16.mxu0 0
        %4934 = vmatpush1.bf16.msra.mxu0 0
        %4935 = vmatprep.subr.bf16.mxu0 0
        %4936 = vmatpush1.bf16.msra.mxu0 0
        %4937 = vmatprep.subr.bf16.mxu0 0
        %4938 = vmatpush1.bf16.msra.mxu0 0
        %4939 = vmatprep.subr.bf16.mxu0 0
        %4940 = vmatpush1.bf16.msra.mxu0 0
        %4941 = vmatprep.subr.bf16.mxu0 0
        %4942 = vmatpush1.bf16.msra.mxu0 0
        %4943 = vmatprep.mubr.bf16.mxu0 0
        %4944 = vmatmul.mubr.bf16.gmra.mrb[0].mxu0 %v4871
        %v4945 = vpop.f32.mrb[0].mxu0
        %v4946 = vadd.f32 0.0, %v4945
        %v4947 = vpop.f32.mrb[0].mxu0
        %v4948 = vpop.f32.mrb[0].mxu0
        %v4949 = vadd.f32 0.0, %v4948
        %v4950 = vpop.f32.mrb[0].mxu0
        %4951 = vmatprep.mubr.bf16.mxu0 0
        %4952 = vmatmul.mubr.bf16.gmra.mrb[0].mxu0 %v4872
        %v4953 = vpop.f32.mrb[0].mxu0
        %v4954 = vadd.f32 0.0, %v4953
        %v4955 = vpop.f32.mrb[0].mxu0
        %v4956 = vpop.f32.mrb[0].mxu0
        %v4957 = vadd.f32 0.0, %v4956
        %v4958 = vpop.f32.mrb[0].mxu0
        %4959 = vmatprep.mubr.bf16.mxu0 0
        %4960 = vmatmul.mubr.bf16.gmra.mrb[0].mxu0 %v4873
        %v4961 = vpop.f32.mrb[0].mxu0
        %v4962 = vadd.f32 0.0, %v4961
        %v4963 = vpop.f32.mrb[0].mxu0
        %v4964 = vpop.f32.mrb[0].mxu0
        %v4965 = vadd.f32 0.0, %v4964
        %v4966 = vpop.f32.mrb[0].mxu0
        %4967 = vmatprep.mubr.bf16.mxu0 0
        %4968 = vmatmul.mubr.bf16.gmra.mrb[0].mxu0 %v4874
        %v4969 = vpop.f32.mrb[0].mxu0
        %v4970 = vadd.f32 0.0, %v4969
        %v4971 = vpop.f32.mrb[0].mxu0
        %v4972 = vpop.f32.mrb[0].mxu0
        %v4973 = vadd.f32 0.0, %v4972
        %v4974 = vpop.f32.mrb[0].mxu0
        %4975 = vmatprep.mubr.bf16.mxu0 0
        %4976 = vmatmul.mubr.bf16.gmra.mrb[0].mxu0 %v4875
        %v4977 = vpop.f32.mrb[0].mxu0
        %v4978 = vadd.f32 0.0, %v4977
        %v4979 = vpop.f32.mrb[0].mxu0
        %v4980 = vpop.f32.mrb[0].mxu0
        %v4981 = vadd.f32 0.0, %v4980
        %v4982 = vpop.f32.mrb[0].mxu0
        %4983 = vmatprep.mubr.bf16.mxu0 0
        %4984 = vmatmul.mubr.bf16.gmra.mrb[0].mxu0 %v4876
        %v4985 = vpop.f32.mrb[0].mxu0
        %v4986 = vadd.f32 0.0, %v4985
        %v4987 = vpop.f32.mrb[0].mxu0
        %v4988 = vpop.f32.mrb[0].mxu0
        %v4989 = vadd.f32 0.0, %v4988
        %v4990 = vpop.f32.mrb[0].mxu0
        %4991 = vmatprep.mubr.bf16.mxu0 0
        %4992 = vmatmul.mubr.bf16.gmra.mrb[0].mxu0 %v4877
        %v4993 = vpop.f32.mrb[0].mxu0
        %v4994 = vadd.f32 0.0, %v4993
        %v4995 = vpop.f32.mrb[0].mxu0
        %v4996 = vpop.f32.mrb[0].mxu0
        %v4997 = vadd.f32 0.0, %v4996
        %v4998 = vpop.f32.mrb[0].mxu0
        %4999 = vmatprep.mubr.bf16.mxu0 0
        %5000 = vmatmul.mubr.bf16.gmra.mrb[0].mxu0 %v4878
        %v5001 = vpop.f32.mrb[0].mxu0
        %v5002 = vadd.f32 0.0, %v5001
        %v5003 = vpop.f32.mrb[0].mxu0
        %v5004 = vpop.f32.mrb[0].mxu0
        %v5005 = vadd.f32 0.0, %v5004
        %v5006 = vpop.f32.mrb[0].mxu0
        %5007 = vdwg.mxu0
        %v5008 = vpack.c.bf16 %v4949, %v4946
        %v5009 = vpack.c.bf16 %v4957, %v4954
        %v5010 = vpack.c.bf16 %v4965, %v4962
        %v5011 = vpack.c.bf16 %v4973, %v4970
        %v5012 = vpack.c.bf16 %v4981, %v4978
        %v5013 = vpack.c.bf16 %v4989, %v4986
        %v5014 = vpack.c.bf16 %v4997, %v4994
        %v5015 = vpack.c.bf16 %v5005, %v5002
        %5024 = vrot.lane.b32.xlu0 %v5008, 64
        %v5025 = vpop.permute.xlu0 %5024
        %5026 = vrot.lane.b32.xlu0 %v5009, 64
        %v5027 = vpop.permute.xlu0 %5026
        %5028 = vrot.lane.b32.xlu0 %v5010, 64
        %v5029 = vpop.permute.xlu0 %5028
        %5030 = vrot.lane.b32.xlu0 %v5011, 64
        %v5031 = vpop.permute.xlu0 %5030
        %5032 = vrot.lane.b32.xlu0 %v5012, 64
        %v5033 = vpop.permute.xlu0 %5032
        %5034 = vrot.lane.b32.xlu0 %v5013, 64
        %v5035 = vpop.permute.xlu0 %5034
        %5036 = vrot.lane.b32.xlu0 %v5014, 64
        %v5037 = vpop.permute.xlu0 %5036
        %5038 = vrot.lane.b32.xlu0 %v5015, 64
        %v5039 = vpop.permute.xlu0 %5038
        %5048 = vst.msk [vmem:[#allocation3 + $0x8] sm:$0xff] %vm4035, %v5025
        %5049 = vst.msk [vmem:[#allocation3 + $0x20] sm:$0xff] %vm4035, %v5027
        %5050 = vst.msk [vmem:[#allocation3 + $0x38] sm:$0xff] %vm4035, %v5029
        %5051 = vst.msk [vmem:[#allocation3 + $0x50] sm:$0xff] %vm4035, %v5031
        %5052 = vst.msk [vmem:[#allocation3 + $0x68] sm:$0xff] %vm4035, %v5033
        %5053 = vst.msk [vmem:[#allocation3 + $0x80] sm:$0xff] %vm4035, %v5035
        %5054 = vst.msk [vmem:[#allocation3 + $0x98] sm:$0xff] %vm4035, %v5037
        %5055 = vst.msk [vmem:[#allocation3 + $0xb0] sm:$0xff] %vm4035, %v5039
        %v5056 = vld [vmem:[#allocation2 + $0x10] sm:$0xff]
        %v5057 = vld [vmem:[#allocation2 + $0x58] sm:$0xff]
        %v5058 = vld [vmem:[#allocation2 + $0xa0] sm:$0xff]
        %v5059 = vld [vmem:[#allocation2 + $0xe8] sm:$0xff]
        %v5060 = vld [vmem:[#allocation2 + $0x130] sm:$0xff]
        %v5061 = vld [vmem:[#allocation2 + $0x178] sm:$0xff]
        %v5062 = vld [vmem:[#allocation2 + $0x1c0] sm:$0xff]
        %v5063 = vld [vmem:[#allocation2 + $0x208] sm:$0xff]
        %v5064 = vld [vmem:[#allocation2 + $0x28] sm:$0xff]
        %v5065 = vld [vmem:[#allocation2 + $0x70] sm:$0xff]
        %v5066 = vld [vmem:[#allocation2 + $0xb8] sm:$0xff]
        %v5067 = vld [vmem:[#allocation2 + $0x100] sm:$0xff]
        %v5068 = vld [vmem:[#allocation2 + $0x148] sm:$0xff]
        %v5069 = vld [vmem:[#allocation2 + $0x190] sm:$0xff]
        %v5070 = vld [vmem:[#allocation2 + $0x1d8] sm:$0xff]
        %v5071 = vld [vmem:[#allocation2 + $0x220] sm:$0xff]
        %v5072 = vld [vmem:[#allocation2 + $0x40] sm:$0xff]
        %v5073 = vld [vmem:[#allocation2 + $0x88] sm:$0xff]
        %v5074 = vld [vmem:[#allocation2 + $0xd0] sm:$0xff]
        %v5075 = vld [vmem:[#allocation2 + $0x118] sm:$0xff]
        %v5076 = vld [vmem:[#allocation2 + $0x160] sm:$0xff]
        %v5077 = vld [vmem:[#allocation2 + $0x1a8] sm:$0xff]
        %v5078 = vld [vmem:[#allocation2 + $0x1f0] sm:$0xff]
        %v5079 = vld [vmem:[#allocation2 + $0x238] sm:$0xff]
        %v5081 = vsel %vm3054, %v5056, 0
        %v5084 = vsel %vm3054, %v5057, 0
        %v5087 = vsel %vm3054, %v5058, 0
        %v5090 = vsel %vm3054, %v5059, 0
        %v5093 = vsel %vm3054, %v5060, 0
        %v5096 = vsel %vm3054, %v5061, 0
        %v5099 = vsel %vm3054, %v5062, 0
        %v5102 = vsel %vm3054, %v5063, 0
        %v5105 = vsel %vm3054, %v5064, 0
        %v5108 = vsel %vm3054, %v5065, 0
        %v5111 = vsel %vm3054, %v5066, 0
        %v5114 = vsel %vm3054, %v5067, 0
        %v5117 = vsel %vm3054, %v5068, 0
        %v5120 = vsel %vm3054, %v5069, 0
        %v5123 = vsel %vm3054, %v5070, 0
        %v5126 = vsel %vm3054, %v5071, 0
        %5128 = vmatprep.subr.bf16.mxu0 0
        %5129 = vmatpush1.bf16.xpose.msra.mxu0 %v5105
        %5130 = vmatprep.subr.bf16.mxu0 0
        %5131 = vmatpush1.bf16.xpose.msra.mxu0 %v5108
        %5132 = vmatprep.subr.bf16.mxu0 0
        %5133 = vmatpush1.bf16.xpose.msra.mxu0 %v5111
        %5134 = vmatprep.subr.bf16.mxu0 0
        %5135 = vmatpush1.bf16.xpose.msra.mxu0 %v5114
        %5136 = vmatprep.subr.bf16.mxu0 0
        %5137 = vmatpush1.bf16.xpose.msra.mxu0 %v5117
        %5138 = vmatprep.subr.bf16.mxu0 0
        %5139 = vmatpush1.bf16.xpose.msra.mxu0 %v5120
        %5140 = vmatprep.subr.bf16.mxu0 0
        %5141 = vmatpush1.bf16.xpose.msra.mxu0 %v5123
        %5142 = vmatprep.subr.bf16.mxu0 0
        %5143 = vmatpush1.bf16.xpose.msra.mxu0 %v5126
        %5144 = vmatprep.subr.bf16.mxu0 0
        %5145 = vmatpush1.bf16.xpose.msra.mxu0 0
        %5146 = vmatprep.subr.bf16.mxu0 0
        %5147 = vmatpush1.bf16.xpose.msra.mxu0 0
        %5148 = vmatprep.subr.bf16.mxu0 0
        %5149 = vmatpush1.bf16.xpose.msra.mxu0 0
        %5150 = vmatprep.subr.bf16.mxu0 0
        %5151 = vmatpush1.bf16.xpose.msra.mxu0 0
        %5152 = vmatprep.subr.bf16.mxu0 0
        %5153 = vmatpush1.bf16.xpose.msra.mxu0 0
        %5154 = vmatprep.subr.bf16.mxu0 0
        %5155 = vmatpush1.bf16.xpose.msra.mxu0 0
        %5156 = vmatprep.subr.bf16.mxu0 0
        %5157 = vmatpush1.bf16.xpose.msra.mxu0 0
        %5158 = vmatprep.subr.bf16.mxu0 0
        %5159 = vmatpush1.bf16.xpose.msra.mxu0 0
        %5160 = vmatprep.mubr.bf16.mxu0 0
        %5161 = vmatmul.mubr.bf16.gmra.mrb[0].mxu0 %v5081
        %v5162 = vpop.f32.mrb[0].mxu0
        %v5163 = vadd.f32 0.0, %v5162
        %v5164 = vpop.f32.mrb[0].mxu0
        %v5165 = vpop.f32.mrb[0].mxu0
        %v5166 = vadd.f32 0.0, %v5165
        %v5167 = vpop.f32.mrb[0].mxu0
        %5168 = vmatprep.mubr.bf16.mxu0 0
        %5169 = vmatmul.mubr.bf16.gmra.mrb[0].mxu0 %v5084
        %v5170 = vpop.f32.mrb[0].mxu0
        %v5171 = vadd.f32 0.0, %v5170
        %v5172 = vpop.f32.mrb[0].mxu0
        %v5173 = vpop.f32.mrb[0].mxu0
        %v5174 = vadd.f32 0.0, %v5173
        %v5175 = vpop.f32.mrb[0].mxu0
        %5176 = vmatprep.mubr.bf16.mxu0 0
        %5177 = vmatmul.mubr.bf16.gmra.mrb[0].mxu0 %v5087
        %v5178 = vpop.f32.mrb[0].mxu0
        %v5179 = vadd.f32 0.0, %v5178
        %v5180 = vpop.f32.mrb[0].mxu0
        %v5181 = vpop.f32.mrb[0].mxu0
        %v5182 = vadd.f32 0.0, %v5181
        %v5183 = vpop.f32.mrb[0].mxu0
        %5184 = vmatprep.mubr.bf16.mxu0 0
        %5185 = vmatmul.mubr.bf16.gmra.mrb[0].mxu0 %v5090
        %v5186 = vpop.f32.mrb[0].mxu0
        %v5187 = vadd.f32 0.0, %v5186
        %v5188 = vpop.f32.mrb[0].mxu0
        %v5189 = vpop.f32.mrb[0].mxu0
        %v5190 = vadd.f32 0.0, %v5189
        %v5191 = vpop.f32.mrb[0].mxu0
        %5192 = vmatprep.mubr.bf16.mxu0 0
        %5193 = vmatmul.mubr.bf16.gmra.mrb[0].mxu0 %v5093
        %v5194 = vpop.f32.mrb[0].mxu0
        %v5195 = vadd.f32 0.0, %v5194
        %v5196 = vpop.f32.mrb[0].mxu0
        %v5197 = vpop.f32.mrb[0].mxu0
        %v5198 = vadd.f32 0.0, %v5197
        %v5199 = vpop.f32.mrb[0].mxu0
        %5200 = vmatprep.mubr.bf16.mxu0 0
        %5201 = vmatmul.mubr.bf16.gmra.mrb[0].mxu0 %v5096
        %v5202 = vpop.f32.mrb[0].mxu0
        %v5203 = vadd.f32 0.0, %v5202
        %v5204 = vpop.f32.mrb[0].mxu0
        %v5205 = vpop.f32.mrb[0].mxu0
        %v5206 = vadd.f32 0.0, %v5205
        %v5207 = vpop.f32.mrb[0].mxu0
        %5208 = vmatprep.mubr.bf16.mxu0 0
        %5209 = vmatmul.mubr.bf16.gmra.mrb[0].mxu0 %v5099
        %v5210 = vpop.f32.mrb[0].mxu0
        %v5211 = vadd.f32 0.0, %v5210
        %v5212 = vpop.f32.mrb[0].mxu0
        %v5213 = vpop.f32.mrb[0].mxu0
        %v5214 = vadd.f32 0.0, %v5213
        %v5215 = vpop.f32.mrb[0].mxu0
        %5216 = vmatprep.mubr.bf16.mxu0 0
        %5217 = vmatmul.mubr.bf16.gmra.mrb[0].mxu0 %v5102
        %v5218 = vpop.f32.mrb[0].mxu0
        %v5219 = vadd.f32 0.0, %v5218
        %v5220 = vpop.f32.mrb[0].mxu0
        %v5221 = vpop.f32.mrb[0].mxu0
        %v5222 = vadd.f32 0.0, %v5221
        %v5223 = vpop.f32.mrb[0].mxu0
        %5224 = vdwg.mxu0
        %v5225 = vsel %vm3014, %v5163, -inf
        %v5226 = vsel %vm3015, %v5166, -inf
        %v5227 = vsel %vm3016, %v5171, -inf
        %v5228 = vsel %vm3017, %v5174, -inf
        %v5229 = vsel %vm3018, %v5179, -inf
        %v5230 = vsel %vm3019, %v5182, -inf
        %v5231 = vsel %vm3020, %v5187, -inf
        %v5232 = vsel %vm3021, %v5190, -inf
        %v5233 = vsel %vm3022, %v5195, -inf
        %v5234 = vsel %vm3023, %v5198, -inf
        %v5235 = vsel %vm3024, %v5203, -inf
        %v5236 = vsel %vm3025, %v5206, -inf
        %v5237 = vsel %vm3026, %v5211, -inf
        %v5238 = vsel %vm3027, %v5214, -inf
        %v5239 = vsel %vm3028, %v5219, -inf
        %v5240 = vsel %vm3029, %v5222, -inf
        %5241 = vmax.xlane.f32.xlu0 %v5225
        %v5242 = vpop.xlane.xlu0 %5241
        %5243 = vmax.xlane.f32.xlu0 %v5226
        %v5244 = vpop.xlane.xlu0 %5243
        %5245 = vmax.xlane.f32.xlu0 %v5227
        %v5246 = vpop.xlane.xlu0 %5245
        %5247 = vmax.xlane.f32.xlu0 %v5228
        %v5248 = vpop.xlane.xlu0 %5247
        %5249 = vmax.xlane.f32.xlu0 %v5229
        %v5250 = vpop.xlane.xlu0 %5249
        %5251 = vmax.xlane.f32.xlu0 %v5230
        %v5252 = vpop.xlane.xlu0 %5251
        %5253 = vmax.xlane.f32.xlu0 %v5231
        %v5254 = vpop.xlane.xlu0 %5253
        %5255 = vmax.xlane.f32.xlu0 %v5232
        %v5256 = vpop.xlane.xlu0 %5255
        %5257 = vmax.xlane.f32.xlu0 %v5233
        %v5258 = vpop.xlane.xlu0 %5257
        %5259 = vmax.xlane.f32.xlu0 %v5234
        %v5260 = vpop.xlane.xlu0 %5259
        %5261 = vmax.xlane.f32.xlu0 %v5235
        %v5262 = vpop.xlane.xlu0 %5261
        %5263 = vmax.xlane.f32.xlu0 %v5236
        %v5264 = vpop.xlane.xlu0 %5263
        %5265 = vmax.xlane.f32.xlu0 %v5237
        %v5266 = vpop.xlane.xlu0 %5265
        %5267 = vmax.xlane.f32.xlu0 %v5238
        %v5268 = vpop.xlane.xlu0 %5267
        %5269 = vmax.xlane.f32.xlu0 %v5239
        %v5270 = vpop.xlane.xlu0 %5269
        %5271 = vmax.xlane.f32.xlu0 %v5240
        %v5272 = vpop.xlane.xlu0 %5271
        %v5273 = vsub.f32 %v5225, %v5242
        %v5274 = vsub.f32 %v5226, %v5244
        %v5275 = vsub.f32 %v5227, %v5246
        %v5276 = vsub.f32 %v5228, %v5248
        %v5277 = vsub.f32 %v5229, %v5250
        %v5278 = vsub.f32 %v5230, %v5252
        %v5279 = vsub.f32 %v5231, %v5254
        %v5280 = vsub.f32 %v5232, %v5256
        %v5281 = vsub.f32 %v5233, %v5258
        %v5282 = vsub.f32 %v5234, %v5260
        %v5283 = vsub.f32 %v5235, %v5262
        %v5284 = vsub.f32 %v5236, %v5264
        %v5285 = vsub.f32 %v5237, %v5266
        %v5286 = vsub.f32 %v5238, %v5268
        %v5287 = vsub.f32 %v5239, %v5270
        %v5288 = vsub.f32 %v5240, %v5272
        %v5289 = vmul.f32 %v5273, 1.442695
        %v5290 = vpow.pop %v5289
        %v5291 = vmul.f32 %v5274, 1.442695
        %v5292 = vpow.pop %v5291
        %v5293 = vmul.f32 %v5275, 1.442695
        %v5294 = vpow.pop %v5293
        %v5295 = vmul.f32 %v5276, 1.442695
        %v5296 = vpow.pop %v5295
        %v5297 = vmul.f32 %v5277, 1.442695
        %v5298 = vpow.pop %v5297
        %v5299 = vmul.f32 %v5278, 1.442695
        %v5300 = vpow.pop %v5299
        %v5301 = vmul.f32 %v5279, 1.442695
        %v5302 = vpow.pop %v5301
        %v5303 = vmul.f32 %v5280, 1.442695
        %v5304 = vpow.pop %v5303
        %v5305 = vmul.f32 %v5281, 1.442695
        %v5306 = vpow.pop %v5305
        %v5307 = vmul.f32 %v5282, 1.442695
        %v5308 = vpow.pop %v5307
        %v5309 = vmul.f32 %v5283, 1.442695
        %v5310 = vpow.pop %v5309
        %v5311 = vmul.f32 %v5284, 1.442695
        %v5312 = vpow.pop %v5311
        %v5313 = vmul.f32 %v5285, 1.442695
        %v5314 = vpow.pop %v5313
        %v5315 = vmul.f32 %v5286, 1.442695
        %v5316 = vpow.pop %v5315
        %v5317 = vmul.f32 %v5287, 1.442695
        %v5318 = vpow.pop %v5317
        %v5319 = vmul.f32 %v5288, 1.442695
        %v5320 = vpow.pop %v5319
        %5321 = vadd.xlane.f32.xlu0 %v5290
        %v5322 = vpop.xlane.xlu0 %5321
        %5323 = vadd.xlane.f32.xlu0 %v5292
        %v5324 = vpop.xlane.xlu0 %5323
        %5325 = vadd.xlane.f32.xlu0 %v5294
        %v5326 = vpop.xlane.xlu0 %5325
        %5327 = vadd.xlane.f32.xlu0 %v5296
        %v5328 = vpop.xlane.xlu0 %5327
        %5329 = vadd.xlane.f32.xlu0 %v5298
        %v5330 = vpop.xlane.xlu0 %5329
        %5331 = vadd.xlane.f32.xlu0 %v5300
        %v5332 = vpop.xlane.xlu0 %5331
        %5333 = vadd.xlane.f32.xlu0 %v5302
        %v5334 = vpop.xlane.xlu0 %5333
        %5335 = vadd.xlane.f32.xlu0 %v5304
        %v5336 = vpop.xlane.xlu0 %5335
        %5337 = vadd.xlane.f32.xlu0 %v5306
        %v5338 = vpop.xlane.xlu0 %5337
        %5339 = vadd.xlane.f32.xlu0 %v5308
        %v5340 = vpop.xlane.xlu0 %5339
        %5341 = vadd.xlane.f32.xlu0 %v5310
        %v5342 = vpop.xlane.xlu0 %5341
        %5343 = vadd.xlane.f32.xlu0 %v5312
        %v5344 = vpop.xlane.xlu0 %5343
        %5345 = vadd.xlane.f32.xlu0 %v5314
        %v5346 = vpop.xlane.xlu0 %5345
        %5347 = vadd.xlane.f32.xlu0 %v5316
        %v5348 = vpop.xlane.xlu0 %5347
        %5349 = vadd.xlane.f32.xlu0 %v5318
        %v5350 = vpop.xlane.xlu0 %5349
        %5351 = vadd.xlane.f32.xlu0 %v5320
        %v5352 = vpop.xlane.xlu0 %5351
        %v5353 = vrcp.pop %v5322
        %v5354 = vmul.f32 %v5290, %v5353
        %v5355 = vrcp.pop %v5324
        %v5356 = vmul.f32 %v5292, %v5355
        %v5357 = vrcp.pop %v5326
        %v5358 = vmul.f32 %v5294, %v5357
        %v5359 = vrcp.pop %v5328
        %v5360 = vmul.f32 %v5296, %v5359
        %v5361 = vrcp.pop %v5330
        %v5362 = vmul.f32 %v5298, %v5361
        %v5363 = vrcp.pop %v5332
        %v5364 = vmul.f32 %v5300, %v5363
        %v5365 = vrcp.pop %v5334
        %v5366 = vmul.f32 %v5302, %v5365
        %v5367 = vrcp.pop %v5336
        %v5368 = vmul.f32 %v5304, %v5367
        %v5369 = vrcp.pop %v5338
        %v5370 = vmul.f32 %v5306, %v5369
        %v5371 = vrcp.pop %v5340
        %v5372 = vmul.f32 %v5308, %v5371
        %v5373 = vrcp.pop %v5342
        %v5374 = vmul.f32 %v5310, %v5373
        %v5375 = vrcp.pop %v5344
        %v5376 = vmul.f32 %v5312, %v5375
        %v5377 = vrcp.pop %v5346
        %v5378 = vmul.f32 %v5314, %v5377
        %v5379 = vrcp.pop %v5348
        %v5380 = vmul.f32 %v5316, %v5379
        %v5381 = vrcp.pop %v5350
        %v5382 = vmul.f32 %v5318, %v5381
        %v5383 = vrcp.pop %v5352
        %v5384 = vmul.f32 %v5320, %v5383
        %v5385 = vpack.c.bf16 %v5356, %v5354
        %v5386 = vpack.c.bf16 %v5360, %v5358
        %v5387 = vpack.c.bf16 %v5364, %v5362
        %v5388 = vpack.c.bf16 %v5368, %v5366
        %v5389 = vpack.c.bf16 %v5372, %v5370
        %v5390 = vpack.c.bf16 %v5376, %v5374
        %v5391 = vpack.c.bf16 %v5380, %v5378
        %v5392 = vpack.c.bf16 %v5384, %v5382
        %5393 = vmatprep.subr.bf16.mxu0 0
        %5394 = vmatpush1.bf16.msra.mxu0 %v5072
        %5395 = vmatprep.subr.bf16.mxu0 0
        %5396 = vmatpush1.bf16.msra.mxu0 %v5073
        %5397 = vmatprep.subr.bf16.mxu0 0
        %5398 = vmatpush1.bf16.msra.mxu0 %v5074
        %5399 = vmatprep.subr.bf16.mxu0 0
        %5400 = vmatpush1.bf16.msra.mxu0 %v5075
        %5401 = vmatprep.subr.bf16.mxu0 0
        %5402 = vmatpush1.bf16.msra.mxu0 %v5076
        %5403 = vmatprep.subr.bf16.mxu0 0
        %5404 = vmatpush1.bf16.msra.mxu0 %v5077
        %5405 = vmatprep.subr.bf16.mxu0 0
        %5406 = vmatpush1.bf16.msra.mxu0 %v5078
        %5407 = vmatprep.subr.bf16.mxu0 0
        %5408 = vmatpush1.bf16.msra.mxu0 %v5079
        %5409 = vmatprep.subr.bf16.mxu0 0
        %5410 = vmatpush1.bf16.msra.mxu0 0
        %5411 = vmatprep.subr.bf16.mxu0 0
        %5412 = vmatpush1.bf16.msra.mxu0 0
        %5413 = vmatprep.subr.bf16.mxu0 0
        %5414 = vmatpush1.bf16.msra.mxu0 0
        %5415 = vmatprep.subr.bf16.mxu0 0
        %5416 = vmatpush1.bf16.msra.mxu0 0
        %5417 = vmatprep.subr.bf16.mxu0 0
        %5418 = vmatpush1.bf16.msra.mxu0 0
        %5419 = vmatprep.subr.bf16.mxu0 0
        %5420 = vmatpush1.bf16.msra.mxu0 0
        %5421 = vmatprep.subr.bf16.mxu0 0
        %5422 = vmatpush1.bf16.msra.mxu0 0
        %5423 = vmatprep.subr.bf16.mxu0 0
        %5424 = vmatpush1.bf16.msra.mxu0 0
        %5425 = vmatprep.mubr.bf16.mxu0 0
        %5426 = vmatmul.mubr.bf16.gmra.mrb[0].mxu0 %v5385
        %v5427 = vpop.f32.mrb[0].mxu0
        %v5428 = vadd.f32 0.0, %v5427
        %v5429 = vpop.f32.mrb[0].mxu0
        %v5430 = vpop.f32.mrb[0].mxu0
        %v5431 = vadd.f32 0.0, %v5430
        %v5432 = vpop.f32.mrb[0].mxu0
        %5433 = vmatprep.mubr.bf16.mxu0 0
        %5434 = vmatmul.mubr.bf16.gmra.mrb[0].mxu0 %v5386
        %v5435 = vpop.f32.mrb[0].mxu0
        %v5436 = vadd.f32 0.0, %v5435
        %v5437 = vpop.f32.mrb[0].mxu0
        %v5438 = vpop.f32.mrb[0].mxu0
        %v5439 = vadd.f32 0.0, %v5438
        %v5440 = vpop.f32.mrb[0].mxu0
        %5441 = vmatprep.mubr.bf16.mxu0 0
        %5442 = vmatmul.mubr.bf16.gmra.mrb[0].mxu0 %v5387
        %v5443 = vpop.f32.mrb[0].mxu0
        %v5444 = vadd.f32 0.0, %v5443
        %v5445 = vpop.f32.mrb[0].mxu0
        %v5446 = vpop.f32.mrb[0].mxu0
        %v5447 = vadd.f32 0.0, %v5446
        %v5448 = vpop.f32.mrb[0].mxu0
        %5449 = vmatprep.mubr.bf16.mxu0 0
        %5450 = vmatmul.mubr.bf16.gmra.mrb[0].mxu0 %v5388
        %v5451 = vpop.f32.mrb[0].mxu0
        %v5452 = vadd.f32 0.0, %v5451
        %v5453 = vpop.f32.mrb[0].mxu0
        %v5454 = vpop.f32.mrb[0].mxu0
        %v5455 = vadd.f32 0.0, %v5454
        %v5456 = vpop.f32.mrb[0].mxu0
        %5457 = vmatprep.mubr.bf16.mxu0 0
        %5458 = vmatmul.mubr.bf16.gmra.mrb[0].mxu0 %v5389
        %v5459 = vpop.f32.mrb[0].mxu0
        %v5460 = vadd.f32 0.0, %v5459
        %v5461 = vpop.f32.mrb[0].mxu0
        %v5462 = vpop.f32.mrb[0].mxu0
        %v5463 = vadd.f32 0.0, %v5462
        %v5464 = vpop.f32.mrb[0].mxu0
        %5465 = vmatprep.mubr.bf16.mxu0 0
        %5466 = vmatmul.mubr.bf16.gmra.mrb[0].mxu0 %v5390
        %v5467 = vpop.f32.mrb[0].mxu0
        %v5468 = vadd.f32 0.0, %v5467
        %v5469 = vpop.f32.mrb[0].mxu0
        %v5470 = vpop.f32.mrb[0].mxu0
        %v5471 = vadd.f32 0.0, %v5470
        %v5472 = vpop.f32.mrb[0].mxu0
        %5473 = vmatprep.mubr.bf16.mxu0 0
        %5474 = vmatmul.mubr.bf16.gmra.mrb[0].mxu0 %v5391
        %v5475 = vpop.f32.mrb[0].mxu0
        %v5476 = vadd.f32 0.0, %v5475
        %v5477 = vpop.f32.mrb[0].mxu0
        %v5478 = vpop.f32.mrb[0].mxu0
        %v5479 = vadd.f32 0.0, %v5478
        %v5480 = vpop.f32.mrb[0].mxu0
        %5481 = vmatprep.mubr.bf16.mxu0 0
        %5482 = vmatmul.mubr.bf16.gmra.mrb[0].mxu0 %v5392
        %v5483 = vpop.f32.mrb[0].mxu0
        %v5484 = vadd.f32 0.0, %v5483
        %v5485 = vpop.f32.mrb[0].mxu0
        %v5486 = vpop.f32.mrb[0].mxu0
        %v5487 = vadd.f32 0.0, %v5486
        %v5488 = vpop.f32.mrb[0].mxu0
        %5489 = vdwg.mxu0
        %v5490 = vpack.c.bf16 %v5431, %v5428
        %v5491 = vpack.c.bf16 %v5439, %v5436
        %v5492 = vpack.c.bf16 %v5447, %v5444
        %v5493 = vpack.c.bf16 %v5455, %v5452
        %v5494 = vpack.c.bf16 %v5463, %v5460
        %v5495 = vpack.c.bf16 %v5471, %v5468
        %v5496 = vpack.c.bf16 %v5479, %v5476
        %v5497 = vpack.c.bf16 %v5487, %v5484
        %5498 = vst.msk [vmem:[#allocation3 + $0x10] sm:$0xff] %vm3054, %v5490
        %5499 = vst.msk [vmem:[#allocation3 + $0x28] sm:$0xff] %vm3054, %v5491
        %5500 = vst.msk [vmem:[#allocation3 + $0x40] sm:$0xff] %vm3054, %v5492
        %5501 = vst.msk [vmem:[#allocation3 + $0x58] sm:$0xff] %vm3054, %v5493
        %5502 = vst.msk [vmem:[#allocation3 + $0x70] sm:$0xff] %vm3054, %v5494
        %5503 = vst.msk [vmem:[#allocation3 + $0x88] sm:$0xff] %vm3054, %v5495
        %5504 = vst.msk [vmem:[#allocation3 + $0xa0] sm:$0xff] %vm3054, %v5496
        %5505 = vst.msk [vmem:[#allocation3 + $0xb8] sm:$0xff] %vm3054, %v5497
        %v5506 = vld [vmem:[#allocation2 + $0x10] sm:$0xff]
        %v5507 = vld [vmem:[#allocation2 + $0x58] sm:$0xff]
        %v5508 = vld [vmem:[#allocation2 + $0xa0] sm:$0xff]
        %v5509 = vld [vmem:[#allocation2 + $0xe8] sm:$0xff]
        %v5510 = vld [vmem:[#allocation2 + $0x130] sm:$0xff]
        %v5511 = vld [vmem:[#allocation2 + $0x178] sm:$0xff]
        %v5512 = vld [vmem:[#allocation2 + $0x1c0] sm:$0xff]
        %v5513 = vld [vmem:[#allocation2 + $0x208] sm:$0xff]
        %v5514 = vld [vmem:[#allocation2 + $0x28] sm:$0xff]
        %v5515 = vld [vmem:[#allocation2 + $0x70] sm:$0xff]
        %v5516 = vld [vmem:[#allocation2 + $0xb8] sm:$0xff]
        %v5517 = vld [vmem:[#allocation2 + $0x100] sm:$0xff]
        %v5518 = vld [vmem:[#allocation2 + $0x148] sm:$0xff]
        %v5519 = vld [vmem:[#allocation2 + $0x190] sm:$0xff]
        %v5520 = vld [vmem:[#allocation2 + $0x1d8] sm:$0xff]
        %v5521 = vld [vmem:[#allocation2 + $0x220] sm:$0xff]
        %v5522 = vld [vmem:[#allocation2 + $0x40] sm:$0xff]
        %v5523 = vld [vmem:[#allocation2 + $0x88] sm:$0xff]
        %v5524 = vld [vmem:[#allocation2 + $0xd0] sm:$0xff]
        %v5525 = vld [vmem:[#allocation2 + $0x118] sm:$0xff]
        %v5526 = vld [vmem:[#allocation2 + $0x160] sm:$0xff]
        %v5527 = vld [vmem:[#allocation2 + $0x1a8] sm:$0xff]
        %v5528 = vld [vmem:[#allocation2 + $0x1f0] sm:$0xff]
        %v5529 = vld [vmem:[#allocation2 + $0x238] sm:$0xff]
        %5538 = vrot.lane.b32.xlu0 %v5506, 64
        %v5539 = vpop.permute.xlu0 %5538
        %5540 = vrot.lane.b32.xlu0 %v5507, 64
        %v5541 = vpop.permute.xlu0 %5540
        %5542 = vrot.lane.b32.xlu0 %v5508, 64
        %v5543 = vpop.permute.xlu0 %5542
        %5544 = vrot.lane.b32.xlu0 %v5509, 64
        %v5545 = vpop.permute.xlu0 %5544
        %5546 = vrot.lane.b32.xlu0 %v5510, 64
        %v5547 = vpop.permute.xlu0 %5546
        %5548 = vrot.lane.b32.xlu0 %v5511, 64
        %v5549 = vpop.permute.xlu0 %5548
        %5550 = vrot.lane.b32.xlu0 %v5512, 64
        %v5551 = vpop.permute.xlu0 %5550
        %5552 = vrot.lane.b32.xlu0 %v5513, 64
        %v5553 = vpop.permute.xlu0 %5552
        %5562 = vrot.lane.b32.xlu0 %v5514, 64
        %v5563 = vpop.permute.xlu0 %5562
        %5564 = vrot.lane.b32.xlu0 %v5515, 64
        %v5565 = vpop.permute.xlu0 %5564
        %5566 = vrot.lane.b32.xlu0 %v5516, 64
        %v5567 = vpop.permute.xlu0 %5566
        %5568 = vrot.lane.b32.xlu0 %v5517, 64
        %v5569 = vpop.permute.xlu0 %5568
        %5570 = vrot.lane.b32.xlu0 %v5518, 64
        %v5571 = vpop.permute.xlu0 %5570
        %5572 = vrot.lane.b32.xlu0 %v5519, 64
        %v5573 = vpop.permute.xlu0 %5572
        %5574 = vrot.lane.b32.xlu0 %v5520, 64
        %v5575 = vpop.permute.xlu0 %5574
        %5576 = vrot.lane.b32.xlu0 %v5521, 64
        %v5577 = vpop.permute.xlu0 %5576
        %v5579 = vsel %vm3054, %v5539, 0
        %v5582 = vsel %vm3054, %v5541, 0
        %v5585 = vsel %vm3054, %v5543, 0
        %v5588 = vsel %vm3054, %v5545, 0
        %v5591 = vsel %vm3054, %v5547, 0
        %v5594 = vsel %vm3054, %v5549, 0
        %v5597 = vsel %vm3054, %v5551, 0
        %v5600 = vsel %vm3054, %v5553, 0
        %v5603 = vsel %vm3054, %v5563, 0
        %v5606 = vsel %vm3054, %v5565, 0
        %v5609 = vsel %vm3054, %v5567, 0
        %v5612 = vsel %vm3054, %v5569, 0
        %v5615 = vsel %vm3054, %v5571, 0
        %v5618 = vsel %vm3054, %v5573, 0
        %v5621 = vsel %vm3054, %v5575, 0
        %v5624 = vsel %vm3054, %v5577, 0
        %5626 = vmatprep.subr.bf16.mxu0 0
        %5627 = vmatpush1.bf16.xpose.msra.mxu0 %v5603
        %5628 = vmatprep.subr.bf16.mxu0 0
        %5629 = vmatpush1.bf16.xpose.msra.mxu0 %v5606
        %5630 = vmatprep.subr.bf16.mxu0 0
        %5631 = vmatpush1.bf16.xpose.msra.mxu0 %v5609
        %5632 = vmatprep.subr.bf16.mxu0 0
        %5633 = vmatpush1.bf16.xpose.msra.mxu0 %v5612
        %5634 = vmatprep.subr.bf16.mxu0 0
        %5635 = vmatpush1.bf16.xpose.msra.mxu0 %v5615
        %5636 = vmatprep.subr.bf16.mxu0 0
        %5637 = vmatpush1.bf16.xpose.msra.mxu0 %v5618
        %5638 = vmatprep.subr.bf16.mxu0 0
        %5639 = vmatpush1.bf16.xpose.msra.mxu0 %v5621
        %5640 = vmatprep.subr.bf16.mxu0 0
        %5641 = vmatpush1.bf16.xpose.msra.mxu0 %v5624
        %5642 = vmatprep.subr.bf16.mxu0 0
        %5643 = vmatpush1.bf16.xpose.msra.mxu0 0
        %5644 = vmatprep.subr.bf16.mxu0 0
        %5645 = vmatpush1.bf16.xpose.msra.mxu0 0
        %5646 = vmatprep.subr.bf16.mxu0 0
        %5647 = vmatpush1.bf16.xpose.msra.mxu0 0
        %5648 = vmatprep.subr.bf16.mxu0 0
        %5649 = vmatpush1.bf16.xpose.msra.mxu0 0
        %5650 = vmatprep.subr.bf16.mxu0 0
        %5651 = vmatpush1.bf16.xpose.msra.mxu0 0
        %5652 = vmatprep.subr.bf16.mxu0 0
        %5653 = vmatpush1.bf16.xpose.msra.mxu0 0
        %5654 = vmatprep.subr.bf16.mxu0 0
        %5655 = vmatpush1.bf16.xpose.msra.mxu0 0
        %5656 = vmatprep.subr.bf16.mxu0 0
        %5657 = vmatpush1.bf16.xpose.msra.mxu0 0
        %5658 = vmatprep.mubr.bf16.mxu0 0
        %5659 = vmatmul.mubr.bf16.gmra.mrb[0].mxu0 %v5579
        %v5660 = vpop.f32.mrb[0].mxu0
        %v5661 = vadd.f32 0.0, %v5660
        %v5662 = vpop.f32.mrb[0].mxu0
        %v5663 = vpop.f32.mrb[0].mxu0
        %v5664 = vadd.f32 0.0, %v5663
        %v5665 = vpop.f32.mrb[0].mxu0
        %5666 = vmatprep.mubr.bf16.mxu0 0
        %5667 = vmatmul.mubr.bf16.gmra.mrb[0].mxu0 %v5582
        %v5668 = vpop.f32.mrb[0].mxu0
        %v5669 = vadd.f32 0.0, %v5668
        %v5670 = vpop.f32.mrb[0].mxu0
        %v5671 = vpop.f32.mrb[0].mxu0
        %v5672 = vadd.f32 0.0, %v5671
        %v5673 = vpop.f32.mrb[0].mxu0
        %5674 = vmatprep.mubr.bf16.mxu0 0
        %5675 = vmatmul.mubr.bf16.gmra.mrb[0].mxu0 %v5585
        %v5676 = vpop.f32.mrb[0].mxu0
        %v5677 = vadd.f32 0.0, %v5676
        %v5678 = vpop.f32.mrb[0].mxu0
        %v5679 = vpop.f32.mrb[0].mxu0
        %v5680 = vadd.f32 0.0, %v5679
        %v5681 = vpop.f32.mrb[0].mxu0
        %5682 = vmatprep.mubr.bf16.mxu0 0
        %5683 = vmatmul.mubr.bf16.gmra.mrb[0].mxu0 %v5588
        %v5684 = vpop.f32.mrb[0].mxu0
        %v5685 = vadd.f32 0.0, %v5684
        %v5686 = vpop.f32.mrb[0].mxu0
        %v5687 = vpop.f32.mrb[0].mxu0
        %v5688 = vadd.f32 0.0, %v5687
        %v5689 = vpop.f32.mrb[0].mxu0
        %5690 = vmatprep.mubr.bf16.mxu0 0
        %5691 = vmatmul.mubr.bf16.gmra.mrb[0].mxu0 %v5591
        %v5692 = vpop.f32.mrb[0].mxu0
        %v5693 = vadd.f32 0.0, %v5692
        %v5694 = vpop.f32.mrb[0].mxu0
        %v5695 = vpop.f32.mrb[0].mxu0
        %v5696 = vadd.f32 0.0, %v5695
        %v5697 = vpop.f32.mrb[0].mxu0
        %5698 = vmatprep.mubr.bf16.mxu0 0
        %5699 = vmatmul.mubr.bf16.gmra.mrb[0].mxu0 %v5594
        %v5700 = vpop.f32.mrb[0].mxu0
        %v5701 = vadd.f32 0.0, %v5700
        %v5702 = vpop.f32.mrb[0].mxu0
        %v5703 = vpop.f32.mrb[0].mxu0
        %v5704 = vadd.f32 0.0, %v5703
        %v5705 = vpop.f32.mrb[0].mxu0
        %5706 = vmatprep.mubr.bf16.mxu0 0
        %5707 = vmatmul.mubr.bf16.gmra.mrb[0].mxu0 %v5597
        %v5708 = vpop.f32.mrb[0].mxu0
        %v5709 = vadd.f32 0.0, %v5708
        %v5710 = vpop.f32.mrb[0].mxu0
        %v5711 = vpop.f32.mrb[0].mxu0
        %v5712 = vadd.f32 0.0, %v5711
        %v5713 = vpop.f32.mrb[0].mxu0
        %5714 = vmatprep.mubr.bf16.mxu0 0
        %5715 = vmatmul.mubr.bf16.gmra.mrb[0].mxu0 %v5600
        %v5716 = vpop.f32.mrb[0].mxu0
        %v5717 = vadd.f32 0.0, %v5716
        %v5718 = vpop.f32.mrb[0].mxu0
        %v5719 = vpop.f32.mrb[0].mxu0
        %v5720 = vadd.f32 0.0, %v5719
        %v5721 = vpop.f32.mrb[0].mxu0
        %5722 = vdwg.mxu0
        %v5723 = vsel %vm3014, %v5661, -inf
        %v5724 = vsel %vm3015, %v5664, -inf
        %v5725 = vsel %vm3016, %v5669, -inf
        %v5726 = vsel %vm3017, %v5672, -inf
        %v5727 = vsel %vm3018, %v5677, -inf
        %v5728 = vsel %vm3019, %v5680, -inf
        %v5729 = vsel %vm3020, %v5685, -inf
        %v5730 = vsel %vm3021, %v5688, -inf
        %v5731 = vsel %vm3022, %v5693, -inf
        %v5732 = vsel %vm3023, %v5696, -inf
        %v5733 = vsel %vm3024, %v5701, -inf
        %v5734 = vsel %vm3025, %v5704, -inf
        %v5735 = vsel %vm3026, %v5709, -inf
        %v5736 = vsel %vm3027, %v5712, -inf
        %v5737 = vsel %vm3028, %v5717, -inf
        %v5738 = vsel %vm3029, %v5720, -inf
        %5739 = vmax.xlane.f32.xlu0 %v5723
        %v5740 = vpop.xlane.xlu0 %5739
        %5741 = vmax.xlane.f32.xlu0 %v5724
        %v5742 = vpop.xlane.xlu0 %5741
        %5743 = vmax.xlane.f32.xlu0 %v5725
        %v5744 = vpop.xlane.xlu0 %5743
        %5745 = vmax.xlane.f32.xlu0 %v5726
        %v5746 = vpop.xlane.xlu0 %5745
        %5747 = vmax.xlane.f32.xlu0 %v5727
        %v5748 = vpop.xlane.xlu0 %5747
        %5749 = vmax.xlane.f32.xlu0 %v5728
        %v5750 = vpop.xlane.xlu0 %5749
        %5751 = vmax.xlane.f32.xlu0 %v5729
        %v5752 = vpop.xlane.xlu0 %5751
        %5753 = vmax.xlane.f32.xlu0 %v5730
        %v5754 = vpop.xlane.xlu0 %5753
        %5755 = vmax.xlane.f32.xlu0 %v5731
        %v5756 = vpop.xlane.xlu0 %5755
        %5757 = vmax.xlane.f32.xlu0 %v5732
        %v5758 = vpop.xlane.xlu0 %5757
        %5759 = vmax.xlane.f32.xlu0 %v5733
        %v5760 = vpop.xlane.xlu0 %5759
        %5761 = vmax.xlane.f32.xlu0 %v5734
        %v5762 = vpop.xlane.xlu0 %5761
        %5763 = vmax.xlane.f32.xlu0 %v5735
        %v5764 = vpop.xlane.xlu0 %5763
        %5765 = vmax.xlane.f32.xlu0 %v5736
        %v5766 = vpop.xlane.xlu0 %5765
        %5767 = vmax.xlane.f32.xlu0 %v5737
        %v5768 = vpop.xlane.xlu0 %5767
        %5769 = vmax.xlane.f32.xlu0 %v5738
        %v5770 = vpop.xlane.xlu0 %5769
        %v5771 = vsub.f32 %v5723, %v5740
        %v5772 = vsub.f32 %v5724, %v5742
        %v5773 = vsub.f32 %v5725, %v5744
        %v5774 = vsub.f32 %v5726, %v5746
        %v5775 = vsub.f32 %v5727, %v5748
        %v5776 = vsub.f32 %v5728, %v5750
        %v5777 = vsub.f32 %v5729, %v5752
        %v5778 = vsub.f32 %v5730, %v5754
        %v5779 = vsub.f32 %v5731, %v5756
        %v5780 = vsub.f32 %v5732, %v5758
        %v5781 = vsub.f32 %v5733, %v5760
        %v5782 = vsub.f32 %v5734, %v5762
        %v5783 = vsub.f32 %v5735, %v5764
        %v5784 = vsub.f32 %v5736, %v5766
        %v5785 = vsub.f32 %v5737, %v5768
        %v5786 = vsub.f32 %v5738, %v5770
        %v5787 = vmul.f32 %v5771, 1.442695
        %v5788 = vpow.pop %v5787
        %v5789 = vmul.f32 %v5772, 1.442695
        %v5790 = vpow.pop %v5789
        %v5791 = vmul.f32 %v5773, 1.442695
        %v5792 = vpow.pop %v5791
        %v5793 = vmul.f32 %v5774, 1.442695
        %v5794 = vpow.pop %v5793
        %v5795 = vmul.f32 %v5775, 1.442695
        %v5796 = vpow.pop %v5795
        %v5797 = vmul.f32 %v5776, 1.442695
        %v5798 = vpow.pop %v5797
        %v5799 = vmul.f32 %v5777, 1.442695
        %v5800 = vpow.pop %v5799
        %v5801 = vmul.f32 %v5778, 1.442695
        %v5802 = vpow.pop %v5801
        %v5803 = vmul.f32 %v5779, 1.442695
        %v5804 = vpow.pop %v5803
        %v5805 = vmul.f32 %v5780, 1.442695
        %v5806 = vpow.pop %v5805
        %v5807 = vmul.f32 %v5781, 1.442695
        %v5808 = vpow.pop %v5807
        %v5809 = vmul.f32 %v5782, 1.442695
        %v5810 = vpow.pop %v5809
        %v5811 = vmul.f32 %v5783, 1.442695
        %v5812 = vpow.pop %v5811
        %v5813 = vmul.f32 %v5784, 1.442695
        %v5814 = vpow.pop %v5813
        %v5815 = vmul.f32 %v5785, 1.442695
        %v5816 = vpow.pop %v5815
        %v5817 = vmul.f32 %v5786, 1.442695
        %v5818 = vpow.pop %v5817
        %5819 = vadd.xlane.f32.xlu0 %v5788
        %v5820 = vpop.xlane.xlu0 %5819
        %5821 = vadd.xlane.f32.xlu0 %v5790
        %v5822 = vpop.xlane.xlu0 %5821
        %5823 = vadd.xlane.f32.xlu0 %v5792
        %v5824 = vpop.xlane.xlu0 %5823
        %5825 = vadd.xlane.f32.xlu0 %v5794
        %v5826 = vpop.xlane.xlu0 %5825
        %5827 = vadd.xlane.f32.xlu0 %v5796
        %v5828 = vpop.xlane.xlu0 %5827
        %5829 = vadd.xlane.f32.xlu0 %v5798
        %v5830 = vpop.xlane.xlu0 %5829
        %5831 = vadd.xlane.f32.xlu0 %v5800
        %v5832 = vpop.xlane.xlu0 %5831
        %5833 = vadd.xlane.f32.xlu0 %v5802
        %v5834 = vpop.xlane.xlu0 %5833
        %5835 = vadd.xlane.f32.xlu0 %v5804
        %v5836 = vpop.xlane.xlu0 %5835
        %5837 = vadd.xlane.f32.xlu0 %v5806
        %v5838 = vpop.xlane.xlu0 %5837
        %5839 = vadd.xlane.f32.xlu0 %v5808
        %v5840 = vpop.xlane.xlu0 %5839
        %5841 = vadd.xlane.f32.xlu0 %v5810
        %v5842 = vpop.xlane.xlu0 %5841
        %5843 = vadd.xlane.f32.xlu0 %v5812
        %v5844 = vpop.xlane.xlu0 %5843
        %5845 = vadd.xlane.f32.xlu0 %v5814
        %v5846 = vpop.xlane.xlu0 %5845
        %5847 = vadd.xlane.f32.xlu0 %v5816
        %v5848 = vpop.xlane.xlu0 %5847
        %5849 = vadd.xlane.f32.xlu0 %v5818
        %v5850 = vpop.xlane.xlu0 %5849
        %v5851 = vrcp.pop %v5820
        %v5852 = vmul.f32 %v5788, %v5851
        %v5853 = vrcp.pop %v5822
        %v5854 = vmul.f32 %v5790, %v5853
        %v5855 = vrcp.pop %v5824
        %v5856 = vmul.f32 %v5792, %v5855
        %v5857 = vrcp.pop %v5826
        %v5858 = vmul.f32 %v5794, %v5857
        %v5859 = vrcp.pop %v5828
        %v5860 = vmul.f32 %v5796, %v5859
        %v5861 = vrcp.pop %v5830
        %v5862 = vmul.f32 %v5798, %v5861
        %v5863 = vrcp.pop %v5832
        %v5864 = vmul.f32 %v5800, %v5863
        %v5865 = vrcp.pop %v5834
        %v5866 = vmul.f32 %v5802, %v5865
        %v5867 = vrcp.pop %v5836
        %v5868 = vmul.f32 %v5804, %v5867
        %v5869 = vrcp.pop %v5838
        %v5870 = vmul.f32 %v5806, %v5869
        %v5871 = vrcp.pop %v5840
        %v5872 = vmul.f32 %v5808, %v5871
        %v5873 = vrcp.pop %v5842
        %v5874 = vmul.f32 %v5810, %v5873
        %v5875 = vrcp.pop %v5844
        %v5876 = vmul.f32 %v5812, %v5875
        %v5877 = vrcp.pop %v5846
        %v5878 = vmul.f32 %v5814, %v5877
        %v5879 = vrcp.pop %v5848
        %v5880 = vmul.f32 %v5816, %v5879
        %v5881 = vrcp.pop %v5850
        %v5882 = vmul.f32 %v5818, %v5881
        %v5883 = vpack.c.bf16 %v5854, %v5852
        %v5884 = vpack.c.bf16 %v5858, %v5856
        %v5885 = vpack.c.bf16 %v5862, %v5860
        %v5886 = vpack.c.bf16 %v5866, %v5864
        %v5887 = vpack.c.bf16 %v5870, %v5868
        %v5888 = vpack.c.bf16 %v5874, %v5872
        %v5889 = vpack.c.bf16 %v5878, %v5876
        %v5890 = vpack.c.bf16 %v5882, %v5880
        %5899 = vrot.lane.b32.xlu0 %v5522, 64
        %v5900 = vpop.permute.xlu0 %5899
        %5901 = vrot.lane.b32.xlu0 %v5523, 64
        %v5902 = vpop.permute.xlu0 %5901
        %5903 = vrot.lane.b32.xlu0 %v5524, 64
        %v5904 = vpop.permute.xlu0 %5903
        %5905 = vrot.lane.b32.xlu0 %v5525, 64
        %v5906 = vpop.permute.xlu0 %5905
        %5907 = vrot.lane.b32.xlu0 %v5526, 64
        %v5908 = vpop.permute.xlu0 %5907
        %5909 = vrot.lane.b32.xlu0 %v5527, 64
        %v5910 = vpop.permute.xlu0 %5909
        %5911 = vrot.lane.b32.xlu0 %v5528, 64
        %v5912 = vpop.permute.xlu0 %5911
        %5913 = vrot.lane.b32.xlu0 %v5529, 64
        %v5914 = vpop.permute.xlu0 %5913
        %5923 = vmatprep.subr.bf16.mxu0 0
        %5924 = vmatpush1.bf16.msra.mxu0 %v5900
        %5925 = vmatprep.subr.bf16.mxu0 0
        %5926 = vmatpush1.bf16.msra.mxu0 %v5902
        %5927 = vmatprep.subr.bf16.mxu0 0
        %5928 = vmatpush1.bf16.msra.mxu0 %v5904
        %5929 = vmatprep.subr.bf16.mxu0 0
        %5930 = vmatpush1.bf16.msra.mxu0 %v5906
        %5931 = vmatprep.subr.bf16.mxu0 0
        %5932 = vmatpush1.bf16.msra.mxu0 %v5908
        %5933 = vmatprep.subr.bf16.mxu0 0
        %5934 = vmatpush1.bf16.msra.mxu0 %v5910
        %5935 = vmatprep.subr.bf16.mxu0 0
        %5936 = vmatpush1.bf16.msra.mxu0 %v5912
        %5937 = vmatprep.subr.bf16.mxu0 0
        %5938 = vmatpush1.bf16.msra.mxu0 %v5914
        %5939 = vmatprep.subr.bf16.mxu0 0
        %5940 = vmatpush1.bf16.msra.mxu0 0
        %5941 = vmatprep.subr.bf16.mxu0 0
        %5942 = vmatpush1.bf16.msra.mxu0 0
        %5943 = vmatprep.subr.bf16.mxu0 0
        %5944 = vmatpush1.bf16.msra.mxu0 0
        %5945 = vmatprep.subr.bf16.mxu0 0
        %5946 = vmatpush1.bf16.msra.mxu0 0
        %5947 = vmatprep.subr.bf16.mxu0 0
        %5948 = vmatpush1.bf16.msra.mxu0 0
        %5949 = vmatprep.subr.bf16.mxu0 0
        %5950 = vmatpush1.bf16.msra.mxu0 0
        %5951 = vmatprep.subr.bf16.mxu0 0
        %5952 = vmatpush1.bf16.msra.mxu0 0
        %5953 = vmatprep.subr.bf16.mxu0 0
        %5954 = vmatpush1.bf16.msra.mxu0 0
        %5955 = vmatprep.mubr.bf16.mxu0 0
        %5956 = vmatmul.mubr.bf16.gmra.mrb[0].mxu0 %v5883
        %v5957 = vpop.f32.mrb[0].mxu0
        %v5958 = vadd.f32 0.0, %v5957
        %v5959 = vpop.f32.mrb[0].mxu0
        %v5960 = vpop.f32.mrb[0].mxu0
        %v5961 = vadd.f32 0.0, %v5960
        %v5962 = vpop.f32.mrb[0].mxu0
        %5963 = vmatprep.mubr.bf16.mxu0 0
        %5964 = vmatmul.mubr.bf16.gmra.mrb[0].mxu0 %v5884
        %v5965 = vpop.f32.mrb[0].mxu0
        %v5966 = vadd.f32 0.0, %v5965
        %v5967 = vpop.f32.mrb[0].mxu0
        %v5968 = vpop.f32.mrb[0].mxu0
        %v5969 = vadd.f32 0.0, %v5968
        %v5970 = vpop.f32.mrb[0].mxu0
        %5971 = vmatprep.mubr.bf16.mxu0 0
        %5972 = vmatmul.mubr.bf16.gmra.mrb[0].mxu0 %v5885
        %v5973 = vpop.f32.mrb[0].mxu0
        %v5974 = vadd.f32 0.0, %v5973
        %v5975 = vpop.f32.mrb[0].mxu0
        %v5976 = vpop.f32.mrb[0].mxu0
        %v5977 = vadd.f32 0.0, %v5976
        %v5978 = vpop.f32.mrb[0].mxu0
        %5979 = vmatprep.mubr.bf16.mxu0 0
        %5980 = vmatmul.mubr.bf16.gmra.mrb[0].mxu0 %v5886
        %v5981 = vpop.f32.mrb[0].mxu0
        %v5982 = vadd.f32 0.0, %v5981
        %v5983 = vpop.f32.mrb[0].mxu0
        %v5984 = vpop.f32.mrb[0].mxu0
        %v5985 = vadd.f32 0.0, %v5984
        %v5986 = vpop.f32.mrb[0].mxu0
        %5987 = vmatprep.mubr.bf16.mxu0 0
        %5988 = vmatmul.mubr.bf16.gmra.mrb[0].mxu0 %v5887
        %v5989 = vpop.f32.mrb[0].mxu0
        %v5990 = vadd.f32 0.0, %v5989
        %v5991 = vpop.f32.mrb[0].mxu0
        %v5992 = vpop.f32.mrb[0].mxu0
        %v5993 = vadd.f32 0.0, %v5992
        %v5994 = vpop.f32.mrb[0].mxu0
        %5995 = vmatprep.mubr.bf16.mxu0 0
        %5996 = vmatmul.mubr.bf16.gmra.mrb[0].mxu0 %v5888
        %v5997 = vpop.f32.mrb[0].mxu0
        %v5998 = vadd.f32 0.0, %v5997
        %v5999 = vpop.f32.mrb[0].mxu0
        %v6000 = vpop.f32.mrb[0].mxu0
        %v6001 = vadd.f32 0.0, %v6000
        %v6002 = vpop.f32.mrb[0].mxu0
        %6003 = vmatprep.mubr.bf16.mxu0 0
        %6004 = vmatmul.mubr.bf16.gmra.mrb[0].mxu0 %v5889
        %v6005 = vpop.f32.mrb[0].mxu0
        %v6006 = vadd.f32 0.0, %v6005
        %v6007 = vpop.f32.mrb[0].mxu0
        %v6008 = vpop.f32.mrb[0].mxu0
        %v6009 = vadd.f32 0.0, %v6008
        %v6010 = vpop.f32.mrb[0].mxu0
        %6011 = vmatprep.mubr.bf16.mxu0 0
        %6012 = vmatmul.mubr.bf16.gmra.mrb[0].mxu0 %v5890
        %v6013 = vpop.f32.mrb[0].mxu0
        %v6014 = vadd.f32 0.0, %v6013
        %v6015 = vpop.f32.mrb[0].mxu0
        %v6016 = vpop.f32.mrb[0].mxu0
        %v6017 = vadd.f32 0.0, %v6016
        %v6018 = vpop.f32.mrb[0].mxu0
        %6019 = vdwg.mxu0
        %v6020 = vpack.c.bf16 %v5961, %v5958
        %v6021 = vpack.c.bf16 %v5969, %v5966
        %v6022 = vpack.c.bf16 %v5977, %v5974
        %v6023 = vpack.c.bf16 %v5985, %v5982
        %v6024 = vpack.c.bf16 %v5993, %v5990
        %v6025 = vpack.c.bf16 %v6001, %v5998
        %v6026 = vpack.c.bf16 %v6009, %v6006
        %v6027 = vpack.c.bf16 %v6017, %v6014
        %6036 = vrot.lane.b32.xlu0 %v6020, 64
        %v6037 = vpop.permute.xlu0 %6036
        %6038 = vrot.lane.b32.xlu0 %v6021, 64
        %v6039 = vpop.permute.xlu0 %6038
        %6040 = vrot.lane.b32.xlu0 %v6022, 64
        %v6041 = vpop.permute.xlu0 %6040
        %6042 = vrot.lane.b32.xlu0 %v6023, 64
        %v6043 = vpop.permute.xlu0 %6042
        %6044 = vrot.lane.b32.xlu0 %v6024, 64
        %v6045 = vpop.permute.xlu0 %6044
        %6046 = vrot.lane.b32.xlu0 %v6025, 64
        %v6047 = vpop.permute.xlu0 %6046
        %6048 = vrot.lane.b32.xlu0 %v6026, 64
        %v6049 = vpop.permute.xlu0 %6048
        %6050 = vrot.lane.b32.xlu0 %v6027, 64
        %v6051 = vpop.permute.xlu0 %6050
        %6060 = vst.msk [vmem:[#allocation3 + $0x10] sm:$0xff] %vm4035, %v6037
        %6061 = vst.msk [vmem:[#allocation3 + $0x28] sm:$0xff] %vm4035, %v6039
        %6062 = vst.msk [vmem:[#allocation3 + $0x40] sm:$0xff] %vm4035, %v6041
        %6063 = vst.msk [vmem:[#allocation3 + $0x58] sm:$0xff] %vm4035, %v6043
        %6064 = vst.msk [vmem:[#allocation3 + $0x70] sm:$0xff] %vm4035, %v6045
        %6065 = vst.msk [vmem:[#allocation3 + $0x88] sm:$0xff] %vm4035, %v6047
        %6066 = vst.msk [vmem:[#allocation3 + $0xa0] sm:$0xff] %vm4035, %v6049
        %6067 = vst.msk [vmem:[#allocation3 + $0xb8] sm:$0xff] %vm4035, %v6051
        %v6068 = vld [vmem:[#allocation3] sm:$0xff]
        %v6069 = vld [vmem:[#allocation3 + $0x8] sm:$0xff]
        %v6070 = vld [vmem:[#allocation3 + $0x10] sm:$0xff]
        %v6071 = vld [vmem:[#allocation3 + $0x18] sm:$0xff]
        %v6072 = vld [vmem:[#allocation3 + $0x20] sm:$0xff]
        %v6073 = vld [vmem:[#allocation3 + $0x28] sm:$0xff]
        %v6074 = vld [vmem:[#allocation3 + $0x30] sm:$0xff]
        %v6075 = vld [vmem:[#allocation3 + $0x38] sm:$0xff]
        %v6076 = vld [vmem:[#allocation3 + $0x40] sm:$0xff]
        %v6077 = vld [vmem:[#allocation3 + $0x48] sm:$0xff]
        %v6078 = vld [vmem:[#allocation3 + $0x50] sm:$0xff]
        %v6079 = vld [vmem:[#allocation3 + $0x58] sm:$0xff]
        %v6080 = vld [vmem:[#allocation3 + $0x60] sm:$0xff]
        %v6081 = vld [vmem:[#allocation3 + $0x68] sm:$0xff]
        %v6082 = vld [vmem:[#allocation3 + $0x70] sm:$0xff]
        %v6083 = vld [vmem:[#allocation3 + $0x78] sm:$0xff]
        %v6084 = vld [vmem:[#allocation3 + $0x80] sm:$0xff]
        %v6085 = vld [vmem:[#allocation3 + $0x88] sm:$0xff]
        %v6086 = vld [vmem:[#allocation3 + $0x90] sm:$0xff]
        %v6087 = vld [vmem:[#allocation3 + $0x98] sm:$0xff]
        %v6088 = vld [vmem:[#allocation3 + $0xa0] sm:$0xff]
        %v6089 = vld [vmem:[#allocation3 + $0xa8] sm:$0xff]
        %v6090 = vld [vmem:[#allocation3 + $0xb0] sm:$0xff]
        %v6091 = vld [vmem:[#allocation3 + $0xb8] sm:$0xff]
        %v6092 = vld [vmem:[#allocation9] sm:$0xff]
        %v6093 = vld [vmem:[#allocation9 + $0x8] sm:$0xf]
        %v6094 = vld [vmem:[#allocation9 + $0xc] sm:$0xff]
        %v6095 = vld [vmem:[#allocation9 + $0x14] sm:$0xf]
        %v6096 = vld [vmem:[#allocation9 + $0x18] sm:$0xff]
        %v6097 = vld [vmem:[#allocation9 + $0x20] sm:$0xf]
        %v6098 = vld [vmem:[#allocation9 + $0x24] sm:$0xff]
        %v6099 = vld [vmem:[#allocation9 + $0x2c] sm:$0xf]
        %v6100 = vld [vmem:[#allocation9 + $0x30] sm:$0xff]
        %v6101 = vld [vmem:[#allocation9 + $0x38] sm:$0xf]
        %v6102 = vld [vmem:[#allocation9 + $0x3c] sm:$0xff]
        %v6103 = vld [vmem:[#allocation9 + $0x44] sm:$0xf]
        %v6104 = vld [vmem:[#allocation9 + $0x48] sm:$0xff]
        %v6105 = vld [vmem:[#allocation9 + $0x50] sm:$0xf]
        %v6106 = vld [vmem:[#allocation9 + $0x54] sm:$0xff]
        %v6107 = vld [vmem:[#allocation9 + $0x5c] sm:$0xf]
        %v6108 = vld [vmem:[#allocation9 + $0x60] sm:$0xff]
        %v6109 = vld [vmem:[#allocation9 + $0x68] sm:$0xf]
        %v6110 = vld [vmem:[#allocation9 + $0x6c] sm:$0xff]
        %v6111 = vld [vmem:[#allocation9 + $0x74] sm:$0xf]
        %v6112 = vld [vmem:[#allocation9 + $0x78] sm:$0xff]
        %v6113 = vld [vmem:[#allocation9 + $0x80] sm:$0xf]
        %v6114 = vld [vmem:[#allocation9 + $0x84] sm:$0xff]
        %v6115 = vld [vmem:[#allocation9 + $0x8c] sm:$0xf]
        %v6116 = vld [vmem:[#allocation9 + $0x90] sm:$0xff]
        %v6117 = vld [vmem:[#allocation9 + $0x98] sm:$0xf]
        %v6118 = vld [vmem:[#allocation9 + $0x9c] sm:$0xff]
        %v6119 = vld [vmem:[#allocation9 + $0xa4] sm:$0xf]
        %v6120 = vld [vmem:[#allocation9 + $0xa8] sm:$0xff]
        %v6121 = vld [vmem:[#allocation9 + $0xb0] sm:$0xf]
        %v6122 = vld [vmem:[#allocation9 + $0xb4] sm:$0xff]
        %v6123 = vld [vmem:[#allocation9 + $0xbc] sm:$0xf]
        %v6124 = vld [vmem:[#allocation9 + $0xc0] sm:$0xff]
        %v6125 = vld [vmem:[#allocation9 + $0xc8] sm:$0xf]
        %v6126 = vld [vmem:[#allocation9 + $0xcc] sm:$0xff]
        %v6127 = vld [vmem:[#allocation9 + $0xd4] sm:$0xf]
        %v6128 = vld [vmem:[#allocation9 + $0xd8] sm:$0xff]
        %v6129 = vld [vmem:[#allocation9 + $0xe0] sm:$0xf]
        %v6130 = vld [vmem:[#allocation9 + $0xe4] sm:$0xff]
        %v6131 = vld [vmem:[#allocation9 + $0xec] sm:$0xf]
        %v6132 = vld [vmem:[#allocation9 + $0xf0] sm:$0xff]
        %v6133 = vld [vmem:[#allocation9 + $0xf8] sm:$0xf]
        %v6134 = vld [vmem:[#allocation9 + $0xfc] sm:$0xff]
        %v6135 = vld [vmem:[#allocation9 + $0x104] sm:$0xf]
        %v6136 = vld [vmem:[#allocation9 + $0x108] sm:$0xff]
        %v6137 = vld [vmem:[#allocation9 + $0x110] sm:$0xf]
        %v6138 = vld [vmem:[#allocation9 + $0x114] sm:$0xff]
        %v6139 = vld [vmem:[#allocation9 + $0x11c] sm:$0xf]
        %v6140 = vld [vmem:[#allocation9 + $0x120] sm:$0xff]
        %v6141 = vld [vmem:[#allocation9 + $0x128] sm:$0xf]
        %v6142 = vld [vmem:[#allocation9 + $0x12c] sm:$0xff]
        %v6143 = vld [vmem:[#allocation9 + $0x134] sm:$0xf]
        %v6144 = vld [vmem:[#allocation9 + $0x138] sm:$0xff]
        %v6145 = vld [vmem:[#allocation9 + $0x140] sm:$0xf]
        %v6146 = vld [vmem:[#allocation9 + $0x144] sm:$0xff]
        %v6147 = vld [vmem:[#allocation9 + $0x14c] sm:$0xf]
        %v6148 = vld [vmem:[#allocation9 + $0x150] sm:$0xff]
        %v6149 = vld [vmem:[#allocation9 + $0x158] sm:$0xf]
        %v6150 = vld [vmem:[#allocation9 + $0x15c] sm:$0xff]
        %v6151 = vld [vmem:[#allocation9 + $0x164] sm:$0xf]
        %v6152 = vld [vmem:[#allocation9 + $0x168] sm:$0xff]
        %v6153 = vld [vmem:[#allocation9 + $0x170] sm:$0xf]
        %v6154 = vld [vmem:[#allocation9 + $0x174] sm:$0xff]
        %v6155 = vld [vmem:[#allocation9 + $0x17c] sm:$0xf]
        %v6156 = vld [vmem:[#allocation9 + $0x180] sm:$0xff]
        %v6157 = vld [vmem:[#allocation9 + $0x188] sm:$0xf]
        %v6158 = vld [vmem:[#allocation9 + $0x18c] sm:$0xff]
        %v6159 = vld [vmem:[#allocation9 + $0x194] sm:$0xf]
        %v6160 = vld [vmem:[#allocation9 + $0x198] sm:$0xff]
        %v6161 = vld [vmem:[#allocation9 + $0x1a0] sm:$0xf]
        %v6162 = vld [vmem:[#allocation9 + $0x1a4] sm:$0xff]
        %v6163 = vld [vmem:[#allocation9 + $0x1ac] sm:$0xf]
        %v6164 = vld [vmem:[#allocation9 + $0x1b0] sm:$0xff]
        %v6165 = vld [vmem:[#allocation9 + $0x1b8] sm:$0xf]
        %v6166 = vld [vmem:[#allocation9 + $0x1bc] sm:$0xff]
        %v6167 = vld [vmem:[#allocation9 + $0x1c4] sm:$0xf]
        %v6168 = vld [vmem:[#allocation9 + $0x1c8] sm:$0xff]
        %v6169 = vld [vmem:[#allocation9 + $0x1d0] sm:$0xf]
        %v6170 = vld [vmem:[#allocation9 + $0x1d4] sm:$0xff]
        %v6171 = vld [vmem:[#allocation9 + $0x1dc] sm:$0xf]
        %v6172 = vld [vmem:[#allocation9 + $0x1e0] sm:$0xff]
        %v6173 = vld [vmem:[#allocation9 + $0x1e8] sm:$0xf]
        %v6174 = vld [vmem:[#allocation9 + $0x1ec] sm:$0xff]
        %v6175 = vld [vmem:[#allocation9 + $0x1f4] sm:$0xf]
        %v6176 = vld [vmem:[#allocation9 + $0x1f8] sm:$0xff]
        %v6177 = vld [vmem:[#allocation9 + $0x200] sm:$0xf]
        %v6178 = vld [vmem:[#allocation9 + $0x204] sm:$0xff]
        %v6179 = vld [vmem:[#allocation9 + $0x20c] sm:$0xf]
        %v6180 = vld [vmem:[#allocation9 + $0x210] sm:$0xff]
        %v6181 = vld [vmem:[#allocation9 + $0x218] sm:$0xf]
        %v6182 = vld [vmem:[#allocation9 + $0x21c] sm:$0xff]
        %v6183 = vld [vmem:[#allocation9 + $0x224] sm:$0xf]
        %v6184 = vld [vmem:[#allocation9 + $0x228] sm:$0xff]
        %v6185 = vld [vmem:[#allocation9 + $0x230] sm:$0xf]
        %v6186 = vld [vmem:[#allocation9 + $0x234] sm:$0xff]
        %v6187 = vld [vmem:[#allocation9 + $0x23c] sm:$0xf]
        %v6188 = vld [vmem:[%s3] sm:$0x7]
        %v6190 = vlaneseq
        %v6191 = vshrl.u32 %v6190, 7
        %v6192 = vsub.s32 0, %v6191
        %v6193 = vrot.slane %v6188, %v6192
        %v6194 = vlaneseq
        %v6195 = vshrl.u32 %v6194, 7
        %v6196 = vsub.s32 1, %v6195
        %v6197 = vrot.slane %v6188, %v6196
        %v6198 = vlaneseq
        %v6199 = vshrl.u32 %v6198, 7
        %v6200 = vsub.s32 2, %v6199
        %v6201 = vrot.slane %v6188, %v6200
        %v6301 = vunpack.c.l.b16 %v6092
        %v6302 = vunpack.c.h.b16 %v6092
        %v6303 = vunpack.c.l.b16 %v6093
        %v6304 = vunpack.c.l.b16 %v6094
        %v6305 = vunpack.c.h.b16 %v6094
        %v6306 = vunpack.c.l.b16 %v6095
        %v6307 = vunpack.c.l.b16 %v6096
        %v6308 = vunpack.c.h.b16 %v6096
        %v6309 = vunpack.c.l.b16 %v6097
        %v6310 = vunpack.c.l.b16 %v6098
        %v6311 = vunpack.c.h.b16 %v6098
        %v6312 = vunpack.c.l.b16 %v6099
        %v6313 = vunpack.c.l.b16 %v6100
        %v6314 = vunpack.c.h.b16 %v6100
        %v6315 = vunpack.c.l.b16 %v6101
        %v6316 = vunpack.c.l.b16 %v6102
        %v6317 = vunpack.c.h.b16 %v6102
        %v6318 = vunpack.c.l.b16 %v6103
        %v6319 = vunpack.c.l.b16 %v6104
        %v6320 = vunpack.c.h.b16 %v6104
        %v6321 = vunpack.c.l.b16 %v6105
        %v6322 = vunpack.c.l.b16 %v6106
        %v6323 = vunpack.c.h.b16 %v6106
        %v6324 = vunpack.c.l.b16 %v6107
        %v6325 = vunpack.c.l.b16 %v6108
        %v6326 = vunpack.c.h.b16 %v6108
        %v6327 = vunpack.c.l.b16 %v6109
        %v6328 = vunpack.c.l.b16 %v6110
        %v6329 = vunpack.c.h.b16 %v6110
        %v6330 = vunpack.c.l.b16 %v6111
        %v6331 = vunpack.c.l.b16 %v6112
        %v6332 = vunpack.c.h.b16 %v6112
        %v6333 = vunpack.c.l.b16 %v6113
        %v6334 = vunpack.c.l.b16 %v6114
        %v6335 = vunpack.c.h.b16 %v6114
        %v6336 = vunpack.c.l.b16 %v6115
        %v6337 = vunpack.c.l.b16 %v6116
        %v6338 = vunpack.c.h.b16 %v6116
        %v6339 = vunpack.c.l.b16 %v6117
        %v6340 = vunpack.c.l.b16 %v6118
        %v6341 = vunpack.c.h.b16 %v6118
        %v6342 = vunpack.c.l.b16 %v6119
        %v6343 = vunpack.c.l.b16 %v6120
        %v6344 = vunpack.c.h.b16 %v6120
        %v6345 = vunpack.c.l.b16 %v6121
        %v6346 = vunpack.c.l.b16 %v6122
        %v6347 = vunpack.c.h.b16 %v6122
        %v6348 = vunpack.c.l.b16 %v6123
        %v6349 = vunpack.c.l.b16 %v6124
        %v6350 = vunpack.c.h.b16 %v6124
        %v6351 = vunpack.c.l.b16 %v6125
        %v6352 = vunpack.c.l.b16 %v6126
        %v6353 = vunpack.c.h.b16 %v6126
        %v6354 = vunpack.c.l.b16 %v6127
        %v6355 = vunpack.c.l.b16 %v6128
        %v6356 = vunpack.c.h.b16 %v6128
        %v6357 = vunpack.c.l.b16 %v6129
        %v6358 = vunpack.c.l.b16 %v6130
        %v6359 = vunpack.c.h.b16 %v6130
        %v6360 = vunpack.c.l.b16 %v6131
        %v6361 = vunpack.c.l.b16 %v6132
        %v6362 = vunpack.c.h.b16 %v6132
        %v6363 = vunpack.c.l.b16 %v6133
        %v6364 = vunpack.c.l.b16 %v6134
        %v6365 = vunpack.c.h.b16 %v6134
        %v6366 = vunpack.c.l.b16 %v6135
        %v6367 = vunpack.c.l.b16 %v6136
        %v6368 = vunpack.c.h.b16 %v6136
        %v6369 = vunpack.c.l.b16 %v6137
        %v6370 = vunpack.c.l.b16 %v6138
        %v6371 = vunpack.c.h.b16 %v6138
        %v6372 = vunpack.c.l.b16 %v6139
        %v6373 = vunpack.c.l.b16 %v6140
        %v6374 = vunpack.c.h.b16 %v6140
        %v6375 = vunpack.c.l.b16 %v6141
        %v6376 = vunpack.c.l.b16 %v6142
        %v6377 = vunpack.c.h.b16 %v6142
        %v6378 = vunpack.c.l.b16 %v6143
        %v6379 = vunpack.c.l.b16 %v6144
        %v6380 = vunpack.c.h.b16 %v6144
        %v6381 = vunpack.c.l.b16 %v6145
        %v6382 = vunpack.c.l.b16 %v6146
        %v6383 = vunpack.c.h.b16 %v6146
        %v6384 = vunpack.c.l.b16 %v6147
        %v6385 = vunpack.c.l.b16 %v6148
        %v6386 = vunpack.c.h.b16 %v6148
        %v6387 = vunpack.c.l.b16 %v6149
        %v6388 = vunpack.c.l.b16 %v6150
        %v6389 = vunpack.c.h.b16 %v6150
        %v6390 = vunpack.c.l.b16 %v6151
        %v6391 = vunpack.c.l.b16 %v6152
        %v6392 = vunpack.c.h.b16 %v6152
        %v6393 = vunpack.c.l.b16 %v6153
        %v6394 = vunpack.c.l.b16 %v6154
        %v6395 = vunpack.c.h.b16 %v6154
        %v6396 = vunpack.c.l.b16 %v6155
        %v6397 = vunpack.c.l.b16 %v6156
        %v6398 = vunpack.c.h.b16 %v6156
        %v6399 = vunpack.c.l.b16 %v6157
        %v6400 = vunpack.c.l.b16 %v6158
        %v6401 = vunpack.c.h.b16 %v6158
        %v6402 = vunpack.c.l.b16 %v6159
        %v6403 = vunpack.c.l.b16 %v6160
        %v6404 = vunpack.c.h.b16 %v6160
        %v6405 = vunpack.c.l.b16 %v6161
        %v6406 = vunpack.c.l.b16 %v6162
        %v6407 = vunpack.c.h.b16 %v6162
        %v6408 = vunpack.c.l.b16 %v6163
        %v6409 = vunpack.c.l.b16 %v6164
        %v6410 = vunpack.c.h.b16 %v6164
        %v6411 = vunpack.c.l.b16 %v6165
        %v6412 = vunpack.c.l.b16 %v6166
        %v6413 = vunpack.c.h.b16 %v6166
        %v6414 = vunpack.c.l.b16 %v6167
        %v6415 = vunpack.c.l.b16 %v6168
        %v6416 = vunpack.c.h.b16 %v6168
        %v6417 = vunpack.c.l.b16 %v6169
        %v6418 = vunpack.c.l.b16 %v6170
        %v6419 = vunpack.c.h.b16 %v6170
        %v6420 = vunpack.c.l.b16 %v6171
        %v6421 = vunpack.c.l.b16 %v6172
        %v6422 = vunpack.c.h.b16 %v6172
        %v6423 = vunpack.c.l.b16 %v6173
        %v6424 = vunpack.c.l.b16 %v6174
        %v6425 = vunpack.c.h.b16 %v6174
        %v6426 = vunpack.c.l.b16 %v6175
        %v6427 = vunpack.c.l.b16 %v6176
        %v6428 = vunpack.c.h.b16 %v6176
        %v6429 = vunpack.c.l.b16 %v6177
        %v6430 = vunpack.c.l.b16 %v6178
        %v6431 = vunpack.c.h.b16 %v6178
        %v6432 = vunpack.c.l.b16 %v6179
        %v6433 = vunpack.c.l.b16 %v6180
        %v6434 = vunpack.c.h.b16 %v6180
        %v6435 = vunpack.c.l.b16 %v6181
        %v6436 = vunpack.c.l.b16 %v6182
        %v6437 = vunpack.c.h.b16 %v6182
        %v6438 = vunpack.c.l.b16 %v6183
        %v6439 = vunpack.c.l.b16 %v6184
        %v6440 = vunpack.c.h.b16 %v6184
        %v6441 = vunpack.c.l.b16 %v6185
        %v6442 = vunpack.c.l.b16 %v6186
        %v6443 = vunpack.c.h.b16 %v6186
        %v6444 = vunpack.c.l.b16 %v6187
        %v6445 = vpack.c.b16 %v6304, %v6301
        %v6446 = vpack.c.b16 %v6305, %v6302
        %v6447 = vpack.c.b16 %v6306, %v6303
        %v6448 = vpack.c.b16 %v6310, %v6307
        %v6449 = vpack.c.b16 %v6311, %v6308
        %v6450 = vpack.c.b16 %v6312, %v6309
        %v6451 = vpack.c.b16 %v6316, %v6313
        %v6452 = vpack.c.b16 %v6317, %v6314
        %v6453 = vpack.c.b16 %v6318, %v6315
        %v6454 = vpack.c.b16 %v6322, %v6319
        %v6455 = vpack.c.b16 %v6323, %v6320
        %v6456 = vpack.c.b16 %v6324, %v6321
        %v6457 = vpack.c.b16 %v6328, %v6325
        %v6458 = vpack.c.b16 %v6329, %v6326
        %v6459 = vpack.c.b16 %v6330, %v6327
        %v6460 = vpack.c.b16 %v6334, %v6331
        %v6461 = vpack.c.b16 %v6335, %v6332
        %v6462 = vpack.c.b16 %v6336, %v6333
        %v6463 = vpack.c.b16 %v6340, %v6337
        %v6464 = vpack.c.b16 %v6341, %v6338
        %v6465 = vpack.c.b16 %v6342, %v6339
        %v6466 = vpack.c.b16 %v6346, %v6343
        %v6467 = vpack.c.b16 %v6347, %v6344
        %v6468 = vpack.c.b16 %v6348, %v6345
        %v6469 = vpack.c.b16 %v6352, %v6349
        %v6470 = vpack.c.b16 %v6353, %v6350
        %v6471 = vpack.c.b16 %v6354, %v6351
        %v6472 = vpack.c.b16 %v6358, %v6355
        %v6473 = vpack.c.b16 %v6359, %v6356
        %v6474 = vpack.c.b16 %v6360, %v6357
        %v6475 = vpack.c.b16 %v6364, %v6361
        %v6476 = vpack.c.b16 %v6365, %v6362
        %v6477 = vpack.c.b16 %v6366, %v6363
        %v6478 = vpack.c.b16 %v6370, %v6367
        %v6479 = vpack.c.b16 %v6371, %v6368
        %v6480 = vpack.c.b16 %v6372, %v6369
        %v6481 = vpack.c.b16 %v6376, %v6373
        %v6482 = vpack.c.b16 %v6377, %v6374
        %v6483 = vpack.c.b16 %v6378, %v6375
        %v6484 = vpack.c.b16 %v6382, %v6379
        %v6485 = vpack.c.b16 %v6383, %v6380
        %v6486 = vpack.c.b16 %v6384, %v6381
        %v6487 = vpack.c.b16 %v6388, %v6385
        %v6488 = vpack.c.b16 %v6389, %v6386
        %v6489 = vpack.c.b16 %v6390, %v6387
        %v6490 = vpack.c.b16 %v6394, %v6391
        %v6491 = vpack.c.b16 %v6395, %v6392
        %v6492 = vpack.c.b16 %v6396, %v6393
        %v6493 = vpack.c.b16 %v6400, %v6397
        %v6494 = vpack.c.b16 %v6401, %v6398
        %v6495 = vpack.c.b16 %v6402, %v6399
        %v6496 = vpack.c.b16 %v6406, %v6403
        %v6497 = vpack.c.b16 %v6407, %v6404
        %v6498 = vpack.c.b16 %v6408, %v6405
        %v6499 = vpack.c.b16 %v6412, %v6409
        %v6500 = vpack.c.b16 %v6413, %v6410
        %v6501 = vpack.c.b16 %v6414, %v6411
        %v6502 = vpack.c.b16 %v6418, %v6415
        %v6503 = vpack.c.b16 %v6419, %v6416
        %v6504 = vpack.c.b16 %v6420, %v6417
        %v6505 = vpack.c.b16 %v6424, %v6421
        %v6506 = vpack.c.b16 %v6425, %v6422
        %v6507 = vpack.c.b16 %v6426, %v6423
        %v6508 = vpack.c.b16 %v6430, %v6427
        %v6509 = vpack.c.b16 %v6431, %v6428
        %v6510 = vpack.c.b16 %v6432, %v6429
        %v6511 = vpack.c.b16 %v6436, %v6433
        %v6512 = vpack.c.b16 %v6437, %v6434
        %v6513 = vpack.c.b16 %v6438, %v6435
        %v6514 = vpack.c.b16 %v6442, %v6439
        %v6515 = vpack.c.b16 %v6443, %v6440
        %v6516 = vpack.c.b16 %v6444, %v6441
        %6589 = vmatprep.subr.bf16.mxu0 %v6446
        %6590 = vmatpush1.bf16.msra.mxu0 %v6445
        %6591 = vmatprep.subr.bf16.mxu0 %v6449
        %6592 = vmatpush1.bf16.msra.mxu0 %v6448
        %6593 = vmatprep.subr.bf16.mxu0 %v6452
        %6594 = vmatpush1.bf16.msra.mxu0 %v6451
        %6595 = vmatprep.subr.bf16.mxu0 %v6455
        %6596 = vmatpush1.bf16.msra.mxu0 %v6454
        %6597 = vmatprep.subr.bf16.mxu0 %v6458
        %6598 = vmatpush1.bf16.msra.mxu0 %v6457
        %6599 = vmatprep.subr.bf16.mxu0 %v6461
        %6600 = vmatpush1.bf16.msra.mxu0 %v6460
        %6601 = vmatprep.subr.bf16.mxu0 %v6464
        %6602 = vmatpush1.bf16.msra.mxu0 %v6463
        %6603 = vmatprep.subr.bf16.mxu0 %v6467
        %6604 = vmatpush1.bf16.msra.mxu0 %v6466
        %6605 = vmatprep.subr.bf16.mxu0 %v6470
        %6606 = vmatpush1.bf16.msra.mxu0 %v6469
        %6607 = vmatprep.subr.bf16.mxu0 %v6473
        %6608 = vmatpush1.bf16.msra.mxu0 %v6472
        %6609 = vmatprep.subr.bf16.mxu0 %v6476
        %6610 = vmatpush1.bf16.msra.mxu0 %v6475
        %6611 = vmatprep.subr.bf16.mxu0 %v6479
        %6612 = vmatpush1.bf16.msra.mxu0 %v6478
        %6613 = vmatprep.subr.bf16.mxu0 %v6482
        %6614 = vmatpush1.bf16.msra.mxu0 %v6481
        %6615 = vmatprep.subr.bf16.mxu0 %v6485
        %6616 = vmatpush1.bf16.msra.mxu0 %v6484
        %6617 = vmatprep.subr.bf16.mxu0 %v6488
        %6618 = vmatpush1.bf16.msra.mxu0 %v6487
        %6619 = vmatprep.subr.bf16.mxu0 %v6491
        %6620 = vmatpush1.bf16.msra.mxu0 %v6490
        %6621 = vmatprep.mubr.bf16.mxu0 %v6069
        %6622 = vmatmul.mubr.bf16.gmra.mrb[0].mxu0 %v6068
        %v6623 = vpop.f32.mrb[0].mxu0
        %v6624 = vadd.f32 %v6193, %v6623
        %v6625 = vpop.f32.mrb[0].mxu0
        %v6626 = vadd.f32 %v6197, %v6625
        %v6627 = vpop.f32.mrb[0].mxu0
        %v6628 = vadd.f32 %v6193, %v6627
        %v6629 = vpop.f32.mrb[0].mxu0
        %v6630 = vadd.f32 %v6197, %v6629
        %6631 = vmatprep.mubr.bf16.mxu0 %v6072
        %6632 = vmatmul.mubr.bf16.gmra.mrb[0].mxu0 %v6071
        %v6633 = vpop.f32.mrb[0].mxu0
        %v6634 = vadd.f32 %v6193, %v6633
        %v6635 = vpop.f32.mrb[0].mxu0
        %v6636 = vadd.f32 %v6197, %v6635
        %v6637 = vpop.f32.mrb[0].mxu0
        %v6638 = vadd.f32 %v6193, %v6637
        %v6639 = vpop.f32.mrb[0].mxu0
        %v6640 = vadd.f32 %v6197, %v6639
        %6641 = vmatprep.mubr.bf16.mxu0 %v6075
        %6642 = vmatmul.mubr.bf16.gmra.mrb[0].mxu0 %v6074
        %v6643 = vpop.f32.mrb[0].mxu0
        %v6644 = vadd.f32 %v6193, %v6643
        %v6645 = vpop.f32.mrb[0].mxu0
        %v6646 = vadd.f32 %v6197, %v6645
        %v6647 = vpop.f32.mrb[0].mxu0
        %v6648 = vadd.f32 %v6193, %v6647
        %v6649 = vpop.f32.mrb[0].mxu0
        %v6650 = vadd.f32 %v6197, %v6649
        %6651 = vmatprep.mubr.bf16.mxu0 %v6078
        %6652 = vmatmul.mubr.bf16.gmra.mrb[0].mxu0 %v6077
        %v6653 = vpop.f32.mrb[0].mxu0
        %v6654 = vadd.f32 %v6193, %v6653
        %v6655 = vpop.f32.mrb[0].mxu0
        %v6656 = vadd.f32 %v6197, %v6655
        %v6657 = vpop.f32.mrb[0].mxu0
        %v6658 = vadd.f32 %v6193, %v6657
        %v6659 = vpop.f32.mrb[0].mxu0
        %v6660 = vadd.f32 %v6197, %v6659
        %6661 = vmatprep.mubr.bf16.mxu0 %v6081
        %6662 = vmatmul.mubr.bf16.gmra.mrb[0].mxu0 %v6080
        %v6663 = vpop.f32.mrb[0].mxu0
        %v6664 = vadd.f32 %v6193, %v6663
        %v6665 = vpop.f32.mrb[0].mxu0
        %v6666 = vadd.f32 %v6197, %v6665
        %v6667 = vpop.f32.mrb[0].mxu0
        %v6668 = vadd.f32 %v6193, %v6667
        %v6669 = vpop.f32.mrb[0].mxu0
        %v6670 = vadd.f32 %v6197, %v6669
        %6671 = vmatprep.mubr.bf16.mxu0 %v6084
        %6672 = vmatmul.mubr.bf16.gmra.mrb[0].mxu0 %v6083
        %v6673 = vpop.f32.mrb[0].mxu0
        %v6674 = vadd.f32 %v6193, %v6673
        %v6675 = vpop.f32.mrb[0].mxu0
        %v6676 = vadd.f32 %v6197, %v6675
        %v6677 = vpop.f32.mrb[0].mxu0
        %v6678 = vadd.f32 %v6193, %v6677
        %v6679 = vpop.f32.mrb[0].mxu0
        %v6680 = vadd.f32 %v6197, %v6679
        %6681 = vmatprep.mubr.bf16.mxu0 %v6087
        %6682 = vmatmul.mubr.bf16.gmra.mrb[0].mxu0 %v6086
        %v6683 = vpop.f32.mrb[0].mxu0
        %v6684 = vadd.f32 %v6193, %v6683
        %v6685 = vpop.f32.mrb[0].mxu0
        %v6686 = vadd.f32 %v6197, %v6685
        %v6687 = vpop.f32.mrb[0].mxu0
        %v6688 = vadd.f32 %v6193, %v6687
        %v6689 = vpop.f32.mrb[0].mxu0
        %v6690 = vadd.f32 %v6197, %v6689
        %6691 = vmatprep.mubr.bf16.mxu0 %v6090
        %6692 = vmatmul.mubr.bf16.gmra.mrb[0].mxu0 %v6089
        %v6693 = vpop.f32.mrb[0].mxu0
        %v6694 = vadd.f32 %v6193, %v6693
        %v6695 = vpop.f32.mrb[0].mxu0
        %v6696 = vadd.f32 %v6197, %v6695
        %v6697 = vpop.f32.mrb[0].mxu0
        %v6698 = vadd.f32 %v6193, %v6697
        %v6699 = vpop.f32.mrb[0].mxu0
        %v6700 = vadd.f32 %v6197, %v6699
        %6701 = vdwg.mxu0
        %6702 = vmatprep.subr.bf16.mxu0 %v6494
        %6703 = vmatpush1.bf16.msra.mxu0 %v6493
        %6704 = vmatprep.subr.bf16.mxu0 %v6497
        %6705 = vmatpush1.bf16.msra.mxu0 %v6496
        %6706 = vmatprep.subr.bf16.mxu0 %v6500
        %6707 = vmatpush1.bf16.msra.mxu0 %v6499
        %6708 = vmatprep.subr.bf16.mxu0 %v6503
        %6709 = vmatpush1.bf16.msra.mxu0 %v6502
        %6710 = vmatprep.subr.bf16.mxu0 %v6506
        %6711 = vmatpush1.bf16.msra.mxu0 %v6505
        %6712 = vmatprep.subr.bf16.mxu0 %v6509
        %6713 = vmatpush1.bf16.msra.mxu0 %v6508
        %6714 = vmatprep.subr.bf16.mxu0 %v6512
        %6715 = vmatpush1.bf16.msra.mxu0 %v6511
        %6716 = vmatprep.subr.bf16.mxu0 %v6515
        %6717 = vmatpush1.bf16.msra.mxu0 %v6514
        %6718 = vmatprep.subr.bf16.mxu0 0
        %6719 = vmatpush1.bf16.msra.mxu0 0
        %6720 = vmatprep.subr.bf16.mxu0 0
        %6721 = vmatpush1.bf16.msra.mxu0 0
        %6722 = vmatprep.subr.bf16.mxu0 0
        %6723 = vmatpush1.bf16.msra.mxu0 0
        %6724 = vmatprep.subr.bf16.mxu0 0
        %6725 = vmatpush1.bf16.msra.mxu0 0
        %6726 = vmatprep.subr.bf16.mxu0 0
        %6727 = vmatpush1.bf16.msra.mxu0 0
        %6728 = vmatprep.subr.bf16.mxu0 0
        %6729 = vmatpush1.bf16.msra.mxu0 0
        %6730 = vmatprep.subr.bf16.mxu0 0
        %6731 = vmatpush1.bf16.msra.mxu0 0
        %6732 = vmatprep.subr.bf16.mxu0 0
        %6733 = vmatpush1.bf16.msra.mxu0 0
        %6734 = vmatprep.mubr.bf16.mxu0 0
        %6735 = vmatmul.mubr.bf16.gmra.mrb[0].mxu0 %v6070
        %v6736 = vpop.f32.mrb[0].mxu0
        %v6737 = vadd.f32 %v6624, %v6736
        %v6738 = vpop.f32.mrb[0].mxu0
        %v6739 = vadd.f32 %v6626, %v6738
        %v6740 = vpop.f32.mrb[0].mxu0
        %v6741 = vadd.f32 %v6628, %v6740
        %v6742 = vpop.f32.mrb[0].mxu0
        %v6743 = vadd.f32 %v6630, %v6742
        %6744 = vmatprep.mubr.bf16.mxu0 0
        %6745 = vmatmul.mubr.bf16.gmra.mrb[0].mxu0 %v6073
        %v6746 = vpop.f32.mrb[0].mxu0
        %v6747 = vadd.f32 %v6634, %v6746
        %v6748 = vpop.f32.mrb[0].mxu0
        %v6749 = vadd.f32 %v6636, %v6748
        %v6750 = vpop.f32.mrb[0].mxu0
        %v6751 = vadd.f32 %v6638, %v6750
        %v6752 = vpop.f32.mrb[0].mxu0
        %v6753 = vadd.f32 %v6640, %v6752
        %6754 = vmatprep.mubr.bf16.mxu0 0
        %6755 = vmatmul.mubr.bf16.gmra.mrb[0].mxu0 %v6076
        %v6756 = vpop.f32.mrb[0].mxu0
        %v6757 = vadd.f32 %v6644, %v6756
        %v6758 = vpop.f32.mrb[0].mxu0
        %v6759 = vadd.f32 %v6646, %v6758
        %v6760 = vpop.f32.mrb[0].mxu0
        %v6761 = vadd.f32 %v6648, %v6760
        %v6762 = vpop.f32.mrb[0].mxu0
        %v6763 = vadd.f32 %v6650, %v6762
        %6764 = vmatprep.mubr.bf16.mxu0 0
        %6765 = vmatmul.mubr.bf16.gmra.mrb[0].mxu0 %v6079
        %v6766 = vpop.f32.mrb[0].mxu0
        %v6767 = vadd.f32 %v6654, %v6766
        %v6768 = vpop.f32.mrb[0].mxu0
        %v6769 = vadd.f32 %v6656, %v6768
        %v6770 = vpop.f32.mrb[0].mxu0
        %v6771 = vadd.f32 %v6658, %v6770
        %v6772 = vpop.f32.mrb[0].mxu0
        %v6773 = vadd.f32 %v6660, %v6772
        %6774 = vmatprep.mubr.bf16.mxu0 0
        %6775 = vmatmul.mubr.bf16.gmra.mrb[0].mxu0 %v6082
        %v6776 = vpop.f32.mrb[0].mxu0
        %v6777 = vadd.f32 %v6664, %v6776
        %v6778 = vpop.f32.mrb[0].mxu0
        %v6779 = vadd.f32 %v6666, %v6778
        %v6780 = vpop.f32.mrb[0].mxu0
        %v6781 = vadd.f32 %v6668, %v6780
        %v6782 = vpop.f32.mrb[0].mxu0
        %v6783 = vadd.f32 %v6670, %v6782
        %6784 = vmatprep.mubr.bf16.mxu0 0
        %6785 = vmatmul.mubr.bf16.gmra.mrb[0].mxu0 %v6085
        %v6786 = vpop.f32.mrb[0].mxu0
        %v6787 = vadd.f32 %v6674, %v6786
        %v6788 = vpop.f32.mrb[0].mxu0
        %v6789 = vadd.f32 %v6676, %v6788
        %v6790 = vpop.f32.mrb[0].mxu0
        %v6791 = vadd.f32 %v6678, %v6790
        %v6792 = vpop.f32.mrb[0].mxu0
        %v6793 = vadd.f32 %v6680, %v6792
        %6794 = vmatprep.mubr.bf16.mxu0 0
        %6795 = vmatmul.mubr.bf16.gmra.mrb[0].mxu0 %v6088
        %v6796 = vpop.f32.mrb[0].mxu0
        %v6797 = vadd.f32 %v6684, %v6796
        %v6798 = vpop.f32.mrb[0].mxu0
        %v6799 = vadd.f32 %v6686, %v6798
        %v6800 = vpop.f32.mrb[0].mxu0
        %v6801 = vadd.f32 %v6688, %v6800
        %v6802 = vpop.f32.mrb[0].mxu0
        %v6803 = vadd.f32 %v6690, %v6802
        %6804 = vmatprep.mubr.bf16.mxu0 0
        %6805 = vmatmul.mubr.bf16.gmra.mrb[0].mxu0 %v6091
        %v6806 = vpop.f32.mrb[0].mxu0
        %v6807 = vadd.f32 %v6694, %v6806
        %v6808 = vpop.f32.mrb[0].mxu0
        %v6809 = vadd.f32 %v6696, %v6808
        %v6810 = vpop.f32.mrb[0].mxu0
        %v6811 = vadd.f32 %v6698, %v6810
        %v6812 = vpop.f32.mrb[0].mxu0
        %v6813 = vadd.f32 %v6700, %v6812
        %6814 = vdwg.mxu0
        %6815 = vmatprep.subr.bf16.mxu0 0
        %6816 = vmatpush1.bf16.msra.mxu0 %v6447
        %6817 = vmatprep.subr.bf16.mxu0 0
        %6818 = vmatpush1.bf16.msra.mxu0 %v6450
        %6819 = vmatprep.subr.bf16.mxu0 0
        %6820 = vmatpush1.bf16.msra.mxu0 %v6453
        %6821 = vmatprep.subr.bf16.mxu0 0
        %6822 = vmatpush1.bf16.msra.mxu0 %v6456
        %6823 = vmatprep.subr.bf16.mxu0 0
        %6824 = vmatpush1.bf16.msra.mxu0 %v6459
        %6825 = vmatprep.subr.bf16.mxu0 0
        %6826 = vmatpush1.bf16.msra.mxu0 %v6462
        %6827 = vmatprep.subr.bf16.mxu0 0
        %6828 = vmatpush1.bf16.msra.mxu0 %v6465
        %6829 = vmatprep.subr.bf16.mxu0 0
        %6830 = vmatpush1.bf16.msra.mxu0 %v6468
        %6831 = vmatprep.subr.bf16.mxu0 0
        %6832 = vmatpush1.bf16.msra.mxu0 %v6471
        %6833 = vmatprep.subr.bf16.mxu0 0
        %6834 = vmatpush1.bf16.msra.mxu0 %v6474
        %6835 = vmatprep.subr.bf16.mxu0 0
        %6836 = vmatpush1.bf16.msra.mxu0 %v6477
        %6837 = vmatprep.subr.bf16.mxu0 0
        %6838 = vmatpush1.bf16.msra.mxu0 %v6480
        %6839 = vmatprep.subr.bf16.mxu0 0
        %6840 = vmatpush1.bf16.msra.mxu0 %v6483
        %6841 = vmatprep.subr.bf16.mxu0 0
        %6842 = vmatpush1.bf16.msra.mxu0 %v6486
        %6843 = vmatprep.subr.bf16.mxu0 0
        %6844 = vmatpush1.bf16.msra.mxu0 %v6489
        %6845 = vmatprep.subr.bf16.mxu0 0
        %6846 = vmatpush1.bf16.msra.mxu0 %v6492
        %6847 = vmatprep.mubr.bf16.mxu0 %v6069
        %6848 = vmatmul.mubr.bf16.gmra.mrb[0].mxu0 %v6068
        %v6849 = vpop.f32.mrb[0].mxu0
        %v6850 = vadd.f32 %v6201, %v6849
        %v6851 = vpop.f32.mrb[0].mxu0
        %v6852 = vpop.f32.mrb[0].mxu0
        %v6853 = vadd.f32 %v6201, %v6852
        %v6854 = vpop.f32.mrb[0].mxu0
        %6855 = vmatprep.mubr.bf16.mxu0 %v6072
        %6856 = vmatmul.mubr.bf16.gmra.mrb[0].mxu0 %v6071
        %v6857 = vpop.f32.mrb[0].mxu0
        %v6858 = vadd.f32 %v6201, %v6857
        %v6859 = vpop.f32.mrb[0].mxu0
        %v6860 = vpop.f32.mrb[0].mxu0
        %v6861 = vadd.f32 %v6201, %v6860
        %v6862 = vpop.f32.mrb[0].mxu0
        %6863 = vmatprep.mubr.bf16.mxu0 %v6075
        %6864 = vmatmul.mubr.bf16.gmra.mrb[0].mxu0 %v6074
        %v6865 = vpop.f32.mrb[0].mxu0
        %v6866 = vadd.f32 %v6201, %v6865
        %v6867 = vpop.f32.mrb[0].mxu0
        %v6868 = vpop.f32.mrb[0].mxu0
        %v6869 = vadd.f32 %v6201, %v6868
        %v6870 = vpop.f32.mrb[0].mxu0
        %6871 = vmatprep.mubr.bf16.mxu0 %v6078
        %6872 = vmatmul.mubr.bf16.gmra.mrb[0].mxu0 %v6077
        %v6873 = vpop.f32.mrb[0].mxu0
        %v6874 = vadd.f32 %v6201, %v6873
        %v6875 = vpop.f32.mrb[0].mxu0
        %v6876 = vpop.f32.mrb[0].mxu0
        %v6877 = vadd.f32 %v6201, %v6876
        %v6878 = vpop.f32.mrb[0].mxu0
        %6879 = vmatprep.mubr.bf16.mxu0 %v6081
        %6880 = vmatmul.mubr.bf16.gmra.mrb[0].mxu0 %v6080
        %v6881 = vpop.f32.mrb[0].mxu0
        %v6882 = vadd.f32 %v6201, %v6881
        %v6883 = vpop.f32.mrb[0].mxu0
        %v6884 = vpop.f32.mrb[0].mxu0
        %v6885 = vadd.f32 %v6201, %v6884
        %v6886 = vpop.f32.mrb[0].mxu0
        %6887 = vmatprep.mubr.bf16.mxu0 %v6084
        %6888 = vmatmul.mubr.bf16.gmra.mrb[0].mxu0 %v6083
        %v6889 = vpop.f32.mrb[0].mxu0
        %v6890 = vadd.f32 %v6201, %v6889
        %v6891 = vpop.f32.mrb[0].mxu0
        %v6892 = vpop.f32.mrb[0].mxu0
        %v6893 = vadd.f32 %v6201, %v6892
        %v6894 = vpop.f32.mrb[0].mxu0
        %6895 = vmatprep.mubr.bf16.mxu0 %v6087
        %6896 = vmatmul.mubr.bf16.gmra.mrb[0].mxu0 %v6086
        %v6897 = vpop.f32.mrb[0].mxu0
        %v6898 = vadd.f32 %v6201, %v6897
        %v6899 = vpop.f32.mrb[0].mxu0
        %v6900 = vpop.f32.mrb[0].mxu0
        %v6901 = vadd.f32 %v6201, %v6900
        %v6902 = vpop.f32.mrb[0].mxu0
        %6903 = vmatprep.mubr.bf16.mxu0 %v6090
        %6904 = vmatmul.mubr.bf16.gmra.mrb[0].mxu0 %v6089
        %v6905 = vpop.f32.mrb[0].mxu0
        %v6906 = vadd.f32 %v6201, %v6905
        %v6907 = vpop.f32.mrb[0].mxu0
        %v6908 = vpop.f32.mrb[0].mxu0
        %v6909 = vadd.f32 %v6201, %v6908
        %v6910 = vpop.f32.mrb[0].mxu0
        %6911 = vdwg.mxu0
        %6912 = vmatprep.subr.bf16.mxu0 0
        %6913 = vmatpush1.bf16.msra.mxu0 %v6495
        %6914 = vmatprep.subr.bf16.mxu0 0
        %6915 = vmatpush1.bf16.msra.mxu0 %v6498
        %6916 = vmatprep.subr.bf16.mxu0 0
        %6917 = vmatpush1.bf16.msra.mxu0 %v6501
        %6918 = vmatprep.subr.bf16.mxu0 0
        %6919 = vmatpush1.bf16.msra.mxu0 %v6504
        %6920 = vmatprep.subr.bf16.mxu0 0
        %6921 = vmatpush1.bf16.msra.mxu0 %v6507
        %6922 = vmatprep.subr.bf16.mxu0 0
        %6923 = vmatpush1.bf16.msra.mxu0 %v6510
        %6924 = vmatprep.subr.bf16.mxu0 0
        %6925 = vmatpush1.bf16.msra.mxu0 %v6513
        %6926 = vmatprep.subr.bf16.mxu0 0
        %6927 = vmatpush1.bf16.msra.mxu0 %v6516
        %6928 = vmatprep.subr.bf16.mxu0 0
        %6929 = vmatpush1.bf16.msra.mxu0 0
        %6930 = vmatprep.subr.bf16.mxu0 0
        %6931 = vmatpush1.bf16.msra.mxu0 0
        %6932 = vmatprep.subr.bf16.mxu0 0
        %6933 = vmatpush1.bf16.msra.mxu0 0
        %6934 = vmatprep.subr.bf16.mxu0 0
        %6935 = vmatpush1.bf16.msra.mxu0 0
        %6936 = vmatprep.subr.bf16.mxu0 0
        %6937 = vmatpush1.bf16.msra.mxu0 0
        %6938 = vmatprep.subr.bf16.mxu0 0
        %6939 = vmatpush1.bf16.msra.mxu0 0
        %6940 = vmatprep.subr.bf16.mxu0 0
        %6941 = vmatpush1.bf16.msra.mxu0 0
        %6942 = vmatprep.subr.bf16.mxu0 0
        %6943 = vmatpush1.bf16.msra.mxu0 0
        %6944 = vmatprep.mubr.bf16.mxu0 0
        %6945 = vmatmul.mubr.bf16.gmra.mrb[0].mxu0 %v6070
        %v6946 = vpop.f32.mrb[0].mxu0
        %v6947 = vadd.f32 %v6850, %v6946
        %v6948 = vpop.f32.mrb[0].mxu0
        %v6949 = vpop.f32.mrb[0].mxu0
        %v6950 = vadd.f32 %v6853, %v6949
        %v6951 = vpop.f32.mrb[0].mxu0
        %6952 = vmatprep.mubr.bf16.mxu0 0
        %6953 = vmatmul.mubr.bf16.gmra.mrb[0].mxu0 %v6073
        %v6954 = vpop.f32.mrb[0].mxu0
        %v6955 = vadd.f32 %v6858, %v6954
        %v6956 = vpop.f32.mrb[0].mxu0
        %v6957 = vpop.f32.mrb[0].mxu0
        %v6958 = vadd.f32 %v6861, %v6957
        %v6959 = vpop.f32.mrb[0].mxu0
        %6960 = vmatprep.mubr.bf16.mxu0 0
        %6961 = vmatmul.mubr.bf16.gmra.mrb[0].mxu0 %v6076
        %v6962 = vpop.f32.mrb[0].mxu0
        %v6963 = vadd.f32 %v6866, %v6962
        %v6964 = vpop.f32.mrb[0].mxu0
        %v6965 = vpop.f32.mrb[0].mxu0
        %v6966 = vadd.f32 %v6869, %v6965
        %v6967 = vpop.f32.mrb[0].mxu0
        %6968 = vmatprep.mubr.bf16.mxu0 0
        %6969 = vmatmul.mubr.bf16.gmra.mrb[0].mxu0 %v6079
        %v6970 = vpop.f32.mrb[0].mxu0
        %v6971 = vadd.f32 %v6874, %v6970
        %v6972 = vpop.f32.mrb[0].mxu0
        %v6973 = vpop.f32.mrb[0].mxu0
        %v6974 = vadd.f32 %v6877, %v6973
        %v6975 = vpop.f32.mrb[0].mxu0
        %6976 = vmatprep.mubr.bf16.mxu0 0
        %6977 = vmatmul.mubr.bf16.gmra.mrb[0].mxu0 %v6082
        %v6978 = vpop.f32.mrb[0].mxu0
        %v6979 = vadd.f32 %v6882, %v6978
        %v6980 = vpop.f32.mrb[0].mxu0
        %v6981 = vpop.f32.mrb[0].mxu0
        %v6982 = vadd.f32 %v6885, %v6981
        %v6983 = vpop.f32.mrb[0].mxu0
        %6984 = vmatprep.mubr.bf16.mxu0 0
        %6985 = vmatmul.mubr.bf16.gmra.mrb[0].mxu0 %v6085
        %v6986 = vpop.f32.mrb[0].mxu0
        %v6987 = vadd.f32 %v6890, %v6986
        %v6988 = vpop.f32.mrb[0].mxu0
        %v6989 = vpop.f32.mrb[0].mxu0
        %v6990 = vadd.f32 %v6893, %v6989
        %v6991 = vpop.f32.mrb[0].mxu0
        %6992 = vmatprep.mubr.bf16.mxu0 0
        %6993 = vmatmul.mubr.bf16.gmra.mrb[0].mxu0 %v6088
        %v6994 = vpop.f32.mrb[0].mxu0
        %v6995 = vadd.f32 %v6898, %v6994
        %v6996 = vpop.f32.mrb[0].mxu0
        %v6997 = vpop.f32.mrb[0].mxu0
        %v6998 = vadd.f32 %v6901, %v6997
        %v6999 = vpop.f32.mrb[0].mxu0
        %7000 = vmatprep.mubr.bf16.mxu0 0
        %7001 = vmatmul.mubr.bf16.gmra.mrb[0].mxu0 %v6091
        %v7002 = vpop.f32.mrb[0].mxu0
        %v7003 = vadd.f32 %v6906, %v7002
        %v7004 = vpop.f32.mrb[0].mxu0
        %v7005 = vpop.f32.mrb[0].mxu0
        %v7006 = vadd.f32 %v6909, %v7005
        %v7007 = vpop.f32.mrb[0].mxu0
        %7008 = vdwg.mxu0
        %7009 = vst [vmem:[%s245] sm:$0xff] %v6737
        %7010 = vst [vmem:[%s245 + $0x8] sm:$0xff] %v6739
        %7011 = vst [vmem:[%s245 + $0x10] sm:$0xff] %v6947
        %7012 = vst [vmem:[%s245 + $0x18] sm:$0xff] %v6741
        %7013 = vst [vmem:[%s245 + $0x20] sm:$0xff] %v6743
        %7014 = vst [vmem:[%s245 + $0x28] sm:$0xff] %v6950
        %7015 = vst [vmem:[%s245 + $0x30] sm:$0xff] %v6747
        %7016 = vst [vmem:[%s245 + $0x38] sm:$0xff] %v6749
        %7017 = vst [vmem:[%s245 + $0x40] sm:$0xff] %v6955
        %7018 = vst [vmem:[%s245 + $0x48] sm:$0xff] %v6751
        %7019 = vst [vmem:[%s245 + $0x50] sm:$0xff] %v6753
        %7020 = vst [vmem:[%s245 + $0x58] sm:$0xff] %v6958
        %7021 = vst [vmem:[%s245 + $0x60] sm:$0xff] %v6757
        %7022 = vst [vmem:[%s245 + $0x68] sm:$0xff] %v6759
        %7023 = vst [vmem:[%s245 + $0x70] sm:$0xff] %v6963
        %7024 = vst [vmem:[%s245 + $0x78] sm:$0xff] %v6761
        %7025 = vst [vmem:[%s245 + $0x80] sm:$0xff] %v6763
        %7026 = vst [vmem:[%s245 + $0x88] sm:$0xff] %v6966
        %7027 = vst [vmem:[%s245 + $0x90] sm:$0xff] %v6767
        %7028 = vst [vmem:[%s245 + $0x98] sm:$0xff] %v6769
        %7029 = vst [vmem:[%s245 + $0xa0] sm:$0xff] %v6971
        %7030 = vst [vmem:[%s245 + $0xa8] sm:$0xff] %v6771
        %7031 = vst [vmem:[%s245 + $0xb0] sm:$0xff] %v6773
        %7032 = vst [vmem:[%s245 + $0xb8] sm:$0xff] %v6974
        %7033 = vst [vmem:[%s245 + $0xc0] sm:$0xff] %v6777
        %7034 = vst [vmem:[%s245 + $0xc8] sm:$0xff] %v6779
        %7035 = vst [vmem:[%s245 + $0xd0] sm:$0xff] %v6979
        %7036 = vst [vmem:[%s245 + $0xd8] sm:$0xff] %v6781
        %7037 = vst [vmem:[%s245 + $0xe0] sm:$0xff] %v6783
        %7038 = vst [vmem:[%s245 + $0xe8] sm:$0xff] %v6982
        %7039 = vst [vmem:[%s245 + $0xf0] sm:$0xff] %v6787
        %7040 = vst [vmem:[%s245 + $0xf8] sm:$0xff] %v6789
        %7041 = vst [vmem:[%s245 + $0x100] sm:$0xff] %v6987
        %7042 = vst [vmem:[%s245 + $0x108] sm:$0xff] %v6791
        %7043 = vst [vmem:[%s245 + $0x110] sm:$0xff] %v6793
        %7044 = vst [vmem:[%s245 + $0x118] sm:$0xff] %v6990
        %7045 = vst [vmem:[%s245 + $0x120] sm:$0xff] %v6797
        %7046 = vst [vmem:[%s245 + $0x128] sm:$0xff] %v6799
        %7047 = vst [vmem:[%s245 + $0x130] sm:$0xff] %v6995
        %7048 = vst [vmem:[%s245 + $0x138] sm:$0xff] %v6801
        %7049 = vst [vmem:[%s245 + $0x140] sm:$0xff] %v6803
        %7050 = vst [vmem:[%s245 + $0x148] sm:$0xff] %v6998
        %7051 = vst [vmem:[%s245 + $0x150] sm:$0xff] %v6807
        %7052 = vst [vmem:[%s245 + $0x158] sm:$0xff] %v6809
        %7053 = vst [vmem:[%s245 + $0x160] sm:$0xff] %v7003
        %7054 = vst [vmem:[%s245 + $0x168] sm:$0xff] %v6811
        %7055 = vst [vmem:[%s245 + $0x170] sm:$0xff] %v6813
        %7056 = vst [vmem:[%s245 + $0x178] sm:$0xff] %v7006
        %s7057 = sand.u32 %s119, 1
        %s7058 = scalar_lea.sflag [#allocation6], %s7057
        %s7059 = sand.u32 %s119, 1
        %s7060 = smul.addr %s7059, 384
        %s7061 = scalar_lea.vmem [#allocation10], %s7060
        // Predicated region
        $region49: #{tpu_custom_call.1} parent=35 // pred_check
          %p7062 = pneg %p129
        $region50: #{tpu_custom_call.1} parent=35 // pred_check_branch
          %7064 = sbr.rel (%p7062) target = $region52
        $region51: #{tpu_custom_call.1} parent=35 // pred_region
          %s7065 = smul.u32 16, %s22
          %s7067 = ssub.s32 6144, 6144
          %7068 = vsyncadd %s7058, %s7067
          %s7069 = smul.addr %s7065, 3
          %s7070 = smul.addr %s7069, 128
          %s7071 = scalar_lea.hbm %s4, %s7070
          %s7072 = sshll.u32 %s7061, 4
          %s7073 = int_to_ptr.vmem [resolvable:$true] %s7072
          %7078 = dma.vmem_to_hbm [thread:$0]  %s7073, 6144, %s7071, %s7058, 384, 384, 24
        $region52: #{tpu_custom_call.1} parent=35 // pred_fallthru
          _
      $region36: #{tpu_custom_call.1} parent=5 // pred_fallthru
        _
      %p7079 = scmp.le.s32.totalorder 2, %s17
      // Predicated region
      $region53: #{tpu_custom_call.1} parent=5 // pred_check
        %p7080 = pneg %p7079
      $region54: #{tpu_custom_call.1} parent=5 // pred_check_branch
        %7082 = sbr.rel (%p7080) target = $region56
      $region55: #{tpu_custom_call.1} parent=5 // pred_region
        %s7083 = ssub.s32 %s17, 2
        // Predicated region
        $region57: #{tpu_custom_call.1} parent=55 // pred_check
          %p7084 = pneg %p135
        $region58: #{tpu_custom_call.1} parent=55 // pred_check_branch
          %7086 = sbr.rel (%p7084) target = $region60
        $region59: #{tpu_custom_call.1} parent=55 // pred_region
          %s7087 = sand.u32 %s120, 1
          %s7088 = scalar_lea.sflag [#allocation6], %s7087
          %s7089 = sand.u32 %s120, 1
          %s7090 = smul.addr %s7089, 384
          %s7091 = scalar_lea.vmem [#allocation10], %s7090
          %7092 = dma.done %s7088, 6144
        $region60: #{tpu_custom_call.1} parent=55 // pred_fallthru
          _
      $region56: #{tpu_custom_call.1} parent=5 // pred_fallthru
        _
    $region6: #{tpu_custom_call.1} parent=1 // loop_footer
      %s21 = sadd.s32 1, %s17
    $region7: #{tpu_custom_call.1} parent=1 // loop_footer_branch
      %16 = sbr.rel target = $region3
    $region8: #{tpu_custom_call.1} parent=1 // loop_exit
      _
    %7093 = vsyncpa [#allocation5], 1
    %s7094 = scalar_lea.sflag [#allocation5], 1
    %7095 = vsyncpa %s7094, 1
    %7096 = vsyncpa [#allocation8], 1
    %7097 = vsyncpa [#allocation6], 1
    %s7098 = scalar_lea.sflag [#allocation6], 1
    %7099 = vsyncpa %s7098, 1

</llo_original>
